<compile_context>
chip_gen: v7x
topology: tpu7x:2x2x1
jax: 0.10.0
libtpu: 0.0.40
codegen_flags: <defaults>
</compile_context>

<pallas_src>
import functools

import jax
import jax.numpy as jnp
from jax.experimental import pallas as pl
from jax.experimental.pallas import tpu as pltpu


def _round_up(n, m):
    return n + (-n) % m


def _resblock_kernel(x_ref, *refs, H, W, Wp, C, num_conv, chunks):
    """One batch element: num_conv x (conv3x3 + bias + ReLU), then + input.

    Padded pseudo-row layout (both for x_ref and the scratch buffers):
      image pixel (y, x) lives at flat index (y + 2) * Wp + x, so every
      interior row starts sublane-aligned; columns W..Wp-1 of each flat row
      are the (zero) right halo of that row and the left halo of the next.

    refs = (w_0..w_{n-1}, b_0..b_{n-1}, o_ref, scratch...)
      x_ref   : ((H+4)*Wp, C) f32    zero-padded input (padded in XLA)
      w_i     : (9*C, C)    bf16     tap-major (HWIO-flattened) conv weights
      b_i     : (1, C)      f32      bias
      o_ref   : (H*Wp, C)   f32      output in pseudo-row layout
      scratch : ((H+4)*Wp, C) bf16   ping-pong padded activations (0..2 bufs)
    """
    w_refs = refs[:num_conv]
    b_refs = refs[num_conv:2 * num_conv]
    o_ref = refs[2 * num_conv]
    scratch = refs[2 * num_conv + 1:]

    # Halo-only zeroing of the ping-pong buffers (top 2 + bottom 2 flat rows).
    # The interior is fully overwritten each stage and the side-halo columns
    # are re-zeroed by the masked chunk stores, so nothing else needs init.
    # (Done unconditionally: scratch is per-core on v7x with the parallel axis.)
    for buf in scratch:
        buf[pl.ds(0, 2 * Wp), :] = jnp.zeros((2 * Wp, C), buf.dtype)
        buf[pl.ds((H + 2) * Wp, 2 * Wp), :] = jnp.zeros((2 * Wp, C), buf.dtype)

    # Column-validity masks (hoisted out of the stage/chunk loops): pseudo-row
    # columns >= W are garbage and must be stored as zero so they double as
    # the next stage's left/right halo.
    masks = {}
    if num_conv > 1:
        for rows in sorted({r for _, r in chunks}):
            m = rows * Wp
            col = jax.lax.broadcasted_iota(jnp.int32, (m, C), 0) % Wp
            masks[rows] = col < W

    for s in range(num_conv):
        last = s == num_conv - 1
        src = x_ref if s == 0 else scratch[(s - 1) % 2]
        dst = o_ref if last else scratch[s % 2]
        w_flat = w_refs[s][...]          # (9*C, C) bf16, loaded once per stage
        bias = b_refs[s][...]            # (1, C) f32

        for y0, rows in chunks:
            m = rows * Wp

            # im2col the 9 shifted taps along lanes -> one (m, 9C)x(9C, C) GEMM.
            patches = []
            for dy in range(3):
                for dx in range(3):
                    start = (y0 + dy + 1) * Wp + (dx - 1)
                    patches.append(src[pl.ds(start, m), :].astype(jnp.bfloat16))
            lhs = jnp.concatenate(patches, axis=1)                  # (m, 9*C)
            acc = jnp.dot(lhs, w_flat, preferred_element_type=jnp.float32)
            acc = jnp.maximum(acc + bias, 0.0)                      # bias + ReLU

            if last:
                # relu(conv(...)) + input, emitted in pseudo-row layout; the
                # garbage columns are stripped by an XLA slice outside.
                res = x_ref[pl.ds((y0 + 2) * Wp, m), :]             # f32
                o_ref[pl.ds(y0 * Wp, m), :] = acc + res
            else:
                # Zero garbage columns in-register, then one contiguous,
                # sublane-aligned store into the next stage's padded buffer.
                acc = jnp.where(masks[rows], acc, 0.0)
                dst[pl.ds((y0 + 2) * Wp, m), :] = acc.astype(dst.dtype)


def residual_block_forward(x_nchw, weights, biases):
    """Pallas forward of ResidualBlock (NCHW in / NCHW out).

    weights: list of (3, 3, C, C) f32 HWIO conv weights (hidden_channels ==
             in_channels path, i.e. the module's default hidden_channels=None).
    biases : list of (C,) f32.
    """
    B, C, H, W = x_nchw.shape
    num_conv = len(weights)

    # Channel padding: 128 lanes for dense (unmasked) vector stores / DMA.
    Cp = 128 if C <= 128 else _round_up(C, 8)
    # Padded pseudo-row width: room for the 2 conv-halo columns, rounded to 16
    # sublanes so bf16 chunk stores and the dy tap offsets stay aligned.
    Wp = _round_up(W + 2, 16)
    Hp = H + 4            # 2 top halo/guard rows + 2 bottom halo/guard rows

    # NCHW -> NHWC (channels on the lane dim), pad channels with zeros
    # (zero weight/bias rows keep the math identical; sliced off at the end).
    x = jnp.transpose(x_nchw, (0, 2, 3, 1)).astype(jnp.float32)
    if Cp != C:
        pc = Cp - C
        x = jnp.pad(x, ((0, 0), (0, 0), (0, 0), (0, pc)))
        weights = [jnp.pad(w, ((0, 0), (0, 0), (0, pc), (0, pc))) for w in weights]
        biases = [jnp.pad(b, ((0, pc),)) for b in biases]

    # Zero-pad to the pseudo-row layout in XLA: pixel (y, x) -> padded (y+2, x).
    x_pad = jnp.pad(x, ((0, 0), (2, 2), (0, Wp - W), (0, 0)))
    x_pad = x_pad.reshape(B, Hp * Wp, Cp)

    w_args = [w.astype(jnp.bfloat16).reshape(9 * Cp, Cp) for w in weights]
    b_args = [b.reshape(1, Cp).astype(jnp.float32) for b in biases]

    # Main 8-row chunks plus a remainder chunk (all static).
    chunks = tuple((y0, min(8, H - y0)) for y0 in range(0, H, 8))

    kernel = functools.partial(_resblock_kernel, H=H, W=W, Wp=Wp, C=Cp,
                               num_conv=num_conv, chunks=chunks)

    n_scratch = min(max(num_conv - 1, 0), 2)      # ping-pong only if needed
    scratch_shapes = [pltpu.VMEM((Hp * Wp, Cp), jnp.bfloat16)
                      for _ in range(n_scratch)]

    in_specs = ([pl.BlockSpec((None, Hp * Wp, Cp), lambda b: (b, 0, 0))]
                + [pl.BlockSpec((9 * Cp, Cp), lambda b: (0, 0))] * num_conv
                + [pl.BlockSpec((1, Cp), lambda b: (0, 0))] * num_conv)

    # VMEM budget from the actual footprint (double-buffered I/O + weights +
    # scratch), with headroom for compiler temporaries.
    bytes_in = Hp * Wp * Cp * 4
    bytes_out = H * Wp * Cp * 4
    bytes_w = num_conv * (9 * Cp * Cp * 2 + Cp * 4)
    bytes_scr = n_scratch * Hp * Wp * Cp * 2
    footprint = 2 * (bytes_in + bytes_out + bytes_w) + bytes_scr
    vmem_limit = int(min(64 * 1024 * 1024, max(32 * 1024 * 1024, 4 * footprint)))

    out = pl.pallas_call(
        kernel,
        out_shape=jax.ShapeDtypeStruct((B, H * Wp, Cp), jnp.float32),
        grid=(B,),
        in_specs=in_specs,
        out_specs=pl.BlockSpec((None, H * Wp, Cp), lambda b: (b, 0, 0)),
        scratch_shapes=scratch_shapes,
        compiler_params=pltpu.CompilerParams(
            dimension_semantics=("parallel",),
            vmem_limit_bytes=vmem_limit),
    )(x_pad, *w_args, *b_args)

    # Strip pad columns / pad channels, back to NCHW.
    out = out.reshape(B, H, Wp, Cp)[:, :, :W, :C]
    return jnp.transpose(out, (0, 3, 1, 2))


def _reference(x_nchw, weights, biases):
    """Pure-JAX reference with the same semantics as the PyTorch module."""
    x = jnp.transpose(x_nchw, (0, 2, 3, 1))
    h = x
    for w, b in zip(weights, biases):
        h = jax.lax.conv_general_dilated(
            h, w, window_strides=(1, 1), padding="SAME",
            dimension_numbers=("NHWC", "HWIO", "NHWC"),
            precision=jax.lax.Precision.HIGHEST)
        h = jnp.maximum(h + b, 0.0)
    return jnp.transpose(h + x, (0, 3, 1, 2))


if __name__ == "__main__":
    key = jax.random.PRNGKey(0)
    # ResidualBlock(num_conv=2, in_channels=64) on a (2, 64, 16, 16) input.
    B, C, H, W = 2, 64, 16, 16
    num_conv = 2

    keys = jax.random.split(key, 2 * num_conv + 1)
    weights, biases = [], []
    for i in range(num_conv):
        fan_in = 9 * C
        weights.append((2.0 / fan_in) ** 0.5
                       * jax.random.normal(keys[2 * i], (3, 3, C, C), jnp.float32))
        biases.append(0.01 * jax.random.normal(keys[2 * i + 1], (C,), jnp.float32))
    x = jax.random.normal(keys[-1], (B, C, H, W), jnp.float32)

    fwd = jax.jit(residual_block_forward)
    out = jax.block_until_ready(fwd(x, weights, biases))

    assert out.shape == (B, C, H, W)
    assert bool(jnp.all(jnp.isfinite(out)))
    ref = _reference(x, weights, biases)
    max_err = float(jnp.max(jnp.abs(out - ref)))
    assert max_err < 0.1, f"max abs error vs reference too large: {max_err}"
    print("KERNEL_OK")
</pallas_src>

<mosaic_0001>
module attributes {stable_mosaic.version = 11 : i64} {
  func.func @_resblock_kernel(%arg0: i32, %arg1: memref<1x640x128xf32, #tpu.memory_space<vmem>>, %arg2: memref<1152x128xbf16, #tpu.memory_space<vmem>>, %arg3: memref<1152x128xbf16, #tpu.memory_space<vmem>>, %arg4: memref<1x128xf32, #tpu.memory_space<vmem>>, %arg5: memref<1x128xf32, #tpu.memory_space<vmem>>, %arg6: memref<1x512x128xf32, #tpu.memory_space<vmem>>, %arg7: memref<640x128xbf16, #tpu.memory_space<vmem>>) attributes {dimension_semantics = [#tpu.dimension_semantics<parallel>], iteration_bounds = array<i64: 2>, scalar_prefetch = 0 : i64, scratch_operands = 1 : i64, tpu.core_type = #tpu.core_type<tc>, window_params = [{transform_indices = @transform_0, window_bounds = array<i64: 1, 640, 128>}, {pipeline_mode = #tpu.pipeline_mode<synchronous>, transform_indices = @transform_1, window_bounds = array<i64: 1152, 128>}, {pipeline_mode = #tpu.pipeline_mode<synchronous>, transform_indices = @transform_2, window_bounds = array<i64: 1152, 128>}, {pipeline_mode = #tpu.pipeline_mode<synchronous>, transform_indices = @transform_3, window_bounds = array<i64: 1, 128>}, {pipeline_mode = #tpu.pipeline_mode<synchronous>, transform_indices = @transform_4, window_bounds = array<i64: 1, 128>}, {transform_indices = @transform_5, window_bounds = array<i64: 1, 512, 128>}]} {
    %cst = arith.constant 0.000000e+00 : bf16
    %0 = vector.broadcast %cst : bf16 to vector<64x128xbf16>
    %c0 = arith.constant 0 : index
    %c0_0 = arith.constant 0 : index
    %1 = vector.load %arg7[%c0, %c0_0] : memref<640x128xbf16, #tpu.memory_space<vmem>>, vector<64x128xbf16>
    tpu.vector_store %arg7[%c0, %c0_0], %0 {strides = array<i32>} : memref<640x128xbf16, #tpu.memory_space<vmem>>, vector<64x128xbf16>,
    %cst_1 = arith.constant 0.000000e+00 : bf16
    %2 = vector.broadcast %cst_1 : bf16 to vector<64x128xbf16>
    %c576 = arith.constant 576 : index
    %c0_2 = arith.constant 0 : index
    %3 = vector.load %arg7[%c576, %c0_2] : memref<640x128xbf16, #tpu.memory_space<vmem>>, vector<64x128xbf16>
    tpu.vector_store %arg7[%c576, %c0_2], %2 {strides = array<i32>} : memref<640x128xbf16, #tpu.memory_space<vmem>>, vector<64x128xbf16>,
    %4 = tpu.iota {dimensions = array<i32: 0>} : vector<256x128xi32>
    %c32_i32 = arith.constant 32 : i32
    %c0_i32 = arith.constant 0 : i32
    %5 = arith.cmpi eq, %c32_i32, %c0_i32 : i32
    %c1_i32 = arith.constant 1 : i32
    %6 = arith.select %5, %c1_i32, %c32_i32 : i32
    %7 = vector.broadcast %6 : i32 to vector<256x128xi32>
    %8 = arith.remsi %4, %7 : vector<256x128xi32>
    %c0_i32_3 = arith.constant 0 : i32
    %9 = vector.broadcast %c0_i32_3 : i32 to vector<256x128xi32>
    %10 = arith.cmpi ne, %8, %9 : vector<256x128xi32>
    %c0_i32_4 = arith.constant 0 : i32
    %11 = vector.broadcast %c0_i32_4 : i32 to vector<256x128xi32>
    %12 = arith.cmpi slt, %8, %11 : vector<256x128xi32>
    %c0_i32_5 = arith.constant 0 : i32
    %13 = arith.cmpi slt, %6, %c0_i32_5 : i32
    %14 = vector.broadcast %13 : i1 to vector<256x128xi1>
    %15 = vector.broadcast %14 : vector<256x128xi1> to vector<256x128xi1>
    %16 = arith.xori %12, %15 : vector<256x128xi1>
    %17 = arith.andi %16, %10 : vector<256x128xi1>
    %18 = vector.broadcast %6 : i32 to vector<256x128xi32>
    %19 = arith.addi %8, %18 : vector<256x128xi32>
    %20 = arith.select %17, %19, %8 : vector<256x128xi1>, vector<256x128xi32>
    %c16_i32 = arith.constant 16 : i32
    %21 = vector.broadcast %c16_i32 : i32 to vector<256x128xi32>
    %22 = arith.cmpi slt, %20, %21 : vector<256x128xi32>
    %c0_6 = arith.constant 0 : index
    %c0_7 = arith.constant 0 : index
    %23 = vector.load %arg2[%c0_6, %c0_7] : memref<1152x128xbf16, #tpu.memory_space<vmem>>, vector<1152x128xbf16>
    %c0_8 = arith.constant 0 : index
    %c0_9 = arith.constant 0 : index
    %24 = vector.load %arg4[%c0_8, %c0_9] : memref<1x128xf32, #tpu.memory_space<vmem>>, vector<1x128xf32>
    %c0_10 = arith.constant 0 : index
    %c31 = arith.constant 31 : index
    %c0_11 = arith.constant 0 : index
    %25 = vector.load %arg1[%c0_10, %c31, %c0_11] : memref<1x640x128xf32, #tpu.memory_space<vmem>>, vector<1x256x128xf32>
    %26 = vector.shape_cast %25 : vector<1x256x128xf32> to vector<256x128xf32>
    %27 = arith.truncf %26 : vector<256x128xf32> to vector<256x128xbf16>
    %c0_12 = arith.constant 0 : index
    %c32 = arith.constant 32 : index
    %c0_13 = arith.constant 0 : index
    %28 = vector.load %arg1[%c0_12, %c32, %c0_13] : memref<1x640x128xf32, #tpu.memory_space<vmem>>, vector<1x256x128xf32>
    %29 = vector.shape_cast %28 : vector<1x256x128xf32> to vector<256x128xf32>
    %30 = arith.truncf %29 : vector<256x128xf32> to vector<256x128xbf16>
    %c0_14 = arith.constant 0 : index
    %c33 = arith.constant 33 : index
    %c0_15 = arith.constant 0 : index
    %31 = vector.load %arg1[%c0_14, %c33, %c0_15] : memref<1x640x128xf32, #tpu.memory_space<vmem>>, vector<1x256x128xf32>
    %32 = vector.shape_cast %31 : vector<1x256x128xf32> to vector<256x128xf32>
    %33 = arith.truncf %32 : vector<256x128xf32> to vector<256x128xbf16>
    %c0_16 = arith.constant 0 : index
    %c63 = arith.constant 63 : index
    %c0_17 = arith.constant 0 : index
    %34 = vector.load %arg1[%c0_16, %c63, %c0_17] : memref<1x640x128xf32, #tpu.memory_space<vmem>>, vector<1x256x128xf32>
    %35 = vector.shape_cast %34 : vector<1x256x128xf32> to vector<256x128xf32>
    %36 = arith.truncf %35 : vector<256x128xf32> to vector<256x128xbf16>
    %c0_18 = arith.constant 0 : index
    %c64 = arith.constant 64 : index
    %c0_19 = arith.constant 0 : index
    %37 = vector.load %arg1[%c0_18, %c64, %c0_19] : memref<1x640x128xf32, #tpu.memory_space<vmem>>, vector<1x256x128xf32>
    %38 = vector.shape_cast %37 : vector<1x256x128xf32> to vector<256x128xf32>
    %39 = arith.truncf %38 : vector<256x128xf32> to vector<256x128xbf16>
    %c0_20 = arith.constant 0 : index
    %c65 = arith.constant 65 : index
    %c0_21 = arith.constant 0 : index
    %40 = vector.load %arg1[%c0_20, %c65, %c0_21] : memref<1x640x128xf32, #tpu.memory_space<vmem>>, vector<1x256x128xf32>
    %41 = vector.shape_cast %40 : vector<1x256x128xf32> to vector<256x128xf32>
    %42 = arith.truncf %41 : vector<256x128xf32> to vector<256x128xbf16>
    %c0_22 = arith.constant 0 : index
    %c95 = arith.constant 95 : index
    %c0_23 = arith.constant 0 : index
    %43 = vector.load %arg1[%c0_22, %c95, %c0_23] : memref<1x640x128xf32, #tpu.memory_space<vmem>>, vector<1x256x128xf32>
    %44 = vector.shape_cast %43 : vector<1x256x128xf32> to vector<256x128xf32>
    %45 = arith.truncf %44 : vector<256x128xf32> to vector<256x128xbf16>
    %c0_24 = arith.constant 0 : index
    %c96 = arith.constant 96 : index
    %c0_25 = arith.constant 0 : index
    %46 = vector.load %arg1[%c0_24, %c96, %c0_25] : memref<1x640x128xf32, #tpu.memory_space<vmem>>, vector<1x256x128xf32>
    %47 = vector.shape_cast %46 : vector<1x256x128xf32> to vector<256x128xf32>
    %48 = arith.truncf %47 : vector<256x128xf32> to vector<256x128xbf16>
    %c0_26 = arith.constant 0 : index
    %c97 = arith.constant 97 : index
    %c0_27 = arith.constant 0 : index
    %49 = vector.load %arg1[%c0_26, %c97, %c0_27] : memref<1x640x128xf32, #tpu.memory_space<vmem>>, vector<1x256x128xf32>
    %50 = vector.shape_cast %49 : vector<1x256x128xf32> to vector<256x128xf32>
    %51 = arith.truncf %50 : vector<256x128xf32> to vector<256x128xbf16>
    %52 = tpu.concatenate %27, %30, %33, %36, %39, %42, %45, %48, %51 in 1 : vector<256x128xbf16>, vector<256x128xbf16>, vector<256x128xbf16>, vector<256x128xbf16>, vector<256x128xbf16>, vector<256x128xbf16>, vector<256x128xbf16>, vector<256x128xbf16>, vector<256x128xbf16> -> vector<256x1152xbf16>
    %cst_28 = arith.constant dense<0.000000e+00> : vector<256x128xf32>
    %53 = tpu.matmul %52, %23, %cst_28 {dimension_numbers = #tpu.dot_dimension_numbers<[1], [0], [0], [1], [0, 0, 1, 1], [], []>} : vector<256x1152xbf16>, vector<1152x128xbf16>, vector<256x128xf32> -> vector<256x128xf32>
    %54 = vector.broadcast %24 : vector<1x128xf32> to vector<256x128xf32>
    %55 = arith.addf %53, %54 : vector<256x128xf32>
    %cst_29 = arith.constant 0.000000e+00 : f32
    %56 = vector.broadcast %cst_29 : f32 to vector<256x128xf32>
    %57 = arith.maximumf %55, %56 : vector<256x128xf32>
    %cst_30 = arith.constant 0.000000e+00 : f32
    %58 = vector.broadcast %cst_30 : f32 to vector<256x128xf32>
    %59 = arith.select %22, %57, %58 : vector<256x128xi1>, vector<256x128xf32>
    %60 = arith.truncf %59 : vector<256x128xf32> to vector<256x128xbf16>
    %c64_31 = arith.constant 64 : index
    %c0_32 = arith.constant 0 : index
    %61 = vector.load %arg7[%c64_31, %c0_32] : memref<640x128xbf16, #tpu.memory_space<vmem>>, vector<256x128xbf16>
    tpu.vector_store %arg7[%c64_31, %c0_32], %60 {strides = array<i32>} : memref<640x128xbf16, #tpu.memory_space<vmem>>, vector<256x128xbf16>,
    %c0_33 = arith.constant 0 : index
    %c287 = arith.constant 287 : index
    %c0_34 = arith.constant 0 : index
    %62 = vector.load %arg1[%c0_33, %c287, %c0_34] : memref<1x640x128xf32, #tpu.memory_space<vmem>>, vector<1x256x128xf32>
    %63 = vector.shape_cast %62 : vector<1x256x128xf32> to vector<256x128xf32>
    %64 = arith.truncf %63 : vector<256x128xf32> to vector<256x128xbf16>
    %c0_35 = arith.constant 0 : index
    %c288 = arith.constant 288 : index
    %c0_36 = arith.constant 0 : index
    %65 = vector.load %arg1[%c0_35, %c288, %c0_36] : memref<1x640x128xf32, #tpu.memory_space<vmem>>, vector<1x256x128xf32>
    %66 = vector.shape_cast %65 : vector<1x256x128xf32> to vector<256x128xf32>
    %67 = arith.truncf %66 : vector<256x128xf32> to vector<256x128xbf16>
    %c0_37 = arith.constant 0 : index
    %c289 = arith.constant 289 : index
    %c0_38 = arith.constant 0 : index
    %68 = vector.load %arg1[%c0_37, %c289, %c0_38] : memref<1x640x128xf32, #tpu.memory_space<vmem>>, vector<1x256x128xf32>
    %69 = vector.shape_cast %68 : vector<1x256x128xf32> to vector<256x128xf32>
    %70 = arith.truncf %69 : vector<256x128xf32> to vector<256x128xbf16>
    %c0_39 = arith.constant 0 : index
    %c319 = arith.constant 319 : index
    %c0_40 = arith.constant 0 : index
    %71 = vector.load %arg1[%c0_39, %c319, %c0_40] : memref<1x640x128xf32, #tpu.memory_space<vmem>>, vector<1x256x128xf32>
    %72 = vector.shape_cast %71 : vector<1x256x128xf32> to vector<256x128xf32>
    %73 = arith.truncf %72 : vector<256x128xf32> to vector<256x128xbf16>
    %c0_41 = arith.constant 0 : index
    %c320 = arith.constant 320 : index
    %c0_42 = arith.constant 0 : index
    %74 = vector.load %arg1[%c0_41, %c320, %c0_42] : memref<1x640x128xf32, #tpu.memory_space<vmem>>, vector<1x256x128xf32>
    %75 = vector.shape_cast %74 : vector<1x256x128xf32> to vector<256x128xf32>
    %76 = arith.truncf %75 : vector<256x128xf32> to vector<256x128xbf16>
    %c0_43 = arith.constant 0 : index
    %c321 = arith.constant 321 : index
    %c0_44 = arith.constant 0 : index
    %77 = vector.load %arg1[%c0_43, %c321, %c0_44] : memref<1x640x128xf32, #tpu.memory_space<vmem>>, vector<1x256x128xf32>
    %78 = vector.shape_cast %77 : vector<1x256x128xf32> to vector<256x128xf32>
    %79 = arith.truncf %78 : vector<256x128xf32> to vector<256x128xbf16>
    %c0_45 = arith.constant 0 : index
    %c351 = arith.constant 351 : index
    %c0_46 = arith.constant 0 : index
    %80 = vector.load %arg1[%c0_45, %c351, %c0_46] : memref<1x640x128xf32, #tpu.memory_space<vmem>>, vector<1x256x128xf32>
    %81 = vector.shape_cast %80 : vector<1x256x128xf32> to vector<256x128xf32>
    %82 = arith.truncf %81 : vector<256x128xf32> to vector<256x128xbf16>
    %c0_47 = arith.constant 0 : index
    %c352 = arith.constant 352 : index
    %c0_48 = arith.constant 0 : index
    %83 = vector.load %arg1[%c0_47, %c352, %c0_48] : memref<1x640x128xf32, #tpu.memory_space<vmem>>, vector<1x256x128xf32>
    %84 = vector.shape_cast %83 : vector<1x256x128xf32> to vector<256x128xf32>
    %85 = arith.truncf %84 : vector<256x128xf32> to vector<256x128xbf16>
    %c0_49 = arith.constant 0 : index
    %c353 = arith.constant 353 : index
    %c0_50 = arith.constant 0 : index
    %86 = vector.load %arg1[%c0_49, %c353, %c0_50] : memref<1x640x128xf32, #tpu.memory_space<vmem>>, vector<1x256x128xf32>
    %87 = vector.shape_cast %86 : vector<1x256x128xf32> to vector<256x128xf32>
    %88 = arith.truncf %87 : vector<256x128xf32> to vector<256x128xbf16>
    %89 = tpu.concatenate %64, %67, %70, %73, %76, %79, %82, %85, %88 in 1 : vector<256x128xbf16>, vector<256x128xbf16>, vector<256x128xbf16>, vector<256x128xbf16>, vector<256x128xbf16>, vector<256x128xbf16>, vector<256x128xbf16>, vector<256x128xbf16>, vector<256x128xbf16> -> vector<256x1152xbf16>
    %cst_51 = arith.constant dense<0.000000e+00> : vector<256x128xf32>
    %90 = tpu.matmul %89, %23, %cst_51 {dimension_numbers = #tpu.dot_dimension_numbers<[1], [0], [0], [1], [0, 0, 1, 1], [], []>} : vector<256x1152xbf16>, vector<1152x128xbf16>, vector<256x128xf32> -> vector<256x128xf32>
    %91 = vector.broadcast %24 : vector<1x128xf32> to vector<256x128xf32>
    %92 = arith.addf %90, %91 : vector<256x128xf32>
    %cst_52 = arith.constant 0.000000e+00 : f32
    %93 = vector.broadcast %cst_52 : f32 to vector<256x128xf32>
    %94 = arith.maximumf %92, %93 : vector<256x128xf32>
    %cst_53 = arith.constant 0.000000e+00 : f32
    %95 = vector.broadcast %cst_53 : f32 to vector<256x128xf32>
    %96 = arith.select %22, %94, %95 : vector<256x128xi1>, vector<256x128xf32>
    %97 = arith.truncf %96 : vector<256x128xf32> to vector<256x128xbf16>
    %c320_54 = arith.constant 320 : index
    %c0_55 = arith.constant 0 : index
    %98 = vector.load %arg7[%c320_54, %c0_55] : memref<640x128xbf16, #tpu.memory_space<vmem>>, vector<256x128xbf16>
    tpu.vector_store %arg7[%c320_54, %c0_55], %97 {strides = array<i32>} : memref<640x128xbf16, #tpu.memory_space<vmem>>, vector<256x128xbf16>,
    %c0_56 = arith.constant 0 : index
    %c0_57 = arith.constant 0 : index
    %99 = vector.load %arg3[%c0_56, %c0_57] : memref<1152x128xbf16, #tpu.memory_space<vmem>>, vector<1152x128xbf16>
    %c0_58 = arith.constant 0 : index
    %c0_59 = arith.constant 0 : index
    %100 = vector.load %arg5[%c0_58, %c0_59] : memref<1x128xf32, #tpu.memory_space<vmem>>, vector<1x128xf32>
    %c31_60 = arith.constant 31 : index
    %c0_61 = arith.constant 0 : index
    %101 = vector.load %arg7[%c31_60, %c0_61] : memref<640x128xbf16, #tpu.memory_space<vmem>>, vector<256x128xbf16>
    %c32_62 = arith.constant 32 : index
    %c0_63 = arith.constant 0 : index
    %102 = vector.load %arg7[%c32_62, %c0_63] : memref<640x128xbf16, #tpu.memory_space<vmem>>, vector<256x128xbf16>
    %c33_64 = arith.constant 33 : index
    %c0_65 = arith.constant 0 : index
    %103 = vector.load %arg7[%c33_64, %c0_65] : memref<640x128xbf16, #tpu.memory_space<vmem>>, vector<256x128xbf16>
    %c63_66 = arith.constant 63 : index
    %c0_67 = arith.constant 0 : index
    %104 = vector.load %arg7[%c63_66, %c0_67] : memref<640x128xbf16, #tpu.memory_space<vmem>>, vector<256x128xbf16>
    %c64_68 = arith.constant 64 : index
    %c0_69 = arith.constant 0 : index
    %105 = vector.load %arg7[%c64_68, %c0_69] : memref<640x128xbf16, #tpu.memory_space<vmem>>, vector<256x128xbf16>
    %c65_70 = arith.constant 65 : index
    %c0_71 = arith.constant 0 : index
    %106 = vector.load %arg7[%c65_70, %c0_71] : memref<640x128xbf16, #tpu.memory_space<vmem>>, vector<256x128xbf16>
    %c95_72 = arith.constant 95 : index
    %c0_73 = arith.constant 0 : index
    %107 = vector.load %arg7[%c95_72, %c0_73] : memref<640x128xbf16, #tpu.memory_space<vmem>>, vector<256x128xbf16>
    %c96_74 = arith.constant 96 : index
    %c0_75 = arith.constant 0 : index
    %108 = vector.load %arg7[%c96_74, %c0_75] : memref<640x128xbf16, #tpu.memory_space<vmem>>, vector<256x128xbf16>
    %c97_76 = arith.constant 97 : index
    %c0_77 = arith.constant 0 : index
    %109 = vector.load %arg7[%c97_76, %c0_77] : memref<640x128xbf16, #tpu.memory_space<vmem>>, vector<256x128xbf16>
    %110 = tpu.concatenate %101, %102, %103, %104, %105, %106, %107, %108, %109 in 1 : vector<256x128xbf16>, vector<256x128xbf16>, vector<256x128xbf16>, vector<256x128xbf16>, vector<256x128xbf16>, vector<256x128xbf16>, vector<256x128xbf16>, vector<256x128xbf16>, vector<256x128xbf16> -> vector<256x1152xbf16>
    %cst_78 = arith.constant dense<0.000000e+00> : vector<256x128xf32>
    %111 = tpu.matmul %110, %99, %cst_78 {dimension_numbers = #tpu.dot_dimension_numbers<[1], [0], [0], [1], [0, 0, 1, 1], [], []>} : vector<256x1152xbf16>, vector<1152x128xbf16>, vector<256x128xf32> -> vector<256x128xf32>
    %112 = vector.broadcast %100 : vector<1x128xf32> to vector<256x128xf32>
    %113 = arith.addf %111, %112 : vector<256x128xf32>
    %cst_79 = arith.constant 0.000000e+00 : f32
    %114 = vector.broadcast %cst_79 : f32 to vector<256x128xf32>
    %115 = arith.maximumf %113, %114 : vector<256x128xf32>
    %c0_80 = arith.constant 0 : index
    %c64_81 = arith.constant 64 : index
    %c0_82 = arith.constant 0 : index
    %116 = vector.load %arg1[%c0_80, %c64_81, %c0_82] : memref<1x640x128xf32, #tpu.memory_space<vmem>>, vector<1x256x128xf32>
    %117 = vector.shape_cast %116 : vector<1x256x128xf32> to vector<256x128xf32>
    %118 = arith.addf %115, %117 : vector<256x128xf32>
    %c0_83 = arith.constant 0 : index
    %c0_84 = arith.constant 0 : index
    %c0_85 = arith.constant 0 : index
    %119 = vector.load %arg6[%c0_83, %c0_84, %c0_85] : memref<1x512x128xf32, #tpu.memory_space<vmem>>, vector<1x256x128xf32>
    %120 = vector.shape_cast %119 : vector<1x256x128xf32> to vector<256x128xf32>
    %121 = vector.shape_cast %118 : vector<256x128xf32> to vector<1x256x128xf32>
    tpu.vector_store %arg6[%c0_83, %c0_84, %c0_85], %121 {strides = array<i32>} : memref<1x512x128xf32, #tpu.memory_space<vmem>>, vector<1x256x128xf32>,
    %c287_86 = arith.constant 287 : index
    %c0_87 = arith.constant 0 : index
    %122 = vector.load %arg7[%c287_86, %c0_87] : memref<640x128xbf16, #tpu.memory_space<vmem>>, vector<256x128xbf16>
    %c288_88 = arith.constant 288 : index
    %c0_89 = arith.constant 0 : index
    %123 = vector.load %arg7[%c288_88, %c0_89] : memref<640x128xbf16, #tpu.memory_space<vmem>>, vector<256x128xbf16>
    %c289_90 = arith.constant 289 : index
    %c0_91 = arith.constant 0 : index
    %124 = vector.load %arg7[%c289_90, %c0_91] : memref<640x128xbf16, #tpu.memory_space<vmem>>, vector<256x128xbf16>
    %c319_92 = arith.constant 319 : index
    %c0_93 = arith.constant 0 : index
    %125 = vector.load %arg7[%c319_92, %c0_93] : memref<640x128xbf16, #tpu.memory_space<vmem>>, vector<256x128xbf16>
    %c320_94 = arith.constant 320 : index
    %c0_95 = arith.constant 0 : index
    %126 = vector.load %arg7[%c320_94, %c0_95] : memref<640x128xbf16, #tpu.memory_space<vmem>>, vector<256x128xbf16>
    %c321_96 = arith.constant 321 : index
    %c0_97 = arith.constant 0 : index
    %127 = vector.load %arg7[%c321_96, %c0_97] : memref<640x128xbf16, #tpu.memory_space<vmem>>, vector<256x128xbf16>
    %c351_98 = arith.constant 351 : index
    %c0_99 = arith.constant 0 : index
    %128 = vector.load %arg7[%c351_98, %c0_99] : memref<640x128xbf16, #tpu.memory_space<vmem>>, vector<256x128xbf16>
    %c352_100 = arith.constant 352 : index
    %c0_101 = arith.constant 0 : index
    %129 = vector.load %arg7[%c352_100, %c0_101] : memref<640x128xbf16, #tpu.memory_space<vmem>>, vector<256x128xbf16>
    %c353_102 = arith.constant 353 : index
    %c0_103 = arith.constant 0 : index
    %130 = vector.load %arg7[%c353_102, %c0_103] : memref<640x128xbf16, #tpu.memory_space<vmem>>, vector<256x128xbf16>
    %131 = tpu.concatenate %122, %123, %124, %125, %126, %127, %128, %129, %130 in 1 : vector<256x128xbf16>, vector<256x128xbf16>, vector<256x128xbf16>, vector<256x128xbf16>, vector<256x128xbf16>, vector<256x128xbf16>, vector<256x128xbf16>, vector<256x128xbf16>, vector<256x128xbf16> -> vector<256x1152xbf16>
    %cst_104 = arith.constant dense<0.000000e+00> : vector<256x128xf32>
    %132 = tpu.matmul %131, %99, %cst_104 {dimension_numbers = #tpu.dot_dimension_numbers<[1], [0], [0], [1], [0, 0, 1, 1], [], []>} : vector<256x1152xbf16>, vector<1152x128xbf16>, vector<256x128xf32> -> vector<256x128xf32>
    %133 = vector.broadcast %100 : vector<1x128xf32> to vector<256x128xf32>
    %134 = arith.addf %132, %133 : vector<256x128xf32>
    %cst_105 = arith.constant 0.000000e+00 : f32
    %135 = vector.broadcast %cst_105 : f32 to vector<256x128xf32>
    %136 = arith.maximumf %134, %135 : vector<256x128xf32>
    %c0_106 = arith.constant 0 : index
    %c320_107 = arith.constant 320 : index
    %c0_108 = arith.constant 0 : index
    %137 = vector.load %arg1[%c0_106, %c320_107, %c0_108] : memref<1x640x128xf32, #tpu.memory_space<vmem>>, vector<1x256x128xf32>
    %138 = vector.shape_cast %137 : vector<1x256x128xf32> to vector<256x128xf32>
    %139 = arith.addf %136, %138 : vector<256x128xf32>
    %c0_109 = arith.constant 0 : index
    %c256 = arith.constant 256 : index
    %c0_110 = arith.constant 0 : index
    %140 = vector.load %arg6[%c0_109, %c256, %c0_110] : memref<1x512x128xf32, #tpu.memory_space<vmem>>, vector<1x256x128xf32>
    %141 = vector.shape_cast %140 : vector<1x256x128xf32> to vector<256x128xf32>
    %142 = vector.shape_cast %139 : vector<256x128xf32> to vector<1x256x128xf32>
    tpu.vector_store %arg6[%c0_109, %c256, %c0_110], %142 {strides = array<i32>} : memref<1x512x128xf32, #tpu.memory_space<vmem>>, vector<1x256x128xf32>,
    return
  }
  func.func @transform_0(%arg0: i32) -> (i32, i32, i32) {
    %c0_i32 = arith.constant 0 : i32
    %c0_i32_0 = arith.constant 0 : i32
    %c0_i32_1 = arith.constant 0 : i32
    return %arg0, %c0_i32, %c0_i32_0 : i32, i32, i32
  }
  func.func @transform_1(%arg0: i32) -> (i32, i32) {
    %c0_i32 = arith.constant 0 : i32
    %c0_i32_0 = arith.constant 0 : i32
    %c0_i32_1 = arith.constant 0 : i32
    return %c0_i32, %c0_i32_0 : i32, i32
  }
  func.func @transform_2(%arg0: i32) -> (i32, i32) {
    %c0_i32 = arith.constant 0 : i32
    %c0_i32_0 = arith.constant 0 : i32
    %c0_i32_1 = arith.constant 0 : i32
    return %c0_i32, %c0_i32_0 : i32, i32
  }
  func.func @transform_3(%arg0: i32) -> (i32, i32) {
    %c0_i32 = arith.constant 0 : i32
    %c0_i32_0 = arith.constant 0 : i32
    %c0_i32_1 = arith.constant 0 : i32
    return %c0_i32, %c0_i32_0 : i32, i32
  }
  func.func @transform_4(%arg0: i32) -> (i32, i32) {
    %c0_i32 = arith.constant 0 : i32
    %c0_i32_0 = arith.constant 0 : i32
    %c0_i32_1 = arith.constant 0 : i32
    return %c0_i32, %c0_i32_0 : i32, i32
  }
  func.func @transform_5(%arg0: i32) -> (i32, i32, i32) {
    %c0_i32 = arith.constant 0 : i32
    %c0_i32_0 = arith.constant 0 : i32
    %c0_i32_1 = arith.constant 0 : i32
    return %arg0, %c0_i32, %c0_i32_0 : i32, i32, i32
  }
}

</mosaic_0001>

<llo_original>
// kernel: residual_block_forward.1
$region0: #{residual_block_forward.1}
  #allocation0 [shape = 'u32[]', space=smem, size = 0x4, offset = 0x4, fixed_abs, tag = 'smem constant byte address 0x4 - core index']
  #allocation1 [shape = 'u32[144,128]{1,0:T(1,128)}', space=vmem, size = 0x12000, scoped, tag = 'internal scratch']
  #allocation2 [shape = 'bf16[640,128]{1,0:T(16,128)(2,1)}', space=vmem, size = 0x28000, scoped, tag = 'scratch operand']
  %s0 = inlined_call_operand.vmem [shape: f32[2,640,128], index: 0, kind: input, shape index: {}]
  %s1 = inlined_call_operand.vmem [shape: bf16[1152,128], index: 1, kind: input, shape index: {}]
  %s2 = inlined_call_operand.vmem [shape: bf16[1152,128], index: 2, kind: input, shape index: {}]
  %s3 = inlined_call_operand.vmem [shape: f32[1,128], index: 3, kind: input, shape index: {}]
  %s4 = inlined_call_operand.vmem [shape: f32[1,128], index: 4, kind: input, shape index: {}]
  %s5 = inlined_call_operand.vmem [shape: f32[2,512,128], index: 5, kind: output, shape index: {}]
  %s6 = sld [smem:[#allocation0]]
  $region53: #{residual_block_forward.1} parent=0
    _
  %s8 = ssub.s32 1, %s6
  %s9 = scalar_select 0, %s8, %s6
  loop: start=0, step=1, limit=4
  $region2: #{residual_block_forward.1} parent=0 // loop_pre_header
    _
  $region3: #{residual_block_forward.1} parent=0 // loop_header
    %s11 = sphi 0, %s15
    %p12 = scmp.ge.s32.totalorder %s11, 4
    %s21 = sphi 0, %s23
    %s24 = sphi 0, %s21
    %s25 = sphi 0, %s24
    %s41 = sphi 0, %s25
    %s45 = sphi 0, %s45
    %s47 = sphi 0, %s45
    %s48 = sphi 0, %s47
    %s62 = sphi 0, %s48
    %s66 = sphi 0, %s66
    %s68 = sphi 0, %s66
    %s69 = sphi 0, %s68
    %s83 = sphi 0, %s69
    %s87 = sphi 0, %s87
    %s89 = sphi 0, %s87
    %s90 = sphi 0, %s89
    %s104 = sphi 0, %s90
    %s108 = sphi 0, %s108
    %s110 = sphi 0, %s108
    %s111 = sphi 0, %s110
    %s125 = sphi 0, %s111
    %s131 = sphi 0, %s133
    %s134 = sphi 0, %s131
    %s135 = sphi 0, %s134
    %s151 = sphi 0, %s135
  $region4: #{residual_block_forward.1} parent=0 // loop_header_branch
    %14 = sbr.rel (%p12) target = $region8
  $region5: #{residual_block_forward.1} parent=0 // loop_body
    %s16 = ssub.s32 %s11, 1
    %s17 = ssub.s32 %s11, 2
    %s18 = sadd.s32 %s11, 1
    %s19 = ssub.s32 %s11, %s18
    %p20 = scmp.eq.s32.totalorder %s19, 0
    %s22 = sadd.s32 %s21, 1
    %s23 = scalar_select %p20, %s21, %s22
    %p26 = pneg %p20
    %p27 = scmp.eq.s32.totalorder %s11, 1
    %p28 = por %p26, %p27
    %p29 = scmp.ne.s32.totalorder %s21, %s24
    %p30 = scmp.eq.s32.totalorder %s11, 0
    %p31 = por %p29, %p30
    %p32 = scmp.ne.s32.totalorder %s21, %s24
    %p33 = scmp.eq.s32.totalorder %s16, 1
    %p34 = por %p32, %p33
    %p35 = scmp.ne.s32.totalorder %s24, %s25
    %p36 = scmp.eq.s32.totalorder %s16, 0
    %p37 = por %p35, %p36
    %p38 = scmp.ne.s32.totalorder %s24, %s25
    %p39 = scmp.eq.s32.totalorder %s17, 1
    %p40 = por %p38, %p39
    %p42 = scmp.ne.s32.totalorder %s25, %s41
    %p43 = scmp.eq.s32.totalorder %s17, 0
    %p44 = por %p42, %p43
    %s46 = sadd.s32 %s45, 1
    %p49 = scmp.eq.s32.totalorder %s11, 1
    %p50 = scmp.ne.s32.totalorder %s45, %s47
    %p51 = scmp.eq.s32.totalorder %s11, 0
    %p52 = por %p50, %p51
    %p53 = scmp.ne.s32.totalorder %s45, %s47
    %p54 = scmp.eq.s32.totalorder %s16, 1
    %p55 = por %p53, %p54
    %p56 = scmp.ne.s32.totalorder %s47, %s48
    %p57 = scmp.eq.s32.totalorder %s16, 0
    %p58 = por %p56, %p57
    %p59 = scmp.ne.s32.totalorder %s47, %s48
    %p60 = scmp.eq.s32.totalorder %s17, 1
    %p61 = por %p59, %p60
    %p63 = scmp.ne.s32.totalorder %s48, %s62
    %p64 = scmp.eq.s32.totalorder %s17, 0
    %p65 = por %p63, %p64
    %s67 = sadd.s32 %s66, 1
    %p70 = scmp.eq.s32.totalorder %s11, 1
    %p71 = scmp.ne.s32.totalorder %s66, %s68
    %p72 = scmp.eq.s32.totalorder %s11, 0
    %p73 = por %p71, %p72
    %p74 = scmp.ne.s32.totalorder %s66, %s68
    %p75 = scmp.eq.s32.totalorder %s16, 1
    %p76 = por %p74, %p75
    %p77 = scmp.ne.s32.totalorder %s68, %s69
    %p78 = scmp.eq.s32.totalorder %s16, 0
    %p79 = por %p77, %p78
    %p80 = scmp.ne.s32.totalorder %s68, %s69
    %p81 = scmp.eq.s32.totalorder %s17, 1
    %p82 = por %p80, %p81
    %p84 = scmp.ne.s32.totalorder %s69, %s83
    %p85 = scmp.eq.s32.totalorder %s17, 0
    %p86 = por %p84, %p85
    %s88 = sadd.s32 %s87, 1
    %p91 = scmp.eq.s32.totalorder %s11, 1
    %p92 = scmp.ne.s32.totalorder %s87, %s89
    %p93 = scmp.eq.s32.totalorder %s11, 0
    %p94 = por %p92, %p93
    %p95 = scmp.ne.s32.totalorder %s87, %s89
    %p96 = scmp.eq.s32.totalorder %s16, 1
    %p97 = por %p95, %p96
    %p98 = scmp.ne.s32.totalorder %s89, %s90
    %p99 = scmp.eq.s32.totalorder %s16, 0
    %p100 = por %p98, %p99
    %p101 = scmp.ne.s32.totalorder %s89, %s90
    %p102 = scmp.eq.s32.totalorder %s17, 1
    %p103 = por %p101, %p102
    %p105 = scmp.ne.s32.totalorder %s90, %s104
    %p106 = scmp.eq.s32.totalorder %s17, 0
    %p107 = por %p105, %p106
    %s109 = sadd.s32 %s108, 1
    %p112 = scmp.eq.s32.totalorder %s11, 1
    %p113 = scmp.ne.s32.totalorder %s108, %s110
    %p114 = scmp.eq.s32.totalorder %s11, 0
    %p115 = por %p113, %p114
    %p116 = scmp.ne.s32.totalorder %s108, %s110
    %p117 = scmp.eq.s32.totalorder %s16, 1
    %p118 = por %p116, %p117
    %p119 = scmp.ne.s32.totalorder %s110, %s111
    %p120 = scmp.eq.s32.totalorder %s16, 0
    %p121 = por %p119, %p120
    %p122 = scmp.ne.s32.totalorder %s110, %s111
    %p123 = scmp.eq.s32.totalorder %s17, 1
    %p124 = por %p122, %p123
    %p126 = scmp.ne.s32.totalorder %s111, %s125
    %p127 = scmp.eq.s32.totalorder %s17, 0
    %p128 = por %p126, %p127
    %s129 = ssub.s32 %s11, %s18
    %p130 = scmp.eq.s32.totalorder %s129, 0
    %s132 = sadd.s32 %s131, 1
    %s133 = scalar_select %p130, %s131, %s132
    %p136 = pneg %p130
    %p137 = scmp.eq.s32.totalorder %s11, 1
    %p138 = por %p136, %p137
    %p139 = scmp.ne.s32.totalorder %s131, %s134
    %p140 = scmp.eq.s32.totalorder %s11, 0
    %p141 = por %p139, %p140
    %p142 = scmp.ne.s32.totalorder %s131, %s134
    %p143 = scmp.eq.s32.totalorder %s16, 1
    %p144 = por %p142, %p143
    %p145 = scmp.ne.s32.totalorder %s134, %s135
    %p146 = scmp.eq.s32.totalorder %s16, 0
    %p147 = por %p145, %p146
    %p148 = scmp.ne.s32.totalorder %s134, %s135
    %p149 = scmp.eq.s32.totalorder %s17, 1
    %p150 = por %p148, %p149
    %p152 = scmp.ne.s32.totalorder %s135, %s151
    %p153 = scmp.eq.s32.totalorder %s17, 0
    %p154 = por %p152, %p153
    %p155 = scmp.le.s32.totalorder 1, %s11
    %p156 = scmp.lt.s32.totalorder %s11, 3
    %p157 = pnand %p155, %p156
    %p158 = pneg %p157
    // Predicated region
    $region9: #{residual_block_forward.1} parent=5 // pred_check
      _
    $region10: #{residual_block_forward.1} parent=5 // pred_check_branch
      %160 = sbr.rel (%p157) target = $region12
    $region11: #{residual_block_forward.1} parent=5 // pred_region
      %s161 = ssub.s32 %s11, 1
      // Predicated region
      $region13: #{residual_block_forward.1} parent=11 // pred_check
        %p162 = pneg %p58
      $region14: #{residual_block_forward.1} parent=11 // pred_check_branch
        %164 = sbr.rel (%p162) target = $region16
      $region15: #{residual_block_forward.1} parent=11 // pred_region
        _
      $region16: #{residual_block_forward.1} parent=11 // pred_fallthru
        _
      // Predicated region
      $region17: #{residual_block_forward.1} parent=11 // pred_check
        %p165 = pneg %p79
      $region18: #{residual_block_forward.1} parent=11 // pred_check_branch
        %167 = sbr.rel (%p165) target = $region20
      $region19: #{residual_block_forward.1} parent=11 // pred_region
        _
      $region20: #{residual_block_forward.1} parent=11 // pred_fallthru
        _
      // Predicated region
      $region21: #{residual_block_forward.1} parent=11 // pred_check
        %p168 = pneg %p100
      $region22: #{residual_block_forward.1} parent=11 // pred_check_branch
        %170 = sbr.rel (%p168) target = $region24
      $region23: #{residual_block_forward.1} parent=11 // pred_region
        _
      $region24: #{residual_block_forward.1} parent=11 // pred_fallthru
        _
      // Predicated region
      $region25: #{residual_block_forward.1} parent=11 // pred_check
        %p171 = pneg %p121
      $region26: #{residual_block_forward.1} parent=11 // pred_check_branch
        %173 = sbr.rel (%p171) target = $region28
      $region27: #{residual_block_forward.1} parent=11 // pred_region
        _
      $region28: #{residual_block_forward.1} parent=11 // pred_fallthru
        _
    $region12: #{residual_block_forward.1} parent=5 // pred_fallthru
      _
    %p174 = scmp.lt.s32.totalorder %s11, 2
    // Predicated region
    $region29: #{residual_block_forward.1} parent=5 // pred_check
      %p175 = pneg %p174
    $region30: #{residual_block_forward.1} parent=5 // pred_check_branch
      %177 = sbr.rel (%p175) target = $region32
    $region31: #{residual_block_forward.1} parent=5 // pred_region
      // Predicated region
      $region33: #{residual_block_forward.1} parent=31 // pred_check
        %p178 = pneg %p31
      $region34: #{residual_block_forward.1} parent=31 // pred_check_branch
        %180 = sbr.rel (%p178) target = $region36
      $region35: #{residual_block_forward.1} parent=31 // pred_region
        %p181 = scmp.lt.s32.totalorder %s11, 1
        %s182 = scalar_select %p181, %s11, 1
        %s183 = smul.addr %s182, 80
        %s184 = smul.addr %s183, 8
        %s185 = scalar_lea.vmem %s0, %s184
      $region36: #{residual_block_forward.1} parent=31 // pred_fallthru
        _
    $region32: #{residual_block_forward.1} parent=5 // pred_fallthru
      _
    %p186 = scmp.le.s32.totalorder 1, %s11
    %p187 = scmp.lt.s32.totalorder %s11, 3
    %p188 = pnand %p186, %p187
    %p189 = pneg %p188
    // Predicated region
    $region37: #{residual_block_forward.1} parent=5 // pred_check
      _
    $region38: #{residual_block_forward.1} parent=5 // pred_check_branch
      %191 = sbr.rel (%p188) target = $region40
    $region39: #{residual_block_forward.1} parent=5 // pred_region
      %s192 = ssub.s32 %s11, 1
      %p193 = scmp.lt.s32.totalorder %s16, 1
      %s194 = scalar_select %p193, %s16, 1
      %s195 = smul.addr %s194, 80
      %s196 = smul.addr %s195, 8
      %s197 = scalar_lea.vmem %s0, %s196
      %p198 = pneg %p37
      %p199 = pneg %p34
      %p200 = pneg %p58
      %p201 = pneg %p55
      %p202 = pneg %p79
      %p203 = pneg %p76
      %p204 = pneg %p100
      %p205 = pneg %p97
      %p206 = pneg %p121
      %p207 = pneg %p118
      %p208 = pneg %p147
      %p209 = pneg %p144
      %p210 = scmp.lt.s32.totalorder %s16, 1
      %s211 = scalar_select %p210, %s16, 1
      %s212 = smul.addr %s211, 64
      %s213 = smul.addr %s212, 8
      %s214 = scalar_lea.vmem %s5, %s213
      %p215 = scmp.lt.s32.totalorder %s16, 1
      %s216 = scalar_select %p215, %s16, 1
      %s217 = smul.addr %s216, 80
      %s218 = smul.addr %s217, 8
      %s219 = scalar_lea.vmem %s0, %s218
      %p220 = scmp.lt.s32.totalorder %s16, 1
      %s221 = scalar_select %p220, %s16, 1
      %s222 = smul.addr %s221, 64
      %s223 = smul.addr %s222, 8
      %s224 = scalar_lea.vmem %s5, %s223
      %226 = vst [vmem:[#allocation2] sm:$0xff] 0
      %227 = vst [vmem:[#allocation2 + $0x8] sm:$0xff] 0
      %228 = vst [vmem:[#allocation2 + $0x10] sm:$0xff] 0
      %229 = vst [vmem:[#allocation2 + $0x18] sm:$0xff] 0
      %230 = vst [vmem:[#allocation2 + $0x120] sm:$0xff] 0
      %231 = vst [vmem:[#allocation2 + $0x128] sm:$0xff] 0
      %232 = vst [vmem:[#allocation2 + $0x130] sm:$0xff] 0
      %233 = vst [vmem:[#allocation2 + $0x138] sm:$0xff] 0
      %v234 = vlaneseq
      %v235 = vshrl.u32 %v234, 7
      %v236 = vadd.s32 %v235, 8
      %v237 = vadd.s32 %v235, 16
      %v238 = vadd.s32 %v235, 24
      %v239 = vadd.s32 %v235, 32
      %v240 = vadd.s32 %v235, 40
      %v241 = vadd.s32 %v235, 48
      %v242 = vadd.s32 %v235, 56
      %v243 = vadd.s32 %v235, 64
      %v244 = vadd.s32 %v235, 72
      %v245 = vadd.s32 %v235, 80
      %v246 = vadd.s32 %v235, 88
      %v247 = vadd.s32 %v235, 96
      %v248 = vadd.s32 %v235, 104
      %v249 = vadd.s32 %v235, 112
      %v250 = vadd.s32 %v235, 120
      %v251 = vadd.s32 %v235, 128
      %v252 = vadd.s32 %v235, 136
      %v253 = vadd.s32 %v235, 144
      %v254 = vadd.s32 %v235, 152
      %v255 = vadd.s32 %v235, 160
      %v256 = vadd.s32 %v235, 168
      %v257 = vadd.s32 %v235, 176
      %v258 = vadd.s32 %v235, 184
      %v259 = vadd.s32 %v235, 192
      %v260 = vadd.s32 %v235, 200
      %v261 = vadd.s32 %v235, 208
      %v262 = vadd.s32 %v235, 216
      %v263 = vadd.s32 %v235, 224
      %v264 = vadd.s32 %v235, 232
      %v265 = vadd.s32 %v235, 240
      %v266 = vadd.s32 %v235, 248
      %vm267 = vcmp.lt.s32.totalorder %v235, 0
      %v268 = vsub.s32 0, %v235
      %v269 = vsel %vm267, %v268, %v235
      %v270 = vshrl.u32 %v269, 5
      %v271 = vand.u32 %v269, 31
      %v272 = vsub.s32 0, %v271
      %v273 = vsel %vm267, %v272, %v271
      %vm274 = vcmp.lt.s32.totalorder %v236, 0
      %v275 = vsub.s32 0, %v236
      %v276 = vsel %vm274, %v275, %v236
      %v277 = vshrl.u32 %v276, 5
      %v278 = vand.u32 %v276, 31
      %v279 = vsub.s32 0, %v278
      %v280 = vsel %vm274, %v279, %v278
      %vm281 = vcmp.lt.s32.totalorder %v237, 0
      %v282 = vsub.s32 0, %v237
      %v283 = vsel %vm281, %v282, %v237
      %v284 = vshrl.u32 %v283, 5
      %v285 = vand.u32 %v283, 31
      %v286 = vsub.s32 0, %v285
      %v287 = vsel %vm281, %v286, %v285
      %vm288 = vcmp.lt.s32.totalorder %v238, 0
      %v289 = vsub.s32 0, %v238
      %v290 = vsel %vm288, %v289, %v238
      %v291 = vshrl.u32 %v290, 5
      %v292 = vand.u32 %v290, 31
      %v293 = vsub.s32 0, %v292
      %v294 = vsel %vm288, %v293, %v292
      %vm295 = vcmp.lt.s32.totalorder %v239, 0
      %v296 = vsub.s32 0, %v239
      %v297 = vsel %vm295, %v296, %v239
      %v298 = vshrl.u32 %v297, 5
      %v299 = vand.u32 %v297, 31
      %v300 = vsub.s32 0, %v299
      %v301 = vsel %vm295, %v300, %v299
      %vm302 = vcmp.lt.s32.totalorder %v240, 0
      %v303 = vsub.s32 0, %v240
      %v304 = vsel %vm302, %v303, %v240
      %v305 = vshrl.u32 %v304, 5
      %v306 = vand.u32 %v304, 31
      %v307 = vsub.s32 0, %v306
      %v308 = vsel %vm302, %v307, %v306
      %vm309 = vcmp.lt.s32.totalorder %v241, 0
      %v310 = vsub.s32 0, %v241
      %v311 = vsel %vm309, %v310, %v241
      %v312 = vshrl.u32 %v311, 5
      %v313 = vand.u32 %v311, 31
      %v314 = vsub.s32 0, %v313
      %v315 = vsel %vm309, %v314, %v313
      %vm316 = vcmp.lt.s32.totalorder %v242, 0
      %v317 = vsub.s32 0, %v242
      %v318 = vsel %vm316, %v317, %v242
      %v319 = vshrl.u32 %v318, 5
      %v320 = vand.u32 %v318, 31
      %v321 = vsub.s32 0, %v320
      %v322 = vsel %vm316, %v321, %v320
      %vm323 = vcmp.lt.s32.totalorder %v243, 0
      %v324 = vsub.s32 0, %v243
      %v325 = vsel %vm323, %v324, %v243
      %v326 = vshrl.u32 %v325, 5
      %v327 = vand.u32 %v325, 31
      %v328 = vsub.s32 0, %v327
      %v329 = vsel %vm323, %v328, %v327
      %vm330 = vcmp.lt.s32.totalorder %v244, 0
      %v331 = vsub.s32 0, %v244
      %v332 = vsel %vm330, %v331, %v244
      %v333 = vshrl.u32 %v332, 5
      %v334 = vand.u32 %v332, 31
      %v335 = vsub.s32 0, %v334
      %v336 = vsel %vm330, %v335, %v334
      %vm337 = vcmp.lt.s32.totalorder %v245, 0
      %v338 = vsub.s32 0, %v245
      %v339 = vsel %vm337, %v338, %v245
      %v340 = vshrl.u32 %v339, 5
      %v341 = vand.u32 %v339, 31
      %v342 = vsub.s32 0, %v341
      %v343 = vsel %vm337, %v342, %v341
      %vm344 = vcmp.lt.s32.totalorder %v246, 0
      %v345 = vsub.s32 0, %v246
      %v346 = vsel %vm344, %v345, %v246
      %v347 = vshrl.u32 %v346, 5
      %v348 = vand.u32 %v346, 31
      %v349 = vsub.s32 0, %v348
      %v350 = vsel %vm344, %v349, %v348
      %vm351 = vcmp.lt.s32.totalorder %v247, 0
      %v352 = vsub.s32 0, %v247
      %v353 = vsel %vm351, %v352, %v247
      %v354 = vshrl.u32 %v353, 5
      %v355 = vand.u32 %v353, 31
      %v356 = vsub.s32 0, %v355
      %v357 = vsel %vm351, %v356, %v355
      %vm358 = vcmp.lt.s32.totalorder %v248, 0
      %v359 = vsub.s32 0, %v248
      %v360 = vsel %vm358, %v359, %v248
      %v361 = vshrl.u32 %v360, 5
      %v362 = vand.u32 %v360, 31
      %v363 = vsub.s32 0, %v362
      %v364 = vsel %vm358, %v363, %v362
      %vm365 = vcmp.lt.s32.totalorder %v249, 0
      %v366 = vsub.s32 0, %v249
      %v367 = vsel %vm365, %v366, %v249
      %v368 = vshrl.u32 %v367, 5
      %v369 = vand.u32 %v367, 31
      %v370 = vsub.s32 0, %v369
      %v371 = vsel %vm365, %v370, %v369
      %vm372 = vcmp.lt.s32.totalorder %v250, 0
      %v373 = vsub.s32 0, %v250
      %v374 = vsel %vm372, %v373, %v250
      %v375 = vshrl.u32 %v374, 5
      %v376 = vand.u32 %v374, 31
      %v377 = vsub.s32 0, %v376
      %v378 = vsel %vm372, %v377, %v376
      %vm379 = vcmp.lt.s32.totalorder %v251, 0
      %v380 = vsub.s32 0, %v251
      %v381 = vsel %vm379, %v380, %v251
      %v382 = vshrl.u32 %v381, 5
      %v383 = vand.u32 %v381, 31
      %v384 = vsub.s32 0, %v383
      %v385 = vsel %vm379, %v384, %v383
      %vm386 = vcmp.lt.s32.totalorder %v252, 0
      %v387 = vsub.s32 0, %v252
      %v388 = vsel %vm386, %v387, %v252
      %v389 = vshrl.u32 %v388, 5
      %v390 = vand.u32 %v388, 31
      %v391 = vsub.s32 0, %v390
      %v392 = vsel %vm386, %v391, %v390
      %vm393 = vcmp.lt.s32.totalorder %v253, 0
      %v394 = vsub.s32 0, %v253
      %v395 = vsel %vm393, %v394, %v253
      %v396 = vshrl.u32 %v395, 5
      %v397 = vand.u32 %v395, 31
      %v398 = vsub.s32 0, %v397
      %v399 = vsel %vm393, %v398, %v397
      %vm400 = vcmp.lt.s32.totalorder %v254, 0
      %v401 = vsub.s32 0, %v254
      %v402 = vsel %vm400, %v401, %v254
      %v403 = vshrl.u32 %v402, 5
      %v404 = vand.u32 %v402, 31
      %v405 = vsub.s32 0, %v404
      %v406 = vsel %vm400, %v405, %v404
      %vm407 = vcmp.lt.s32.totalorder %v255, 0
      %v408 = vsub.s32 0, %v255
      %v409 = vsel %vm407, %v408, %v255
      %v410 = vshrl.u32 %v409, 5
      %v411 = vand.u32 %v409, 31
      %v412 = vsub.s32 0, %v411
      %v413 = vsel %vm407, %v412, %v411
      %vm414 = vcmp.lt.s32.totalorder %v256, 0
      %v415 = vsub.s32 0, %v256
      %v416 = vsel %vm414, %v415, %v256
      %v417 = vshrl.u32 %v416, 5
      %v418 = vand.u32 %v416, 31
      %v419 = vsub.s32 0, %v418
      %v420 = vsel %vm414, %v419, %v418
      %vm421 = vcmp.lt.s32.totalorder %v257, 0
      %v422 = vsub.s32 0, %v257
      %v423 = vsel %vm421, %v422, %v257
      %v424 = vshrl.u32 %v423, 5
      %v425 = vand.u32 %v423, 31
      %v426 = vsub.s32 0, %v425
      %v427 = vsel %vm421, %v426, %v425
      %vm428 = vcmp.lt.s32.totalorder %v258, 0
      %v429 = vsub.s32 0, %v258
      %v430 = vsel %vm428, %v429, %v258
      %v431 = vshrl.u32 %v430, 5
      %v432 = vand.u32 %v430, 31
      %v433 = vsub.s32 0, %v432
      %v434 = vsel %vm428, %v433, %v432
      %vm435 = vcmp.lt.s32.totalorder %v259, 0
      %v436 = vsub.s32 0, %v259
      %v437 = vsel %vm435, %v436, %v259
      %v438 = vshrl.u32 %v437, 5
      %v439 = vand.u32 %v437, 31
      %v440 = vsub.s32 0, %v439
      %v441 = vsel %vm435, %v440, %v439
      %vm442 = vcmp.lt.s32.totalorder %v260, 0
      %v443 = vsub.s32 0, %v260
      %v444 = vsel %vm442, %v443, %v260
      %v445 = vshrl.u32 %v444, 5
      %v446 = vand.u32 %v444, 31
      %v447 = vsub.s32 0, %v446
      %v448 = vsel %vm442, %v447, %v446
      %vm449 = vcmp.lt.s32.totalorder %v261, 0
      %v450 = vsub.s32 0, %v261
      %v451 = vsel %vm449, %v450, %v261
      %v452 = vshrl.u32 %v451, 5
      %v453 = vand.u32 %v451, 31
      %v454 = vsub.s32 0, %v453
      %v455 = vsel %vm449, %v454, %v453
      %vm456 = vcmp.lt.s32.totalorder %v262, 0
      %v457 = vsub.s32 0, %v262
      %v458 = vsel %vm456, %v457, %v262
      %v459 = vshrl.u32 %v458, 5
      %v460 = vand.u32 %v458, 31
      %v461 = vsub.s32 0, %v460
      %v462 = vsel %vm456, %v461, %v460
      %vm463 = vcmp.lt.s32.totalorder %v263, 0
      %v464 = vsub.s32 0, %v263
      %v465 = vsel %vm463, %v464, %v263
      %v466 = vshrl.u32 %v465, 5
      %v467 = vand.u32 %v465, 31
      %v468 = vsub.s32 0, %v467
      %v469 = vsel %vm463, %v468, %v467
      %vm470 = vcmp.lt.s32.totalorder %v264, 0
      %v471 = vsub.s32 0, %v264
      %v472 = vsel %vm470, %v471, %v264
      %v473 = vshrl.u32 %v472, 5
      %v474 = vand.u32 %v472, 31
      %v475 = vsub.s32 0, %v474
      %v476 = vsel %vm470, %v475, %v474
      %vm477 = vcmp.lt.s32.totalorder %v265, 0
      %v478 = vsub.s32 0, %v265
      %v479 = vsel %vm477, %v478, %v265
      %v480 = vshrl.u32 %v479, 5
      %v481 = vand.u32 %v479, 31
      %v482 = vsub.s32 0, %v481
      %v483 = vsel %vm477, %v482, %v481
      %vm484 = vcmp.lt.s32.totalorder %v266, 0
      %v485 = vsub.s32 0, %v266
      %v486 = vsel %vm484, %v485, %v266
      %v487 = vshrl.u32 %v486, 5
      %v488 = vand.u32 %v486, 31
      %v489 = vsub.s32 0, %v488
      %v490 = vsel %vm484, %v489, %v488
      %vm491 = vcmp.ne.s32.totalorder %v273, 0
      %vm492 = vcmp.ne.s32.totalorder %v280, 0
      %vm493 = vcmp.ne.s32.totalorder %v287, 0
      %vm494 = vcmp.ne.s32.totalorder %v294, 0
      %vm495 = vcmp.ne.s32.totalorder %v301, 0
      %vm496 = vcmp.ne.s32.totalorder %v308, 0
      %vm497 = vcmp.ne.s32.totalorder %v315, 0
      %vm498 = vcmp.ne.s32.totalorder %v322, 0
      %vm499 = vcmp.ne.s32.totalorder %v329, 0
      %vm500 = vcmp.ne.s32.totalorder %v336, 0
      %vm501 = vcmp.ne.s32.totalorder %v343, 0
      %vm502 = vcmp.ne.s32.totalorder %v350, 0
      %vm503 = vcmp.ne.s32.totalorder %v357, 0
      %vm504 = vcmp.ne.s32.totalorder %v364, 0
      %vm505 = vcmp.ne.s32.totalorder %v371, 0
      %vm506 = vcmp.ne.s32.totalorder %v378, 0
      %vm507 = vcmp.ne.s32.totalorder %v385, 0
      %vm508 = vcmp.ne.s32.totalorder %v392, 0
      %vm509 = vcmp.ne.s32.totalorder %v399, 0
      %vm510 = vcmp.ne.s32.totalorder %v406, 0
      %vm511 = vcmp.ne.s32.totalorder %v413, 0
      %vm512 = vcmp.ne.s32.totalorder %v420, 0
      %vm513 = vcmp.ne.s32.totalorder %v427, 0
      %vm514 = vcmp.ne.s32.totalorder %v434, 0
      %vm515 = vcmp.ne.s32.totalorder %v441, 0
      %vm516 = vcmp.ne.s32.totalorder %v448, 0
      %vm517 = vcmp.ne.s32.totalorder %v455, 0
      %vm518 = vcmp.ne.s32.totalorder %v462, 0
      %vm519 = vcmp.ne.s32.totalorder %v469, 0
      %vm520 = vcmp.ne.s32.totalorder %v476, 0
      %vm521 = vcmp.ne.s32.totalorder %v483, 0
      %vm522 = vcmp.ne.s32.totalorder %v490, 0
      %vm523 = vcmp.lt.s32.totalorder %v273, 0
      %vm524 = vcmp.lt.s32.totalorder %v280, 0
      %vm525 = vcmp.lt.s32.totalorder %v287, 0
      %vm526 = vcmp.lt.s32.totalorder %v294, 0
      %vm527 = vcmp.lt.s32.totalorder %v301, 0
      %vm528 = vcmp.lt.s32.totalorder %v308, 0
      %vm529 = vcmp.lt.s32.totalorder %v315, 0
      %vm530 = vcmp.lt.s32.totalorder %v322, 0
      %vm531 = vcmp.lt.s32.totalorder %v329, 0
      %vm532 = vcmp.lt.s32.totalorder %v336, 0
      %vm533 = vcmp.lt.s32.totalorder %v343, 0
      %vm534 = vcmp.lt.s32.totalorder %v350, 0
      %vm535 = vcmp.lt.s32.totalorder %v357, 0
      %vm536 = vcmp.lt.s32.totalorder %v364, 0
      %vm537 = vcmp.lt.s32.totalorder %v371, 0
      %vm538 = vcmp.lt.s32.totalorder %v378, 0
      %vm539 = vcmp.lt.s32.totalorder %v385, 0
      %vm540 = vcmp.lt.s32.totalorder %v392, 0
      %vm541 = vcmp.lt.s32.totalorder %v399, 0
      %vm542 = vcmp.lt.s32.totalorder %v406, 0
      %vm543 = vcmp.lt.s32.totalorder %v413, 0
      %vm544 = vcmp.lt.s32.totalorder %v420, 0
      %vm545 = vcmp.lt.s32.totalorder %v427, 0
      %vm546 = vcmp.lt.s32.totalorder %v434, 0
      %vm547 = vcmp.lt.s32.totalorder %v441, 0
      %vm548 = vcmp.lt.s32.totalorder %v448, 0
      %vm549 = vcmp.lt.s32.totalorder %v455, 0
      %vm550 = vcmp.lt.s32.totalorder %v462, 0
      %vm551 = vcmp.lt.s32.totalorder %v469, 0
      %vm552 = vcmp.lt.s32.totalorder %v476, 0
      %vm553 = vcmp.lt.s32.totalorder %v483, 0
      %vm554 = vcmp.lt.s32.totalorder %v490, 0
      %vm555 = vmand %vm523, %vm491
      %vm556 = vmand %vm524, %vm492
      %vm557 = vmand %vm525, %vm493
      %vm558 = vmand %vm526, %vm494
      %vm559 = vmand %vm527, %vm495
      %vm560 = vmand %vm528, %vm496
      %vm561 = vmand %vm529, %vm497
      %vm562 = vmand %vm530, %vm498
      %vm563 = vmand %vm531, %vm499
      %vm564 = vmand %vm532, %vm500
      %vm565 = vmand %vm533, %vm501
      %vm566 = vmand %vm534, %vm502
      %vm567 = vmand %vm535, %vm503
      %vm568 = vmand %vm536, %vm504
      %vm569 = vmand %vm537, %vm505
      %vm570 = vmand %vm538, %vm506
      %vm571 = vmand %vm539, %vm507
      %vm572 = vmand %vm540, %vm508
      %vm573 = vmand %vm541, %vm509
      %vm574 = vmand %vm542, %vm510
      %vm575 = vmand %vm543, %vm511
      %vm576 = vmand %vm544, %vm512
      %vm577 = vmand %vm545, %vm513
      %vm578 = vmand %vm546, %vm514
      %vm579 = vmand %vm547, %vm515
      %vm580 = vmand %vm548, %vm516
      %vm581 = vmand %vm549, %vm517
      %vm582 = vmand %vm550, %vm518
      %vm583 = vmand %vm551, %vm519
      %vm584 = vmand %vm552, %vm520
      %vm585 = vmand %vm553, %vm521
      %vm586 = vmand %vm554, %vm522
      %v587 = vadd.s32 %v273, 32
      %v588 = vadd.s32 %v280, 32
      %v589 = vadd.s32 %v287, 32
      %v590 = vadd.s32 %v294, 32
      %v591 = vadd.s32 %v301, 32
      %v592 = vadd.s32 %v308, 32
      %v593 = vadd.s32 %v315, 32
      %v594 = vadd.s32 %v322, 32
      %v595 = vadd.s32 %v329, 32
      %v596 = vadd.s32 %v336, 32
      %v597 = vadd.s32 %v343, 32
      %v598 = vadd.s32 %v350, 32
      %v599 = vadd.s32 %v357, 32
      %v600 = vadd.s32 %v364, 32
      %v601 = vadd.s32 %v371, 32
      %v602 = vadd.s32 %v378, 32
      %v603 = vadd.s32 %v385, 32
      %v604 = vadd.s32 %v392, 32
      %v605 = vadd.s32 %v399, 32
      %v606 = vadd.s32 %v406, 32
      %v607 = vadd.s32 %v413, 32
      %v608 = vadd.s32 %v420, 32
      %v609 = vadd.s32 %v427, 32
      %v610 = vadd.s32 %v434, 32
      %v611 = vadd.s32 %v441, 32
      %v612 = vadd.s32 %v448, 32
      %v613 = vadd.s32 %v455, 32
      %v614 = vadd.s32 %v462, 32
      %v615 = vadd.s32 %v469, 32
      %v616 = vadd.s32 %v476, 32
      %v617 = vadd.s32 %v483, 32
      %v618 = vadd.s32 %v490, 32
      %v619 = vsel %vm555, %v587, %v273
      %v620 = vsel %vm556, %v588, %v280
      %v621 = vsel %vm557, %v589, %v287
      %v622 = vsel %vm558, %v590, %v294
      %v623 = vsel %vm559, %v591, %v301
      %v624 = vsel %vm560, %v592, %v308
      %v625 = vsel %vm561, %v593, %v315
      %v626 = vsel %vm562, %v594, %v322
      %v627 = vsel %vm563, %v595, %v329
      %v628 = vsel %vm564, %v596, %v336
      %v629 = vsel %vm565, %v597, %v343
      %v630 = vsel %vm566, %v598, %v350
      %v631 = vsel %vm567, %v599, %v357
      %v632 = vsel %vm568, %v600, %v364
      %v633 = vsel %vm569, %v601, %v371
      %v634 = vsel %vm570, %v602, %v378
      %v635 = vsel %vm571, %v603, %v385
      %v636 = vsel %vm572, %v604, %v392
      %v637 = vsel %vm573, %v605, %v399
      %v638 = vsel %vm574, %v606, %v406
      %v639 = vsel %vm575, %v607, %v413
      %v640 = vsel %vm576, %v608, %v420
      %v641 = vsel %vm577, %v609, %v427
      %v642 = vsel %vm578, %v610, %v434
      %v643 = vsel %vm579, %v611, %v441
      %v644 = vsel %vm580, %v612, %v448
      %v645 = vsel %vm581, %v613, %v455
      %v646 = vsel %vm582, %v614, %v462
      %v647 = vsel %vm583, %v615, %v469
      %v648 = vsel %vm584, %v616, %v476
      %v649 = vsel %vm585, %v617, %v483
      %v650 = vsel %vm586, %v618, %v490
      %vm651 = vcmp.lt.s32.totalorder %v619, 16
      %vm652 = vcmp.lt.s32.totalorder %v620, 16
      %vm653 = vcmp.lt.s32.totalorder %v621, 16
      %vm654 = vcmp.lt.s32.totalorder %v622, 16
      %vm655 = vcmp.lt.s32.totalorder %v623, 16
      %vm656 = vcmp.lt.s32.totalorder %v624, 16
      %vm657 = vcmp.lt.s32.totalorder %v625, 16
      %vm658 = vcmp.lt.s32.totalorder %v626, 16
      %vm659 = vcmp.lt.s32.totalorder %v627, 16
      %vm660 = vcmp.lt.s32.totalorder %v628, 16
      %vm661 = vcmp.lt.s32.totalorder %v629, 16
      %vm662 = vcmp.lt.s32.totalorder %v630, 16
      %vm663 = vcmp.lt.s32.totalorder %v631, 16
      %vm664 = vcmp.lt.s32.totalorder %v632, 16
      %vm665 = vcmp.lt.s32.totalorder %v633, 16
      %vm666 = vcmp.lt.s32.totalorder %v634, 16
      %vm667 = vcmp.lt.s32.totalorder %v635, 16
      %vm668 = vcmp.lt.s32.totalorder %v636, 16
      %vm669 = vcmp.lt.s32.totalorder %v637, 16
      %vm670 = vcmp.lt.s32.totalorder %v638, 16
      %vm671 = vcmp.lt.s32.totalorder %v639, 16
      %vm672 = vcmp.lt.s32.totalorder %v640, 16
      %vm673 = vcmp.lt.s32.totalorder %v641, 16
      %vm674 = vcmp.lt.s32.totalorder %v642, 16
      %vm675 = vcmp.lt.s32.totalorder %v643, 16
      %vm676 = vcmp.lt.s32.totalorder %v644, 16
      %vm677 = vcmp.lt.s32.totalorder %v645, 16
      %vm678 = vcmp.lt.s32.totalorder %v646, 16
      %vm679 = vcmp.lt.s32.totalorder %v647, 16
      %vm680 = vcmp.lt.s32.totalorder %v648, 16
      %vm681 = vcmp.lt.s32.totalorder %v649, 16
      %vm682 = vcmp.lt.s32.totalorder %v650, 16
      %v683 = vld [vmem:[%s1] sm:$0xf]
      %v684 = vld [vmem:[%s1 + $0x4] sm:$0xf]
      %v685 = vld [vmem:[%s1 + $0x8] sm:$0xf]
      %v686 = vld [vmem:[%s1 + $0xc] sm:$0xf]
      %v687 = vld [vmem:[%s1 + $0x10] sm:$0xf]
      %v688 = vld [vmem:[%s1 + $0x14] sm:$0xf]
      %v689 = vld [vmem:[%s1 + $0x18] sm:$0xf]
      %v690 = vld [vmem:[%s1 + $0x1c] sm:$0xf]
      %v691 = vld [vmem:[%s1 + $0x20] sm:$0xf]
      %v692 = vld [vmem:[%s1 + $0x24] sm:$0xf]
      %v693 = vld [vmem:[%s1 + $0x28] sm:$0xf]
      %v694 = vld [vmem:[%s1 + $0x2c] sm:$0xf]
      %v695 = vld [vmem:[%s1 + $0x30] sm:$0xf]
      %v696 = vld [vmem:[%s1 + $0x34] sm:$0xf]
      %v697 = vld [vmem:[%s1 + $0x38] sm:$0xf]
      %v698 = vld [vmem:[%s1 + $0x3c] sm:$0xf]
      %v699 = vld [vmem:[%s1 + $0x40] sm:$0xf]
      %v700 = vld [vmem:[%s1 + $0x44] sm:$0xf]
      %v701 = vld [vmem:[%s1 + $0x48] sm:$0xf]
      %v702 = vld [vmem:[%s1 + $0x4c] sm:$0xf]
      %v703 = vld [vmem:[%s1 + $0x50] sm:$0xf]
      %v704 = vld [vmem:[%s1 + $0x54] sm:$0xf]
      %v705 = vld [vmem:[%s1 + $0x58] sm:$0xf]
      %v706 = vld [vmem:[%s1 + $0x5c] sm:$0xf]
      %v707 = vld [vmem:[%s1 + $0x60] sm:$0xf]
      %v708 = vld [vmem:[%s1 + $0x64] sm:$0xf]
      %v709 = vld [vmem:[%s1 + $0x68] sm:$0xf]
      %v710 = vld [vmem:[%s1 + $0x6c] sm:$0xf]
      %v711 = vld [vmem:[%s1 + $0x70] sm:$0xf]
      %v712 = vld [vmem:[%s1 + $0x74] sm:$0xf]
      %v713 = vld [vmem:[%s1 + $0x78] sm:$0xf]
      %v714 = vld [vmem:[%s1 + $0x7c] sm:$0xf]
      %v715 = vld [vmem:[%s1 + $0x80] sm:$0xf]
      %v716 = vld [vmem:[%s1 + $0x84] sm:$0xf]
      %v717 = vld [vmem:[%s1 + $0x88] sm:$0xf]
      %v718 = vld [vmem:[%s1 + $0x8c] sm:$0xf]
      %v719 = vld [vmem:[%s1 + $0x90] sm:$0xf]
      %v720 = vld [vmem:[%s1 + $0x94] sm:$0xf]
      %v721 = vld [vmem:[%s1 + $0x98] sm:$0xf]
      %v722 = vld [vmem:[%s1 + $0x9c] sm:$0xf]
      %v723 = vld [vmem:[%s1 + $0xa0] sm:$0xf]
      %v724 = vld [vmem:[%s1 + $0xa4] sm:$0xf]
      %v725 = vld [vmem:[%s1 + $0xa8] sm:$0xf]
      %v726 = vld [vmem:[%s1 + $0xac] sm:$0xf]
      %v727 = vld [vmem:[%s1 + $0xb0] sm:$0xf]
      %v728 = vld [vmem:[%s1 + $0xb4] sm:$0xf]
      %v729 = vld [vmem:[%s1 + $0xb8] sm:$0xf]
      %v730 = vld [vmem:[%s1 + $0xbc] sm:$0xf]
      %v731 = vld [vmem:[%s1 + $0xc0] sm:$0xf]
      %v732 = vld [vmem:[%s1 + $0xc4] sm:$0xf]
      %v733 = vld [vmem:[%s1 + $0xc8] sm:$0xf]
      %v734 = vld [vmem:[%s1 + $0xcc] sm:$0xf]
      %v735 = vld [vmem:[%s1 + $0xd0] sm:$0xf]
      %v736 = vld [vmem:[%s1 + $0xd4] sm:$0xf]
      %v737 = vld [vmem:[%s1 + $0xd8] sm:$0xf]
      %v738 = vld [vmem:[%s1 + $0xdc] sm:$0xf]
      %v739 = vld [vmem:[%s1 + $0xe0] sm:$0xf]
      %v740 = vld [vmem:[%s1 + $0xe4] sm:$0xf]
      %v741 = vld [vmem:[%s1 + $0xe8] sm:$0xf]
      %v742 = vld [vmem:[%s1 + $0xec] sm:$0xf]
      %v743 = vld [vmem:[%s1 + $0xf0] sm:$0xf]
      %v744 = vld [vmem:[%s1 + $0xf4] sm:$0xf]
      %v745 = vld [vmem:[%s1 + $0xf8] sm:$0xf]
      %v746 = vld [vmem:[%s1 + $0xfc] sm:$0xf]
      %v747 = vld [vmem:[%s1 + $0x100] sm:$0xf]
      %v748 = vld [vmem:[%s1 + $0x104] sm:$0xf]
      %v749 = vld [vmem:[%s1 + $0x108] sm:$0xf]
      %v750 = vld [vmem:[%s1 + $0x10c] sm:$0xf]
      %v751 = vld [vmem:[%s1 + $0x110] sm:$0xf]
      %v752 = vld [vmem:[%s1 + $0x114] sm:$0xf]
      %v753 = vld [vmem:[%s1 + $0x118] sm:$0xf]
      %v754 = vld [vmem:[%s1 + $0x11c] sm:$0xf]
      %v755 = vld [vmem:[%s1 + $0x120] sm:$0xf]
      %v756 = vld [vmem:[%s1 + $0x124] sm:$0xf]
      %v757 = vld [vmem:[%s1 + $0x128] sm:$0xf]
      %v758 = vld [vmem:[%s1 + $0x12c] sm:$0xf]
      %v759 = vld [vmem:[%s1 + $0x130] sm:$0xf]
      %v760 = vld [vmem:[%s1 + $0x134] sm:$0xf]
      %v761 = vld [vmem:[%s1 + $0x138] sm:$0xf]
      %v762 = vld [vmem:[%s1 + $0x13c] sm:$0xf]
      %v763 = vld [vmem:[%s1 + $0x140] sm:$0xf]
      %v764 = vld [vmem:[%s1 + $0x144] sm:$0xf]
      %v765 = vld [vmem:[%s1 + $0x148] sm:$0xf]
      %v766 = vld [vmem:[%s1 + $0x14c] sm:$0xf]
      %v767 = vld [vmem:[%s1 + $0x150] sm:$0xf]
      %v768 = vld [vmem:[%s1 + $0x154] sm:$0xf]
      %v769 = vld [vmem:[%s1 + $0x158] sm:$0xf]
      %v770 = vld [vmem:[%s1 + $0x15c] sm:$0xf]
      %v771 = vld [vmem:[%s1 + $0x160] sm:$0xf]
      %v772 = vld [vmem:[%s1 + $0x164] sm:$0xf]
      %v773 = vld [vmem:[%s1 + $0x168] sm:$0xf]
      %v774 = vld [vmem:[%s1 + $0x16c] sm:$0xf]
      %v775 = vld [vmem:[%s1 + $0x170] sm:$0xf]
      %v776 = vld [vmem:[%s1 + $0x174] sm:$0xf]
      %v777 = vld [vmem:[%s1 + $0x178] sm:$0xf]
      %v778 = vld [vmem:[%s1 + $0x17c] sm:$0xf]
      %v779 = vld [vmem:[%s1 + $0x180] sm:$0xf]
      %v780 = vld [vmem:[%s1 + $0x184] sm:$0xf]
      %v781 = vld [vmem:[%s1 + $0x188] sm:$0xf]
      %v782 = vld [vmem:[%s1 + $0x18c] sm:$0xf]
      %v783 = vld [vmem:[%s1 + $0x190] sm:$0xf]
      %v784 = vld [vmem:[%s1 + $0x194] sm:$0xf]
      %v785 = vld [vmem:[%s1 + $0x198] sm:$0xf]
      %v786 = vld [vmem:[%s1 + $0x19c] sm:$0xf]
      %v787 = vld [vmem:[%s1 + $0x1a0] sm:$0xf]
      %v788 = vld [vmem:[%s1 + $0x1a4] sm:$0xf]
      %v789 = vld [vmem:[%s1 + $0x1a8] sm:$0xf]
      %v790 = vld [vmem:[%s1 + $0x1ac] sm:$0xf]
      %v791 = vld [vmem:[%s1 + $0x1b0] sm:$0xf]
      %v792 = vld [vmem:[%s1 + $0x1b4] sm:$0xf]
      %v793 = vld [vmem:[%s1 + $0x1b8] sm:$0xf]
      %v794 = vld [vmem:[%s1 + $0x1bc] sm:$0xf]
      %v795 = vld [vmem:[%s1 + $0x1c0] sm:$0xf]
      %v796 = vld [vmem:[%s1 + $0x1c4] sm:$0xf]
      %v797 = vld [vmem:[%s1 + $0x1c8] sm:$0xf]
      %v798 = vld [vmem:[%s1 + $0x1cc] sm:$0xf]
      %v799 = vld [vmem:[%s1 + $0x1d0] sm:$0xf]
      %v800 = vld [vmem:[%s1 + $0x1d4] sm:$0xf]
      %v801 = vld [vmem:[%s1 + $0x1d8] sm:$0xf]
      %v802 = vld [vmem:[%s1 + $0x1dc] sm:$0xf]
      %v803 = vld [vmem:[%s1 + $0x1e0] sm:$0xf]
      %v804 = vld [vmem:[%s1 + $0x1e4] sm:$0xf]
      %v805 = vld [vmem:[%s1 + $0x1e8] sm:$0xf]
      %v806 = vld [vmem:[%s1 + $0x1ec] sm:$0xf]
      %v807 = vld [vmem:[%s1 + $0x1f0] sm:$0xf]
      %v808 = vld [vmem:[%s1 + $0x1f4] sm:$0xf]
      %v809 = vld [vmem:[%s1 + $0x1f8] sm:$0xf]
      %v810 = vld [vmem:[%s1 + $0x1fc] sm:$0xf]
      %v811 = vld [vmem:[%s1 + $0x200] sm:$0xf]
      %v812 = vld [vmem:[%s1 + $0x204] sm:$0xf]
      %v813 = vld [vmem:[%s1 + $0x208] sm:$0xf]
      %v814 = vld [vmem:[%s1 + $0x20c] sm:$0xf]
      %v815 = vld [vmem:[%s1 + $0x210] sm:$0xf]
      %v816 = vld [vmem:[%s1 + $0x214] sm:$0xf]
      %v817 = vld [vmem:[%s1 + $0x218] sm:$0xf]
      %v818 = vld [vmem:[%s1 + $0x21c] sm:$0xf]
      %v819 = vld [vmem:[%s1 + $0x220] sm:$0xf]
      %v820 = vld [vmem:[%s1 + $0x224] sm:$0xf]
      %v821 = vld [vmem:[%s1 + $0x228] sm:$0xf]
      %v822 = vld [vmem:[%s1 + $0x22c] sm:$0xf]
      %v823 = vld [vmem:[%s1 + $0x230] sm:$0xf]
      %v824 = vld [vmem:[%s1 + $0x234] sm:$0xf]
      %v825 = vld [vmem:[%s1 + $0x238] sm:$0xf]
      %v826 = vld [vmem:[%s1 + $0x23c] sm:$0xf]
      %v827 = vld [vmem:[%s3] sm:$0x1]
      %v828 = vld [vmem:[%s219 + $0x1f] sm:$0xff]
      %v829 = vld [vmem:[%s219 + $0x27] sm:$0xff]
      %v830 = vld [vmem:[%s219 + $0x2f] sm:$0xff]
      %v831 = vld [vmem:[%s219 + $0x37] sm:$0xff]
      %v832 = vld [vmem:[%s219 + $0x3f] sm:$0xff]
      %v833 = vld [vmem:[%s219 + $0x47] sm:$0xff]
      %v834 = vld [vmem:[%s219 + $0x4f] sm:$0xff]
      %v835 = vld [vmem:[%s219 + $0x57] sm:$0xff]
      %v836 = vld [vmem:[%s219 + $0x5f] sm:$0xff]
      %v837 = vld [vmem:[%s219 + $0x67] sm:$0xff]
      %v838 = vld [vmem:[%s219 + $0x6f] sm:$0xff]
      %v839 = vld [vmem:[%s219 + $0x77] sm:$0xff]
      %v840 = vld [vmem:[%s219 + $0x7f] sm:$0xff]
      %v841 = vld [vmem:[%s219 + $0x87] sm:$0xff]
      %v842 = vld [vmem:[%s219 + $0x8f] sm:$0xff]
      %v843 = vld [vmem:[%s219 + $0x97] sm:$0xff]
      %v844 = vld [vmem:[%s219 + $0x9f] sm:$0xff]
      %v845 = vld [vmem:[%s219 + $0xa7] sm:$0xff]
      %v846 = vld [vmem:[%s219 + $0xaf] sm:$0xff]
      %v847 = vld [vmem:[%s219 + $0xb7] sm:$0xff]
      %v848 = vld [vmem:[%s219 + $0xbf] sm:$0xff]
      %v849 = vld [vmem:[%s219 + $0xc7] sm:$0xff]
      %v850 = vld [vmem:[%s219 + $0xcf] sm:$0xff]
      %v851 = vld [vmem:[%s219 + $0xd7] sm:$0xff]
      %v852 = vld [vmem:[%s219 + $0xdf] sm:$0xff]
      %v853 = vld [vmem:[%s219 + $0xe7] sm:$0xff]
      %v854 = vld [vmem:[%s219 + $0xef] sm:$0xff]
      %v855 = vld [vmem:[%s219 + $0xf7] sm:$0xff]
      %v856 = vld [vmem:[%s219 + $0xff] sm:$0xff]
      %v857 = vld [vmem:[%s219 + $0x107] sm:$0xff]
      %v858 = vld [vmem:[%s219 + $0x10f] sm:$0xff]
      %v859 = vld [vmem:[%s219 + $0x117] sm:$0xff]
      %v860 = vpack.c.bf16 %v829, %v828
      %v861 = vpack.c.bf16 %v831, %v830
      %v862 = vpack.c.bf16 %v833, %v832
      %v863 = vpack.c.bf16 %v835, %v834
      %v864 = vpack.c.bf16 %v837, %v836
      %v865 = vpack.c.bf16 %v839, %v838
      %v866 = vpack.c.bf16 %v841, %v840
      %v867 = vpack.c.bf16 %v843, %v842
      %v868 = vpack.c.bf16 %v845, %v844
      %v869 = vpack.c.bf16 %v847, %v846
      %v870 = vpack.c.bf16 %v849, %v848
      %v871 = vpack.c.bf16 %v851, %v850
      %v872 = vpack.c.bf16 %v853, %v852
      %v873 = vpack.c.bf16 %v855, %v854
      %v874 = vpack.c.bf16 %v857, %v856
      %v875 = vpack.c.bf16 %v859, %v858
      %v876 = vld [vmem:[%s219 + $0x20] sm:$0xff]
      %v877 = vld [vmem:[%s219 + $0x28] sm:$0xff]
      %v878 = vld [vmem:[%s219 + $0x30] sm:$0xff]
      %v879 = vld [vmem:[%s219 + $0x38] sm:$0xff]
      %v880 = vld [vmem:[%s219 + $0x40] sm:$0xff]
      %v881 = vld [vmem:[%s219 + $0x48] sm:$0xff]
      %v882 = vld [vmem:[%s219 + $0x50] sm:$0xff]
      %v883 = vld [vmem:[%s219 + $0x58] sm:$0xff]
      %v884 = vld [vmem:[%s219 + $0x60] sm:$0xff]
      %v885 = vld [vmem:[%s219 + $0x68] sm:$0xff]
      %v886 = vld [vmem:[%s219 + $0x70] sm:$0xff]
      %v887 = vld [vmem:[%s219 + $0x78] sm:$0xff]
      %v888 = vld [vmem:[%s219 + $0x80] sm:$0xff]
      %v889 = vld [vmem:[%s219 + $0x88] sm:$0xff]
      %v890 = vld [vmem:[%s219 + $0x90] sm:$0xff]
      %v891 = vld [vmem:[%s219 + $0x98] sm:$0xff]
      %v892 = vld [vmem:[%s219 + $0xa0] sm:$0xff]
      %v893 = vld [vmem:[%s219 + $0xa8] sm:$0xff]
      %v894 = vld [vmem:[%s219 + $0xb0] sm:$0xff]
      %v895 = vld [vmem:[%s219 + $0xb8] sm:$0xff]
      %v896 = vld [vmem:[%s219 + $0xc0] sm:$0xff]
      %v897 = vld [vmem:[%s219 + $0xc8] sm:$0xff]
      %v898 = vld [vmem:[%s219 + $0xd0] sm:$0xff]
      %v899 = vld [vmem:[%s219 + $0xd8] sm:$0xff]
      %v900 = vld [vmem:[%s219 + $0xe0] sm:$0xff]
      %v901 = vld [vmem:[%s219 + $0xe8] sm:$0xff]
      %v902 = vld [vmem:[%s219 + $0xf0] sm:$0xff]
      %v903 = vld [vmem:[%s219 + $0xf8] sm:$0xff]
      %v904 = vld [vmem:[%s219 + $0x100] sm:$0xff]
      %v905 = vld [vmem:[%s219 + $0x108] sm:$0xff]
      %v906 = vld [vmem:[%s219 + $0x110] sm:$0xff]
      %v907 = vld [vmem:[%s219 + $0x118] sm:$0xff]
      %v908 = vpack.c.bf16 %v877, %v876
      %v909 = vpack.c.bf16 %v879, %v878
      %v910 = vpack.c.bf16 %v881, %v880
      %v911 = vpack.c.bf16 %v883, %v882
      %v912 = vpack.c.bf16 %v885, %v884
      %v913 = vpack.c.bf16 %v887, %v886
      %v914 = vpack.c.bf16 %v889, %v888
      %v915 = vpack.c.bf16 %v891, %v890
      %v916 = vpack.c.bf16 %v893, %v892
      %v917 = vpack.c.bf16 %v895, %v894
      %v918 = vpack.c.bf16 %v897, %v896
      %v919 = vpack.c.bf16 %v899, %v898
      %v920 = vpack.c.bf16 %v901, %v900
      %v921 = vpack.c.bf16 %v903, %v902
      %v922 = vpack.c.bf16 %v905, %v904
      %v923 = vpack.c.bf16 %v907, %v906
      %v924 = vld [vmem:[%s219 + $0x21] sm:$0xff]
      %v925 = vld [vmem:[%s219 + $0x29] sm:$0xff]
      %v926 = vld [vmem:[%s219 + $0x31] sm:$0xff]
      %v927 = vld [vmem:[%s219 + $0x39] sm:$0xff]
      %v928 = vld [vmem:[%s219 + $0x41] sm:$0xff]
      %v929 = vld [vmem:[%s219 + $0x49] sm:$0xff]
      %v930 = vld [vmem:[%s219 + $0x51] sm:$0xff]
      %v931 = vld [vmem:[%s219 + $0x59] sm:$0xff]
      %v932 = vld [vmem:[%s219 + $0x61] sm:$0xff]
      %v933 = vld [vmem:[%s219 + $0x69] sm:$0xff]
      %v934 = vld [vmem:[%s219 + $0x71] sm:$0xff]
      %v935 = vld [vmem:[%s219 + $0x79] sm:$0xff]
      %v936 = vld [vmem:[%s219 + $0x81] sm:$0xff]
      %v937 = vld [vmem:[%s219 + $0x89] sm:$0xff]
      %v938 = vld [vmem:[%s219 + $0x91] sm:$0xff]
      %v939 = vld [vmem:[%s219 + $0x99] sm:$0xff]
      %v940 = vld [vmem:[%s219 + $0xa1] sm:$0xff]
      %v941 = vld [vmem:[%s219 + $0xa9] sm:$0xff]
      %v942 = vld [vmem:[%s219 + $0xb1] sm:$0xff]
      %v943 = vld [vmem:[%s219 + $0xb9] sm:$0xff]
      %v944 = vld [vmem:[%s219 + $0xc1] sm:$0xff]
      %v945 = vld [vmem:[%s219 + $0xc9] sm:$0xff]
      %v946 = vld [vmem:[%s219 + $0xd1] sm:$0xff]
      %v947 = vld [vmem:[%s219 + $0xd9] sm:$0xff]
      %v948 = vld [vmem:[%s219 + $0xe1] sm:$0xff]
      %v949 = vld [vmem:[%s219 + $0xe9] sm:$0xff]
      %v950 = vld [vmem:[%s219 + $0xf1] sm:$0xff]
      %v951 = vld [vmem:[%s219 + $0xf9] sm:$0xff]
      %v952 = vld [vmem:[%s219 + $0x101] sm:$0xff]
      %v953 = vld [vmem:[%s219 + $0x109] sm:$0xff]
      %v954 = vld [vmem:[%s219 + $0x111] sm:$0xff]
      %v955 = vld [vmem:[%s219 + $0x119] sm:$0xff]
      %v956 = vpack.c.bf16 %v925, %v924
      %v957 = vpack.c.bf16 %v927, %v926
      %v958 = vpack.c.bf16 %v929, %v928
      %v959 = vpack.c.bf16 %v931, %v930
      %v960 = vpack.c.bf16 %v933, %v932
      %v961 = vpack.c.bf16 %v935, %v934
      %v962 = vpack.c.bf16 %v937, %v936
      %v963 = vpack.c.bf16 %v939, %v938
      %v964 = vpack.c.bf16 %v941, %v940
      %v965 = vpack.c.bf16 %v943, %v942
      %v966 = vpack.c.bf16 %v945, %v944
      %v967 = vpack.c.bf16 %v947, %v946
      %v968 = vpack.c.bf16 %v949, %v948
      %v969 = vpack.c.bf16 %v951, %v950
      %v970 = vpack.c.bf16 %v953, %v952
      %v971 = vpack.c.bf16 %v955, %v954
      %v972 = vld [vmem:[%s219 + $0x11f] sm:$0xff]
      %v973 = vld [vmem:[%s219 + $0x127] sm:$0xff]
      %v974 = vld [vmem:[%s219 + $0x12f] sm:$0xff]
      %v975 = vld [vmem:[%s219 + $0x137] sm:$0xff]
      %v976 = vpack.c.bf16 %v973, %v972
      %v977 = vpack.c.bf16 %v975, %v974
      %v978 = vld [vmem:[%s219 + $0x120] sm:$0xff]
      %v979 = vld [vmem:[%s219 + $0x128] sm:$0xff]
      %v980 = vld [vmem:[%s219 + $0x130] sm:$0xff]
      %v981 = vld [vmem:[%s219 + $0x138] sm:$0xff]
      %v982 = vpack.c.bf16 %v979, %v978
      %v983 = vpack.c.bf16 %v981, %v980
      %v984 = vld [vmem:[%s219 + $0x121] sm:$0xff]
      %v985 = vld [vmem:[%s219 + $0x129] sm:$0xff]
      %v986 = vld [vmem:[%s219 + $0x131] sm:$0xff]
      %v987 = vld [vmem:[%s219 + $0x139] sm:$0xff]
      %v988 = vpack.c.bf16 %v985, %v984
      %v989 = vpack.c.bf16 %v987, %v986
      %v990 = vld [vmem:[%s219 + $0x13f] sm:$0xff]
      %v991 = vld [vmem:[%s219 + $0x147] sm:$0xff]
      %v992 = vld [vmem:[%s219 + $0x14f] sm:$0xff]
      %v993 = vld [vmem:[%s219 + $0x157] sm:$0xff]
      %v994 = vpack.c.bf16 %v991, %v990
      %v995 = vpack.c.bf16 %v993, %v992
      %v996 = vld [vmem:[%s219 + $0x140] sm:$0xff]
      %v997 = vld [vmem:[%s219 + $0x148] sm:$0xff]
      %v998 = vld [vmem:[%s219 + $0x150] sm:$0xff]
      %v999 = vld [vmem:[%s219 + $0x158] sm:$0xff]
      %v1000 = vpack.c.bf16 %v997, %v996
      %v1001 = vpack.c.bf16 %v999, %v998
      %v1002 = vld [vmem:[%s219 + $0x141] sm:$0xff]
      %v1003 = vld [vmem:[%s219 + $0x149] sm:$0xff]
      %v1004 = vld [vmem:[%s219 + $0x151] sm:$0xff]
      %v1005 = vld [vmem:[%s219 + $0x159] sm:$0xff]
      %v1006 = vpack.c.bf16 %v1003, %v1002
      %v1007 = vpack.c.bf16 %v1005, %v1004
      %v1009 = vlaneseq
      %v1010 = vshrl.u32 %v1009, 7
      %v1011 = vsub.s32 0, %v1010
      %v1012 = vrot.slane %v827, %v1011
      %v1158 = vunpack.c.l.b16 %v683
      %v1159 = vunpack.c.l.b16 %v684
      %v1160 = vunpack.c.l.b16 %v685
      %v1161 = vunpack.c.l.b16 %v686
      %v1162 = vunpack.c.l.b16 %v687
      %v1163 = vunpack.c.l.b16 %v688
      %v1164 = vunpack.c.l.b16 %v689
      %v1165 = vunpack.c.l.b16 %v690
      %v1166 = vunpack.c.l.b16 %v691
      %v1167 = vunpack.c.l.b16 %v692
      %v1168 = vunpack.c.l.b16 %v693
      %v1169 = vunpack.c.l.b16 %v694
      %v1170 = vunpack.c.l.b16 %v695
      %v1171 = vunpack.c.l.b16 %v696
      %v1172 = vunpack.c.l.b16 %v697
      %v1173 = vunpack.c.l.b16 %v698
      %v1174 = vunpack.c.l.b16 %v699
      %v1175 = vunpack.c.l.b16 %v700
      %v1176 = vunpack.c.l.b16 %v701
      %v1177 = vunpack.c.l.b16 %v702
      %v1178 = vunpack.c.l.b16 %v703
      %v1179 = vunpack.c.l.b16 %v704
      %v1180 = vunpack.c.l.b16 %v705
      %v1181 = vunpack.c.l.b16 %v706
      %v1182 = vunpack.c.l.b16 %v707
      %v1183 = vunpack.c.l.b16 %v708
      %v1184 = vunpack.c.l.b16 %v709
      %v1185 = vunpack.c.l.b16 %v710
      %v1186 = vunpack.c.l.b16 %v711
      %v1187 = vunpack.c.l.b16 %v712
      %v1188 = vunpack.c.l.b16 %v713
      %v1189 = vunpack.c.l.b16 %v714
      %v1190 = vunpack.c.l.b16 %v715
      %v1191 = vunpack.c.l.b16 %v716
      %v1192 = vunpack.c.l.b16 %v717
      %v1193 = vunpack.c.l.b16 %v718
      %v1194 = vunpack.c.l.b16 %v719
      %v1195 = vunpack.c.l.b16 %v720
      %v1196 = vunpack.c.l.b16 %v721
      %v1197 = vunpack.c.l.b16 %v722
      %v1198 = vunpack.c.l.b16 %v723
      %v1199 = vunpack.c.l.b16 %v724
      %v1200 = vunpack.c.l.b16 %v725
      %v1201 = vunpack.c.l.b16 %v726
      %v1202 = vunpack.c.l.b16 %v727
      %v1203 = vunpack.c.l.b16 %v728
      %v1204 = vunpack.c.l.b16 %v729
      %v1205 = vunpack.c.l.b16 %v730
      %v1206 = vunpack.c.l.b16 %v731
      %v1207 = vunpack.c.l.b16 %v732
      %v1208 = vunpack.c.l.b16 %v733
      %v1209 = vunpack.c.l.b16 %v734
      %v1210 = vunpack.c.l.b16 %v735
      %v1211 = vunpack.c.l.b16 %v736
      %v1212 = vunpack.c.l.b16 %v737
      %v1213 = vunpack.c.l.b16 %v738
      %v1214 = vunpack.c.l.b16 %v739
      %v1215 = vunpack.c.l.b16 %v740
      %v1216 = vunpack.c.l.b16 %v741
      %v1217 = vunpack.c.l.b16 %v742
      %v1218 = vunpack.c.l.b16 %v743
      %v1219 = vunpack.c.l.b16 %v744
      %v1220 = vunpack.c.l.b16 %v745
      %v1221 = vunpack.c.l.b16 %v746
      %v1222 = vunpack.c.l.b16 %v747
      %v1223 = vunpack.c.l.b16 %v748
      %v1224 = vunpack.c.l.b16 %v749
      %v1225 = vunpack.c.l.b16 %v750
      %v1226 = vunpack.c.l.b16 %v751
      %v1227 = vunpack.c.l.b16 %v752
      %v1228 = vunpack.c.l.b16 %v753
      %v1229 = vunpack.c.l.b16 %v754
      %v1230 = vunpack.c.l.b16 %v755
      %v1231 = vunpack.c.l.b16 %v756
      %v1232 = vunpack.c.l.b16 %v757
      %v1233 = vunpack.c.l.b16 %v758
      %v1234 = vunpack.c.l.b16 %v759
      %v1235 = vunpack.c.l.b16 %v760
      %v1236 = vunpack.c.l.b16 %v761
      %v1237 = vunpack.c.l.b16 %v762
      %v1238 = vunpack.c.l.b16 %v763
      %v1239 = vunpack.c.l.b16 %v764
      %v1240 = vunpack.c.l.b16 %v765
      %v1241 = vunpack.c.l.b16 %v766
      %v1242 = vunpack.c.l.b16 %v767
      %v1243 = vunpack.c.l.b16 %v768
      %v1244 = vunpack.c.l.b16 %v769
      %v1245 = vunpack.c.l.b16 %v770
      %v1246 = vunpack.c.l.b16 %v771
      %v1247 = vunpack.c.l.b16 %v772
      %v1248 = vunpack.c.l.b16 %v773
      %v1249 = vunpack.c.l.b16 %v774
      %v1250 = vunpack.c.l.b16 %v775
      %v1251 = vunpack.c.l.b16 %v776
      %v1252 = vunpack.c.l.b16 %v777
      %v1253 = vunpack.c.l.b16 %v778
      %v1254 = vunpack.c.l.b16 %v779
      %v1255 = vunpack.c.l.b16 %v780
      %v1256 = vunpack.c.l.b16 %v781
      %v1257 = vunpack.c.l.b16 %v782
      %v1258 = vunpack.c.l.b16 %v783
      %v1259 = vunpack.c.l.b16 %v784
      %v1260 = vunpack.c.l.b16 %v785
      %v1261 = vunpack.c.l.b16 %v786
      %v1262 = vunpack.c.l.b16 %v787
      %v1263 = vunpack.c.l.b16 %v788
      %v1264 = vunpack.c.l.b16 %v789
      %v1265 = vunpack.c.l.b16 %v790
      %v1266 = vunpack.c.l.b16 %v791
      %v1267 = vunpack.c.l.b16 %v792
      %v1268 = vunpack.c.l.b16 %v793
      %v1269 = vunpack.c.l.b16 %v794
      %v1270 = vunpack.c.l.b16 %v795
      %v1271 = vunpack.c.l.b16 %v796
      %v1272 = vunpack.c.l.b16 %v797
      %v1273 = vunpack.c.l.b16 %v798
      %v1274 = vunpack.c.l.b16 %v799
      %v1275 = vunpack.c.l.b16 %v800
      %v1276 = vunpack.c.l.b16 %v801
      %v1277 = vunpack.c.l.b16 %v802
      %v1278 = vunpack.c.l.b16 %v803
      %v1279 = vunpack.c.l.b16 %v804
      %v1280 = vunpack.c.l.b16 %v805
      %v1281 = vunpack.c.l.b16 %v806
      %v1282 = vunpack.c.l.b16 %v807
      %v1283 = vunpack.c.l.b16 %v808
      %v1284 = vunpack.c.l.b16 %v809
      %v1285 = vunpack.c.l.b16 %v810
      %v1286 = vunpack.c.l.b16 %v811
      %v1287 = vunpack.c.l.b16 %v812
      %v1288 = vunpack.c.l.b16 %v813
      %v1289 = vunpack.c.l.b16 %v814
      %v1290 = vunpack.c.l.b16 %v815
      %v1291 = vunpack.c.l.b16 %v816
      %v1292 = vunpack.c.l.b16 %v817
      %v1293 = vunpack.c.l.b16 %v818
      %v1294 = vunpack.c.l.b16 %v819
      %v1295 = vunpack.c.l.b16 %v820
      %v1296 = vunpack.c.l.b16 %v821
      %v1297 = vunpack.c.l.b16 %v822
      %v1298 = vunpack.c.l.b16 %v823
      %v1299 = vunpack.c.l.b16 %v824
      %v1300 = vunpack.c.l.b16 %v825
      %v1301 = vunpack.c.l.b16 %v826
      %v1302 = vpack.c.b16 %v1159, %v1158
      %v1303 = vpack.c.b16 %v1161, %v1160
      %v1304 = vpack.c.b16 %v1163, %v1162
      %v1305 = vpack.c.b16 %v1165, %v1164
      %v1306 = vpack.c.b16 %v1167, %v1166
      %v1307 = vpack.c.b16 %v1169, %v1168
      %v1308 = vpack.c.b16 %v1171, %v1170
      %v1309 = vpack.c.b16 %v1173, %v1172
      %v1310 = vpack.c.b16 %v1175, %v1174
      %v1311 = vpack.c.b16 %v1177, %v1176
      %v1312 = vpack.c.b16 %v1179, %v1178
      %v1313 = vpack.c.b16 %v1181, %v1180
      %v1314 = vpack.c.b16 %v1183, %v1182
      %v1315 = vpack.c.b16 %v1185, %v1184
      %v1316 = vpack.c.b16 %v1187, %v1186
      %v1317 = vpack.c.b16 %v1189, %v1188
      %v1318 = vpack.c.b16 %v1191, %v1190
      %v1319 = vpack.c.b16 %v1193, %v1192
      %v1320 = vpack.c.b16 %v1195, %v1194
      %v1321 = vpack.c.b16 %v1197, %v1196
      %v1322 = vpack.c.b16 %v1199, %v1198
      %v1323 = vpack.c.b16 %v1201, %v1200
      %v1324 = vpack.c.b16 %v1203, %v1202
      %v1325 = vpack.c.b16 %v1205, %v1204
      %v1326 = vpack.c.b16 %v1207, %v1206
      %v1327 = vpack.c.b16 %v1209, %v1208
      %v1328 = vpack.c.b16 %v1211, %v1210
      %v1329 = vpack.c.b16 %v1213, %v1212
      %v1330 = vpack.c.b16 %v1215, %v1214
      %v1331 = vpack.c.b16 %v1217, %v1216
      %v1332 = vpack.c.b16 %v1219, %v1218
      %v1333 = vpack.c.b16 %v1221, %v1220
      %v1334 = vpack.c.b16 %v1223, %v1222
      %v1335 = vpack.c.b16 %v1225, %v1224
      %v1336 = vpack.c.b16 %v1227, %v1226
      %v1337 = vpack.c.b16 %v1229, %v1228
      %v1338 = vpack.c.b16 %v1231, %v1230
      %v1339 = vpack.c.b16 %v1233, %v1232
      %v1340 = vpack.c.b16 %v1235, %v1234
      %v1341 = vpack.c.b16 %v1237, %v1236
      %v1342 = vpack.c.b16 %v1239, %v1238
      %v1343 = vpack.c.b16 %v1241, %v1240
      %v1344 = vpack.c.b16 %v1243, %v1242
      %v1345 = vpack.c.b16 %v1245, %v1244
      %v1346 = vpack.c.b16 %v1247, %v1246
      %v1347 = vpack.c.b16 %v1249, %v1248
      %v1348 = vpack.c.b16 %v1251, %v1250
      %v1349 = vpack.c.b16 %v1253, %v1252
      %v1350 = vpack.c.b16 %v1255, %v1254
      %v1351 = vpack.c.b16 %v1257, %v1256
      %v1352 = vpack.c.b16 %v1259, %v1258
      %v1353 = vpack.c.b16 %v1261, %v1260
      %v1354 = vpack.c.b16 %v1263, %v1262
      %v1355 = vpack.c.b16 %v1265, %v1264
      %v1356 = vpack.c.b16 %v1267, %v1266
      %v1357 = vpack.c.b16 %v1269, %v1268
      %v1358 = vpack.c.b16 %v1271, %v1270
      %v1359 = vpack.c.b16 %v1273, %v1272
      %v1360 = vpack.c.b16 %v1275, %v1274
      %v1361 = vpack.c.b16 %v1277, %v1276
      %v1362 = vpack.c.b16 %v1279, %v1278
      %v1363 = vpack.c.b16 %v1281, %v1280
      %v1364 = vpack.c.b16 %v1283, %v1282
      %v1365 = vpack.c.b16 %v1285, %v1284
      %v1366 = vpack.c.b16 %v1287, %v1286
      %v1367 = vpack.c.b16 %v1289, %v1288
      %v1368 = vpack.c.b16 %v1291, %v1290
      %v1369 = vpack.c.b16 %v1293, %v1292
      %v1370 = vpack.c.b16 %v1295, %v1294
      %v1371 = vpack.c.b16 %v1297, %v1296
      %v1372 = vpack.c.b16 %v1299, %v1298
      %v1373 = vpack.c.b16 %v1301, %v1300
      %1446 = vmatprep.subr.bf16.mxu0 0
      %1447 = vmatpush1.bf16.msra.mxu0 %v1302
      %1448 = vmatprep.subr.bf16.mxu0 0
      %1449 = vmatpush1.bf16.msra.mxu0 %v1303
      %1450 = vmatprep.subr.bf16.mxu0 0
      %1451 = vmatpush1.bf16.msra.mxu0 %v1304
      %1452 = vmatprep.subr.bf16.mxu0 0
      %1453 = vmatpush1.bf16.msra.mxu0 %v1305
      %1454 = vmatprep.subr.bf16.mxu0 0
      %1455 = vmatpush1.bf16.msra.mxu0 %v1306
      %1456 = vmatprep.subr.bf16.mxu0 0
      %1457 = vmatpush1.bf16.msra.mxu0 %v1307
      %1458 = vmatprep.subr.bf16.mxu0 0
      %1459 = vmatpush1.bf16.msra.mxu0 %v1308
      %1460 = vmatprep.subr.bf16.mxu0 0
      %1461 = vmatpush1.bf16.msra.mxu0 %v1309
      %1462 = vmatprep.subr.bf16.mxu0 0
      %1463 = vmatpush1.bf16.msra.mxu0 %v1310
      %1464 = vmatprep.subr.bf16.mxu0 0
      %1465 = vmatpush1.bf16.msra.mxu0 %v1311
      %1466 = vmatprep.subr.bf16.mxu0 0
      %1467 = vmatpush1.bf16.msra.mxu0 %v1312
      %1468 = vmatprep.subr.bf16.mxu0 0
      %1469 = vmatpush1.bf16.msra.mxu0 %v1313
      %1470 = vmatprep.subr.bf16.mxu0 0
      %1471 = vmatpush1.bf16.msra.mxu0 %v1314
      %1472 = vmatprep.subr.bf16.mxu0 0
      %1473 = vmatpush1.bf16.msra.mxu0 %v1315
      %1474 = vmatprep.subr.bf16.mxu0 0
      %1475 = vmatpush1.bf16.msra.mxu0 %v1316
      %1476 = vmatprep.subr.bf16.mxu0 0
      %1477 = vmatpush1.bf16.msra.mxu0 %v1317
      %1478 = vmatprep.mubr.bf16.mxu0 %v908
      %1479 = vmatmul.mubr.bf16.gmra.mrb[0].mxu0 %v860
      %v1480 = vpop.f32.mrb[0].mxu0
      %v1481 = vadd.f32 %v1012, %v1480
      %v1482 = vpop.f32.mrb[0].mxu0
      %v1483 = vpop.f32.mrb[0].mxu0
      %v1484 = vadd.f32 %v1012, %v1483
      %v1485 = vpop.f32.mrb[0].mxu0
      %1486 = vmatprep.mubr.bf16.mxu0 %v909
      %1487 = vmatmul.mubr.bf16.gmra.mrb[0].mxu0 %v861
      %v1488 = vpop.f32.mrb[0].mxu0
      %v1489 = vadd.f32 %v1012, %v1488
      %v1490 = vpop.f32.mrb[0].mxu0
      %v1491 = vpop.f32.mrb[0].mxu0
      %v1492 = vadd.f32 %v1012, %v1491
      %v1493 = vpop.f32.mrb[0].mxu0
      %1494 = vmatprep.mubr.bf16.mxu0 %v910
      %1495 = vmatmul.mubr.bf16.gmra.mrb[0].mxu0 %v862
      %v1496 = vpop.f32.mrb[0].mxu0
      %v1497 = vadd.f32 %v1012, %v1496
      %v1498 = vpop.f32.mrb[0].mxu0
      %v1499 = vpop.f32.mrb[0].mxu0
      %v1500 = vadd.f32 %v1012, %v1499
      %v1501 = vpop.f32.mrb[0].mxu0
      %1502 = vmatprep.mubr.bf16.mxu0 %v911
      %1503 = vmatmul.mubr.bf16.gmra.mrb[0].mxu0 %v863
      %v1504 = vpop.f32.mrb[0].mxu0
      %v1505 = vadd.f32 %v1012, %v1504
      %v1506 = vpop.f32.mrb[0].mxu0
      %v1507 = vpop.f32.mrb[0].mxu0
      %v1508 = vadd.f32 %v1012, %v1507
      %v1509 = vpop.f32.mrb[0].mxu0
      %1510 = vmatprep.mubr.bf16.mxu0 %v912
      %1511 = vmatmul.mubr.bf16.gmra.mrb[0].mxu0 %v864
      %v1512 = vpop.f32.mrb[0].mxu0
      %v1513 = vadd.f32 %v1012, %v1512
      %v1514 = vpop.f32.mrb[0].mxu0
      %v1515 = vpop.f32.mrb[0].mxu0
      %v1516 = vadd.f32 %v1012, %v1515
      %v1517 = vpop.f32.mrb[0].mxu0
      %1518 = vmatprep.mubr.bf16.mxu0 %v913
      %1519 = vmatmul.mubr.bf16.gmra.mrb[0].mxu0 %v865
      %v1520 = vpop.f32.mrb[0].mxu0
      %v1521 = vadd.f32 %v1012, %v1520
      %v1522 = vpop.f32.mrb[0].mxu0
      %v1523 = vpop.f32.mrb[0].mxu0
      %v1524 = vadd.f32 %v1012, %v1523
      %v1525 = vpop.f32.mrb[0].mxu0
      %1526 = vmatprep.mubr.bf16.mxu0 %v914
      %1527 = vmatmul.mubr.bf16.gmra.mrb[0].mxu0 %v866
      %v1528 = vpop.f32.mrb[0].mxu0
      %v1529 = vadd.f32 %v1012, %v1528
      %v1530 = vpop.f32.mrb[0].mxu0
      %v1531 = vpop.f32.mrb[0].mxu0
      %v1532 = vadd.f32 %v1012, %v1531
      %v1533 = vpop.f32.mrb[0].mxu0
      %1534 = vmatprep.mubr.bf16.mxu0 %v915
      %1535 = vmatmul.mubr.bf16.gmra.mrb[0].mxu0 %v867
      %v1536 = vpop.f32.mrb[0].mxu0
      %v1537 = vadd.f32 %v1012, %v1536
      %v1538 = vpop.f32.mrb[0].mxu0
      %v1539 = vpop.f32.mrb[0].mxu0
      %v1540 = vadd.f32 %v1012, %v1539
      %v1541 = vpop.f32.mrb[0].mxu0
      %1542 = vmatprep.mubr.bf16.mxu0 %v916
      %1543 = vmatmul.mubr.bf16.gmra.mrb[0].mxu0 %v868
      %v1544 = vpop.f32.mrb[0].mxu0
      %v1545 = vadd.f32 %v1012, %v1544
      %v1546 = vpop.f32.mrb[0].mxu0
      %v1547 = vpop.f32.mrb[0].mxu0
      %v1548 = vadd.f32 %v1012, %v1547
      %v1549 = vpop.f32.mrb[0].mxu0
      %1550 = vmatprep.mubr.bf16.mxu0 %v917
      %1551 = vmatmul.mubr.bf16.gmra.mrb[0].mxu0 %v869
      %v1552 = vpop.f32.mrb[0].mxu0
      %v1553 = vadd.f32 %v1012, %v1552
      %v1554 = vpop.f32.mrb[0].mxu0
      %v1555 = vpop.f32.mrb[0].mxu0
      %v1556 = vadd.f32 %v1012, %v1555
      %v1557 = vpop.f32.mrb[0].mxu0
      %1558 = vmatprep.mubr.bf16.mxu0 %v918
      %1559 = vmatmul.mubr.bf16.gmra.mrb[0].mxu0 %v870
      %v1560 = vpop.f32.mrb[0].mxu0
      %v1561 = vadd.f32 %v1012, %v1560
      %v1562 = vpop.f32.mrb[0].mxu0
      %v1563 = vpop.f32.mrb[0].mxu0
      %v1564 = vadd.f32 %v1012, %v1563
      %v1565 = vpop.f32.mrb[0].mxu0
      %1566 = vmatprep.mubr.bf16.mxu0 %v919
      %1567 = vmatmul.mubr.bf16.gmra.mrb[0].mxu0 %v871
      %v1568 = vpop.f32.mrb[0].mxu0
      %v1569 = vadd.f32 %v1012, %v1568
      %v1570 = vpop.f32.mrb[0].mxu0
      %v1571 = vpop.f32.mrb[0].mxu0
      %v1572 = vadd.f32 %v1012, %v1571
      %v1573 = vpop.f32.mrb[0].mxu0
      %1574 = vmatprep.mubr.bf16.mxu0 %v920
      %1575 = vmatmul.mubr.bf16.gmra.mrb[0].mxu0 %v872
      %v1576 = vpop.f32.mrb[0].mxu0
      %v1577 = vadd.f32 %v1012, %v1576
      %v1578 = vpop.f32.mrb[0].mxu0
      %v1579 = vpop.f32.mrb[0].mxu0
      %v1580 = vadd.f32 %v1012, %v1579
      %v1581 = vpop.f32.mrb[0].mxu0
      %1582 = vmatprep.mubr.bf16.mxu0 %v921
      %1583 = vmatmul.mubr.bf16.gmra.mrb[0].mxu0 %v873
      %v1584 = vpop.f32.mrb[0].mxu0
      %v1585 = vadd.f32 %v1012, %v1584
      %v1586 = vpop.f32.mrb[0].mxu0
      %v1587 = vpop.f32.mrb[0].mxu0
      %v1588 = vadd.f32 %v1012, %v1587
      %v1589 = vpop.f32.mrb[0].mxu0
      %1590 = vmatprep.mubr.bf16.mxu0 %v922
      %1591 = vmatmul.mubr.bf16.gmra.mrb[0].mxu0 %v874
      %v1592 = vpop.f32.mrb[0].mxu0
      %v1593 = vadd.f32 %v1012, %v1592
      %v1594 = vpop.f32.mrb[0].mxu0
      %v1595 = vpop.f32.mrb[0].mxu0
      %v1596 = vadd.f32 %v1012, %v1595
      %v1597 = vpop.f32.mrb[0].mxu0
      %1598 = vmatprep.mubr.bf16.mxu0 %v923
      %1599 = vmatmul.mubr.bf16.gmra.mrb[0].mxu0 %v875
      %v1600 = vpop.f32.mrb[0].mxu0
      %v1601 = vadd.f32 %v1012, %v1600
      %v1602 = vpop.f32.mrb[0].mxu0
      %v1603 = vpop.f32.mrb[0].mxu0
      %v1604 = vadd.f32 %v1012, %v1603
      %v1605 = vpop.f32.mrb[0].mxu0
      %1606 = vdwg.mxu0
      %1607 = vmatprep.subr.bf16.mxu0 0
      %1608 = vmatpush1.bf16.msra.mxu0 %v1318
      %1609 = vmatprep.subr.bf16.mxu0 0
      %1610 = vmatpush1.bf16.msra.mxu0 %v1319
      %1611 = vmatprep.subr.bf16.mxu0 0
      %1612 = vmatpush1.bf16.msra.mxu0 %v1320
      %1613 = vmatprep.subr.bf16.mxu0 0
      %1614 = vmatpush1.bf16.msra.mxu0 %v1321
      %1615 = vmatprep.subr.bf16.mxu0 0
      %1616 = vmatpush1.bf16.msra.mxu0 %v1322
      %1617 = vmatprep.subr.bf16.mxu0 0
      %1618 = vmatpush1.bf16.msra.mxu0 %v1323
      %1619 = vmatprep.subr.bf16.mxu0 0
      %1620 = vmatpush1.bf16.msra.mxu0 %v1324
      %1621 = vmatprep.subr.bf16.mxu0 0
      %1622 = vmatpush1.bf16.msra.mxu0 %v1325
      %1623 = vmatprep.subr.bf16.mxu0 0
      %1624 = vmatpush1.bf16.msra.mxu0 %v1326
      %1625 = vmatprep.subr.bf16.mxu0 0
      %1626 = vmatpush1.bf16.msra.mxu0 %v1327
      %1627 = vmatprep.subr.bf16.mxu0 0
      %1628 = vmatpush1.bf16.msra.mxu0 %v1328
      %1629 = vmatprep.subr.bf16.mxu0 0
      %1630 = vmatpush1.bf16.msra.mxu0 %v1329
      %1631 = vmatprep.subr.bf16.mxu0 0
      %1632 = vmatpush1.bf16.msra.mxu0 %v1330
      %1633 = vmatprep.subr.bf16.mxu0 0
      %1634 = vmatpush1.bf16.msra.mxu0 %v1331
      %1635 = vmatprep.subr.bf16.mxu0 0
      %1636 = vmatpush1.bf16.msra.mxu0 %v1332
      %1637 = vmatprep.subr.bf16.mxu0 0
      %1638 = vmatpush1.bf16.msra.mxu0 %v1333
      %1639 = vmatprep.mubr.bf16.mxu0 %v862
      %1640 = vmatmul.mubr.bf16.gmra.mrb[0].mxu0 %v956
      %v1641 = vpop.f32.mrb[0].mxu0
      %v1642 = vadd.f32 %v1481, %v1641
      %v1643 = vpop.f32.mrb[0].mxu0
      %v1644 = vpop.f32.mrb[0].mxu0
      %v1645 = vadd.f32 %v1484, %v1644
      %v1646 = vpop.f32.mrb[0].mxu0
      %1647 = vmatprep.mubr.bf16.mxu0 %v863
      %1648 = vmatmul.mubr.bf16.gmra.mrb[0].mxu0 %v957
      %v1649 = vpop.f32.mrb[0].mxu0
      %v1650 = vadd.f32 %v1489, %v1649
      %v1651 = vpop.f32.mrb[0].mxu0
      %v1652 = vpop.f32.mrb[0].mxu0
      %v1653 = vadd.f32 %v1492, %v1652
      %v1654 = vpop.f32.mrb[0].mxu0
      %1655 = vmatprep.mubr.bf16.mxu0 %v864
      %1656 = vmatmul.mubr.bf16.gmra.mrb[0].mxu0 %v958
      %v1657 = vpop.f32.mrb[0].mxu0
      %v1658 = vadd.f32 %v1497, %v1657
      %v1659 = vpop.f32.mrb[0].mxu0
      %v1660 = vpop.f32.mrb[0].mxu0
      %v1661 = vadd.f32 %v1500, %v1660
      %v1662 = vpop.f32.mrb[0].mxu0
      %1663 = vmatprep.mubr.bf16.mxu0 %v865
      %1664 = vmatmul.mubr.bf16.gmra.mrb[0].mxu0 %v959
      %v1665 = vpop.f32.mrb[0].mxu0
      %v1666 = vadd.f32 %v1505, %v1665
      %v1667 = vpop.f32.mrb[0].mxu0
      %v1668 = vpop.f32.mrb[0].mxu0
      %v1669 = vadd.f32 %v1508, %v1668
      %v1670 = vpop.f32.mrb[0].mxu0
      %1671 = vmatprep.mubr.bf16.mxu0 %v866
      %1672 = vmatmul.mubr.bf16.gmra.mrb[0].mxu0 %v960
      %v1673 = vpop.f32.mrb[0].mxu0
      %v1674 = vadd.f32 %v1513, %v1673
      %v1675 = vpop.f32.mrb[0].mxu0
      %v1676 = vpop.f32.mrb[0].mxu0
      %v1677 = vadd.f32 %v1516, %v1676
      %v1678 = vpop.f32.mrb[0].mxu0
      %1679 = vmatprep.mubr.bf16.mxu0 %v867
      %1680 = vmatmul.mubr.bf16.gmra.mrb[0].mxu0 %v961
      %v1681 = vpop.f32.mrb[0].mxu0
      %v1682 = vadd.f32 %v1521, %v1681
      %v1683 = vpop.f32.mrb[0].mxu0
      %v1684 = vpop.f32.mrb[0].mxu0
      %v1685 = vadd.f32 %v1524, %v1684
      %v1686 = vpop.f32.mrb[0].mxu0
      %1687 = vmatprep.mubr.bf16.mxu0 %v868
      %1688 = vmatmul.mubr.bf16.gmra.mrb[0].mxu0 %v962
      %v1689 = vpop.f32.mrb[0].mxu0
      %v1690 = vadd.f32 %v1529, %v1689
      %v1691 = vpop.f32.mrb[0].mxu0
      %v1692 = vpop.f32.mrb[0].mxu0
      %v1693 = vadd.f32 %v1532, %v1692
      %v1694 = vpop.f32.mrb[0].mxu0
      %1695 = vmatprep.mubr.bf16.mxu0 %v869
      %1696 = vmatmul.mubr.bf16.gmra.mrb[0].mxu0 %v963
      %v1697 = vpop.f32.mrb[0].mxu0
      %v1698 = vadd.f32 %v1537, %v1697
      %v1699 = vpop.f32.mrb[0].mxu0
      %v1700 = vpop.f32.mrb[0].mxu0
      %v1701 = vadd.f32 %v1540, %v1700
      %v1702 = vpop.f32.mrb[0].mxu0
      %1703 = vmatprep.mubr.bf16.mxu0 %v870
      %1704 = vmatmul.mubr.bf16.gmra.mrb[0].mxu0 %v964
      %v1705 = vpop.f32.mrb[0].mxu0
      %v1706 = vadd.f32 %v1545, %v1705
      %v1707 = vpop.f32.mrb[0].mxu0
      %v1708 = vpop.f32.mrb[0].mxu0
      %v1709 = vadd.f32 %v1548, %v1708
      %v1710 = vpop.f32.mrb[0].mxu0
      %1711 = vmatprep.mubr.bf16.mxu0 %v871
      %1712 = vmatmul.mubr.bf16.gmra.mrb[0].mxu0 %v965
      %v1713 = vpop.f32.mrb[0].mxu0
      %v1714 = vadd.f32 %v1553, %v1713
      %v1715 = vpop.f32.mrb[0].mxu0
      %v1716 = vpop.f32.mrb[0].mxu0
      %v1717 = vadd.f32 %v1556, %v1716
      %v1718 = vpop.f32.mrb[0].mxu0
      %1719 = vmatprep.mubr.bf16.mxu0 %v872
      %1720 = vmatmul.mubr.bf16.gmra.mrb[0].mxu0 %v966
      %v1721 = vpop.f32.mrb[0].mxu0
      %v1722 = vadd.f32 %v1561, %v1721
      %v1723 = vpop.f32.mrb[0].mxu0
      %v1724 = vpop.f32.mrb[0].mxu0
      %v1725 = vadd.f32 %v1564, %v1724
      %v1726 = vpop.f32.mrb[0].mxu0
      %1727 = vmatprep.mubr.bf16.mxu0 %v873
      %1728 = vmatmul.mubr.bf16.gmra.mrb[0].mxu0 %v967
      %v1729 = vpop.f32.mrb[0].mxu0
      %v1730 = vadd.f32 %v1569, %v1729
      %v1731 = vpop.f32.mrb[0].mxu0
      %v1732 = vpop.f32.mrb[0].mxu0
      %v1733 = vadd.f32 %v1572, %v1732
      %v1734 = vpop.f32.mrb[0].mxu0
      %1735 = vmatprep.mubr.bf16.mxu0 %v874
      %1736 = vmatmul.mubr.bf16.gmra.mrb[0].mxu0 %v968
      %v1737 = vpop.f32.mrb[0].mxu0
      %v1738 = vadd.f32 %v1577, %v1737
      %v1739 = vpop.f32.mrb[0].mxu0
      %v1740 = vpop.f32.mrb[0].mxu0
      %v1741 = vadd.f32 %v1580, %v1740
      %v1742 = vpop.f32.mrb[0].mxu0
      %1743 = vmatprep.mubr.bf16.mxu0 %v875
      %1744 = vmatmul.mubr.bf16.gmra.mrb[0].mxu0 %v969
      %v1745 = vpop.f32.mrb[0].mxu0
      %v1746 = vadd.f32 %v1585, %v1745
      %v1747 = vpop.f32.mrb[0].mxu0
      %v1748 = vpop.f32.mrb[0].mxu0
      %v1749 = vadd.f32 %v1588, %v1748
      %v1750 = vpop.f32.mrb[0].mxu0
      %1751 = vmatprep.mubr.bf16.mxu0 %v976
      %1752 = vmatmul.mubr.bf16.gmra.mrb[0].mxu0 %v970
      %v1753 = vpop.f32.mrb[0].mxu0
      %v1754 = vadd.f32 %v1593, %v1753
      %v1755 = vpop.f32.mrb[0].mxu0
      %v1756 = vpop.f32.mrb[0].mxu0
      %v1757 = vadd.f32 %v1596, %v1756
      %v1758 = vpop.f32.mrb[0].mxu0
      %1759 = vmatprep.mubr.bf16.mxu0 %v977
      %1760 = vmatmul.mubr.bf16.gmra.mrb[0].mxu0 %v971
      %v1761 = vpop.f32.mrb[0].mxu0
      %v1762 = vadd.f32 %v1601, %v1761
      %v1763 = vpop.f32.mrb[0].mxu0
      %v1764 = vpop.f32.mrb[0].mxu0
      %v1765 = vadd.f32 %v1604, %v1764
      %v1766 = vpop.f32.mrb[0].mxu0
      %1767 = vdwg.mxu0
      %1768 = vmatprep.subr.bf16.mxu0 0
      %1769 = vmatpush1.bf16.msra.mxu0 %v1334
      %1770 = vmatprep.subr.bf16.mxu0 0
      %1771 = vmatpush1.bf16.msra.mxu0 %v1335
      %1772 = vmatprep.subr.bf16.mxu0 0
      %1773 = vmatpush1.bf16.msra.mxu0 %v1336
      %1774 = vmatprep.subr.bf16.mxu0 0
      %1775 = vmatpush1.bf16.msra.mxu0 %v1337
      %1776 = vmatprep.subr.bf16.mxu0 0
      %1777 = vmatpush1.bf16.msra.mxu0 %v1338
      %1778 = vmatprep.subr.bf16.mxu0 0
      %1779 = vmatpush1.bf16.msra.mxu0 %v1339
      %1780 = vmatprep.subr.bf16.mxu0 0
      %1781 = vmatpush1.bf16.msra.mxu0 %v1340
      %1782 = vmatprep.subr.bf16.mxu0 0
      %1783 = vmatpush1.bf16.msra.mxu0 %v1341
      %1784 = vmatprep.subr.bf16.mxu0 0
      %1785 = vmatpush1.bf16.msra.mxu0 %v1342
      %1786 = vmatprep.subr.bf16.mxu0 0
      %1787 = vmatpush1.bf16.msra.mxu0 %v1343
      %1788 = vmatprep.subr.bf16.mxu0 0
      %1789 = vmatpush1.bf16.msra.mxu0 %v1344
      %1790 = vmatprep.subr.bf16.mxu0 0
      %1791 = vmatpush1.bf16.msra.mxu0 %v1345
      %1792 = vmatprep.subr.bf16.mxu0 0
      %1793 = vmatpush1.bf16.msra.mxu0 %v1346
      %1794 = vmatprep.subr.bf16.mxu0 0
      %1795 = vmatpush1.bf16.msra.mxu0 %v1347
      %1796 = vmatprep.subr.bf16.mxu0 0
      %1797 = vmatpush1.bf16.msra.mxu0 %v1348
      %1798 = vmatprep.subr.bf16.mxu0 0
      %1799 = vmatpush1.bf16.msra.mxu0 %v1349
      %1800 = vmatprep.mubr.bf16.mxu0 %v958
      %1801 = vmatmul.mubr.bf16.gmra.mrb[0].mxu0 %v910
      %v1802 = vpop.f32.mrb[0].mxu0
      %v1803 = vadd.f32 %v1642, %v1802
      %v1804 = vpop.f32.mrb[0].mxu0
      %v1805 = vpop.f32.mrb[0].mxu0
      %v1806 = vadd.f32 %v1645, %v1805
      %v1807 = vpop.f32.mrb[0].mxu0
      %1808 = vmatprep.mubr.bf16.mxu0 %v959
      %1809 = vmatmul.mubr.bf16.gmra.mrb[0].mxu0 %v911
      %v1810 = vpop.f32.mrb[0].mxu0
      %v1811 = vadd.f32 %v1650, %v1810
      %v1812 = vpop.f32.mrb[0].mxu0
      %v1813 = vpop.f32.mrb[0].mxu0
      %v1814 = vadd.f32 %v1653, %v1813
      %v1815 = vpop.f32.mrb[0].mxu0
      %1816 = vmatprep.mubr.bf16.mxu0 %v960
      %1817 = vmatmul.mubr.bf16.gmra.mrb[0].mxu0 %v912
      %v1818 = vpop.f32.mrb[0].mxu0
      %v1819 = vadd.f32 %v1658, %v1818
      %v1820 = vpop.f32.mrb[0].mxu0
      %v1821 = vpop.f32.mrb[0].mxu0
      %v1822 = vadd.f32 %v1661, %v1821
      %v1823 = vpop.f32.mrb[0].mxu0
      %1824 = vmatprep.mubr.bf16.mxu0 %v961
      %1825 = vmatmul.mubr.bf16.gmra.mrb[0].mxu0 %v913
      %v1826 = vpop.f32.mrb[0].mxu0
      %v1827 = vadd.f32 %v1666, %v1826
      %v1828 = vpop.f32.mrb[0].mxu0
      %v1829 = vpop.f32.mrb[0].mxu0
      %v1830 = vadd.f32 %v1669, %v1829
      %v1831 = vpop.f32.mrb[0].mxu0
      %1832 = vmatprep.mubr.bf16.mxu0 %v962
      %1833 = vmatmul.mubr.bf16.gmra.mrb[0].mxu0 %v914
      %v1834 = vpop.f32.mrb[0].mxu0
      %v1835 = vadd.f32 %v1674, %v1834
      %v1836 = vpop.f32.mrb[0].mxu0
      %v1837 = vpop.f32.mrb[0].mxu0
      %v1838 = vadd.f32 %v1677, %v1837
      %v1839 = vpop.f32.mrb[0].mxu0
      %1840 = vmatprep.mubr.bf16.mxu0 %v963
      %1841 = vmatmul.mubr.bf16.gmra.mrb[0].mxu0 %v915
      %v1842 = vpop.f32.mrb[0].mxu0
      %v1843 = vadd.f32 %v1682, %v1842
      %v1844 = vpop.f32.mrb[0].mxu0
      %v1845 = vpop.f32.mrb[0].mxu0
      %v1846 = vadd.f32 %v1685, %v1845
      %v1847 = vpop.f32.mrb[0].mxu0
      %1848 = vmatprep.mubr.bf16.mxu0 %v964
      %1849 = vmatmul.mubr.bf16.gmra.mrb[0].mxu0 %v916
      %v1850 = vpop.f32.mrb[0].mxu0
      %v1851 = vadd.f32 %v1690, %v1850
      %v1852 = vpop.f32.mrb[0].mxu0
      %v1853 = vpop.f32.mrb[0].mxu0
      %v1854 = vadd.f32 %v1693, %v1853
      %v1855 = vpop.f32.mrb[0].mxu0
      %1856 = vmatprep.mubr.bf16.mxu0 %v965
      %1857 = vmatmul.mubr.bf16.gmra.mrb[0].mxu0 %v917
      %v1858 = vpop.f32.mrb[0].mxu0
      %v1859 = vadd.f32 %v1698, %v1858
      %v1860 = vpop.f32.mrb[0].mxu0
      %v1861 = vpop.f32.mrb[0].mxu0
      %v1862 = vadd.f32 %v1701, %v1861
      %v1863 = vpop.f32.mrb[0].mxu0
      %1864 = vmatprep.mubr.bf16.mxu0 %v966
      %1865 = vmatmul.mubr.bf16.gmra.mrb[0].mxu0 %v918
      %v1866 = vpop.f32.mrb[0].mxu0
      %v1867 = vadd.f32 %v1706, %v1866
      %v1868 = vpop.f32.mrb[0].mxu0
      %v1869 = vpop.f32.mrb[0].mxu0
      %v1870 = vadd.f32 %v1709, %v1869
      %v1871 = vpop.f32.mrb[0].mxu0
      %1872 = vmatprep.mubr.bf16.mxu0 %v967
      %1873 = vmatmul.mubr.bf16.gmra.mrb[0].mxu0 %v919
      %v1874 = vpop.f32.mrb[0].mxu0
      %v1875 = vadd.f32 %v1714, %v1874
      %v1876 = vpop.f32.mrb[0].mxu0
      %v1877 = vpop.f32.mrb[0].mxu0
      %v1878 = vadd.f32 %v1717, %v1877
      %v1879 = vpop.f32.mrb[0].mxu0
      %1880 = vmatprep.mubr.bf16.mxu0 %v968
      %1881 = vmatmul.mubr.bf16.gmra.mrb[0].mxu0 %v920
      %v1882 = vpop.f32.mrb[0].mxu0
      %v1883 = vadd.f32 %v1722, %v1882
      %v1884 = vpop.f32.mrb[0].mxu0
      %v1885 = vpop.f32.mrb[0].mxu0
      %v1886 = vadd.f32 %v1725, %v1885
      %v1887 = vpop.f32.mrb[0].mxu0
      %1888 = vmatprep.mubr.bf16.mxu0 %v969
      %1889 = vmatmul.mubr.bf16.gmra.mrb[0].mxu0 %v921
      %v1890 = vpop.f32.mrb[0].mxu0
      %v1891 = vadd.f32 %v1730, %v1890
      %v1892 = vpop.f32.mrb[0].mxu0
      %v1893 = vpop.f32.mrb[0].mxu0
      %v1894 = vadd.f32 %v1733, %v1893
      %v1895 = vpop.f32.mrb[0].mxu0
      %1896 = vmatprep.mubr.bf16.mxu0 %v970
      %1897 = vmatmul.mubr.bf16.gmra.mrb[0].mxu0 %v922
      %v1898 = vpop.f32.mrb[0].mxu0
      %v1899 = vadd.f32 %v1738, %v1898
      %v1900 = vpop.f32.mrb[0].mxu0
      %v1901 = vpop.f32.mrb[0].mxu0
      %v1902 = vadd.f32 %v1741, %v1901
      %v1903 = vpop.f32.mrb[0].mxu0
      %1904 = vmatprep.mubr.bf16.mxu0 %v971
      %1905 = vmatmul.mubr.bf16.gmra.mrb[0].mxu0 %v923
      %v1906 = vpop.f32.mrb[0].mxu0
      %v1907 = vadd.f32 %v1746, %v1906
      %v1908 = vpop.f32.mrb[0].mxu0
      %v1909 = vpop.f32.mrb[0].mxu0
      %v1910 = vadd.f32 %v1749, %v1909
      %v1911 = vpop.f32.mrb[0].mxu0
      %1912 = vmatprep.mubr.bf16.mxu0 %v988
      %1913 = vmatmul.mubr.bf16.gmra.mrb[0].mxu0 %v982
      %v1914 = vpop.f32.mrb[0].mxu0
      %v1915 = vadd.f32 %v1754, %v1914
      %v1916 = vpop.f32.mrb[0].mxu0
      %v1917 = vpop.f32.mrb[0].mxu0
      %v1918 = vadd.f32 %v1757, %v1917
      %v1919 = vpop.f32.mrb[0].mxu0
      %1920 = vmatprep.mubr.bf16.mxu0 %v989
      %1921 = vmatmul.mubr.bf16.gmra.mrb[0].mxu0 %v983
      %v1922 = vpop.f32.mrb[0].mxu0
      %v1923 = vadd.f32 %v1762, %v1922
      %v1924 = vpop.f32.mrb[0].mxu0
      %v1925 = vpop.f32.mrb[0].mxu0
      %v1926 = vadd.f32 %v1765, %v1925
      %v1927 = vpop.f32.mrb[0].mxu0
      %1928 = vdwg.mxu0
      %1929 = vmatprep.subr.bf16.mxu0 0
      %1930 = vmatpush1.bf16.msra.mxu0 %v1350
      %1931 = vmatprep.subr.bf16.mxu0 0
      %1932 = vmatpush1.bf16.msra.mxu0 %v1351
      %1933 = vmatprep.subr.bf16.mxu0 0
      %1934 = vmatpush1.bf16.msra.mxu0 %v1352
      %1935 = vmatprep.subr.bf16.mxu0 0
      %1936 = vmatpush1.bf16.msra.mxu0 %v1353
      %1937 = vmatprep.subr.bf16.mxu0 0
      %1938 = vmatpush1.bf16.msra.mxu0 %v1354
      %1939 = vmatprep.subr.bf16.mxu0 0
      %1940 = vmatpush1.bf16.msra.mxu0 %v1355
      %1941 = vmatprep.subr.bf16.mxu0 0
      %1942 = vmatpush1.bf16.msra.mxu0 %v1356
      %1943 = vmatprep.subr.bf16.mxu0 0
      %1944 = vmatpush1.bf16.msra.mxu0 %v1357
      %1945 = vmatprep.subr.bf16.mxu0 0
      %1946 = vmatpush1.bf16.msra.mxu0 %v1358
      %1947 = vmatprep.subr.bf16.mxu0 0
      %1948 = vmatpush1.bf16.msra.mxu0 %v1359
      %1949 = vmatprep.subr.bf16.mxu0 0
      %1950 = vmatpush1.bf16.msra.mxu0 %v1360
      %1951 = vmatprep.subr.bf16.mxu0 0
      %1952 = vmatpush1.bf16.msra.mxu0 %v1361
      %1953 = vmatprep.subr.bf16.mxu0 0
      %1954 = vmatpush1.bf16.msra.mxu0 %v1362
      %1955 = vmatprep.subr.bf16.mxu0 0
      %1956 = vmatpush1.bf16.msra.mxu0 %v1363
      %1957 = vmatprep.subr.bf16.mxu0 0
      %1958 = vmatpush1.bf16.msra.mxu0 %v1364
      %1959 = vmatprep.subr.bf16.mxu0 0
      %1960 = vmatpush1.bf16.msra.mxu0 %v1365
      %1961 = vmatprep.mubr.bf16.mxu0 %v912
      %1962 = vmatmul.mubr.bf16.gmra.mrb[0].mxu0 %v864
      %v1963 = vpop.f32.mrb[0].mxu0
      %v1964 = vadd.f32 %v1803, %v1963
      %v1965 = vpop.f32.mrb[0].mxu0
      %v1966 = vpop.f32.mrb[0].mxu0
      %v1967 = vadd.f32 %v1806, %v1966
      %v1968 = vpop.f32.mrb[0].mxu0
      %1969 = vmatprep.mubr.bf16.mxu0 %v913
      %1970 = vmatmul.mubr.bf16.gmra.mrb[0].mxu0 %v865
      %v1971 = vpop.f32.mrb[0].mxu0
      %v1972 = vadd.f32 %v1811, %v1971
      %v1973 = vpop.f32.mrb[0].mxu0
      %v1974 = vpop.f32.mrb[0].mxu0
      %v1975 = vadd.f32 %v1814, %v1974
      %v1976 = vpop.f32.mrb[0].mxu0
      %1977 = vmatprep.mubr.bf16.mxu0 %v914
      %1978 = vmatmul.mubr.bf16.gmra.mrb[0].mxu0 %v866
      %v1979 = vpop.f32.mrb[0].mxu0
      %v1980 = vadd.f32 %v1819, %v1979
      %v1981 = vpop.f32.mrb[0].mxu0
      %v1982 = vpop.f32.mrb[0].mxu0
      %v1983 = vadd.f32 %v1822, %v1982
      %v1984 = vpop.f32.mrb[0].mxu0
      %1985 = vmatprep.mubr.bf16.mxu0 %v915
      %1986 = vmatmul.mubr.bf16.gmra.mrb[0].mxu0 %v867
      %v1987 = vpop.f32.mrb[0].mxu0
      %v1988 = vadd.f32 %v1827, %v1987
      %v1989 = vpop.f32.mrb[0].mxu0
      %v1990 = vpop.f32.mrb[0].mxu0
      %v1991 = vadd.f32 %v1830, %v1990
      %v1992 = vpop.f32.mrb[0].mxu0
      %1993 = vmatprep.mubr.bf16.mxu0 %v916
      %1994 = vmatmul.mubr.bf16.gmra.mrb[0].mxu0 %v868
      %v1995 = vpop.f32.mrb[0].mxu0
      %v1996 = vadd.f32 %v1835, %v1995
      %v1997 = vpop.f32.mrb[0].mxu0
      %v1998 = vpop.f32.mrb[0].mxu0
      %v1999 = vadd.f32 %v1838, %v1998
      %v2000 = vpop.f32.mrb[0].mxu0
      %2001 = vmatprep.mubr.bf16.mxu0 %v917
      %2002 = vmatmul.mubr.bf16.gmra.mrb[0].mxu0 %v869
      %v2003 = vpop.f32.mrb[0].mxu0
      %v2004 = vadd.f32 %v1843, %v2003
      %v2005 = vpop.f32.mrb[0].mxu0
      %v2006 = vpop.f32.mrb[0].mxu0
      %v2007 = vadd.f32 %v1846, %v2006
      %v2008 = vpop.f32.mrb[0].mxu0
      %2009 = vmatprep.mubr.bf16.mxu0 %v918
      %2010 = vmatmul.mubr.bf16.gmra.mrb[0].mxu0 %v870
      %v2011 = vpop.f32.mrb[0].mxu0
      %v2012 = vadd.f32 %v1851, %v2011
      %v2013 = vpop.f32.mrb[0].mxu0
      %v2014 = vpop.f32.mrb[0].mxu0
      %v2015 = vadd.f32 %v1854, %v2014
      %v2016 = vpop.f32.mrb[0].mxu0
      %2017 = vmatprep.mubr.bf16.mxu0 %v919
      %2018 = vmatmul.mubr.bf16.gmra.mrb[0].mxu0 %v871
      %v2019 = vpop.f32.mrb[0].mxu0
      %v2020 = vadd.f32 %v1859, %v2019
      %v2021 = vpop.f32.mrb[0].mxu0
      %v2022 = vpop.f32.mrb[0].mxu0
      %v2023 = vadd.f32 %v1862, %v2022
      %v2024 = vpop.f32.mrb[0].mxu0
      %2025 = vmatprep.mubr.bf16.mxu0 %v920
      %2026 = vmatmul.mubr.bf16.gmra.mrb[0].mxu0 %v872
      %v2027 = vpop.f32.mrb[0].mxu0
      %v2028 = vadd.f32 %v1867, %v2027
      %v2029 = vpop.f32.mrb[0].mxu0
      %v2030 = vpop.f32.mrb[0].mxu0
      %v2031 = vadd.f32 %v1870, %v2030
      %v2032 = vpop.f32.mrb[0].mxu0
      %2033 = vmatprep.mubr.bf16.mxu0 %v921
      %2034 = vmatmul.mubr.bf16.gmra.mrb[0].mxu0 %v873
      %v2035 = vpop.f32.mrb[0].mxu0
      %v2036 = vadd.f32 %v1875, %v2035
      %v2037 = vpop.f32.mrb[0].mxu0
      %v2038 = vpop.f32.mrb[0].mxu0
      %v2039 = vadd.f32 %v1878, %v2038
      %v2040 = vpop.f32.mrb[0].mxu0
      %2041 = vmatprep.mubr.bf16.mxu0 %v922
      %2042 = vmatmul.mubr.bf16.gmra.mrb[0].mxu0 %v874
      %v2043 = vpop.f32.mrb[0].mxu0
      %v2044 = vadd.f32 %v1883, %v2043
      %v2045 = vpop.f32.mrb[0].mxu0
      %v2046 = vpop.f32.mrb[0].mxu0
      %v2047 = vadd.f32 %v1886, %v2046
      %v2048 = vpop.f32.mrb[0].mxu0
      %2049 = vmatprep.mubr.bf16.mxu0 %v923
      %2050 = vmatmul.mubr.bf16.gmra.mrb[0].mxu0 %v875
      %v2051 = vpop.f32.mrb[0].mxu0
      %v2052 = vadd.f32 %v1891, %v2051
      %v2053 = vpop.f32.mrb[0].mxu0
      %v2054 = vpop.f32.mrb[0].mxu0
      %v2055 = vadd.f32 %v1894, %v2054
      %v2056 = vpop.f32.mrb[0].mxu0
      %2057 = vmatprep.mubr.bf16.mxu0 %v982
      %2058 = vmatmul.mubr.bf16.gmra.mrb[0].mxu0 %v976
      %v2059 = vpop.f32.mrb[0].mxu0
      %v2060 = vadd.f32 %v1899, %v2059
      %v2061 = vpop.f32.mrb[0].mxu0
      %v2062 = vpop.f32.mrb[0].mxu0
      %v2063 = vadd.f32 %v1902, %v2062
      %v2064 = vpop.f32.mrb[0].mxu0
      %2065 = vmatprep.mubr.bf16.mxu0 %v983
      %2066 = vmatmul.mubr.bf16.gmra.mrb[0].mxu0 %v977
      %v2067 = vpop.f32.mrb[0].mxu0
      %v2068 = vadd.f32 %v1907, %v2067
      %v2069 = vpop.f32.mrb[0].mxu0
      %v2070 = vpop.f32.mrb[0].mxu0
      %v2071 = vadd.f32 %v1910, %v2070
      %v2072 = vpop.f32.mrb[0].mxu0
      %2073 = vmatprep.mubr.bf16.mxu0 %v1000
      %2074 = vmatmul.mubr.bf16.gmra.mrb[0].mxu0 %v994
      %v2075 = vpop.f32.mrb[0].mxu0
      %v2076 = vadd.f32 %v1915, %v2075
      %v2077 = vpop.f32.mrb[0].mxu0
      %v2078 = vpop.f32.mrb[0].mxu0
      %v2079 = vadd.f32 %v1918, %v2078
      %v2080 = vpop.f32.mrb[0].mxu0
      %2081 = vmatprep.mubr.bf16.mxu0 %v1001
      %2082 = vmatmul.mubr.bf16.gmra.mrb[0].mxu0 %v995
      %v2083 = vpop.f32.mrb[0].mxu0
      %v2084 = vadd.f32 %v1923, %v2083
      %v2085 = vpop.f32.mrb[0].mxu0
      %v2086 = vpop.f32.mrb[0].mxu0
      %v2087 = vadd.f32 %v1926, %v2086
      %v2088 = vpop.f32.mrb[0].mxu0
      %2089 = vdwg.mxu0
      %2090 = vmatprep.subr.bf16.mxu0 0
      %2091 = vmatpush1.bf16.msra.mxu0 %v1366
      %2092 = vmatprep.subr.bf16.mxu0 0
      %2093 = vmatpush1.bf16.msra.mxu0 %v1367
      %2094 = vmatprep.subr.bf16.mxu0 0
      %2095 = vmatpush1.bf16.msra.mxu0 %v1368
      %2096 = vmatprep.subr.bf16.mxu0 0
      %2097 = vmatpush1.bf16.msra.mxu0 %v1369
      %2098 = vmatprep.subr.bf16.mxu0 0
      %2099 = vmatpush1.bf16.msra.mxu0 %v1370
      %2100 = vmatprep.subr.bf16.mxu0 0
      %2101 = vmatpush1.bf16.msra.mxu0 %v1371
      %2102 = vmatprep.subr.bf16.mxu0 0
      %2103 = vmatpush1.bf16.msra.mxu0 %v1372
      %2104 = vmatprep.subr.bf16.mxu0 0
      %2105 = vmatpush1.bf16.msra.mxu0 %v1373
      %2106 = vmatprep.subr.bf16.mxu0 0
      %2107 = vmatpush1.bf16.msra.mxu0 0
      %2108 = vmatprep.subr.bf16.mxu0 0
      %2109 = vmatpush1.bf16.msra.mxu0 0
      %2110 = vmatprep.subr.bf16.mxu0 0
      %2111 = vmatpush1.bf16.msra.mxu0 0
      %2112 = vmatprep.subr.bf16.mxu0 0
      %2113 = vmatpush1.bf16.msra.mxu0 0
      %2114 = vmatprep.subr.bf16.mxu0 0
      %2115 = vmatpush1.bf16.msra.mxu0 0
      %2116 = vmatprep.subr.bf16.mxu0 0
      %2117 = vmatpush1.bf16.msra.mxu0 0
      %2118 = vmatprep.subr.bf16.mxu0 0
      %2119 = vmatpush1.bf16.msra.mxu0 0
      %2120 = vmatprep.subr.bf16.mxu0 0
      %2121 = vmatpush1.bf16.msra.mxu0 0
      %2122 = vmatprep.mubr.bf16.mxu0 0
      %2123 = vmatmul.mubr.bf16.gmra.mrb[0].mxu0 %v960
      %v2124 = vpop.f32.mrb[0].mxu0
      %v2125 = vadd.f32 %v1964, %v2124
      %v2126 = vpop.f32.mrb[0].mxu0
      %v2127 = vpop.f32.mrb[0].mxu0
      %v2128 = vadd.f32 %v1967, %v2127
      %v2129 = vpop.f32.mrb[0].mxu0
      %2130 = vmatprep.mubr.bf16.mxu0 0
      %2131 = vmatmul.mubr.bf16.gmra.mrb[0].mxu0 %v961
      %v2132 = vpop.f32.mrb[0].mxu0
      %v2133 = vadd.f32 %v1972, %v2132
      %v2134 = vpop.f32.mrb[0].mxu0
      %v2135 = vpop.f32.mrb[0].mxu0
      %v2136 = vadd.f32 %v1975, %v2135
      %v2137 = vpop.f32.mrb[0].mxu0
      %2138 = vmatprep.mubr.bf16.mxu0 0
      %2139 = vmatmul.mubr.bf16.gmra.mrb[0].mxu0 %v962
      %v2140 = vpop.f32.mrb[0].mxu0
      %v2141 = vadd.f32 %v1980, %v2140
      %v2142 = vpop.f32.mrb[0].mxu0
      %v2143 = vpop.f32.mrb[0].mxu0
      %v2144 = vadd.f32 %v1983, %v2143
      %v2145 = vpop.f32.mrb[0].mxu0
      %2146 = vmatprep.mubr.bf16.mxu0 0
      %2147 = vmatmul.mubr.bf16.gmra.mrb[0].mxu0 %v963
      %v2148 = vpop.f32.mrb[0].mxu0
      %v2149 = vadd.f32 %v1988, %v2148
      %v2150 = vpop.f32.mrb[0].mxu0
      %v2151 = vpop.f32.mrb[0].mxu0
      %v2152 = vadd.f32 %v1991, %v2151
      %v2153 = vpop.f32.mrb[0].mxu0
      %2154 = vmatprep.mubr.bf16.mxu0 0
      %2155 = vmatmul.mubr.bf16.gmra.mrb[0].mxu0 %v964
      %v2156 = vpop.f32.mrb[0].mxu0
      %v2157 = vadd.f32 %v1996, %v2156
      %v2158 = vpop.f32.mrb[0].mxu0
      %v2159 = vpop.f32.mrb[0].mxu0
      %v2160 = vadd.f32 %v1999, %v2159
      %v2161 = vpop.f32.mrb[0].mxu0
      %2162 = vmatprep.mubr.bf16.mxu0 0
      %2163 = vmatmul.mubr.bf16.gmra.mrb[0].mxu0 %v965
      %v2164 = vpop.f32.mrb[0].mxu0
      %v2165 = vadd.f32 %v2004, %v2164
      %v2166 = vpop.f32.mrb[0].mxu0
      %v2167 = vpop.f32.mrb[0].mxu0
      %v2168 = vadd.f32 %v2007, %v2167
      %v2169 = vpop.f32.mrb[0].mxu0
      %2170 = vmatprep.mubr.bf16.mxu0 0
      %2171 = vmatmul.mubr.bf16.gmra.mrb[0].mxu0 %v966
      %v2172 = vpop.f32.mrb[0].mxu0
      %v2173 = vadd.f32 %v2012, %v2172
      %v2174 = vpop.f32.mrb[0].mxu0
      %v2175 = vpop.f32.mrb[0].mxu0
      %v2176 = vadd.f32 %v2015, %v2175
      %v2177 = vpop.f32.mrb[0].mxu0
      %2178 = vmatprep.mubr.bf16.mxu0 0
      %2179 = vmatmul.mubr.bf16.gmra.mrb[0].mxu0 %v967
      %v2180 = vpop.f32.mrb[0].mxu0
      %v2181 = vadd.f32 %v2020, %v2180
      %v2182 = vpop.f32.mrb[0].mxu0
      %v2183 = vpop.f32.mrb[0].mxu0
      %v2184 = vadd.f32 %v2023, %v2183
      %v2185 = vpop.f32.mrb[0].mxu0
      %2186 = vmatprep.mubr.bf16.mxu0 0
      %2187 = vmatmul.mubr.bf16.gmra.mrb[0].mxu0 %v968
      %v2188 = vpop.f32.mrb[0].mxu0
      %v2189 = vadd.f32 %v2028, %v2188
      %v2190 = vpop.f32.mrb[0].mxu0
      %v2191 = vpop.f32.mrb[0].mxu0
      %v2192 = vadd.f32 %v2031, %v2191
      %v2193 = vpop.f32.mrb[0].mxu0
      %2194 = vmatprep.mubr.bf16.mxu0 0
      %2195 = vmatmul.mubr.bf16.gmra.mrb[0].mxu0 %v969
      %v2196 = vpop.f32.mrb[0].mxu0
      %v2197 = vadd.f32 %v2036, %v2196
      %v2198 = vpop.f32.mrb[0].mxu0
      %v2199 = vpop.f32.mrb[0].mxu0
      %v2200 = vadd.f32 %v2039, %v2199
      %v2201 = vpop.f32.mrb[0].mxu0
      %2202 = vmatprep.mubr.bf16.mxu0 0
      %2203 = vmatmul.mubr.bf16.gmra.mrb[0].mxu0 %v970
      %v2204 = vpop.f32.mrb[0].mxu0
      %v2205 = vadd.f32 %v2044, %v2204
      %v2206 = vpop.f32.mrb[0].mxu0
      %v2207 = vpop.f32.mrb[0].mxu0
      %v2208 = vadd.f32 %v2047, %v2207
      %v2209 = vpop.f32.mrb[0].mxu0
      %2210 = vmatprep.mubr.bf16.mxu0 0
      %2211 = vmatmul.mubr.bf16.gmra.mrb[0].mxu0 %v971
      %v2212 = vpop.f32.mrb[0].mxu0
      %v2213 = vadd.f32 %v2052, %v2212
      %v2214 = vpop.f32.mrb[0].mxu0
      %v2215 = vpop.f32.mrb[0].mxu0
      %v2216 = vadd.f32 %v2055, %v2215
      %v2217 = vpop.f32.mrb[0].mxu0
      %2218 = vmatprep.mubr.bf16.mxu0 0
      %2219 = vmatmul.mubr.bf16.gmra.mrb[0].mxu0 %v988
      %v2220 = vpop.f32.mrb[0].mxu0
      %v2221 = vadd.f32 %v2060, %v2220
      %v2222 = vpop.f32.mrb[0].mxu0
      %v2223 = vpop.f32.mrb[0].mxu0
      %v2224 = vadd.f32 %v2063, %v2223
      %v2225 = vpop.f32.mrb[0].mxu0
      %2226 = vmatprep.mubr.bf16.mxu0 0
      %2227 = vmatmul.mubr.bf16.gmra.mrb[0].mxu0 %v989
      %v2228 = vpop.f32.mrb[0].mxu0
      %v2229 = vadd.f32 %v2068, %v2228
      %v2230 = vpop.f32.mrb[0].mxu0
      %v2231 = vpop.f32.mrb[0].mxu0
      %v2232 = vadd.f32 %v2071, %v2231
      %v2233 = vpop.f32.mrb[0].mxu0
      %2234 = vmatprep.mubr.bf16.mxu0 0
      %2235 = vmatmul.mubr.bf16.gmra.mrb[0].mxu0 %v1006
      %v2236 = vpop.f32.mrb[0].mxu0
      %v2237 = vadd.f32 %v2076, %v2236
      %v2238 = vpop.f32.mrb[0].mxu0
      %v2239 = vpop.f32.mrb[0].mxu0
      %v2240 = vadd.f32 %v2079, %v2239
      %v2241 = vpop.f32.mrb[0].mxu0
      %2242 = vmatprep.mubr.bf16.mxu0 0
      %2243 = vmatmul.mubr.bf16.gmra.mrb[0].mxu0 %v1007
      %v2244 = vpop.f32.mrb[0].mxu0
      %v2245 = vadd.f32 %v2084, %v2244
      %v2246 = vpop.f32.mrb[0].mxu0
      %v2247 = vpop.f32.mrb[0].mxu0
      %v2248 = vadd.f32 %v2087, %v2247
      %v2249 = vpop.f32.mrb[0].mxu0
      %2250 = vdwg.mxu0
      %v2251 = vmax.f32 %v2125, 0.0
      %v2252 = vmax.f32 %v2128, 0.0
      %v2253 = vmax.f32 %v2133, 0.0
      %v2254 = vmax.f32 %v2136, 0.0
      %v2255 = vmax.f32 %v2141, 0.0
      %v2256 = vmax.f32 %v2144, 0.0
      %v2257 = vmax.f32 %v2149, 0.0
      %v2258 = vmax.f32 %v2152, 0.0
      %v2259 = vmax.f32 %v2157, 0.0
      %v2260 = vmax.f32 %v2160, 0.0
      %v2261 = vmax.f32 %v2165, 0.0
      %v2262 = vmax.f32 %v2168, 0.0
      %v2263 = vmax.f32 %v2173, 0.0
      %v2264 = vmax.f32 %v2176, 0.0
      %v2265 = vmax.f32 %v2181, 0.0
      %v2266 = vmax.f32 %v2184, 0.0
      %v2267 = vmax.f32 %v2189, 0.0
      %v2268 = vmax.f32 %v2192, 0.0
      %v2269 = vmax.f32 %v2197, 0.0
      %v2270 = vmax.f32 %v2200, 0.0
      %v2271 = vmax.f32 %v2205, 0.0
      %v2272 = vmax.f32 %v2208, 0.0
      %v2273 = vmax.f32 %v2213, 0.0
      %v2274 = vmax.f32 %v2216, 0.0
      %v2275 = vmax.f32 %v2221, 0.0
      %v2276 = vmax.f32 %v2224, 0.0
      %v2277 = vmax.f32 %v2229, 0.0
      %v2278 = vmax.f32 %v2232, 0.0
      %v2279 = vmax.f32 %v2237, 0.0
      %v2280 = vmax.f32 %v2240, 0.0
      %v2281 = vmax.f32 %v2245, 0.0
      %v2282 = vmax.f32 %v2248, 0.0
      %v2283 = vsel %vm651, %v2251, 0.0
      %v2284 = vsel %vm652, %v2252, 0.0
      %v2285 = vsel %vm653, %v2253, 0.0
      %v2286 = vsel %vm654, %v2254, 0.0
      %v2287 = vsel %vm655, %v2255, 0.0
      %v2288 = vsel %vm656, %v2256, 0.0
      %v2289 = vsel %vm657, %v2257, 0.0
      %v2290 = vsel %vm658, %v2258, 0.0
      %v2291 = vsel %vm659, %v2259, 0.0
      %v2292 = vsel %vm660, %v2260, 0.0
      %v2293 = vsel %vm661, %v2261, 0.0
      %v2294 = vsel %vm662, %v2262, 0.0
      %v2295 = vsel %vm663, %v2263, 0.0
      %v2296 = vsel %vm664, %v2264, 0.0
      %v2297 = vsel %vm665, %v2265, 0.0
      %v2298 = vsel %vm666, %v2266, 0.0
      %v2299 = vsel %vm667, %v2267, 0.0
      %v2300 = vsel %vm668, %v2268, 0.0
      %v2301 = vsel %vm669, %v2269, 0.0
      %v2302 = vsel %vm670, %v2270, 0.0
      %v2303 = vsel %vm671, %v2271, 0.0
      %v2304 = vsel %vm672, %v2272, 0.0
      %v2305 = vsel %vm673, %v2273, 0.0
      %v2306 = vsel %vm674, %v2274, 0.0
      %v2307 = vsel %vm675, %v2275, 0.0
      %v2308 = vsel %vm676, %v2276, 0.0
      %v2309 = vsel %vm677, %v2277, 0.0
      %v2310 = vsel %vm678, %v2278, 0.0
      %v2311 = vsel %vm679, %v2279, 0.0
      %v2312 = vsel %vm680, %v2280, 0.0
      %v2313 = vsel %vm681, %v2281, 0.0
      %v2314 = vsel %vm682, %v2282, 0.0
      %v2315 = vpack.c.bf16 %v2284, %v2283
      %v2316 = vpack.c.bf16 %v2286, %v2285
      %v2317 = vpack.c.bf16 %v2288, %v2287
      %v2318 = vpack.c.bf16 %v2290, %v2289
      %v2319 = vpack.c.bf16 %v2292, %v2291
      %v2320 = vpack.c.bf16 %v2294, %v2293
      %v2321 = vpack.c.bf16 %v2296, %v2295
      %v2322 = vpack.c.bf16 %v2298, %v2297
      %v2323 = vpack.c.bf16 %v2300, %v2299
      %v2324 = vpack.c.bf16 %v2302, %v2301
      %v2325 = vpack.c.bf16 %v2304, %v2303
      %v2326 = vpack.c.bf16 %v2306, %v2305
      %v2327 = vpack.c.bf16 %v2308, %v2307
      %v2328 = vpack.c.bf16 %v2310, %v2309
      %v2329 = vpack.c.bf16 %v2312, %v2311
      %v2330 = vpack.c.bf16 %v2314, %v2313
      %2331 = vst [vmem:[#allocation2 + $0x20] sm:$0xff] %v2315
      %2332 = vst [vmem:[#allocation2 + $0x28] sm:$0xff] %v2316
      %2333 = vst [vmem:[#allocation2 + $0x30] sm:$0xff] %v2317
      %2334 = vst [vmem:[#allocation2 + $0x38] sm:$0xff] %v2318
      %2335 = vst [vmem:[#allocation2 + $0x40] sm:$0xff] %v2319
      %2336 = vst [vmem:[#allocation2 + $0x48] sm:$0xff] %v2320
      %2337 = vst [vmem:[#allocation2 + $0x50] sm:$0xff] %v2321
      %2338 = vst [vmem:[#allocation2 + $0x58] sm:$0xff] %v2322
      %2339 = vst [vmem:[#allocation2 + $0x60] sm:$0xff] %v2323
      %2340 = vst [vmem:[#allocation2 + $0x68] sm:$0xff] %v2324
      %2341 = vst [vmem:[#allocation2 + $0x70] sm:$0xff] %v2325
      %2342 = vst [vmem:[#allocation2 + $0x78] sm:$0xff] %v2326
      %2343 = vst [vmem:[#allocation2 + $0x80] sm:$0xff] %v2327
      %2344 = vst [vmem:[#allocation2 + $0x88] sm:$0xff] %v2328
      %2345 = vst [vmem:[#allocation2 + $0x90] sm:$0xff] %v2329
      %2346 = vst [vmem:[#allocation2 + $0x98] sm:$0xff] %v2330
      %v2347 = vld [vmem:[%s219 + $0x11f] sm:$0xff]
      %v2348 = vld [vmem:[%s219 + $0x127] sm:$0xff]
      %v2349 = vld [vmem:[%s219 + $0x12f] sm:$0xff]
      %v2350 = vld [vmem:[%s219 + $0x137] sm:$0xff]
      %v2351 = vld [vmem:[%s219 + $0x13f] sm:$0xff]
      %v2352 = vld [vmem:[%s219 + $0x147] sm:$0xff]
      %v2353 = vld [vmem:[%s219 + $0x14f] sm:$0xff]
      %v2354 = vld [vmem:[%s219 + $0x157] sm:$0xff]
      %v2355 = vld [vmem:[%s219 + $0x15f] sm:$0xff]
      %v2356 = vld [vmem:[%s219 + $0x167] sm:$0xff]
      %v2357 = vld [vmem:[%s219 + $0x16f] sm:$0xff]
      %v2358 = vld [vmem:[%s219 + $0x177] sm:$0xff]
      %v2359 = vld [vmem:[%s219 + $0x17f] sm:$0xff]
      %v2360 = vld [vmem:[%s219 + $0x187] sm:$0xff]
      %v2361 = vld [vmem:[%s219 + $0x18f] sm:$0xff]
      %v2362 = vld [vmem:[%s219 + $0x197] sm:$0xff]
      %v2363 = vld [vmem:[%s219 + $0x19f] sm:$0xff]
      %v2364 = vld [vmem:[%s219 + $0x1a7] sm:$0xff]
      %v2365 = vld [vmem:[%s219 + $0x1af] sm:$0xff]
      %v2366 = vld [vmem:[%s219 + $0x1b7] sm:$0xff]
      %v2367 = vld [vmem:[%s219 + $0x1bf] sm:$0xff]
      %v2368 = vld [vmem:[%s219 + $0x1c7] sm:$0xff]
      %v2369 = vld [vmem:[%s219 + $0x1cf] sm:$0xff]
      %v2370 = vld [vmem:[%s219 + $0x1d7] sm:$0xff]
      %v2371 = vld [vmem:[%s219 + $0x1df] sm:$0xff]
      %v2372 = vld [vmem:[%s219 + $0x1e7] sm:$0xff]
      %v2373 = vld [vmem:[%s219 + $0x1ef] sm:$0xff]
      %v2374 = vld [vmem:[%s219 + $0x1f7] sm:$0xff]
      %v2375 = vld [vmem:[%s219 + $0x1ff] sm:$0xff]
      %v2376 = vld [vmem:[%s219 + $0x207] sm:$0xff]
      %v2377 = vld [vmem:[%s219 + $0x20f] sm:$0xff]
      %v2378 = vld [vmem:[%s219 + $0x217] sm:$0xff]
      %v2379 = vpack.c.bf16 %v2348, %v2347
      %v2380 = vpack.c.bf16 %v2350, %v2349
      %v2381 = vpack.c.bf16 %v2352, %v2351
      %v2382 = vpack.c.bf16 %v2354, %v2353
      %v2383 = vpack.c.bf16 %v2356, %v2355
      %v2384 = vpack.c.bf16 %v2358, %v2357
      %v2385 = vpack.c.bf16 %v2360, %v2359
      %v2386 = vpack.c.bf16 %v2362, %v2361
      %v2387 = vpack.c.bf16 %v2364, %v2363
      %v2388 = vpack.c.bf16 %v2366, %v2365
      %v2389 = vpack.c.bf16 %v2368, %v2367
      %v2390 = vpack.c.bf16 %v2370, %v2369
      %v2391 = vpack.c.bf16 %v2372, %v2371
      %v2392 = vpack.c.bf16 %v2374, %v2373
      %v2393 = vpack.c.bf16 %v2376, %v2375
      %v2394 = vpack.c.bf16 %v2378, %v2377
      %v2395 = vld [vmem:[%s219 + $0x120] sm:$0xff]
      %v2396 = vld [vmem:[%s219 + $0x128] sm:$0xff]
      %v2397 = vld [vmem:[%s219 + $0x130] sm:$0xff]
      %v2398 = vld [vmem:[%s219 + $0x138] sm:$0xff]
      %v2399 = vld [vmem:[%s219 + $0x140] sm:$0xff]
      %v2400 = vld [vmem:[%s219 + $0x148] sm:$0xff]
      %v2401 = vld [vmem:[%s219 + $0x150] sm:$0xff]
      %v2402 = vld [vmem:[%s219 + $0x158] sm:$0xff]
      %v2403 = vld [vmem:[%s219 + $0x160] sm:$0xff]
      %v2404 = vld [vmem:[%s219 + $0x168] sm:$0xff]
      %v2405 = vld [vmem:[%s219 + $0x170] sm:$0xff]
      %v2406 = vld [vmem:[%s219 + $0x178] sm:$0xff]
      %v2407 = vld [vmem:[%s219 + $0x180] sm:$0xff]
      %v2408 = vld [vmem:[%s219 + $0x188] sm:$0xff]
      %v2409 = vld [vmem:[%s219 + $0x190] sm:$0xff]
      %v2410 = vld [vmem:[%s219 + $0x198] sm:$0xff]
      %v2411 = vld [vmem:[%s219 + $0x1a0] sm:$0xff]
      %v2412 = vld [vmem:[%s219 + $0x1a8] sm:$0xff]
      %v2413 = vld [vmem:[%s219 + $0x1b0] sm:$0xff]
      %v2414 = vld [vmem:[%s219 + $0x1b8] sm:$0xff]
      %v2415 = vld [vmem:[%s219 + $0x1c0] sm:$0xff]
      %v2416 = vld [vmem:[%s219 + $0x1c8] sm:$0xff]
      %v2417 = vld [vmem:[%s219 + $0x1d0] sm:$0xff]
      %v2418 = vld [vmem:[%s219 + $0x1d8] sm:$0xff]
      %v2419 = vld [vmem:[%s219 + $0x1e0] sm:$0xff]
      %v2420 = vld [vmem:[%s219 + $0x1e8] sm:$0xff]
      %v2421 = vld [vmem:[%s219 + $0x1f0] sm:$0xff]
      %v2422 = vld [vmem:[%s219 + $0x1f8] sm:$0xff]
      %v2423 = vld [vmem:[%s219 + $0x200] sm:$0xff]
      %v2424 = vld [vmem:[%s219 + $0x208] sm:$0xff]
      %v2425 = vld [vmem:[%s219 + $0x210] sm:$0xff]
      %v2426 = vld [vmem:[%s219 + $0x218] sm:$0xff]
      %v2427 = vpack.c.bf16 %v2396, %v2395
      %v2428 = vpack.c.bf16 %v2398, %v2397
      %v2429 = vpack.c.bf16 %v2400, %v2399
      %v2430 = vpack.c.bf16 %v2402, %v2401
      %v2431 = vpack.c.bf16 %v2404, %v2403
      %v2432 = vpack.c.bf16 %v2406, %v2405
      %v2433 = vpack.c.bf16 %v2408, %v2407
      %v2434 = vpack.c.bf16 %v2410, %v2409
      %v2435 = vpack.c.bf16 %v2412, %v2411
      %v2436 = vpack.c.bf16 %v2414, %v2413
      %v2437 = vpack.c.bf16 %v2416, %v2415
      %v2438 = vpack.c.bf16 %v2418, %v2417
      %v2439 = vpack.c.bf16 %v2420, %v2419
      %v2440 = vpack.c.bf16 %v2422, %v2421
      %v2441 = vpack.c.bf16 %v2424, %v2423
      %v2442 = vpack.c.bf16 %v2426, %v2425
      %v2443 = vld [vmem:[%s219 + $0x121] sm:$0xff]
      %v2444 = vld [vmem:[%s219 + $0x129] sm:$0xff]
      %v2445 = vld [vmem:[%s219 + $0x131] sm:$0xff]
      %v2446 = vld [vmem:[%s219 + $0x139] sm:$0xff]
      %v2447 = vld [vmem:[%s219 + $0x141] sm:$0xff]
      %v2448 = vld [vmem:[%s219 + $0x149] sm:$0xff]
      %v2449 = vld [vmem:[%s219 + $0x151] sm:$0xff]
      %v2450 = vld [vmem:[%s219 + $0x159] sm:$0xff]
      %v2451 = vld [vmem:[%s219 + $0x161] sm:$0xff]
      %v2452 = vld [vmem:[%s219 + $0x169] sm:$0xff]
      %v2453 = vld [vmem:[%s219 + $0x171] sm:$0xff]
      %v2454 = vld [vmem:[%s219 + $0x179] sm:$0xff]
      %v2455 = vld [vmem:[%s219 + $0x181] sm:$0xff]
      %v2456 = vld [vmem:[%s219 + $0x189] sm:$0xff]
      %v2457 = vld [vmem:[%s219 + $0x191] sm:$0xff]
      %v2458 = vld [vmem:[%s219 + $0x199] sm:$0xff]
      %v2459 = vld [vmem:[%s219 + $0x1a1] sm:$0xff]
      %v2460 = vld [vmem:[%s219 + $0x1a9] sm:$0xff]
      %v2461 = vld [vmem:[%s219 + $0x1b1] sm:$0xff]
      %v2462 = vld [vmem:[%s219 + $0x1b9] sm:$0xff]
      %v2463 = vld [vmem:[%s219 + $0x1c1] sm:$0xff]
      %v2464 = vld [vmem:[%s219 + $0x1c9] sm:$0xff]
      %v2465 = vld [vmem:[%s219 + $0x1d1] sm:$0xff]
      %v2466 = vld [vmem:[%s219 + $0x1d9] sm:$0xff]
      %v2467 = vld [vmem:[%s219 + $0x1e1] sm:$0xff]
      %v2468 = vld [vmem:[%s219 + $0x1e9] sm:$0xff]
      %v2469 = vld [vmem:[%s219 + $0x1f1] sm:$0xff]
      %v2470 = vld [vmem:[%s219 + $0x1f9] sm:$0xff]
      %v2471 = vld [vmem:[%s219 + $0x201] sm:$0xff]
      %v2472 = vld [vmem:[%s219 + $0x209] sm:$0xff]
      %v2473 = vld [vmem:[%s219 + $0x211] sm:$0xff]
      %v2474 = vld [vmem:[%s219 + $0x219] sm:$0xff]
      %v2475 = vpack.c.bf16 %v2444, %v2443
      %v2476 = vpack.c.bf16 %v2446, %v2445
      %v2477 = vpack.c.bf16 %v2448, %v2447
      %v2478 = vpack.c.bf16 %v2450, %v2449
      %v2479 = vpack.c.bf16 %v2452, %v2451
      %v2480 = vpack.c.bf16 %v2454, %v2453
      %v2481 = vpack.c.bf16 %v2456, %v2455
      %v2482 = vpack.c.bf16 %v2458, %v2457
      %v2483 = vpack.c.bf16 %v2460, %v2459
      %v2484 = vpack.c.bf16 %v2462, %v2461
      %v2485 = vpack.c.bf16 %v2464, %v2463
      %v2486 = vpack.c.bf16 %v2466, %v2465
      %v2487 = vpack.c.bf16 %v2468, %v2467
      %v2488 = vpack.c.bf16 %v2470, %v2469
      %v2489 = vpack.c.bf16 %v2472, %v2471
      %v2490 = vpack.c.bf16 %v2474, %v2473
      %v2491 = vld [vmem:[%s219 + $0x21f] sm:$0xff]
      %v2492 = vld [vmem:[%s219 + $0x227] sm:$0xff]
      %v2493 = vld [vmem:[%s219 + $0x22f] sm:$0xff]
      %v2494 = vld [vmem:[%s219 + $0x237] sm:$0xff]
      %v2495 = vpack.c.bf16 %v2492, %v2491
      %v2496 = vpack.c.bf16 %v2494, %v2493
      %v2497 = vld [vmem:[%s219 + $0x220] sm:$0xff]
      %v2498 = vld [vmem:[%s219 + $0x228] sm:$0xff]
      %v2499 = vld [vmem:[%s219 + $0x230] sm:$0xff]
      %v2500 = vld [vmem:[%s219 + $0x238] sm:$0xff]
      %v2501 = vpack.c.bf16 %v2498, %v2497
      %v2502 = vpack.c.bf16 %v2500, %v2499
      %v2503 = vld [vmem:[%s219 + $0x221] sm:$0xff]
      %v2504 = vld [vmem:[%s219 + $0x229] sm:$0xff]
      %v2505 = vld [vmem:[%s219 + $0x231] sm:$0xff]
      %v2506 = vld [vmem:[%s219 + $0x239] sm:$0xff]
      %v2507 = vpack.c.bf16 %v2504, %v2503
      %v2508 = vpack.c.bf16 %v2506, %v2505
      %v2509 = vld [vmem:[%s219 + $0x23f] sm:$0xff]
      %v2510 = vld [vmem:[%s219 + $0x247] sm:$0xff]
      %v2511 = vld [vmem:[%s219 + $0x24f] sm:$0xff]
      %v2512 = vld [vmem:[%s219 + $0x257] sm:$0xff]
      %v2513 = vpack.c.bf16 %v2510, %v2509
      %v2514 = vpack.c.bf16 %v2512, %v2511
      %v2515 = vld [vmem:[%s219 + $0x240] sm:$0xff]
      %v2516 = vld [vmem:[%s219 + $0x248] sm:$0xff]
      %v2517 = vld [vmem:[%s219 + $0x250] sm:$0xff]
      %v2518 = vld [vmem:[%s219 + $0x258] sm:$0xff]
      %v2519 = vpack.c.bf16 %v2516, %v2515
      %v2520 = vpack.c.bf16 %v2518, %v2517
      %v2521 = vld [vmem:[%s219 + $0x241] sm:$0xff]
      %v2522 = vld [vmem:[%s219 + $0x249] sm:$0xff]
      %v2523 = vld [vmem:[%s219 + $0x251] sm:$0xff]
      %v2524 = vld [vmem:[%s219 + $0x259] sm:$0xff]
      %v2525 = vpack.c.bf16 %v2522, %v2521
      %v2526 = vpack.c.bf16 %v2524, %v2523
      %2527 = vmatprep.subr.bf16.mxu0 0
      %2528 = vmatpush1.bf16.msra.mxu0 %v1302
      %2529 = vmatprep.subr.bf16.mxu0 0
      %2530 = vmatpush1.bf16.msra.mxu0 %v1303
      %2531 = vmatprep.subr.bf16.mxu0 0
      %2532 = vmatpush1.bf16.msra.mxu0 %v1304
      %2533 = vmatprep.subr.bf16.mxu0 0
      %2534 = vmatpush1.bf16.msra.mxu0 %v1305
      %2535 = vmatprep.subr.bf16.mxu0 0
      %2536 = vmatpush1.bf16.msra.mxu0 %v1306
      %2537 = vmatprep.subr.bf16.mxu0 0
      %2538 = vmatpush1.bf16.msra.mxu0 %v1307
      %2539 = vmatprep.subr.bf16.mxu0 0
      %2540 = vmatpush1.bf16.msra.mxu0 %v1308
      %2541 = vmatprep.subr.bf16.mxu0 0
      %2542 = vmatpush1.bf16.msra.mxu0 %v1309
      %2543 = vmatprep.subr.bf16.mxu0 0
      %2544 = vmatpush1.bf16.msra.mxu0 %v1310
      %2545 = vmatprep.subr.bf16.mxu0 0
      %2546 = vmatpush1.bf16.msra.mxu0 %v1311
      %2547 = vmatprep.subr.bf16.mxu0 0
      %2548 = vmatpush1.bf16.msra.mxu0 %v1312
      %2549 = vmatprep.subr.bf16.mxu0 0
      %2550 = vmatpush1.bf16.msra.mxu0 %v1313
      %2551 = vmatprep.subr.bf16.mxu0 0
      %2552 = vmatpush1.bf16.msra.mxu0 %v1314
      %2553 = vmatprep.subr.bf16.mxu0 0
      %2554 = vmatpush1.bf16.msra.mxu0 %v1315
      %2555 = vmatprep.subr.bf16.mxu0 0
      %2556 = vmatpush1.bf16.msra.mxu0 %v1316
      %2557 = vmatprep.subr.bf16.mxu0 0
      %2558 = vmatpush1.bf16.msra.mxu0 %v1317
      %2559 = vmatprep.mubr.bf16.mxu0 %v2427
      %2560 = vmatmul.mubr.bf16.gmra.mrb[0].mxu0 %v2379
      %v2561 = vpop.f32.mrb[0].mxu0
      %v2562 = vadd.f32 %v1012, %v2561
      %v2563 = vpop.f32.mrb[0].mxu0
      %v2564 = vpop.f32.mrb[0].mxu0
      %v2565 = vadd.f32 %v1012, %v2564
      %v2566 = vpop.f32.mrb[0].mxu0
      %2567 = vmatprep.mubr.bf16.mxu0 %v2428
      %2568 = vmatmul.mubr.bf16.gmra.mrb[0].mxu0 %v2380
      %v2569 = vpop.f32.mrb[0].mxu0
      %v2570 = vadd.f32 %v1012, %v2569
      %v2571 = vpop.f32.mrb[0].mxu0
      %v2572 = vpop.f32.mrb[0].mxu0
      %v2573 = vadd.f32 %v1012, %v2572
      %v2574 = vpop.f32.mrb[0].mxu0
      %2575 = vmatprep.mubr.bf16.mxu0 %v2429
      %2576 = vmatmul.mubr.bf16.gmra.mrb[0].mxu0 %v2381
      %v2577 = vpop.f32.mrb[0].mxu0
      %v2578 = vadd.f32 %v1012, %v2577
      %v2579 = vpop.f32.mrb[0].mxu0
      %v2580 = vpop.f32.mrb[0].mxu0
      %v2581 = vadd.f32 %v1012, %v2580
      %v2582 = vpop.f32.mrb[0].mxu0
      %2583 = vmatprep.mubr.bf16.mxu0 %v2430
      %2584 = vmatmul.mubr.bf16.gmra.mrb[0].mxu0 %v2382
      %v2585 = vpop.f32.mrb[0].mxu0
      %v2586 = vadd.f32 %v1012, %v2585
      %v2587 = vpop.f32.mrb[0].mxu0
      %v2588 = vpop.f32.mrb[0].mxu0
      %v2589 = vadd.f32 %v1012, %v2588
      %v2590 = vpop.f32.mrb[0].mxu0
      %2591 = vmatprep.mubr.bf16.mxu0 %v2431
      %2592 = vmatmul.mubr.bf16.gmra.mrb[0].mxu0 %v2383
      %v2593 = vpop.f32.mrb[0].mxu0
      %v2594 = vadd.f32 %v1012, %v2593
      %v2595 = vpop.f32.mrb[0].mxu0
      %v2596 = vpop.f32.mrb[0].mxu0
      %v2597 = vadd.f32 %v1012, %v2596
      %v2598 = vpop.f32.mrb[0].mxu0
      %2599 = vmatprep.mubr.bf16.mxu0 %v2432
      %2600 = vmatmul.mubr.bf16.gmra.mrb[0].mxu0 %v2384
      %v2601 = vpop.f32.mrb[0].mxu0
      %v2602 = vadd.f32 %v1012, %v2601
      %v2603 = vpop.f32.mrb[0].mxu0
      %v2604 = vpop.f32.mrb[0].mxu0
      %v2605 = vadd.f32 %v1012, %v2604
      %v2606 = vpop.f32.mrb[0].mxu0
      %2607 = vmatprep.mubr.bf16.mxu0 %v2433
      %2608 = vmatmul.mubr.bf16.gmra.mrb[0].mxu0 %v2385
      %v2609 = vpop.f32.mrb[0].mxu0
      %v2610 = vadd.f32 %v1012, %v2609
      %v2611 = vpop.f32.mrb[0].mxu0
      %v2612 = vpop.f32.mrb[0].mxu0
      %v2613 = vadd.f32 %v1012, %v2612
      %v2614 = vpop.f32.mrb[0].mxu0
      %2615 = vmatprep.mubr.bf16.mxu0 %v2434
      %2616 = vmatmul.mubr.bf16.gmra.mrb[0].mxu0 %v2386
      %v2617 = vpop.f32.mrb[0].mxu0
      %v2618 = vadd.f32 %v1012, %v2617
      %v2619 = vpop.f32.mrb[0].mxu0
      %v2620 = vpop.f32.mrb[0].mxu0
      %v2621 = vadd.f32 %v1012, %v2620
      %v2622 = vpop.f32.mrb[0].mxu0
      %2623 = vmatprep.mubr.bf16.mxu0 %v2435
      %2624 = vmatmul.mubr.bf16.gmra.mrb[0].mxu0 %v2387
      %v2625 = vpop.f32.mrb[0].mxu0
      %v2626 = vadd.f32 %v1012, %v2625
      %v2627 = vpop.f32.mrb[0].mxu0
      %v2628 = vpop.f32.mrb[0].mxu0
      %v2629 = vadd.f32 %v1012, %v2628
      %v2630 = vpop.f32.mrb[0].mxu0
      %2631 = vmatprep.mubr.bf16.mxu0 %v2436
      %2632 = vmatmul.mubr.bf16.gmra.mrb[0].mxu0 %v2388
      %v2633 = vpop.f32.mrb[0].mxu0
      %v2634 = vadd.f32 %v1012, %v2633
      %v2635 = vpop.f32.mrb[0].mxu0
      %v2636 = vpop.f32.mrb[0].mxu0
      %v2637 = vadd.f32 %v1012, %v2636
      %v2638 = vpop.f32.mrb[0].mxu0
      %2639 = vmatprep.mubr.bf16.mxu0 %v2437
      %2640 = vmatmul.mubr.bf16.gmra.mrb[0].mxu0 %v2389
      %v2641 = vpop.f32.mrb[0].mxu0
      %v2642 = vadd.f32 %v1012, %v2641
      %v2643 = vpop.f32.mrb[0].mxu0
      %v2644 = vpop.f32.mrb[0].mxu0
      %v2645 = vadd.f32 %v1012, %v2644
      %v2646 = vpop.f32.mrb[0].mxu0
      %2647 = vmatprep.mubr.bf16.mxu0 %v2438
      %2648 = vmatmul.mubr.bf16.gmra.mrb[0].mxu0 %v2390
      %v2649 = vpop.f32.mrb[0].mxu0
      %v2650 = vadd.f32 %v1012, %v2649
      %v2651 = vpop.f32.mrb[0].mxu0
      %v2652 = vpop.f32.mrb[0].mxu0
      %v2653 = vadd.f32 %v1012, %v2652
      %v2654 = vpop.f32.mrb[0].mxu0
      %2655 = vmatprep.mubr.bf16.mxu0 %v2439
      %2656 = vmatmul.mubr.bf16.gmra.mrb[0].mxu0 %v2391
      %v2657 = vpop.f32.mrb[0].mxu0
      %v2658 = vadd.f32 %v1012, %v2657
      %v2659 = vpop.f32.mrb[0].mxu0
      %v2660 = vpop.f32.mrb[0].mxu0
      %v2661 = vadd.f32 %v1012, %v2660
      %v2662 = vpop.f32.mrb[0].mxu0
      %2663 = vmatprep.mubr.bf16.mxu0 %v2440
      %2664 = vmatmul.mubr.bf16.gmra.mrb[0].mxu0 %v2392
      %v2665 = vpop.f32.mrb[0].mxu0
      %v2666 = vadd.f32 %v1012, %v2665
      %v2667 = vpop.f32.mrb[0].mxu0
      %v2668 = vpop.f32.mrb[0].mxu0
      %v2669 = vadd.f32 %v1012, %v2668
      %v2670 = vpop.f32.mrb[0].mxu0
      %2671 = vmatprep.mubr.bf16.mxu0 %v2441
      %2672 = vmatmul.mubr.bf16.gmra.mrb[0].mxu0 %v2393
      %v2673 = vpop.f32.mrb[0].mxu0
      %v2674 = vadd.f32 %v1012, %v2673
      %v2675 = vpop.f32.mrb[0].mxu0
      %v2676 = vpop.f32.mrb[0].mxu0
      %v2677 = vadd.f32 %v1012, %v2676
      %v2678 = vpop.f32.mrb[0].mxu0
      %2679 = vmatprep.mubr.bf16.mxu0 %v2442
      %2680 = vmatmul.mubr.bf16.gmra.mrb[0].mxu0 %v2394
      %v2681 = vpop.f32.mrb[0].mxu0
      %v2682 = vadd.f32 %v1012, %v2681
      %v2683 = vpop.f32.mrb[0].mxu0
      %v2684 = vpop.f32.mrb[0].mxu0
      %v2685 = vadd.f32 %v1012, %v2684
      %v2686 = vpop.f32.mrb[0].mxu0
      %2687 = vdwg.mxu0
      %2688 = vmatprep.subr.bf16.mxu0 0
      %2689 = vmatpush1.bf16.msra.mxu0 %v1318
      %2690 = vmatprep.subr.bf16.mxu0 0
      %2691 = vmatpush1.bf16.msra.mxu0 %v1319
      %2692 = vmatprep.subr.bf16.mxu0 0
      %2693 = vmatpush1.bf16.msra.mxu0 %v1320
      %2694 = vmatprep.subr.bf16.mxu0 0
      %2695 = vmatpush1.bf16.msra.mxu0 %v1321
      %2696 = vmatprep.subr.bf16.mxu0 0
      %2697 = vmatpush1.bf16.msra.mxu0 %v1322
      %2698 = vmatprep.subr.bf16.mxu0 0
      %2699 = vmatpush1.bf16.msra.mxu0 %v1323
      %2700 = vmatprep.subr.bf16.mxu0 0
      %2701 = vmatpush1.bf16.msra.mxu0 %v1324
      %2702 = vmatprep.subr.bf16.mxu0 0
      %2703 = vmatpush1.bf16.msra.mxu0 %v1325
      %2704 = vmatprep.subr.bf16.mxu0 0
      %2705 = vmatpush1.bf16.msra.mxu0 %v1326
      %2706 = vmatprep.subr.bf16.mxu0 0
      %2707 = vmatpush1.bf16.msra.mxu0 %v1327
      %2708 = vmatprep.subr.bf16.mxu0 0
      %2709 = vmatpush1.bf16.msra.mxu0 %v1328
      %2710 = vmatprep.subr.bf16.mxu0 0
      %2711 = vmatpush1.bf16.msra.mxu0 %v1329
      %2712 = vmatprep.subr.bf16.mxu0 0
      %2713 = vmatpush1.bf16.msra.mxu0 %v1330
      %2714 = vmatprep.subr.bf16.mxu0 0
      %2715 = vmatpush1.bf16.msra.mxu0 %v1331
      %2716 = vmatprep.subr.bf16.mxu0 0
      %2717 = vmatpush1.bf16.msra.mxu0 %v1332
      %2718 = vmatprep.subr.bf16.mxu0 0
      %2719 = vmatpush1.bf16.msra.mxu0 %v1333
      %2720 = vmatprep.mubr.bf16.mxu0 %v2381
      %2721 = vmatmul.mubr.bf16.gmra.mrb[0].mxu0 %v2475
      %v2722 = vpop.f32.mrb[0].mxu0
      %v2723 = vadd.f32 %v2562, %v2722
      %v2724 = vpop.f32.mrb[0].mxu0
      %v2725 = vpop.f32.mrb[0].mxu0
      %v2726 = vadd.f32 %v2565, %v2725
      %v2727 = vpop.f32.mrb[0].mxu0
      %2728 = vmatprep.mubr.bf16.mxu0 %v2382
      %2729 = vmatmul.mubr.bf16.gmra.mrb[0].mxu0 %v2476
      %v2730 = vpop.f32.mrb[0].mxu0
      %v2731 = vadd.f32 %v2570, %v2730
      %v2732 = vpop.f32.mrb[0].mxu0
      %v2733 = vpop.f32.mrb[0].mxu0
      %v2734 = vadd.f32 %v2573, %v2733
      %v2735 = vpop.f32.mrb[0].mxu0
      %2736 = vmatprep.mubr.bf16.mxu0 %v2383
      %2737 = vmatmul.mubr.bf16.gmra.mrb[0].mxu0 %v2477
      %v2738 = vpop.f32.mrb[0].mxu0
      %v2739 = vadd.f32 %v2578, %v2738
      %v2740 = vpop.f32.mrb[0].mxu0
      %v2741 = vpop.f32.mrb[0].mxu0
      %v2742 = vadd.f32 %v2581, %v2741
      %v2743 = vpop.f32.mrb[0].mxu0
      %2744 = vmatprep.mubr.bf16.mxu0 %v2384
      %2745 = vmatmul.mubr.bf16.gmra.mrb[0].mxu0 %v2478
      %v2746 = vpop.f32.mrb[0].mxu0
      %v2747 = vadd.f32 %v2586, %v2746
      %v2748 = vpop.f32.mrb[0].mxu0
      %v2749 = vpop.f32.mrb[0].mxu0
      %v2750 = vadd.f32 %v2589, %v2749
      %v2751 = vpop.f32.mrb[0].mxu0
      %2752 = vmatprep.mubr.bf16.mxu0 %v2385
      %2753 = vmatmul.mubr.bf16.gmra.mrb[0].mxu0 %v2479
      %v2754 = vpop.f32.mrb[0].mxu0
      %v2755 = vadd.f32 %v2594, %v2754
      %v2756 = vpop.f32.mrb[0].mxu0
      %v2757 = vpop.f32.mrb[0].mxu0
      %v2758 = vadd.f32 %v2597, %v2757
      %v2759 = vpop.f32.mrb[0].mxu0
      %2760 = vmatprep.mubr.bf16.mxu0 %v2386
      %2761 = vmatmul.mubr.bf16.gmra.mrb[0].mxu0 %v2480
      %v2762 = vpop.f32.mrb[0].mxu0
      %v2763 = vadd.f32 %v2602, %v2762
      %v2764 = vpop.f32.mrb[0].mxu0
      %v2765 = vpop.f32.mrb[0].mxu0
      %v2766 = vadd.f32 %v2605, %v2765
      %v2767 = vpop.f32.mrb[0].mxu0
      %2768 = vmatprep.mubr.bf16.mxu0 %v2387
      %2769 = vmatmul.mubr.bf16.gmra.mrb[0].mxu0 %v2481
      %v2770 = vpop.f32.mrb[0].mxu0
      %v2771 = vadd.f32 %v2610, %v2770
      %v2772 = vpop.f32.mrb[0].mxu0
      %v2773 = vpop.f32.mrb[0].mxu0
      %v2774 = vadd.f32 %v2613, %v2773
      %v2775 = vpop.f32.mrb[0].mxu0
      %2776 = vmatprep.mubr.bf16.mxu0 %v2388
      %2777 = vmatmul.mubr.bf16.gmra.mrb[0].mxu0 %v2482
      %v2778 = vpop.f32.mrb[0].mxu0
      %v2779 = vadd.f32 %v2618, %v2778
      %v2780 = vpop.f32.mrb[0].mxu0
      %v2781 = vpop.f32.mrb[0].mxu0
      %v2782 = vadd.f32 %v2621, %v2781
      %v2783 = vpop.f32.mrb[0].mxu0
      %2784 = vmatprep.mubr.bf16.mxu0 %v2389
      %2785 = vmatmul.mubr.bf16.gmra.mrb[0].mxu0 %v2483
      %v2786 = vpop.f32.mrb[0].mxu0
      %v2787 = vadd.f32 %v2626, %v2786
      %v2788 = vpop.f32.mrb[0].mxu0
      %v2789 = vpop.f32.mrb[0].mxu0
      %v2790 = vadd.f32 %v2629, %v2789
      %v2791 = vpop.f32.mrb[0].mxu0
      %2792 = vmatprep.mubr.bf16.mxu0 %v2390
      %2793 = vmatmul.mubr.bf16.gmra.mrb[0].mxu0 %v2484
      %v2794 = vpop.f32.mrb[0].mxu0
      %v2795 = vadd.f32 %v2634, %v2794
      %v2796 = vpop.f32.mrb[0].mxu0
      %v2797 = vpop.f32.mrb[0].mxu0
      %v2798 = vadd.f32 %v2637, %v2797
      %v2799 = vpop.f32.mrb[0].mxu0
      %2800 = vmatprep.mubr.bf16.mxu0 %v2391
      %2801 = vmatmul.mubr.bf16.gmra.mrb[0].mxu0 %v2485
      %v2802 = vpop.f32.mrb[0].mxu0
      %v2803 = vadd.f32 %v2642, %v2802
      %v2804 = vpop.f32.mrb[0].mxu0
      %v2805 = vpop.f32.mrb[0].mxu0
      %v2806 = vadd.f32 %v2645, %v2805
      %v2807 = vpop.f32.mrb[0].mxu0
      %2808 = vmatprep.mubr.bf16.mxu0 %v2392
      %2809 = vmatmul.mubr.bf16.gmra.mrb[0].mxu0 %v2486
      %v2810 = vpop.f32.mrb[0].mxu0
      %v2811 = vadd.f32 %v2650, %v2810
      %v2812 = vpop.f32.mrb[0].mxu0
      %v2813 = vpop.f32.mrb[0].mxu0
      %v2814 = vadd.f32 %v2653, %v2813
      %v2815 = vpop.f32.mrb[0].mxu0
      %2816 = vmatprep.mubr.bf16.mxu0 %v2393
      %2817 = vmatmul.mubr.bf16.gmra.mrb[0].mxu0 %v2487
      %v2818 = vpop.f32.mrb[0].mxu0
      %v2819 = vadd.f32 %v2658, %v2818
      %v2820 = vpop.f32.mrb[0].mxu0
      %v2821 = vpop.f32.mrb[0].mxu0
      %v2822 = vadd.f32 %v2661, %v2821
      %v2823 = vpop.f32.mrb[0].mxu0
      %2824 = vmatprep.mubr.bf16.mxu0 %v2394
      %2825 = vmatmul.mubr.bf16.gmra.mrb[0].mxu0 %v2488
      %v2826 = vpop.f32.mrb[0].mxu0
      %v2827 = vadd.f32 %v2666, %v2826
      %v2828 = vpop.f32.mrb[0].mxu0
      %v2829 = vpop.f32.mrb[0].mxu0
      %v2830 = vadd.f32 %v2669, %v2829
      %v2831 = vpop.f32.mrb[0].mxu0
      %2832 = vmatprep.mubr.bf16.mxu0 %v2495
      %2833 = vmatmul.mubr.bf16.gmra.mrb[0].mxu0 %v2489
      %v2834 = vpop.f32.mrb[0].mxu0
      %v2835 = vadd.f32 %v2674, %v2834
      %v2836 = vpop.f32.mrb[0].mxu0
      %v2837 = vpop.f32.mrb[0].mxu0
      %v2838 = vadd.f32 %v2677, %v2837
      %v2839 = vpop.f32.mrb[0].mxu0
      %2840 = vmatprep.mubr.bf16.mxu0 %v2496
      %2841 = vmatmul.mubr.bf16.gmra.mrb[0].mxu0 %v2490
      %v2842 = vpop.f32.mrb[0].mxu0
      %v2843 = vadd.f32 %v2682, %v2842
      %v2844 = vpop.f32.mrb[0].mxu0
      %v2845 = vpop.f32.mrb[0].mxu0
      %v2846 = vadd.f32 %v2685, %v2845
      %v2847 = vpop.f32.mrb[0].mxu0
      %2848 = vdwg.mxu0
      %2849 = vmatprep.subr.bf16.mxu0 0
      %2850 = vmatpush1.bf16.msra.mxu0 %v1334
      %2851 = vmatprep.subr.bf16.mxu0 0
      %2852 = vmatpush1.bf16.msra.mxu0 %v1335
      %2853 = vmatprep.subr.bf16.mxu0 0
      %2854 = vmatpush1.bf16.msra.mxu0 %v1336
      %2855 = vmatprep.subr.bf16.mxu0 0
      %2856 = vmatpush1.bf16.msra.mxu0 %v1337
      %2857 = vmatprep.subr.bf16.mxu0 0
      %2858 = vmatpush1.bf16.msra.mxu0 %v1338
      %2859 = vmatprep.subr.bf16.mxu0 0
      %2860 = vmatpush1.bf16.msra.mxu0 %v1339
      %2861 = vmatprep.subr.bf16.mxu0 0
      %2862 = vmatpush1.bf16.msra.mxu0 %v1340
      %2863 = vmatprep.subr.bf16.mxu0 0
      %2864 = vmatpush1.bf16.msra.mxu0 %v1341
      %2865 = vmatprep.subr.bf16.mxu0 0
      %2866 = vmatpush1.bf16.msra.mxu0 %v1342
      %2867 = vmatprep.subr.bf16.mxu0 0
      %2868 = vmatpush1.bf16.msra.mxu0 %v1343
      %2869 = vmatprep.subr.bf16.mxu0 0
      %2870 = vmatpush1.bf16.msra.mxu0 %v1344
      %2871 = vmatprep.subr.bf16.mxu0 0
      %2872 = vmatpush1.bf16.msra.mxu0 %v1345
      %2873 = vmatprep.subr.bf16.mxu0 0
      %2874 = vmatpush1.bf16.msra.mxu0 %v1346
      %2875 = vmatprep.subr.bf16.mxu0 0
      %2876 = vmatpush1.bf16.msra.mxu0 %v1347
      %2877 = vmatprep.subr.bf16.mxu0 0
      %2878 = vmatpush1.bf16.msra.mxu0 %v1348
      %2879 = vmatprep.subr.bf16.mxu0 0
      %2880 = vmatpush1.bf16.msra.mxu0 %v1349
      %2881 = vmatprep.mubr.bf16.mxu0 %v2477
      %2882 = vmatmul.mubr.bf16.gmra.mrb[0].mxu0 %v2429
      %v2883 = vpop.f32.mrb[0].mxu0
      %v2884 = vadd.f32 %v2723, %v2883
      %v2885 = vpop.f32.mrb[0].mxu0
      %v2886 = vpop.f32.mrb[0].mxu0
      %v2887 = vadd.f32 %v2726, %v2886
      %v2888 = vpop.f32.mrb[0].mxu0
      %2889 = vmatprep.mubr.bf16.mxu0 %v2478
      %2890 = vmatmul.mubr.bf16.gmra.mrb[0].mxu0 %v2430
      %v2891 = vpop.f32.mrb[0].mxu0
      %v2892 = vadd.f32 %v2731, %v2891
      %v2893 = vpop.f32.mrb[0].mxu0
      %v2894 = vpop.f32.mrb[0].mxu0
      %v2895 = vadd.f32 %v2734, %v2894
      %v2896 = vpop.f32.mrb[0].mxu0
      %2897 = vmatprep.mubr.bf16.mxu0 %v2479
      %2898 = vmatmul.mubr.bf16.gmra.mrb[0].mxu0 %v2431
      %v2899 = vpop.f32.mrb[0].mxu0
      %v2900 = vadd.f32 %v2739, %v2899
      %v2901 = vpop.f32.mrb[0].mxu0
      %v2902 = vpop.f32.mrb[0].mxu0
      %v2903 = vadd.f32 %v2742, %v2902
      %v2904 = vpop.f32.mrb[0].mxu0
      %2905 = vmatprep.mubr.bf16.mxu0 %v2480
      %2906 = vmatmul.mubr.bf16.gmra.mrb[0].mxu0 %v2432
      %v2907 = vpop.f32.mrb[0].mxu0
      %v2908 = vadd.f32 %v2747, %v2907
      %v2909 = vpop.f32.mrb[0].mxu0
      %v2910 = vpop.f32.mrb[0].mxu0
      %v2911 = vadd.f32 %v2750, %v2910
      %v2912 = vpop.f32.mrb[0].mxu0
      %2913 = vmatprep.mubr.bf16.mxu0 %v2481
      %2914 = vmatmul.mubr.bf16.gmra.mrb[0].mxu0 %v2433
      %v2915 = vpop.f32.mrb[0].mxu0
      %v2916 = vadd.f32 %v2755, %v2915
      %v2917 = vpop.f32.mrb[0].mxu0
      %v2918 = vpop.f32.mrb[0].mxu0
      %v2919 = vadd.f32 %v2758, %v2918
      %v2920 = vpop.f32.mrb[0].mxu0
      %2921 = vmatprep.mubr.bf16.mxu0 %v2482
      %2922 = vmatmul.mubr.bf16.gmra.mrb[0].mxu0 %v2434
      %v2923 = vpop.f32.mrb[0].mxu0
      %v2924 = vadd.f32 %v2763, %v2923
      %v2925 = vpop.f32.mrb[0].mxu0
      %v2926 = vpop.f32.mrb[0].mxu0
      %v2927 = vadd.f32 %v2766, %v2926
      %v2928 = vpop.f32.mrb[0].mxu0
      %2929 = vmatprep.mubr.bf16.mxu0 %v2483
      %2930 = vmatmul.mubr.bf16.gmra.mrb[0].mxu0 %v2435
      %v2931 = vpop.f32.mrb[0].mxu0
      %v2932 = vadd.f32 %v2771, %v2931
      %v2933 = vpop.f32.mrb[0].mxu0
      %v2934 = vpop.f32.mrb[0].mxu0
      %v2935 = vadd.f32 %v2774, %v2934
      %v2936 = vpop.f32.mrb[0].mxu0
      %2937 = vmatprep.mubr.bf16.mxu0 %v2484
      %2938 = vmatmul.mubr.bf16.gmra.mrb[0].mxu0 %v2436
      %v2939 = vpop.f32.mrb[0].mxu0
      %v2940 = vadd.f32 %v2779, %v2939
      %v2941 = vpop.f32.mrb[0].mxu0
      %v2942 = vpop.f32.mrb[0].mxu0
      %v2943 = vadd.f32 %v2782, %v2942
      %v2944 = vpop.f32.mrb[0].mxu0
      %2945 = vmatprep.mubr.bf16.mxu0 %v2485
      %2946 = vmatmul.mubr.bf16.gmra.mrb[0].mxu0 %v2437
      %v2947 = vpop.f32.mrb[0].mxu0
      %v2948 = vadd.f32 %v2787, %v2947
      %v2949 = vpop.f32.mrb[0].mxu0
      %v2950 = vpop.f32.mrb[0].mxu0
      %v2951 = vadd.f32 %v2790, %v2950
      %v2952 = vpop.f32.mrb[0].mxu0
      %2953 = vmatprep.mubr.bf16.mxu0 %v2486
      %2954 = vmatmul.mubr.bf16.gmra.mrb[0].mxu0 %v2438
      %v2955 = vpop.f32.mrb[0].mxu0
      %v2956 = vadd.f32 %v2795, %v2955
      %v2957 = vpop.f32.mrb[0].mxu0
      %v2958 = vpop.f32.mrb[0].mxu0
      %v2959 = vadd.f32 %v2798, %v2958
      %v2960 = vpop.f32.mrb[0].mxu0
      %2961 = vmatprep.mubr.bf16.mxu0 %v2487
      %2962 = vmatmul.mubr.bf16.gmra.mrb[0].mxu0 %v2439
      %v2963 = vpop.f32.mrb[0].mxu0
      %v2964 = vadd.f32 %v2803, %v2963
      %v2965 = vpop.f32.mrb[0].mxu0
      %v2966 = vpop.f32.mrb[0].mxu0
      %v2967 = vadd.f32 %v2806, %v2966
      %v2968 = vpop.f32.mrb[0].mxu0
      %2969 = vmatprep.mubr.bf16.mxu0 %v2488
      %2970 = vmatmul.mubr.bf16.gmra.mrb[0].mxu0 %v2440
      %v2971 = vpop.f32.mrb[0].mxu0
      %v2972 = vadd.f32 %v2811, %v2971
      %v2973 = vpop.f32.mrb[0].mxu0
      %v2974 = vpop.f32.mrb[0].mxu0
      %v2975 = vadd.f32 %v2814, %v2974
      %v2976 = vpop.f32.mrb[0].mxu0
      %2977 = vmatprep.mubr.bf16.mxu0 %v2489
      %2978 = vmatmul.mubr.bf16.gmra.mrb[0].mxu0 %v2441
      %v2979 = vpop.f32.mrb[0].mxu0
      %v2980 = vadd.f32 %v2819, %v2979
      %v2981 = vpop.f32.mrb[0].mxu0
      %v2982 = vpop.f32.mrb[0].mxu0
      %v2983 = vadd.f32 %v2822, %v2982
      %v2984 = vpop.f32.mrb[0].mxu0
      %2985 = vmatprep.mubr.bf16.mxu0 %v2490
      %2986 = vmatmul.mubr.bf16.gmra.mrb[0].mxu0 %v2442
      %v2987 = vpop.f32.mrb[0].mxu0
      %v2988 = vadd.f32 %v2827, %v2987
      %v2989 = vpop.f32.mrb[0].mxu0
      %v2990 = vpop.f32.mrb[0].mxu0
      %v2991 = vadd.f32 %v2830, %v2990
      %v2992 = vpop.f32.mrb[0].mxu0
      %2993 = vmatprep.mubr.bf16.mxu0 %v2507
      %2994 = vmatmul.mubr.bf16.gmra.mrb[0].mxu0 %v2501
      %v2995 = vpop.f32.mrb[0].mxu0
      %v2996 = vadd.f32 %v2835, %v2995
      %v2997 = vpop.f32.mrb[0].mxu0
      %v2998 = vpop.f32.mrb[0].mxu0
      %v2999 = vadd.f32 %v2838, %v2998
      %v3000 = vpop.f32.mrb[0].mxu0
      %3001 = vmatprep.mubr.bf16.mxu0 %v2508
      %3002 = vmatmul.mubr.bf16.gmra.mrb[0].mxu0 %v2502
      %v3003 = vpop.f32.mrb[0].mxu0
      %v3004 = vadd.f32 %v2843, %v3003
      %v3005 = vpop.f32.mrb[0].mxu0
      %v3006 = vpop.f32.mrb[0].mxu0
      %v3007 = vadd.f32 %v2846, %v3006
      %v3008 = vpop.f32.mrb[0].mxu0
      %3009 = vdwg.mxu0
      %3010 = vmatprep.subr.bf16.mxu0 0
      %3011 = vmatpush1.bf16.msra.mxu0 %v1350
      %3012 = vmatprep.subr.bf16.mxu0 0
      %3013 = vmatpush1.bf16.msra.mxu0 %v1351
      %3014 = vmatprep.subr.bf16.mxu0 0
      %3015 = vmatpush1.bf16.msra.mxu0 %v1352
      %3016 = vmatprep.subr.bf16.mxu0 0
      %3017 = vmatpush1.bf16.msra.mxu0 %v1353
      %3018 = vmatprep.subr.bf16.mxu0 0
      %3019 = vmatpush1.bf16.msra.mxu0 %v1354
      %3020 = vmatprep.subr.bf16.mxu0 0
      %3021 = vmatpush1.bf16.msra.mxu0 %v1355
      %3022 = vmatprep.subr.bf16.mxu0 0
      %3023 = vmatpush1.bf16.msra.mxu0 %v1356
      %3024 = vmatprep.subr.bf16.mxu0 0
      %3025 = vmatpush1.bf16.msra.mxu0 %v1357
      %3026 = vmatprep.subr.bf16.mxu0 0
      %3027 = vmatpush1.bf16.msra.mxu0 %v1358
      %3028 = vmatprep.subr.bf16.mxu0 0
      %3029 = vmatpush1.bf16.msra.mxu0 %v1359
      %3030 = vmatprep.subr.bf16.mxu0 0
      %3031 = vmatpush1.bf16.msra.mxu0 %v1360
      %3032 = vmatprep.subr.bf16.mxu0 0
      %3033 = vmatpush1.bf16.msra.mxu0 %v1361
      %3034 = vmatprep.subr.bf16.mxu0 0
      %3035 = vmatpush1.bf16.msra.mxu0 %v1362
      %3036 = vmatprep.subr.bf16.mxu0 0
      %3037 = vmatpush1.bf16.msra.mxu0 %v1363
      %3038 = vmatprep.subr.bf16.mxu0 0
      %3039 = vmatpush1.bf16.msra.mxu0 %v1364
      %3040 = vmatprep.subr.bf16.mxu0 0
      %3041 = vmatpush1.bf16.msra.mxu0 %v1365
      %3042 = vmatprep.mubr.bf16.mxu0 %v2431
      %3043 = vmatmul.mubr.bf16.gmra.mrb[0].mxu0 %v2383
      %v3044 = vpop.f32.mrb[0].mxu0
      %v3045 = vadd.f32 %v2884, %v3044
      %v3046 = vpop.f32.mrb[0].mxu0
      %v3047 = vpop.f32.mrb[0].mxu0
      %v3048 = vadd.f32 %v2887, %v3047
      %v3049 = vpop.f32.mrb[0].mxu0
      %3050 = vmatprep.mubr.bf16.mxu0 %v2432
      %3051 = vmatmul.mubr.bf16.gmra.mrb[0].mxu0 %v2384
      %v3052 = vpop.f32.mrb[0].mxu0
      %v3053 = vadd.f32 %v2892, %v3052
      %v3054 = vpop.f32.mrb[0].mxu0
      %v3055 = vpop.f32.mrb[0].mxu0
      %v3056 = vadd.f32 %v2895, %v3055
      %v3057 = vpop.f32.mrb[0].mxu0
      %3058 = vmatprep.mubr.bf16.mxu0 %v2433
      %3059 = vmatmul.mubr.bf16.gmra.mrb[0].mxu0 %v2385
      %v3060 = vpop.f32.mrb[0].mxu0
      %v3061 = vadd.f32 %v2900, %v3060
      %v3062 = vpop.f32.mrb[0].mxu0
      %v3063 = vpop.f32.mrb[0].mxu0
      %v3064 = vadd.f32 %v2903, %v3063
      %v3065 = vpop.f32.mrb[0].mxu0
      %3066 = vmatprep.mubr.bf16.mxu0 %v2434
      %3067 = vmatmul.mubr.bf16.gmra.mrb[0].mxu0 %v2386
      %v3068 = vpop.f32.mrb[0].mxu0
      %v3069 = vadd.f32 %v2908, %v3068
      %v3070 = vpop.f32.mrb[0].mxu0
      %v3071 = vpop.f32.mrb[0].mxu0
      %v3072 = vadd.f32 %v2911, %v3071
      %v3073 = vpop.f32.mrb[0].mxu0
      %3074 = vmatprep.mubr.bf16.mxu0 %v2435
      %3075 = vmatmul.mubr.bf16.gmra.mrb[0].mxu0 %v2387
      %v3076 = vpop.f32.mrb[0].mxu0
      %v3077 = vadd.f32 %v2916, %v3076
      %v3078 = vpop.f32.mrb[0].mxu0
      %v3079 = vpop.f32.mrb[0].mxu0
      %v3080 = vadd.f32 %v2919, %v3079
      %v3081 = vpop.f32.mrb[0].mxu0
      %3082 = vmatprep.mubr.bf16.mxu0 %v2436
      %3083 = vmatmul.mubr.bf16.gmra.mrb[0].mxu0 %v2388
      %v3084 = vpop.f32.mrb[0].mxu0
      %v3085 = vadd.f32 %v2924, %v3084
      %v3086 = vpop.f32.mrb[0].mxu0
      %v3087 = vpop.f32.mrb[0].mxu0
      %v3088 = vadd.f32 %v2927, %v3087
      %v3089 = vpop.f32.mrb[0].mxu0
      %3090 = vmatprep.mubr.bf16.mxu0 %v2437
      %3091 = vmatmul.mubr.bf16.gmra.mrb[0].mxu0 %v2389
      %v3092 = vpop.f32.mrb[0].mxu0
      %v3093 = vadd.f32 %v2932, %v3092
      %v3094 = vpop.f32.mrb[0].mxu0
      %v3095 = vpop.f32.mrb[0].mxu0
      %v3096 = vadd.f32 %v2935, %v3095
      %v3097 = vpop.f32.mrb[0].mxu0
      %3098 = vmatprep.mubr.bf16.mxu0 %v2438
      %3099 = vmatmul.mubr.bf16.gmra.mrb[0].mxu0 %v2390
      %v3100 = vpop.f32.mrb[0].mxu0
      %v3101 = vadd.f32 %v2940, %v3100
      %v3102 = vpop.f32.mrb[0].mxu0
      %v3103 = vpop.f32.mrb[0].mxu0
      %v3104 = vadd.f32 %v2943, %v3103
      %v3105 = vpop.f32.mrb[0].mxu0
      %3106 = vmatprep.mubr.bf16.mxu0 %v2439
      %3107 = vmatmul.mubr.bf16.gmra.mrb[0].mxu0 %v2391
      %v3108 = vpop.f32.mrb[0].mxu0
      %v3109 = vadd.f32 %v2948, %v3108
      %v3110 = vpop.f32.mrb[0].mxu0
      %v3111 = vpop.f32.mrb[0].mxu0
      %v3112 = vadd.f32 %v2951, %v3111
      %v3113 = vpop.f32.mrb[0].mxu0
      %3114 = vmatprep.mubr.bf16.mxu0 %v2440
      %3115 = vmatmul.mubr.bf16.gmra.mrb[0].mxu0 %v2392
      %v3116 = vpop.f32.mrb[0].mxu0
      %v3117 = vadd.f32 %v2956, %v3116
      %v3118 = vpop.f32.mrb[0].mxu0
      %v3119 = vpop.f32.mrb[0].mxu0
      %v3120 = vadd.f32 %v2959, %v3119
      %v3121 = vpop.f32.mrb[0].mxu0
      %3122 = vmatprep.mubr.bf16.mxu0 %v2441
      %3123 = vmatmul.mubr.bf16.gmra.mrb[0].mxu0 %v2393
      %v3124 = vpop.f32.mrb[0].mxu0
      %v3125 = vadd.f32 %v2964, %v3124
      %v3126 = vpop.f32.mrb[0].mxu0
      %v3127 = vpop.f32.mrb[0].mxu0
      %v3128 = vadd.f32 %v2967, %v3127
      %v3129 = vpop.f32.mrb[0].mxu0
      %3130 = vmatprep.mubr.bf16.mxu0 %v2442
      %3131 = vmatmul.mubr.bf16.gmra.mrb[0].mxu0 %v2394
      %v3132 = vpop.f32.mrb[0].mxu0
      %v3133 = vadd.f32 %v2972, %v3132
      %v3134 = vpop.f32.mrb[0].mxu0
      %v3135 = vpop.f32.mrb[0].mxu0
      %v3136 = vadd.f32 %v2975, %v3135
      %v3137 = vpop.f32.mrb[0].mxu0
      %3138 = vmatprep.mubr.bf16.mxu0 %v2501
      %3139 = vmatmul.mubr.bf16.gmra.mrb[0].mxu0 %v2495
      %v3140 = vpop.f32.mrb[0].mxu0
      %v3141 = vadd.f32 %v2980, %v3140
      %v3142 = vpop.f32.mrb[0].mxu0
      %v3143 = vpop.f32.mrb[0].mxu0
      %v3144 = vadd.f32 %v2983, %v3143
      %v3145 = vpop.f32.mrb[0].mxu0
      %3146 = vmatprep.mubr.bf16.mxu0 %v2502
      %3147 = vmatmul.mubr.bf16.gmra.mrb[0].mxu0 %v2496
      %v3148 = vpop.f32.mrb[0].mxu0
      %v3149 = vadd.f32 %v2988, %v3148
      %v3150 = vpop.f32.mrb[0].mxu0
      %v3151 = vpop.f32.mrb[0].mxu0
      %v3152 = vadd.f32 %v2991, %v3151
      %v3153 = vpop.f32.mrb[0].mxu0
      %3154 = vmatprep.mubr.bf16.mxu0 %v2519
      %3155 = vmatmul.mubr.bf16.gmra.mrb[0].mxu0 %v2513
      %v3156 = vpop.f32.mrb[0].mxu0
      %v3157 = vadd.f32 %v2996, %v3156
      %v3158 = vpop.f32.mrb[0].mxu0
      %v3159 = vpop.f32.mrb[0].mxu0
      %v3160 = vadd.f32 %v2999, %v3159
      %v3161 = vpop.f32.mrb[0].mxu0
      %3162 = vmatprep.mubr.bf16.mxu0 %v2520
      %3163 = vmatmul.mubr.bf16.gmra.mrb[0].mxu0 %v2514
      %v3164 = vpop.f32.mrb[0].mxu0
      %v3165 = vadd.f32 %v3004, %v3164
      %v3166 = vpop.f32.mrb[0].mxu0
      %v3167 = vpop.f32.mrb[0].mxu0
      %v3168 = vadd.f32 %v3007, %v3167
      %v3169 = vpop.f32.mrb[0].mxu0
      %3170 = vdwg.mxu0
      %3171 = vmatprep.subr.bf16.mxu0 0
      %3172 = vmatpush1.bf16.msra.mxu0 %v1366
      %3173 = vmatprep.subr.bf16.mxu0 0
      %3174 = vmatpush1.bf16.msra.mxu0 %v1367
      %3175 = vmatprep.subr.bf16.mxu0 0
      %3176 = vmatpush1.bf16.msra.mxu0 %v1368
      %3177 = vmatprep.subr.bf16.mxu0 0
      %3178 = vmatpush1.bf16.msra.mxu0 %v1369
      %3179 = vmatprep.subr.bf16.mxu0 0
      %3180 = vmatpush1.bf16.msra.mxu0 %v1370
      %3181 = vmatprep.subr.bf16.mxu0 0
      %3182 = vmatpush1.bf16.msra.mxu0 %v1371
      %3183 = vmatprep.subr.bf16.mxu0 0
      %3184 = vmatpush1.bf16.msra.mxu0 %v1372
      %3185 = vmatprep.subr.bf16.mxu0 0
      %3186 = vmatpush1.bf16.msra.mxu0 %v1373
      %3187 = vmatprep.subr.bf16.mxu0 0
      %3188 = vmatpush1.bf16.msra.mxu0 0
      %3189 = vmatprep.subr.bf16.mxu0 0
      %3190 = vmatpush1.bf16.msra.mxu0 0
      %3191 = vmatprep.subr.bf16.mxu0 0
      %3192 = vmatpush1.bf16.msra.mxu0 0
      %3193 = vmatprep.subr.bf16.mxu0 0
      %3194 = vmatpush1.bf16.msra.mxu0 0
      %3195 = vmatprep.subr.bf16.mxu0 0
      %3196 = vmatpush1.bf16.msra.mxu0 0
      %3197 = vmatprep.subr.bf16.mxu0 0
      %3198 = vmatpush1.bf16.msra.mxu0 0
      %3199 = vmatprep.subr.bf16.mxu0 0
      %3200 = vmatpush1.bf16.msra.mxu0 0
      %3201 = vmatprep.subr.bf16.mxu0 0
      %3202 = vmatpush1.bf16.msra.mxu0 0
      %3203 = vmatprep.mubr.bf16.mxu0 0
      %3204 = vmatmul.mubr.bf16.gmra.mrb[0].mxu0 %v2479
      %v3205 = vpop.f32.mrb[0].mxu0
      %v3206 = vadd.f32 %v3045, %v3205
      %v3207 = vpop.f32.mrb[0].mxu0
      %v3208 = vpop.f32.mrb[0].mxu0
      %v3209 = vadd.f32 %v3048, %v3208
      %v3210 = vpop.f32.mrb[0].mxu0
      %3211 = vmatprep.mubr.bf16.mxu0 0
      %3212 = vmatmul.mubr.bf16.gmra.mrb[0].mxu0 %v2480
      %v3213 = vpop.f32.mrb[0].mxu0
      %v3214 = vadd.f32 %v3053, %v3213
      %v3215 = vpop.f32.mrb[0].mxu0
      %v3216 = vpop.f32.mrb[0].mxu0
      %v3217 = vadd.f32 %v3056, %v3216
      %v3218 = vpop.f32.mrb[0].mxu0
      %3219 = vmatprep.mubr.bf16.mxu0 0
      %3220 = vmatmul.mubr.bf16.gmra.mrb[0].mxu0 %v2481
      %v3221 = vpop.f32.mrb[0].mxu0
      %v3222 = vadd.f32 %v3061, %v3221
      %v3223 = vpop.f32.mrb[0].mxu0
      %v3224 = vpop.f32.mrb[0].mxu0
      %v3225 = vadd.f32 %v3064, %v3224
      %v3226 = vpop.f32.mrb[0].mxu0
      %3227 = vmatprep.mubr.bf16.mxu0 0
      %3228 = vmatmul.mubr.bf16.gmra.mrb[0].mxu0 %v2482
      %v3229 = vpop.f32.mrb[0].mxu0
      %v3230 = vadd.f32 %v3069, %v3229
      %v3231 = vpop.f32.mrb[0].mxu0
      %v3232 = vpop.f32.mrb[0].mxu0
      %v3233 = vadd.f32 %v3072, %v3232
      %v3234 = vpop.f32.mrb[0].mxu0
      %3235 = vmatprep.mubr.bf16.mxu0 0
      %3236 = vmatmul.mubr.bf16.gmra.mrb[0].mxu0 %v2483
      %v3237 = vpop.f32.mrb[0].mxu0
      %v3238 = vadd.f32 %v3077, %v3237
      %v3239 = vpop.f32.mrb[0].mxu0
      %v3240 = vpop.f32.mrb[0].mxu0
      %v3241 = vadd.f32 %v3080, %v3240
      %v3242 = vpop.f32.mrb[0].mxu0
      %3243 = vmatprep.mubr.bf16.mxu0 0
      %3244 = vmatmul.mubr.bf16.gmra.mrb[0].mxu0 %v2484
      %v3245 = vpop.f32.mrb[0].mxu0
      %v3246 = vadd.f32 %v3085, %v3245
      %v3247 = vpop.f32.mrb[0].mxu0
      %v3248 = vpop.f32.mrb[0].mxu0
      %v3249 = vadd.f32 %v3088, %v3248
      %v3250 = vpop.f32.mrb[0].mxu0
      %3251 = vmatprep.mubr.bf16.mxu0 0
      %3252 = vmatmul.mubr.bf16.gmra.mrb[0].mxu0 %v2485
      %v3253 = vpop.f32.mrb[0].mxu0
      %v3254 = vadd.f32 %v3093, %v3253
      %v3255 = vpop.f32.mrb[0].mxu0
      %v3256 = vpop.f32.mrb[0].mxu0
      %v3257 = vadd.f32 %v3096, %v3256
      %v3258 = vpop.f32.mrb[0].mxu0
      %3259 = vmatprep.mubr.bf16.mxu0 0
      %3260 = vmatmul.mubr.bf16.gmra.mrb[0].mxu0 %v2486
      %v3261 = vpop.f32.mrb[0].mxu0
      %v3262 = vadd.f32 %v3101, %v3261
      %v3263 = vpop.f32.mrb[0].mxu0
      %v3264 = vpop.f32.mrb[0].mxu0
      %v3265 = vadd.f32 %v3104, %v3264
      %v3266 = vpop.f32.mrb[0].mxu0
      %3267 = vmatprep.mubr.bf16.mxu0 0
      %3268 = vmatmul.mubr.bf16.gmra.mrb[0].mxu0 %v2487
      %v3269 = vpop.f32.mrb[0].mxu0
      %v3270 = vadd.f32 %v3109, %v3269
      %v3271 = vpop.f32.mrb[0].mxu0
      %v3272 = vpop.f32.mrb[0].mxu0
      %v3273 = vadd.f32 %v3112, %v3272
      %v3274 = vpop.f32.mrb[0].mxu0
      %3275 = vmatprep.mubr.bf16.mxu0 0
      %3276 = vmatmul.mubr.bf16.gmra.mrb[0].mxu0 %v2488
      %v3277 = vpop.f32.mrb[0].mxu0
      %v3278 = vadd.f32 %v3117, %v3277
      %v3279 = vpop.f32.mrb[0].mxu0
      %v3280 = vpop.f32.mrb[0].mxu0
      %v3281 = vadd.f32 %v3120, %v3280
      %v3282 = vpop.f32.mrb[0].mxu0
      %3283 = vmatprep.mubr.bf16.mxu0 0
      %3284 = vmatmul.mubr.bf16.gmra.mrb[0].mxu0 %v2489
      %v3285 = vpop.f32.mrb[0].mxu0
      %v3286 = vadd.f32 %v3125, %v3285
      %v3287 = vpop.f32.mrb[0].mxu0
      %v3288 = vpop.f32.mrb[0].mxu0
      %v3289 = vadd.f32 %v3128, %v3288
      %v3290 = vpop.f32.mrb[0].mxu0
      %3291 = vmatprep.mubr.bf16.mxu0 0
      %3292 = vmatmul.mubr.bf16.gmra.mrb[0].mxu0 %v2490
      %v3293 = vpop.f32.mrb[0].mxu0
      %v3294 = vadd.f32 %v3133, %v3293
      %v3295 = vpop.f32.mrb[0].mxu0
      %v3296 = vpop.f32.mrb[0].mxu0
      %v3297 = vadd.f32 %v3136, %v3296
      %v3298 = vpop.f32.mrb[0].mxu0
      %3299 = vmatprep.mubr.bf16.mxu0 0
      %3300 = vmatmul.mubr.bf16.gmra.mrb[0].mxu0 %v2507
      %v3301 = vpop.f32.mrb[0].mxu0
      %v3302 = vadd.f32 %v3141, %v3301
      %v3303 = vpop.f32.mrb[0].mxu0
      %v3304 = vpop.f32.mrb[0].mxu0
      %v3305 = vadd.f32 %v3144, %v3304
      %v3306 = vpop.f32.mrb[0].mxu0
      %3307 = vmatprep.mubr.bf16.mxu0 0
      %3308 = vmatmul.mubr.bf16.gmra.mrb[0].mxu0 %v2508
      %v3309 = vpop.f32.mrb[0].mxu0
      %v3310 = vadd.f32 %v3149, %v3309
      %v3311 = vpop.f32.mrb[0].mxu0
      %v3312 = vpop.f32.mrb[0].mxu0
      %v3313 = vadd.f32 %v3152, %v3312
      %v3314 = vpop.f32.mrb[0].mxu0
      %3315 = vmatprep.mubr.bf16.mxu0 0
      %3316 = vmatmul.mubr.bf16.gmra.mrb[0].mxu0 %v2525
      %v3317 = vpop.f32.mrb[0].mxu0
      %v3318 = vadd.f32 %v3157, %v3317
      %v3319 = vpop.f32.mrb[0].mxu0
      %v3320 = vpop.f32.mrb[0].mxu0
      %v3321 = vadd.f32 %v3160, %v3320
      %v3322 = vpop.f32.mrb[0].mxu0
      %3323 = vmatprep.mubr.bf16.mxu0 0
      %3324 = vmatmul.mubr.bf16.gmra.mrb[0].mxu0 %v2526
      %v3325 = vpop.f32.mrb[0].mxu0
      %v3326 = vadd.f32 %v3165, %v3325
      %v3327 = vpop.f32.mrb[0].mxu0
      %v3328 = vpop.f32.mrb[0].mxu0
      %v3329 = vadd.f32 %v3168, %v3328
      %v3330 = vpop.f32.mrb[0].mxu0
      %3331 = vdwg.mxu0
      %v3332 = vmax.f32 %v3206, 0.0
      %v3333 = vmax.f32 %v3209, 0.0
      %v3334 = vmax.f32 %v3214, 0.0
      %v3335 = vmax.f32 %v3217, 0.0
      %v3336 = vmax.f32 %v3222, 0.0
      %v3337 = vmax.f32 %v3225, 0.0
      %v3338 = vmax.f32 %v3230, 0.0
      %v3339 = vmax.f32 %v3233, 0.0
      %v3340 = vmax.f32 %v3238, 0.0
      %v3341 = vmax.f32 %v3241, 0.0
      %v3342 = vmax.f32 %v3246, 0.0
      %v3343 = vmax.f32 %v3249, 0.0
      %v3344 = vmax.f32 %v3254, 0.0
      %v3345 = vmax.f32 %v3257, 0.0
      %v3346 = vmax.f32 %v3262, 0.0
      %v3347 = vmax.f32 %v3265, 0.0
      %v3348 = vmax.f32 %v3270, 0.0
      %v3349 = vmax.f32 %v3273, 0.0
      %v3350 = vmax.f32 %v3278, 0.0
      %v3351 = vmax.f32 %v3281, 0.0
      %v3352 = vmax.f32 %v3286, 0.0
      %v3353 = vmax.f32 %v3289, 0.0
      %v3354 = vmax.f32 %v3294, 0.0
      %v3355 = vmax.f32 %v3297, 0.0
      %v3356 = vmax.f32 %v3302, 0.0
      %v3357 = vmax.f32 %v3305, 0.0
      %v3358 = vmax.f32 %v3310, 0.0
      %v3359 = vmax.f32 %v3313, 0.0
      %v3360 = vmax.f32 %v3318, 0.0
      %v3361 = vmax.f32 %v3321, 0.0
      %v3362 = vmax.f32 %v3326, 0.0
      %v3363 = vmax.f32 %v3329, 0.0
      %v3364 = vsel %vm651, %v3332, 0.0
      %v3365 = vsel %vm652, %v3333, 0.0
      %v3366 = vsel %vm653, %v3334, 0.0
      %v3367 = vsel %vm654, %v3335, 0.0
      %v3368 = vsel %vm655, %v3336, 0.0
      %v3369 = vsel %vm656, %v3337, 0.0
      %v3370 = vsel %vm657, %v3338, 0.0
      %v3371 = vsel %vm658, %v3339, 0.0
      %v3372 = vsel %vm659, %v3340, 0.0
      %v3373 = vsel %vm660, %v3341, 0.0
      %v3374 = vsel %vm661, %v3342, 0.0
      %v3375 = vsel %vm662, %v3343, 0.0
      %v3376 = vsel %vm663, %v3344, 0.0
      %v3377 = vsel %vm664, %v3345, 0.0
      %v3378 = vsel %vm665, %v3346, 0.0
      %v3379 = vsel %vm666, %v3347, 0.0
      %v3380 = vsel %vm667, %v3348, 0.0
      %v3381 = vsel %vm668, %v3349, 0.0
      %v3382 = vsel %vm669, %v3350, 0.0
      %v3383 = vsel %vm670, %v3351, 0.0
      %v3384 = vsel %vm671, %v3352, 0.0
      %v3385 = vsel %vm672, %v3353, 0.0
      %v3386 = vsel %vm673, %v3354, 0.0
      %v3387 = vsel %vm674, %v3355, 0.0
      %v3388 = vsel %vm675, %v3356, 0.0
      %v3389 = vsel %vm676, %v3357, 0.0
      %v3390 = vsel %vm677, %v3358, 0.0
      %v3391 = vsel %vm678, %v3359, 0.0
      %v3392 = vsel %vm679, %v3360, 0.0
      %v3393 = vsel %vm680, %v3361, 0.0
      %v3394 = vsel %vm681, %v3362, 0.0
      %v3395 = vsel %vm682, %v3363, 0.0
      %v3396 = vpack.c.bf16 %v3365, %v3364
      %v3397 = vpack.c.bf16 %v3367, %v3366
      %v3398 = vpack.c.bf16 %v3369, %v3368
      %v3399 = vpack.c.bf16 %v3371, %v3370
      %v3400 = vpack.c.bf16 %v3373, %v3372
      %v3401 = vpack.c.bf16 %v3375, %v3374
      %v3402 = vpack.c.bf16 %v3377, %v3376
      %v3403 = vpack.c.bf16 %v3379, %v3378
      %v3404 = vpack.c.bf16 %v3381, %v3380
      %v3405 = vpack.c.bf16 %v3383, %v3382
      %v3406 = vpack.c.bf16 %v3385, %v3384
      %v3407 = vpack.c.bf16 %v3387, %v3386
      %v3408 = vpack.c.bf16 %v3389, %v3388
      %v3409 = vpack.c.bf16 %v3391, %v3390
      %v3410 = vpack.c.bf16 %v3393, %v3392
      %v3411 = vpack.c.bf16 %v3395, %v3394
      %3412 = vst [vmem:[#allocation2 + $0xa0] sm:$0xff] %v3396
      %3413 = vst [vmem:[#allocation2 + $0xa8] sm:$0xff] %v3397
      %3414 = vst [vmem:[#allocation2 + $0xb0] sm:$0xff] %v3398
      %3415 = vst [vmem:[#allocation2 + $0xb8] sm:$0xff] %v3399
      %3416 = vst [vmem:[#allocation2 + $0xc0] sm:$0xff] %v3400
      %3417 = vst [vmem:[#allocation2 + $0xc8] sm:$0xff] %v3401
      %3418 = vst [vmem:[#allocation2 + $0xd0] sm:$0xff] %v3402
      %3419 = vst [vmem:[#allocation2 + $0xd8] sm:$0xff] %v3403
      %3420 = vst [vmem:[#allocation2 + $0xe0] sm:$0xff] %v3404
      %3421 = vst [vmem:[#allocation2 + $0xe8] sm:$0xff] %v3405
      %3422 = vst [vmem:[#allocation2 + $0xf0] sm:$0xff] %v3406
      %3423 = vst [vmem:[#allocation2 + $0xf8] sm:$0xff] %v3407
      %3424 = vst [vmem:[#allocation2 + $0x100] sm:$0xff] %v3408
      %3425 = vst [vmem:[#allocation2 + $0x108] sm:$0xff] %v3409
      %3426 = vst [vmem:[#allocation2 + $0x110] sm:$0xff] %v3410
      %3427 = vst [vmem:[#allocation2 + $0x118] sm:$0xff] %v3411
      %v3428 = vld [vmem:[%s2] sm:$0xf]
      %v3429 = vld [vmem:[%s2 + $0x4] sm:$0xf]
      %v3430 = vld [vmem:[%s2 + $0x8] sm:$0xf]
      %v3431 = vld [vmem:[%s2 + $0xc] sm:$0xf]
      %v3432 = vld [vmem:[%s2 + $0x10] sm:$0xf]
      %v3433 = vld [vmem:[%s2 + $0x14] sm:$0xf]
      %v3434 = vld [vmem:[%s2 + $0x18] sm:$0xf]
      %v3435 = vld [vmem:[%s2 + $0x1c] sm:$0xf]
      %v3436 = vld [vmem:[%s2 + $0x20] sm:$0xf]
      %v3437 = vld [vmem:[%s2 + $0x24] sm:$0xf]
      %v3438 = vld [vmem:[%s2 + $0x28] sm:$0xf]
      %v3439 = vld [vmem:[%s2 + $0x2c] sm:$0xf]
      %v3440 = vld [vmem:[%s2 + $0x30] sm:$0xf]
      %v3441 = vld [vmem:[%s2 + $0x34] sm:$0xf]
      %v3442 = vld [vmem:[%s2 + $0x38] sm:$0xf]
      %v3443 = vld [vmem:[%s2 + $0x3c] sm:$0xf]
      %v3444 = vld [vmem:[%s2 + $0x40] sm:$0xf]
      %v3445 = vld [vmem:[%s2 + $0x44] sm:$0xf]
      %v3446 = vld [vmem:[%s2 + $0x48] sm:$0xf]
      %v3447 = vld [vmem:[%s2 + $0x4c] sm:$0xf]
      %v3448 = vld [vmem:[%s2 + $0x50] sm:$0xf]
      %v3449 = vld [vmem:[%s2 + $0x54] sm:$0xf]
      %v3450 = vld [vmem:[%s2 + $0x58] sm:$0xf]
      %v3451 = vld [vmem:[%s2 + $0x5c] sm:$0xf]
      %v3452 = vld [vmem:[%s2 + $0x60] sm:$0xf]
      %v3453 = vld [vmem:[%s2 + $0x64] sm:$0xf]
      %v3454 = vld [vmem:[%s2 + $0x68] sm:$0xf]
      %v3455 = vld [vmem:[%s2 + $0x6c] sm:$0xf]
      %v3456 = vld [vmem:[%s2 + $0x70] sm:$0xf]
      %v3457 = vld [vmem:[%s2 + $0x74] sm:$0xf]
      %v3458 = vld [vmem:[%s2 + $0x78] sm:$0xf]
      %v3459 = vld [vmem:[%s2 + $0x7c] sm:$0xf]
      %v3460 = vld [vmem:[%s2 + $0x80] sm:$0xf]
      %v3461 = vld [vmem:[%s2 + $0x84] sm:$0xf]
      %v3462 = vld [vmem:[%s2 + $0x88] sm:$0xf]
      %v3463 = vld [vmem:[%s2 + $0x8c] sm:$0xf]
      %v3464 = vld [vmem:[%s2 + $0x90] sm:$0xf]
      %v3465 = vld [vmem:[%s2 + $0x94] sm:$0xf]
      %v3466 = vld [vmem:[%s2 + $0x98] sm:$0xf]
      %v3467 = vld [vmem:[%s2 + $0x9c] sm:$0xf]
      %v3468 = vld [vmem:[%s2 + $0xa0] sm:$0xf]
      %v3469 = vld [vmem:[%s2 + $0xa4] sm:$0xf]
      %v3470 = vld [vmem:[%s2 + $0xa8] sm:$0xf]
      %v3471 = vld [vmem:[%s2 + $0xac] sm:$0xf]
      %v3472 = vld [vmem:[%s2 + $0xb0] sm:$0xf]
      %v3473 = vld [vmem:[%s2 + $0xb4] sm:$0xf]
      %v3474 = vld [vmem:[%s2 + $0xb8] sm:$0xf]
      %v3475 = vld [vmem:[%s2 + $0xbc] sm:$0xf]
      %v3476 = vld [vmem:[%s2 + $0xc0] sm:$0xf]
      %v3477 = vld [vmem:[%s2 + $0xc4] sm:$0xf]
      %v3478 = vld [vmem:[%s2 + $0xc8] sm:$0xf]
      %v3479 = vld [vmem:[%s2 + $0xcc] sm:$0xf]
      %v3480 = vld [vmem:[%s2 + $0xd0] sm:$0xf]
      %v3481 = vld [vmem:[%s2 + $0xd4] sm:$0xf]
      %v3482 = vld [vmem:[%s2 + $0xd8] sm:$0xf]
      %v3483 = vld [vmem:[%s2 + $0xdc] sm:$0xf]
      %v3484 = vld [vmem:[%s2 + $0xe0] sm:$0xf]
      %v3485 = vld [vmem:[%s2 + $0xe4] sm:$0xf]
      %v3486 = vld [vmem:[%s2 + $0xe8] sm:$0xf]
      %v3487 = vld [vmem:[%s2 + $0xec] sm:$0xf]
      %v3488 = vld [vmem:[%s2 + $0xf0] sm:$0xf]
      %v3489 = vld [vmem:[%s2 + $0xf4] sm:$0xf]
      %v3490 = vld [vmem:[%s2 + $0xf8] sm:$0xf]
      %v3491 = vld [vmem:[%s2 + $0xfc] sm:$0xf]
      %v3492 = vld [vmem:[%s2 + $0x100] sm:$0xf]
      %v3493 = vld [vmem:[%s2 + $0x104] sm:$0xf]
      %v3494 = vld [vmem:[%s2 + $0x108] sm:$0xf]
      %v3495 = vld [vmem:[%s2 + $0x10c] sm:$0xf]
      %v3496 = vld [vmem:[%s2 + $0x110] sm:$0xf]
      %v3497 = vld [vmem:[%s2 + $0x114] sm:$0xf]
      %v3498 = vld [vmem:[%s2 + $0x118] sm:$0xf]
      %v3499 = vld [vmem:[%s2 + $0x11c] sm:$0xf]
      %v3500 = vld [vmem:[%s2 + $0x120] sm:$0xf]
      %v3501 = vld [vmem:[%s2 + $0x124] sm:$0xf]
      %v3502 = vld [vmem:[%s2 + $0x128] sm:$0xf]
      %v3503 = vld [vmem:[%s2 + $0x12c] sm:$0xf]
      %v3504 = vld [vmem:[%s2 + $0x130] sm:$0xf]
      %v3505 = vld [vmem:[%s2 + $0x134] sm:$0xf]
      %v3506 = vld [vmem:[%s2 + $0x138] sm:$0xf]
      %v3507 = vld [vmem:[%s2 + $0x13c] sm:$0xf]
      %v3508 = vld [vmem:[%s2 + $0x140] sm:$0xf]
      %v3509 = vld [vmem:[%s2 + $0x144] sm:$0xf]
      %v3510 = vld [vmem:[%s2 + $0x148] sm:$0xf]
      %v3511 = vld [vmem:[%s2 + $0x14c] sm:$0xf]
      %v3512 = vld [vmem:[%s2 + $0x150] sm:$0xf]
      %v3513 = vld [vmem:[%s2 + $0x154] sm:$0xf]
      %v3514 = vld [vmem:[%s2 + $0x158] sm:$0xf]
      %v3515 = vld [vmem:[%s2 + $0x15c] sm:$0xf]
      %v3516 = vld [vmem:[%s2 + $0x160] sm:$0xf]
      %v3517 = vld [vmem:[%s2 + $0x164] sm:$0xf]
      %v3518 = vld [vmem:[%s2 + $0x168] sm:$0xf]
      %v3519 = vld [vmem:[%s2 + $0x16c] sm:$0xf]
      %v3520 = vld [vmem:[%s2 + $0x170] sm:$0xf]
      %v3521 = vld [vmem:[%s2 + $0x174] sm:$0xf]
      %v3522 = vld [vmem:[%s2 + $0x178] sm:$0xf]
      %v3523 = vld [vmem:[%s2 + $0x17c] sm:$0xf]
      %v3524 = vld [vmem:[%s2 + $0x180] sm:$0xf]
      %v3525 = vld [vmem:[%s2 + $0x184] sm:$0xf]
      %v3526 = vld [vmem:[%s2 + $0x188] sm:$0xf]
      %v3527 = vld [vmem:[%s2 + $0x18c] sm:$0xf]
      %v3528 = vld [vmem:[%s2 + $0x190] sm:$0xf]
      %v3529 = vld [vmem:[%s2 + $0x194] sm:$0xf]
      %v3530 = vld [vmem:[%s2 + $0x198] sm:$0xf]
      %v3531 = vld [vmem:[%s2 + $0x19c] sm:$0xf]
      %v3532 = vld [vmem:[%s2 + $0x1a0] sm:$0xf]
      %v3533 = vld [vmem:[%s2 + $0x1a4] sm:$0xf]
      %v3534 = vld [vmem:[%s2 + $0x1a8] sm:$0xf]
      %v3535 = vld [vmem:[%s2 + $0x1ac] sm:$0xf]
      %v3536 = vld [vmem:[%s2 + $0x1b0] sm:$0xf]
      %v3537 = vld [vmem:[%s2 + $0x1b4] sm:$0xf]
      %v3538 = vld [vmem:[%s2 + $0x1b8] sm:$0xf]
      %v3539 = vld [vmem:[%s2 + $0x1bc] sm:$0xf]
      %v3540 = vld [vmem:[%s2 + $0x1c0] sm:$0xf]
      %v3541 = vld [vmem:[%s2 + $0x1c4] sm:$0xf]
      %v3542 = vld [vmem:[%s2 + $0x1c8] sm:$0xf]
      %v3543 = vld [vmem:[%s2 + $0x1cc] sm:$0xf]
      %v3544 = vld [vmem:[%s2 + $0x1d0] sm:$0xf]
      %v3545 = vld [vmem:[%s2 + $0x1d4] sm:$0xf]
      %v3546 = vld [vmem:[%s2 + $0x1d8] sm:$0xf]
      %v3547 = vld [vmem:[%s2 + $0x1dc] sm:$0xf]
      %v3548 = vld [vmem:[%s2 + $0x1e0] sm:$0xf]
      %v3549 = vld [vmem:[%s2 + $0x1e4] sm:$0xf]
      %v3550 = vld [vmem:[%s2 + $0x1e8] sm:$0xf]
      %v3551 = vld [vmem:[%s2 + $0x1ec] sm:$0xf]
      %v3552 = vld [vmem:[%s2 + $0x1f0] sm:$0xf]
      %v3553 = vld [vmem:[%s2 + $0x1f4] sm:$0xf]
      %v3554 = vld [vmem:[%s2 + $0x1f8] sm:$0xf]
      %v3555 = vld [vmem:[%s2 + $0x1fc] sm:$0xf]
      %v3556 = vld [vmem:[%s2 + $0x200] sm:$0xf]
      %v3557 = vld [vmem:[%s2 + $0x204] sm:$0xf]
      %v3558 = vld [vmem:[%s2 + $0x208] sm:$0xf]
      %v3559 = vld [vmem:[%s2 + $0x20c] sm:$0xf]
      %v3560 = vld [vmem:[%s2 + $0x210] sm:$0xf]
      %v3561 = vld [vmem:[%s2 + $0x214] sm:$0xf]
      %v3562 = vld [vmem:[%s2 + $0x218] sm:$0xf]
      %v3563 = vld [vmem:[%s2 + $0x21c] sm:$0xf]
      %v3564 = vld [vmem:[%s2 + $0x220] sm:$0xf]
      %v3565 = vld [vmem:[%s2 + $0x224] sm:$0xf]
      %v3566 = vld [vmem:[%s2 + $0x228] sm:$0xf]
      %v3567 = vld [vmem:[%s2 + $0x22c] sm:$0xf]
      %v3568 = vld [vmem:[%s2 + $0x230] sm:$0xf]
      %v3569 = vld [vmem:[%s2 + $0x234] sm:$0xf]
      %v3570 = vld [vmem:[%s2 + $0x238] sm:$0xf]
      %v3571 = vld [vmem:[%s2 + $0x23c] sm:$0xf]
      %v3572 = vld [vmem:[%s4] sm:$0x1]
      %v3573 = vld [vmem:[#allocation2 + $0x8] sm:$0x80]
      %v3574 = vld [vmem:[#allocation2 + $0x10] sm:$0xff]
      %v3575 = vld [vmem:[#allocation2 + $0x18] sm:$0xff]
      %v3576 = vld [vmem:[#allocation2 + $0x20] sm:$0xff]
      %v3577 = vld [vmem:[#allocation2 + $0x28] sm:$0xff]
      %v3578 = vld [vmem:[#allocation2 + $0x30] sm:$0xff]
      %v3579 = vld [vmem:[#allocation2 + $0x38] sm:$0xff]
      %v3580 = vld [vmem:[#allocation2 + $0x40] sm:$0xff]
      %v3581 = vld [vmem:[#allocation2 + $0x48] sm:$0xff]
      %v3582 = vld [vmem:[#allocation2 + $0x50] sm:$0xff]
      %v3583 = vld [vmem:[#allocation2 + $0x58] sm:$0xff]
      %v3584 = vld [vmem:[#allocation2 + $0x60] sm:$0xff]
      %v3585 = vld [vmem:[#allocation2 + $0x68] sm:$0xff]
      %v3586 = vld [vmem:[#allocation2 + $0x70] sm:$0xff]
      %v3587 = vld [vmem:[#allocation2 + $0x78] sm:$0xff]
      %v3588 = vld [vmem:[#allocation2 + $0x80] sm:$0xff]
      %v3589 = vld [vmem:[#allocation2 + $0x88] sm:$0xff]
      %v3590 = vld [vmem:[#allocation2 + $0x90] sm:$0x1]
      %v3591 = vld [vmem:[#allocation2 + $0x18] sm:$0x80]
      %v3592 = vld [vmem:[#allocation2 + $0x90] sm:$0xff]
      %v3593 = vld [vmem:[#allocation2 + $0x98] sm:$0xff]
      %v3594 = vld [vmem:[#allocation2 + $0xa0] sm:$0x1]
      %v3595 = vld [vmem:[#allocation2 + $0x28] sm:$0x80]
      %v3596 = vld [vmem:[#allocation2 + $0xa0] sm:$0xff]
      %v3597 = vld [vmem:[#allocation2 + $0xa8] sm:$0xff]
      %v3598 = vld [vmem:[#allocation2 + $0xb0] sm:$0x1]
      %vm3599 = vsmask.f32 7424
      %v3601 = vshll.u32 %v3574, 16
      %v3603 = vrot.slane %v3601, 1
      %v3604 = vshrl.u32 %v3574, 16
      %v3606 = vor.u32 %v3604, %v3603
      %v3608 = vshll.u32 %v3575, 16
      %v3610 = vrot.slane %v3608, 1
      %v3611 = vsel %vm3599, %v3606, %v3610
      %v3612 = vshrl.u32 %v3575, 16
      %v3614 = vor.u32 %v3612, %v3610
      %v3616 = vshll.u32 %v3576, 16
      %v3618 = vrot.slane %v3616, 1
      %v3619 = vsel %vm3599, %v3614, %v3618
      %v3620 = vshrl.u32 %v3576, 16
      %v3622 = vor.u32 %v3620, %v3618
      %v3624 = vshll.u32 %v3577, 16
      %v3626 = vrot.slane %v3624, 1
      %v3627 = vsel %vm3599, %v3622, %v3626
      %v3628 = vshrl.u32 %v3577, 16
      %v3630 = vor.u32 %v3628, %v3626
      %v3632 = vshll.u32 %v3578, 16
      %v3634 = vrot.slane %v3632, 1
      %v3635 = vsel %vm3599, %v3630, %v3634
      %v3636 = vshrl.u32 %v3578, 16
      %v3638 = vor.u32 %v3636, %v3634
      %v3640 = vshll.u32 %v3579, 16
      %v3642 = vrot.slane %v3640, 1
      %v3643 = vsel %vm3599, %v3638, %v3642
      %v3644 = vshrl.u32 %v3579, 16
      %v3646 = vor.u32 %v3644, %v3642
      %v3648 = vshll.u32 %v3580, 16
      %v3650 = vrot.slane %v3648, 1
      %v3651 = vsel %vm3599, %v3646, %v3650
      %v3652 = vshrl.u32 %v3580, 16
      %v3654 = vor.u32 %v3652, %v3650
      %v3656 = vshll.u32 %v3581, 16
      %v3658 = vrot.slane %v3656, 1
      %v3659 = vsel %vm3599, %v3654, %v3658
      %v3660 = vshrl.u32 %v3581, 16
      %v3662 = vor.u32 %v3660, %v3658
      %v3664 = vshll.u32 %v3582, 16
      %v3666 = vrot.slane %v3664, 1
      %v3667 = vsel %vm3599, %v3662, %v3666
      %v3668 = vshrl.u32 %v3582, 16
      %v3670 = vor.u32 %v3668, %v3666
      %v3672 = vshll.u32 %v3583, 16
      %v3674 = vrot.slane %v3672, 1
      %v3675 = vsel %vm3599, %v3670, %v3674
      %v3676 = vshrl.u32 %v3583, 16
      %v3678 = vor.u32 %v3676, %v3674
      %v3680 = vshll.u32 %v3584, 16
      %v3682 = vrot.slane %v3680, 1
      %v3683 = vsel %vm3599, %v3678, %v3682
      %v3684 = vshrl.u32 %v3584, 16
      %v3686 = vor.u32 %v3684, %v3682
      %v3688 = vshll.u32 %v3585, 16
      %v3690 = vrot.slane %v3688, 1
      %v3691 = vsel %vm3599, %v3686, %v3690
      %v3692 = vshrl.u32 %v3585, 16
      %v3694 = vor.u32 %v3692, %v3690
      %v3696 = vshll.u32 %v3586, 16
      %v3698 = vrot.slane %v3696, 1
      %v3699 = vsel %vm3599, %v3694, %v3698
      %v3700 = vshrl.u32 %v3586, 16
      %v3702 = vor.u32 %v3700, %v3698
      %v3704 = vshll.u32 %v3587, 16
      %v3706 = vrot.slane %v3704, 1
      %v3707 = vsel %vm3599, %v3702, %v3706
      %v3708 = vshrl.u32 %v3587, 16
      %v3710 = vor.u32 %v3708, %v3706
      %v3712 = vshll.u32 %v3588, 16
      %v3714 = vrot.slane %v3712, 1
      %v3715 = vsel %vm3599, %v3710, %v3714
      %v3716 = vshrl.u32 %v3588, 16
      %v3718 = vor.u32 %v3716, %v3714
      %v3720 = vshll.u32 %v3589, 16
      %v3722 = vrot.slane %v3720, 1
      %v3723 = vsel %vm3599, %v3718, %v3722
      %v3724 = vshrl.u32 %v3589, 16
      %v3726 = vor.u32 %v3724, %v3722
      %vm3744 = vcmask 1046528
      %v3745 = vrot.slane %v3574, 1
      %v3746 = vrot.slane %v3575, 1
      %v3747 = vsel %vm3744, %v3745, %v3746
      %v3748 = vrot.slane %v3576, 1
      %v3749 = vsel %vm3744, %v3746, %v3748
      %v3750 = vrot.slane %v3577, 1
      %v3751 = vsel %vm3744, %v3748, %v3750
      %v3752 = vrot.slane %v3578, 1
      %v3753 = vsel %vm3744, %v3750, %v3752
      %v3754 = vrot.slane %v3579, 1
      %v3755 = vsel %vm3744, %v3752, %v3754
      %v3756 = vrot.slane %v3580, 1
      %v3757 = vsel %vm3744, %v3754, %v3756
      %v3758 = vrot.slane %v3581, 1
      %v3759 = vsel %vm3744, %v3756, %v3758
      %v3760 = vrot.slane %v3582, 1
      %v3761 = vsel %vm3744, %v3758, %v3760
      %v3762 = vrot.slane %v3583, 1
      %v3763 = vsel %vm3744, %v3760, %v3762
      %v3764 = vrot.slane %v3584, 1
      %v3765 = vsel %vm3744, %v3762, %v3764
      %v3766 = vrot.slane %v3585, 1
      %v3767 = vsel %vm3744, %v3764, %v3766
      %v3768 = vrot.slane %v3586, 1
      %v3769 = vsel %vm3744, %v3766, %v3768
      %v3770 = vrot.slane %v3587, 1
      %v3771 = vsel %vm3744, %v3768, %v3770
      %v3772 = vrot.slane %v3588, 1
      %v3773 = vsel %vm3744, %v3770, %v3772
      %v3774 = vrot.slane %v3589, 1
      %v3775 = vsel %vm3744, %v3772, %v3774
      %v3776 = vrot.slane %v3590, 1
      %v3777 = vsel %vm3744, %v3774, %v3776
      %v3779 = vshll.u32 %v3592, 16
      %v3781 = vrot.slane %v3779, 1
      %v3782 = vsel %vm3599, %v3726, %v3781
      %v3783 = vshrl.u32 %v3592, 16
      %v3785 = vor.u32 %v3783, %v3781
      %v3787 = vshll.u32 %v3593, 16
      %v3789 = vrot.slane %v3787, 1
      %v3790 = vsel %vm3599, %v3785, %v3789
      %v3791 = vshrl.u32 %v3593, 16
      %v3793 = vor.u32 %v3791, %v3789
      %v3797 = vrot.slane %v3592, 1
      %v3798 = vsel %vm3744, %v3774, %v3797
      %v3799 = vrot.slane %v3593, 1
      %v3800 = vsel %vm3744, %v3797, %v3799
      %v3801 = vrot.slane %v3594, 1
      %v3802 = vsel %vm3744, %v3799, %v3801
      %v3804 = vshll.u32 %v3596, 16
      %v3806 = vrot.slane %v3804, 1
      %v3807 = vsel %vm3599, %v3793, %v3806
      %v3808 = vshrl.u32 %v3596, 16
      %v3810 = vor.u32 %v3808, %v3806
      %v3812 = vshll.u32 %v3597, 16
      %v3814 = vrot.slane %v3812, 1
      %v3815 = vsel %vm3599, %v3810, %v3814
      %v3816 = vshrl.u32 %v3597, 16
      %v3818 = vor.u32 %v3816, %v3814
      %v3822 = vrot.slane %v3596, 1
      %v3823 = vsel %vm3744, %v3799, %v3822
      %v3824 = vrot.slane %v3597, 1
      %v3825 = vsel %vm3744, %v3822, %v3824
      %v3826 = vrot.slane %v3598, 1
      %v3827 = vsel %vm3744, %v3824, %v3826
      %v3829 = vlaneseq
      %v3830 = vshrl.u32 %v3829, 7
      %v3831 = vsub.s32 0, %v3830
      %v3832 = vrot.slane %v3572, %v3831
      %vm3834 = vsmask.f32 256
      %v3836 = vshrl.u32 %v3573, 16
      %v3838 = vrot.slane %v3836, 7
      %v3839 = vrot.slane %v3604, 7
      %v3840 = vor.u32 %v3839, %v3601
      %v3841 = vsel %vm3834, %v3838, %v3840
      %v3843 = vshrl.u32 %v3603, 16
      %v3845 = vrot.slane %v3843, 7
      %v3847 = vshrl.u32 %v3611, 16
      %v3849 = vrot.slane %v3847, 7
      %v3850 = vshll.u32 %v3611, 16
      %v3852 = vor.u32 %v3849, %v3850
      %v3853 = vsel %vm3834, %v3845, %v3852
      %v3855 = vshrl.u32 %v3745, 16
      %v3857 = vrot.slane %v3855, 7
      %v3859 = vshrl.u32 %v3747, 16
      %v3861 = vrot.slane %v3859, 7
      %v3862 = vshll.u32 %v3747, 16
      %v3864 = vor.u32 %v3861, %v3862
      %v3865 = vsel %vm3834, %v3857, %v3864
      %v3867 = vshrl.u32 %v3591, 16
      %v3869 = vrot.slane %v3867, 7
      %v3870 = vrot.slane %v3620, 7
      %v3871 = vor.u32 %v3870, %v3616
      %v3872 = vsel %vm3834, %v3869, %v3871
      %v3874 = vshrl.u32 %v3618, 16
      %v3876 = vrot.slane %v3874, 7
      %v3878 = vshrl.u32 %v3627, 16
      %v3880 = vrot.slane %v3878, 7
      %v3881 = vshll.u32 %v3627, 16
      %v3883 = vor.u32 %v3880, %v3881
      %v3884 = vsel %vm3834, %v3876, %v3883
      %v3886 = vshrl.u32 %v3748, 16
      %v3888 = vrot.slane %v3886, 7
      %v3890 = vshrl.u32 %v3751, 16
      %v3892 = vrot.slane %v3890, 7
      %v3893 = vshll.u32 %v3751, 16
      %v3895 = vor.u32 %v3892, %v3893
      %v3896 = vsel %vm3834, %v3888, %v3895
      %v3898 = vshrl.u32 %v3595, 16
      %v3900 = vrot.slane %v3898, 7
      %v3901 = vrot.slane %v3636, 7
      %v3902 = vor.u32 %v3901, %v3632
      %v3903 = vsel %vm3834, %v3900, %v3902
      %v3905 = vshrl.u32 %v3634, 16
      %v3907 = vrot.slane %v3905, 7
      %v3909 = vshrl.u32 %v3643, 16
      %v3911 = vrot.slane %v3909, 7
      %v3912 = vshll.u32 %v3643, 16
      %v3914 = vor.u32 %v3911, %v3912
      %v3915 = vsel %vm3834, %v3907, %v3914
      %v3917 = vshrl.u32 %v3752, 16
      %v3919 = vrot.slane %v3917, 7
      %v3921 = vshrl.u32 %v3755, 16
      %v3923 = vrot.slane %v3921, 7
      %v3924 = vshll.u32 %v3755, 16
      %v3926 = vor.u32 %v3923, %v3924
      %v3927 = vsel %vm3834, %v3919, %v3926
      %v3928 = vrot.slane %v3612, 7
      %v3929 = vor.u32 %v3928, %v3608
      %v3930 = vsel %vm3834, %v3839, %v3929
      %v3932 = vshrl.u32 %v3619, 16
      %v3934 = vrot.slane %v3932, 7
      %v3935 = vshll.u32 %v3619, 16
      %v3937 = vor.u32 %v3934, %v3935
      %v3938 = vsel %vm3834, %v3849, %v3937
      %v3940 = vshrl.u32 %v3749, 16
      %v3942 = vrot.slane %v3940, 7
      %v3943 = vshll.u32 %v3749, 16
      %v3945 = vor.u32 %v3942, %v3943
      %v3946 = vsel %vm3834, %v3861, %v3945
      %v3947 = vrot.slane %v3628, 7
      %v3948 = vor.u32 %v3947, %v3624
      %v3949 = vsel %vm3834, %v3870, %v3948
      %v3951 = vshrl.u32 %v3635, 16
      %v3953 = vrot.slane %v3951, 7
      %v3954 = vshll.u32 %v3635, 16
      %v3956 = vor.u32 %v3953, %v3954
      %v3957 = vsel %vm3834, %v3880, %v3956
      %v3959 = vshrl.u32 %v3753, 16
      %v3961 = vrot.slane %v3959, 7
      %v3962 = vshll.u32 %v3753, 16
      %v3964 = vor.u32 %v3961, %v3962
      %v3965 = vsel %vm3834, %v3892, %v3964
      %v3966 = vrot.slane %v3644, 7
      %v3967 = vor.u32 %v3966, %v3640
      %v3968 = vsel %vm3834, %v3901, %v3967
      %v3970 = vshrl.u32 %v3651, 16
      %v3972 = vrot.slane %v3970, 7
      %v3973 = vshll.u32 %v3651, 16
      %v3975 = vor.u32 %v3972, %v3973
      %v3976 = vsel %vm3834, %v3911, %v3975
      %v3978 = vshrl.u32 %v3757, 16
      %v3980 = vrot.slane %v3978, 7
      %v3981 = vshll.u32 %v3757, 16
      %v3983 = vor.u32 %v3980, %v3981
      %v3984 = vsel %vm3834, %v3923, %v3983
      %v3985 = vsel %vm3834, %v3928, %v3871
      %v3986 = vsel %vm3834, %v3934, %v3883
      %v3987 = vsel %vm3834, %v3942, %v3895
      %v3988 = vsel %vm3834, %v3947, %v3902
      %v3989 = vsel %vm3834, %v3953, %v3914
      %v3990 = vsel %vm3834, %v3961, %v3926
      %v3991 = vrot.slane %v3652, 7
      %v3992 = vor.u32 %v3991, %v3648
      %v3993 = vsel %vm3834, %v3966, %v3992
      %v3995 = vshrl.u32 %v3659, 16
      %v3997 = vrot.slane %v3995, 7
      %v3998 = vshll.u32 %v3659, 16
      %v4000 = vor.u32 %v3997, %v3998
      %v4001 = vsel %vm3834, %v3972, %v4000
      %v4003 = vshrl.u32 %v3759, 16
      %v4005 = vrot.slane %v4003, 7
      %v4006 = vshll.u32 %v3759, 16
      %v4008 = vor.u32 %v4005, %v4006
      %v4009 = vsel %vm3834, %v3980, %v4008
      %v4010 = vrot.slane %v3660, 7
      %v4011 = vor.u32 %v4010, %v3656
      %v4012 = vsel %vm3834, %v3991, %v4011
      %v4014 = vshrl.u32 %v3667, 16
      %v4016 = vrot.slane %v4014, 7
      %v4017 = vshll.u32 %v3667, 16
      %v4019 = vor.u32 %v4016, %v4017
      %v4020 = vsel %vm3834, %v3997, %v4019
      %v4022 = vshrl.u32 %v3761, 16
      %v4024 = vrot.slane %v4022, 7
      %v4025 = vshll.u32 %v3761, 16
      %v4027 = vor.u32 %v4024, %v4025
      %v4028 = vsel %vm3834, %v4005, %v4027
      %v4029 = vrot.slane %v3668, 7
      %v4030 = vor.u32 %v4029, %v3664
      %v4031 = vsel %vm3834, %v4010, %v4030
      %v4033 = vshrl.u32 %v3675, 16
      %v4035 = vrot.slane %v4033, 7
      %v4036 = vshll.u32 %v3675, 16
      %v4038 = vor.u32 %v4035, %v4036
      %v4039 = vsel %vm3834, %v4016, %v4038
      %v4041 = vshrl.u32 %v3763, 16
      %v4043 = vrot.slane %v4041, 7
      %v4044 = vshll.u32 %v3763, 16
      %v4046 = vor.u32 %v4043, %v4044
      %v4047 = vsel %vm3834, %v4024, %v4046
      %v4048 = vrot.slane %v3676, 7
      %v4049 = vor.u32 %v4048, %v3672
      %v4050 = vsel %vm3834, %v4029, %v4049
      %v4052 = vshrl.u32 %v3683, 16
      %v4054 = vrot.slane %v4052, 7
      %v4055 = vshll.u32 %v3683, 16
      %v4057 = vor.u32 %v4054, %v4055
      %v4058 = vsel %vm3834, %v4035, %v4057
      %v4060 = vshrl.u32 %v3765, 16
      %v4062 = vrot.slane %v4060, 7
      %v4063 = vshll.u32 %v3765, 16
      %v4065 = vor.u32 %v4062, %v4063
      %v4066 = vsel %vm3834, %v4043, %v4065
      %v4067 = vrot.slane %v3684, 7
      %v4068 = vor.u32 %v4067, %v3680
      %v4069 = vsel %vm3834, %v4048, %v4068
      %v4071 = vshrl.u32 %v3691, 16
      %v4073 = vrot.slane %v4071, 7
      %v4074 = vshll.u32 %v3691, 16
      %v4076 = vor.u32 %v4073, %v4074
      %v4077 = vsel %vm3834, %v4054, %v4076
      %v4079 = vshrl.u32 %v3767, 16
      %v4081 = vrot.slane %v4079, 7
      %v4082 = vshll.u32 %v3767, 16
      %v4084 = vor.u32 %v4081, %v4082
      %v4085 = vsel %vm3834, %v4062, %v4084
      %v4086 = vrot.slane %v3692, 7
      %v4087 = vor.u32 %v4086, %v3688
      %v4088 = vsel %vm3834, %v4067, %v4087
      %v4090 = vshrl.u32 %v3699, 16
      %v4092 = vrot.slane %v4090, 7
      %v4093 = vshll.u32 %v3699, 16
      %v4095 = vor.u32 %v4092, %v4093
      %v4096 = vsel %vm3834, %v4073, %v4095
      %v4098 = vshrl.u32 %v3769, 16
      %v4100 = vrot.slane %v4098, 7
      %v4101 = vshll.u32 %v3769, 16
      %v4103 = vor.u32 %v4100, %v4101
      %v4104 = vsel %vm3834, %v4081, %v4103
      %v4105 = vrot.slane %v3700, 7
      %v4106 = vor.u32 %v4105, %v3696
      %v4107 = vsel %vm3834, %v4086, %v4106
      %v4109 = vshrl.u32 %v3707, 16
      %v4111 = vrot.slane %v4109, 7
      %v4112 = vshll.u32 %v3707, 16
      %v4114 = vor.u32 %v4111, %v4112
      %v4115 = vsel %vm3834, %v4092, %v4114
      %v4117 = vshrl.u32 %v3771, 16
      %v4119 = vrot.slane %v4117, 7
      %v4120 = vshll.u32 %v3771, 16
      %v4122 = vor.u32 %v4119, %v4120
      %v4123 = vsel %vm3834, %v4100, %v4122
      %v4124 = vrot.slane %v3708, 7
      %v4125 = vor.u32 %v4124, %v3704
      %v4126 = vsel %vm3834, %v4105, %v4125
      %v4128 = vshrl.u32 %v3715, 16
      %v4130 = vrot.slane %v4128, 7
      %v4131 = vshll.u32 %v3715, 16
      %v4133 = vor.u32 %v4130, %v4131
      %v4134 = vsel %vm3834, %v4111, %v4133
      %v4136 = vshrl.u32 %v3773, 16
      %v4138 = vrot.slane %v4136, 7
      %v4139 = vshll.u32 %v3773, 16
      %v4141 = vor.u32 %v4138, %v4139
      %v4142 = vsel %vm3834, %v4119, %v4141
      %v4143 = vrot.slane %v3716, 7
      %v4144 = vor.u32 %v4143, %v3712
      %v4145 = vsel %vm3834, %v4124, %v4144
      %v4147 = vshrl.u32 %v3723, 16
      %v4149 = vrot.slane %v4147, 7
      %v4150 = vshll.u32 %v3723, 16
      %v4152 = vor.u32 %v4149, %v4150
      %v4153 = vsel %vm3834, %v4130, %v4152
      %v4155 = vshrl.u32 %v3775, 16
      %v4157 = vrot.slane %v4155, 7
      %v4158 = vshll.u32 %v3775, 16
      %v4160 = vor.u32 %v4157, %v4158
      %v4161 = vsel %vm3834, %v4138, %v4160
      %v4162 = vrot.slane %v3724, 7
      %v4163 = vor.u32 %v4162, %v3720
      %v4164 = vsel %vm3834, %v4143, %v4163
      %v4166 = vshrl.u32 %v3782, 16
      %v4168 = vrot.slane %v4166, 7
      %v4169 = vshll.u32 %v3782, 16
      %v4171 = vor.u32 %v4168, %v4169
      %v4172 = vsel %vm3834, %v4149, %v4171
      %v4174 = vshrl.u32 %v3798, 16
      %v4176 = vrot.slane %v4174, 7
      %v4177 = vshll.u32 %v3798, 16
      %v4179 = vor.u32 %v4176, %v4177
      %v4180 = vsel %vm3834, %v4157, %v4179
      %v4181 = vrot.slane %v3783, 7
      %v4182 = vor.u32 %v4181, %v3779
      %v4183 = vsel %vm3834, %v4162, %v4182
      %v4185 = vshrl.u32 %v3790, 16
      %v4187 = vrot.slane %v4185, 7
      %v4188 = vshll.u32 %v3790, 16
      %v4190 = vor.u32 %v4187, %v4188
      %v4191 = vsel %vm3834, %v4168, %v4190
      %v4193 = vshrl.u32 %v3800, 16
      %v4195 = vrot.slane %v4193, 7
      %v4196 = vshll.u32 %v3800, 16
      %v4198 = vor.u32 %v4195, %v4196
      %v4199 = vsel %vm3834, %v4176, %v4198
      %v4200 = vrot.slane %v3791, 7
      %v4201 = vor.u32 %v4200, %v3787
      %v4202 = vsel %vm3834, %v4181, %v4201
      %v4204 = vshrl.u32 %v3807, 16
      %v4206 = vrot.slane %v4204, 7
      %v4207 = vshll.u32 %v3807, 16
      %v4209 = vor.u32 %v4206, %v4207
      %v4210 = vsel %vm3834, %v4187, %v4209
      %v4212 = vshrl.u32 %v3823, 16
      %v4214 = vrot.slane %v4212, 7
      %v4215 = vshll.u32 %v3823, 16
      %v4217 = vor.u32 %v4214, %v4215
      %v4218 = vsel %vm3834, %v4195, %v4217
      %v4219 = vrot.slane %v3808, 7
      %v4220 = vor.u32 %v4219, %v3804
      %v4221 = vsel %vm3834, %v4200, %v4220
      %v4223 = vshrl.u32 %v3815, 16
      %v4225 = vrot.slane %v4223, 7
      %v4226 = vshll.u32 %v3815, 16
      %v4228 = vor.u32 %v4225, %v4226
      %v4229 = vsel %vm3834, %v4206, %v4228
      %v4231 = vshrl.u32 %v3825, 16
      %v4233 = vrot.slane %v4231, 7
      %v4234 = vshll.u32 %v3825, 16
      %v4236 = vor.u32 %v4233, %v4234
      %v4237 = vsel %vm3834, %v4214, %v4236
      %v4239 = vshrl.u32 %v3726, 16
      %v4241 = vrot.slane %v4239, 7
      %v4242 = vshll.u32 %v3726, 16
      %v4244 = vor.u32 %v4241, %v4242
      %v4245 = vsel %vm3834, %v4149, %v4244
      %v4247 = vshrl.u32 %v3777, 16
      %v4249 = vrot.slane %v4247, 7
      %v4250 = vshll.u32 %v3777, 16
      %v4252 = vor.u32 %v4249, %v4250
      %v4253 = vsel %vm3834, %v4157, %v4252
      %v4255 = vshrl.u32 %v3793, 16
      %v4257 = vrot.slane %v4255, 7
      %v4258 = vshll.u32 %v3793, 16
      %v4260 = vor.u32 %v4257, %v4258
      %v4261 = vsel %vm3834, %v4187, %v4260
      %v4263 = vshrl.u32 %v3802, 16
      %v4265 = vrot.slane %v4263, 7
      %v4266 = vshll.u32 %v3802, 16
      %v4268 = vor.u32 %v4265, %v4266
      %v4269 = vsel %vm3834, %v4195, %v4268
      %v4270 = vrot.slane %v3816, 7
      %v4271 = vor.u32 %v4270, %v3812
      %v4272 = vsel %vm3834, %v4219, %v4271
      %v4274 = vshrl.u32 %v3818, 16
      %v4276 = vrot.slane %v4274, 7
      %v4277 = vshll.u32 %v3818, 16
      %v4279 = vor.u32 %v4276, %v4277
      %v4280 = vsel %vm3834, %v4225, %v4279
      %v4282 = vshrl.u32 %v3827, 16
      %v4284 = vrot.slane %v4282, 7
      %v4285 = vshll.u32 %v3827, 16
      %v4287 = vor.u32 %v4284, %v4285
      %v4288 = vsel %vm3834, %v4233, %v4287
      %v4503 = vunpack.c.l.b16 %v3428
      %v4504 = vunpack.c.l.b16 %v3429
      %v4505 = vunpack.c.l.b16 %v3430
      %v4506 = vunpack.c.l.b16 %v3431
      %v4507 = vunpack.c.l.b16 %v3432
      %v4508 = vunpack.c.l.b16 %v3433
      %v4509 = vunpack.c.l.b16 %v3434
      %v4510 = vunpack.c.l.b16 %v3435
      %v4511 = vunpack.c.l.b16 %v3436
      %v4512 = vunpack.c.l.b16 %v3437
      %v4513 = vunpack.c.l.b16 %v3438
      %v4514 = vunpack.c.l.b16 %v3439
      %v4515 = vunpack.c.l.b16 %v3440
      %v4516 = vunpack.c.l.b16 %v3441
      %v4517 = vunpack.c.l.b16 %v3442
      %v4518 = vunpack.c.l.b16 %v3443
      %v4519 = vunpack.c.l.b16 %v3444
      %v4520 = vunpack.c.l.b16 %v3445
      %v4521 = vunpack.c.l.b16 %v3446
      %v4522 = vunpack.c.l.b16 %v3447
      %v4523 = vunpack.c.l.b16 %v3448
      %v4524 = vunpack.c.l.b16 %v3449
      %v4525 = vunpack.c.l.b16 %v3450
      %v4526 = vunpack.c.l.b16 %v3451
      %v4527 = vunpack.c.l.b16 %v3452
      %v4528 = vunpack.c.l.b16 %v3453
      %v4529 = vunpack.c.l.b16 %v3454
      %v4530 = vunpack.c.l.b16 %v3455
      %v4531 = vunpack.c.l.b16 %v3456
      %v4532 = vunpack.c.l.b16 %v3457
      %v4533 = vunpack.c.l.b16 %v3458
      %v4534 = vunpack.c.l.b16 %v3459
      %v4535 = vunpack.c.l.b16 %v3460
      %v4536 = vunpack.c.l.b16 %v3461
      %v4537 = vunpack.c.l.b16 %v3462
      %v4538 = vunpack.c.l.b16 %v3463
      %v4539 = vunpack.c.l.b16 %v3464
      %v4540 = vunpack.c.l.b16 %v3465
      %v4541 = vunpack.c.l.b16 %v3466
      %v4542 = vunpack.c.l.b16 %v3467
      %v4543 = vunpack.c.l.b16 %v3468
      %v4544 = vunpack.c.l.b16 %v3469
      %v4545 = vunpack.c.l.b16 %v3470
      %v4546 = vunpack.c.l.b16 %v3471
      %v4547 = vunpack.c.l.b16 %v3472
      %v4548 = vunpack.c.l.b16 %v3473
      %v4549 = vunpack.c.l.b16 %v3474
      %v4550 = vunpack.c.l.b16 %v3475
      %v4551 = vunpack.c.l.b16 %v3476
      %v4552 = vunpack.c.l.b16 %v3477
      %v4553 = vunpack.c.l.b16 %v3478
      %v4554 = vunpack.c.l.b16 %v3479
      %v4555 = vunpack.c.l.b16 %v3480
      %v4556 = vunpack.c.l.b16 %v3481
      %v4557 = vunpack.c.l.b16 %v3482
      %v4558 = vunpack.c.l.b16 %v3483
      %v4559 = vunpack.c.l.b16 %v3484
      %v4560 = vunpack.c.l.b16 %v3485
      %v4561 = vunpack.c.l.b16 %v3486
      %v4562 = vunpack.c.l.b16 %v3487
      %v4563 = vunpack.c.l.b16 %v3488
      %v4564 = vunpack.c.l.b16 %v3489
      %v4565 = vunpack.c.l.b16 %v3490
      %v4566 = vunpack.c.l.b16 %v3491
      %v4567 = vunpack.c.l.b16 %v3492
      %v4568 = vunpack.c.l.b16 %v3493
      %v4569 = vunpack.c.l.b16 %v3494
      %v4570 = vunpack.c.l.b16 %v3495
      %v4571 = vunpack.c.l.b16 %v3496
      %v4572 = vunpack.c.l.b16 %v3497
      %v4573 = vunpack.c.l.b16 %v3498
      %v4574 = vunpack.c.l.b16 %v3499
      %v4575 = vunpack.c.l.b16 %v3500
      %v4576 = vunpack.c.l.b16 %v3501
      %v4577 = vunpack.c.l.b16 %v3502
      %v4578 = vunpack.c.l.b16 %v3503
      %v4579 = vunpack.c.l.b16 %v3504
      %v4580 = vunpack.c.l.b16 %v3505
      %v4581 = vunpack.c.l.b16 %v3506
      %v4582 = vunpack.c.l.b16 %v3507
      %v4583 = vunpack.c.l.b16 %v3508
      %v4584 = vunpack.c.l.b16 %v3509
      %v4585 = vunpack.c.l.b16 %v3510
      %v4586 = vunpack.c.l.b16 %v3511
      %v4587 = vunpack.c.l.b16 %v3512
      %v4588 = vunpack.c.l.b16 %v3513
      %v4589 = vunpack.c.l.b16 %v3514
      %v4590 = vunpack.c.l.b16 %v3515
      %v4591 = vunpack.c.l.b16 %v3516
      %v4592 = vunpack.c.l.b16 %v3517
      %v4593 = vunpack.c.l.b16 %v3518
      %v4594 = vunpack.c.l.b16 %v3519
      %v4595 = vunpack.c.l.b16 %v3520
      %v4596 = vunpack.c.l.b16 %v3521
      %v4597 = vunpack.c.l.b16 %v3522
      %v4598 = vunpack.c.l.b16 %v3523
      %v4599 = vunpack.c.l.b16 %v3524
      %v4600 = vunpack.c.l.b16 %v3525
      %v4601 = vunpack.c.l.b16 %v3526
      %v4602 = vunpack.c.l.b16 %v3527
      %v4603 = vunpack.c.l.b16 %v3528
      %v4604 = vunpack.c.l.b16 %v3529
      %v4605 = vunpack.c.l.b16 %v3530
      %v4606 = vunpack.c.l.b16 %v3531
      %v4607 = vunpack.c.l.b16 %v3532
      %v4608 = vunpack.c.l.b16 %v3533
      %v4609 = vunpack.c.l.b16 %v3534
      %v4610 = vunpack.c.l.b16 %v3535
      %v4611 = vunpack.c.l.b16 %v3536
      %v4612 = vunpack.c.l.b16 %v3537
      %v4613 = vunpack.c.l.b16 %v3538
      %v4614 = vunpack.c.l.b16 %v3539
      %v4615 = vunpack.c.l.b16 %v3540
      %v4616 = vunpack.c.l.b16 %v3541
      %v4617 = vunpack.c.l.b16 %v3542
      %v4618 = vunpack.c.l.b16 %v3543
      %v4619 = vunpack.c.l.b16 %v3544
      %v4620 = vunpack.c.l.b16 %v3545
      %v4621 = vunpack.c.l.b16 %v3546
      %v4622 = vunpack.c.l.b16 %v3547
      %v4623 = vunpack.c.l.b16 %v3548
      %v4624 = vunpack.c.l.b16 %v3549
      %v4625 = vunpack.c.l.b16 %v3550
      %v4626 = vunpack.c.l.b16 %v3551
      %v4627 = vunpack.c.l.b16 %v3552
      %v4628 = vunpack.c.l.b16 %v3553
      %v4629 = vunpack.c.l.b16 %v3554
      %v4630 = vunpack.c.l.b16 %v3555
      %v4631 = vunpack.c.l.b16 %v3556
      %v4632 = vunpack.c.l.b16 %v3557
      %v4633 = vunpack.c.l.b16 %v3558
      %v4634 = vunpack.c.l.b16 %v3559
      %v4635 = vunpack.c.l.b16 %v3560
      %v4636 = vunpack.c.l.b16 %v3561
      %v4637 = vunpack.c.l.b16 %v3562
      %v4638 = vunpack.c.l.b16 %v3563
      %v4639 = vunpack.c.l.b16 %v3564
      %v4640 = vunpack.c.l.b16 %v3565
      %v4641 = vunpack.c.l.b16 %v3566
      %v4642 = vunpack.c.l.b16 %v3567
      %v4643 = vunpack.c.l.b16 %v3568
      %v4644 = vunpack.c.l.b16 %v3569
      %v4645 = vunpack.c.l.b16 %v3570
      %v4646 = vunpack.c.l.b16 %v3571
      %v4647 = vpack.c.b16 %v4504, %v4503
      %v4648 = vpack.c.b16 %v4506, %v4505
      %v4649 = vpack.c.b16 %v4508, %v4507
      %v4650 = vpack.c.b16 %v4510, %v4509
      %v4651 = vpack.c.b16 %v4512, %v4511
      %v4652 = vpack.c.b16 %v4514, %v4513
      %v4653 = vpack.c.b16 %v4516, %v4515
      %v4654 = vpack.c.b16 %v4518, %v4517
      %v4655 = vpack.c.b16 %v4520, %v4519
      %v4656 = vpack.c.b16 %v4522, %v4521
      %v4657 = vpack.c.b16 %v4524, %v4523
      %v4658 = vpack.c.b16 %v4526, %v4525
      %v4659 = vpack.c.b16 %v4528, %v4527
      %v4660 = vpack.c.b16 %v4530, %v4529
      %v4661 = vpack.c.b16 %v4532, %v4531
      %v4662 = vpack.c.b16 %v4534, %v4533
      %v4663 = vpack.c.b16 %v4536, %v4535
      %v4664 = vpack.c.b16 %v4538, %v4537
      %v4665 = vpack.c.b16 %v4540, %v4539
      %v4666 = vpack.c.b16 %v4542, %v4541
      %v4667 = vpack.c.b16 %v4544, %v4543
      %v4668 = vpack.c.b16 %v4546, %v4545
      %v4669 = vpack.c.b16 %v4548, %v4547
      %v4670 = vpack.c.b16 %v4550, %v4549
      %v4671 = vpack.c.b16 %v4552, %v4551
      %v4672 = vpack.c.b16 %v4554, %v4553
      %v4673 = vpack.c.b16 %v4556, %v4555
      %v4674 = vpack.c.b16 %v4558, %v4557
      %v4675 = vpack.c.b16 %v4560, %v4559
      %v4676 = vpack.c.b16 %v4562, %v4561
      %v4677 = vpack.c.b16 %v4564, %v4563
      %v4678 = vpack.c.b16 %v4566, %v4565
      %v4679 = vpack.c.b16 %v4568, %v4567
      %v4680 = vpack.c.b16 %v4570, %v4569
      %v4681 = vpack.c.b16 %v4572, %v4571
      %v4682 = vpack.c.b16 %v4574, %v4573
      %v4683 = vpack.c.b16 %v4576, %v4575
      %v4684 = vpack.c.b16 %v4578, %v4577
      %v4685 = vpack.c.b16 %v4580, %v4579
      %v4686 = vpack.c.b16 %v4582, %v4581
      %v4687 = vpack.c.b16 %v4584, %v4583
      %v4688 = vpack.c.b16 %v4586, %v4585
      %v4689 = vpack.c.b16 %v4588, %v4587
      %v4690 = vpack.c.b16 %v4590, %v4589
      %v4691 = vpack.c.b16 %v4592, %v4591
      %v4692 = vpack.c.b16 %v4594, %v4593
      %v4693 = vpack.c.b16 %v4596, %v4595
      %v4694 = vpack.c.b16 %v4598, %v4597
      %v4695 = vpack.c.b16 %v4600, %v4599
      %v4696 = vpack.c.b16 %v4602, %v4601
      %v4697 = vpack.c.b16 %v4604, %v4603
      %v4698 = vpack.c.b16 %v4606, %v4605
      %v4699 = vpack.c.b16 %v4608, %v4607
      %v4700 = vpack.c.b16 %v4610, %v4609
      %v4701 = vpack.c.b16 %v4612, %v4611
      %v4702 = vpack.c.b16 %v4614, %v4613
      %v4703 = vpack.c.b16 %v4616, %v4615
      %v4704 = vpack.c.b16 %v4618, %v4617
      %v4705 = vpack.c.b16 %v4620, %v4619
      %v4706 = vpack.c.b16 %v4622, %v4621
      %v4707 = vpack.c.b16 %v4624, %v4623
      %v4708 = vpack.c.b16 %v4626, %v4625
      %v4709 = vpack.c.b16 %v4628, %v4627
      %v4710 = vpack.c.b16 %v4630, %v4629
      %v4711 = vpack.c.b16 %v4632, %v4631
      %v4712 = vpack.c.b16 %v4634, %v4633
      %v4713 = vpack.c.b16 %v4636, %v4635
      %v4714 = vpack.c.b16 %v4638, %v4637
      %v4715 = vpack.c.b16 %v4640, %v4639
      %v4716 = vpack.c.b16 %v4642, %v4641
      %v4717 = vpack.c.b16 %v4644, %v4643
      %v4718 = vpack.c.b16 %v4646, %v4645
      %4791 = vmatprep.subr.bf16.mxu0 0
      %4792 = vmatpush1.bf16.msra.mxu0 %v4647
      %4793 = vmatprep.subr.bf16.mxu0 0
      %4794 = vmatpush1.bf16.msra.mxu0 %v4648
      %4795 = vmatprep.subr.bf16.mxu0 0
      %4796 = vmatpush1.bf16.msra.mxu0 %v4649
      %4797 = vmatprep.subr.bf16.mxu0 0
      %4798 = vmatpush1.bf16.msra.mxu0 %v4650
      %4799 = vmatprep.subr.bf16.mxu0 0
      %4800 = vmatpush1.bf16.msra.mxu0 %v4651
      %4801 = vmatprep.subr.bf16.mxu0 0
      %4802 = vmatpush1.bf16.msra.mxu0 %v4652
      %4803 = vmatprep.subr.bf16.mxu0 0
      %4804 = vmatpush1.bf16.msra.mxu0 %v4653
      %4805 = vmatprep.subr.bf16.mxu0 0
      %4806 = vmatpush1.bf16.msra.mxu0 %v4654
      %4807 = vmatprep.subr.bf16.mxu0 0
      %4808 = vmatpush1.bf16.msra.mxu0 %v4655
      %4809 = vmatprep.subr.bf16.mxu0 0
      %4810 = vmatpush1.bf16.msra.mxu0 %v4656
      %4811 = vmatprep.subr.bf16.mxu0 0
      %4812 = vmatpush1.bf16.msra.mxu0 %v4657
      %4813 = vmatprep.subr.bf16.mxu0 0
      %4814 = vmatpush1.bf16.msra.mxu0 %v4658
      %4815 = vmatprep.subr.bf16.mxu0 0
      %4816 = vmatpush1.bf16.msra.mxu0 %v4659
      %4817 = vmatprep.subr.bf16.mxu0 0
      %4818 = vmatpush1.bf16.msra.mxu0 %v4660
      %4819 = vmatprep.subr.bf16.mxu0 0
      %4820 = vmatpush1.bf16.msra.mxu0 %v4661
      %4821 = vmatprep.subr.bf16.mxu0 0
      %4822 = vmatpush1.bf16.msra.mxu0 %v4662
      %4823 = vmatprep.mubr.bf16.mxu0 %v3853
      %4824 = vmatmul.mubr.bf16.gmra.mrb[0].mxu0 %v3841
      %v4825 = vpop.f32.mrb[0].mxu0
      %v4826 = vadd.f32 %v3832, %v4825
      %v4827 = vpop.f32.mrb[0].mxu0
      %v4828 = vpop.f32.mrb[0].mxu0
      %v4829 = vadd.f32 %v3832, %v4828
      %v4830 = vpop.f32.mrb[0].mxu0
      %4831 = vmatprep.mubr.bf16.mxu0 %v3938
      %4832 = vmatmul.mubr.bf16.gmra.mrb[0].mxu0 %v3930
      %v4833 = vpop.f32.mrb[0].mxu0
      %v4834 = vadd.f32 %v3832, %v4833
      %v4835 = vpop.f32.mrb[0].mxu0
      %v4836 = vpop.f32.mrb[0].mxu0
      %v4837 = vadd.f32 %v3832, %v4836
      %v4838 = vpop.f32.mrb[0].mxu0
      %4839 = vmatprep.mubr.bf16.mxu0 %v3986
      %4840 = vmatmul.mubr.bf16.gmra.mrb[0].mxu0 %v3985
      %v4841 = vpop.f32.mrb[0].mxu0
      %v4842 = vadd.f32 %v3832, %v4841
      %v4843 = vpop.f32.mrb[0].mxu0
      %v4844 = vpop.f32.mrb[0].mxu0
      %v4845 = vadd.f32 %v3832, %v4844
      %v4846 = vpop.f32.mrb[0].mxu0
      %4847 = vmatprep.mubr.bf16.mxu0 %v3957
      %4848 = vmatmul.mubr.bf16.gmra.mrb[0].mxu0 %v3949
      %v4849 = vpop.f32.mrb[0].mxu0
      %v4850 = vadd.f32 %v3832, %v4849
      %v4851 = vpop.f32.mrb[0].mxu0
      %v4852 = vpop.f32.mrb[0].mxu0
      %v4853 = vadd.f32 %v3832, %v4852
      %v4854 = vpop.f32.mrb[0].mxu0
      %4855 = vmatprep.mubr.bf16.mxu0 %v3989
      %4856 = vmatmul.mubr.bf16.gmra.mrb[0].mxu0 %v3988
      %v4857 = vpop.f32.mrb[0].mxu0
      %v4858 = vadd.f32 %v3832, %v4857
      %v4859 = vpop.f32.mrb[0].mxu0
      %v4860 = vpop.f32.mrb[0].mxu0
      %v4861 = vadd.f32 %v3832, %v4860
      %v4862 = vpop.f32.mrb[0].mxu0
      %4863 = vmatprep.mubr.bf16.mxu0 %v3976
      %4864 = vmatmul.mubr.bf16.gmra.mrb[0].mxu0 %v3968
      %v4865 = vpop.f32.mrb[0].mxu0
      %v4866 = vadd.f32 %v3832, %v4865
      %v4867 = vpop.f32.mrb[0].mxu0
      %v4868 = vpop.f32.mrb[0].mxu0
      %v4869 = vadd.f32 %v3832, %v4868
      %v4870 = vpop.f32.mrb[0].mxu0
      %4871 = vmatprep.mubr.bf16.mxu0 %v4001
      %4872 = vmatmul.mubr.bf16.gmra.mrb[0].mxu0 %v3993
      %v4873 = vpop.f32.mrb[0].mxu0
      %v4874 = vadd.f32 %v3832, %v4873
      %v4875 = vpop.f32.mrb[0].mxu0
      %v4876 = vpop.f32.mrb[0].mxu0
      %v4877 = vadd.f32 %v3832, %v4876
      %v4878 = vpop.f32.mrb[0].mxu0
      %4879 = vmatprep.mubr.bf16.mxu0 %v4020
      %4880 = vmatmul.mubr.bf16.gmra.mrb[0].mxu0 %v4012
      %v4881 = vpop.f32.mrb[0].mxu0
      %v4882 = vadd.f32 %v3832, %v4881
      %v4883 = vpop.f32.mrb[0].mxu0
      %v4884 = vpop.f32.mrb[0].mxu0
      %v4885 = vadd.f32 %v3832, %v4884
      %v4886 = vpop.f32.mrb[0].mxu0
      %4887 = vmatprep.mubr.bf16.mxu0 %v4039
      %4888 = vmatmul.mubr.bf16.gmra.mrb[0].mxu0 %v4031
      %v4889 = vpop.f32.mrb[0].mxu0
      %v4890 = vadd.f32 %v3832, %v4889
      %v4891 = vpop.f32.mrb[0].mxu0
      %v4892 = vpop.f32.mrb[0].mxu0
      %v4893 = vadd.f32 %v3832, %v4892
      %v4894 = vpop.f32.mrb[0].mxu0
      %4895 = vmatprep.mubr.bf16.mxu0 %v4058
      %4896 = vmatmul.mubr.bf16.gmra.mrb[0].mxu0 %v4050
      %v4897 = vpop.f32.mrb[0].mxu0
      %v4898 = vadd.f32 %v3832, %v4897
      %v4899 = vpop.f32.mrb[0].mxu0
      %v4900 = vpop.f32.mrb[0].mxu0
      %v4901 = vadd.f32 %v3832, %v4900
      %v4902 = vpop.f32.mrb[0].mxu0
      %4903 = vmatprep.mubr.bf16.mxu0 %v4077
      %4904 = vmatmul.mubr.bf16.gmra.mrb[0].mxu0 %v4069
      %v4905 = vpop.f32.mrb[0].mxu0
      %v4906 = vadd.f32 %v3832, %v4905
      %v4907 = vpop.f32.mrb[0].mxu0
      %v4908 = vpop.f32.mrb[0].mxu0
      %v4909 = vadd.f32 %v3832, %v4908
      %v4910 = vpop.f32.mrb[0].mxu0
      %4911 = vmatprep.mubr.bf16.mxu0 %v4096
      %4912 = vmatmul.mubr.bf16.gmra.mrb[0].mxu0 %v4088
      %v4913 = vpop.f32.mrb[0].mxu0
      %v4914 = vadd.f32 %v3832, %v4913
      %v4915 = vpop.f32.mrb[0].mxu0
      %v4916 = vpop.f32.mrb[0].mxu0
      %v4917 = vadd.f32 %v3832, %v4916
      %v4918 = vpop.f32.mrb[0].mxu0
      %4919 = vmatprep.mubr.bf16.mxu0 %v4115
      %4920 = vmatmul.mubr.bf16.gmra.mrb[0].mxu0 %v4107
      %v4921 = vpop.f32.mrb[0].mxu0
      %v4922 = vadd.f32 %v3832, %v4921
      %v4923 = vpop.f32.mrb[0].mxu0
      %v4924 = vpop.f32.mrb[0].mxu0
      %v4925 = vadd.f32 %v3832, %v4924
      %v4926 = vpop.f32.mrb[0].mxu0
      %4927 = vmatprep.mubr.bf16.mxu0 %v4134
      %4928 = vmatmul.mubr.bf16.gmra.mrb[0].mxu0 %v4126
      %v4929 = vpop.f32.mrb[0].mxu0
      %v4930 = vadd.f32 %v3832, %v4929
      %v4931 = vpop.f32.mrb[0].mxu0
      %v4932 = vpop.f32.mrb[0].mxu0
      %v4933 = vadd.f32 %v3832, %v4932
      %v4934 = vpop.f32.mrb[0].mxu0
      %4935 = vmatprep.mubr.bf16.mxu0 %v4153
      %4936 = vmatmul.mubr.bf16.gmra.mrb[0].mxu0 %v4145
      %v4937 = vpop.f32.mrb[0].mxu0
      %v4938 = vadd.f32 %v3832, %v4937
      %v4939 = vpop.f32.mrb[0].mxu0
      %v4940 = vpop.f32.mrb[0].mxu0
      %v4941 = vadd.f32 %v3832, %v4940
      %v4942 = vpop.f32.mrb[0].mxu0
      %4943 = vmatprep.mubr.bf16.mxu0 %v4245
      %4944 = vmatmul.mubr.bf16.gmra.mrb[0].mxu0 %v4164
      %v4945 = vpop.f32.mrb[0].mxu0
      %v4946 = vadd.f32 %v3832, %v4945
      %v4947 = vpop.f32.mrb[0].mxu0
      %v4948 = vpop.f32.mrb[0].mxu0
      %v4949 = vadd.f32 %v3832, %v4948
      %v4950 = vpop.f32.mrb[0].mxu0
      %4951 = vdwg.mxu0
      %4952 = vmatprep.subr.bf16.mxu0 0
      %4953 = vmatpush1.bf16.msra.mxu0 %v4663
      %4954 = vmatprep.subr.bf16.mxu0 0
      %4955 = vmatpush1.bf16.msra.mxu0 %v4664
      %4956 = vmatprep.subr.bf16.mxu0 0
      %4957 = vmatpush1.bf16.msra.mxu0 %v4665
      %4958 = vmatprep.subr.bf16.mxu0 0
      %4959 = vmatpush1.bf16.msra.mxu0 %v4666
      %4960 = vmatprep.subr.bf16.mxu0 0
      %4961 = vmatpush1.bf16.msra.mxu0 %v4667
      %4962 = vmatprep.subr.bf16.mxu0 0
      %4963 = vmatpush1.bf16.msra.mxu0 %v4668
      %4964 = vmatprep.subr.bf16.mxu0 0
      %4965 = vmatpush1.bf16.msra.mxu0 %v4669
      %4966 = vmatprep.subr.bf16.mxu0 0
      %4967 = vmatpush1.bf16.msra.mxu0 %v4670
      %4968 = vmatprep.subr.bf16.mxu0 0
      %4969 = vmatpush1.bf16.msra.mxu0 %v4671
      %4970 = vmatprep.subr.bf16.mxu0 0
      %4971 = vmatpush1.bf16.msra.mxu0 %v4672
      %4972 = vmatprep.subr.bf16.mxu0 0
      %4973 = vmatpush1.bf16.msra.mxu0 %v4673
      %4974 = vmatprep.subr.bf16.mxu0 0
      %4975 = vmatpush1.bf16.msra.mxu0 %v4674
      %4976 = vmatprep.subr.bf16.mxu0 0
      %4977 = vmatpush1.bf16.msra.mxu0 %v4675
      %4978 = vmatprep.subr.bf16.mxu0 0
      %4979 = vmatpush1.bf16.msra.mxu0 %v4676
      %4980 = vmatprep.subr.bf16.mxu0 0
      %4981 = vmatpush1.bf16.msra.mxu0 %v4677
      %4982 = vmatprep.subr.bf16.mxu0 0
      %4983 = vmatpush1.bf16.msra.mxu0 %v4678
      %4984 = vmatprep.mubr.bf16.mxu0 %v3872
      %4985 = vmatmul.mubr.bf16.gmra.mrb[0].mxu0 %v3865
      %v4986 = vpop.f32.mrb[0].mxu0
      %v4987 = vadd.f32 %v4826, %v4986
      %v4988 = vpop.f32.mrb[0].mxu0
      %v4989 = vpop.f32.mrb[0].mxu0
      %v4990 = vadd.f32 %v4829, %v4989
      %v4991 = vpop.f32.mrb[0].mxu0
      %4992 = vmatprep.mubr.bf16.mxu0 %v3949
      %4993 = vmatmul.mubr.bf16.gmra.mrb[0].mxu0 %v3946
      %v4994 = vpop.f32.mrb[0].mxu0
      %v4995 = vadd.f32 %v4834, %v4994
      %v4996 = vpop.f32.mrb[0].mxu0
      %v4997 = vpop.f32.mrb[0].mxu0
      %v4998 = vadd.f32 %v4837, %v4997
      %v4999 = vpop.f32.mrb[0].mxu0
      %5000 = vmatprep.mubr.bf16.mxu0 %v3988
      %5001 = vmatmul.mubr.bf16.gmra.mrb[0].mxu0 %v3987
      %v5002 = vpop.f32.mrb[0].mxu0
      %v5003 = vadd.f32 %v4842, %v5002
      %v5004 = vpop.f32.mrb[0].mxu0
      %v5005 = vpop.f32.mrb[0].mxu0
      %v5006 = vadd.f32 %v4845, %v5005
      %v5007 = vpop.f32.mrb[0].mxu0
      %5008 = vmatprep.mubr.bf16.mxu0 %v3968
      %5009 = vmatmul.mubr.bf16.gmra.mrb[0].mxu0 %v3965
      %v5010 = vpop.f32.mrb[0].mxu0
      %v5011 = vadd.f32 %v4850, %v5010
      %v5012 = vpop.f32.mrb[0].mxu0
      %v5013 = vpop.f32.mrb[0].mxu0
      %v5014 = vadd.f32 %v4853, %v5013
      %v5015 = vpop.f32.mrb[0].mxu0
      %5016 = vmatprep.mubr.bf16.mxu0 %v3993
      %5017 = vmatmul.mubr.bf16.gmra.mrb[0].mxu0 %v3990
      %v5018 = vpop.f32.mrb[0].mxu0
      %v5019 = vadd.f32 %v4858, %v5018
      %v5020 = vpop.f32.mrb[0].mxu0
      %v5021 = vpop.f32.mrb[0].mxu0
      %v5022 = vadd.f32 %v4861, %v5021
      %v5023 = vpop.f32.mrb[0].mxu0
      %5024 = vmatprep.mubr.bf16.mxu0 %v4012
      %5025 = vmatmul.mubr.bf16.gmra.mrb[0].mxu0 %v3984
      %v5026 = vpop.f32.mrb[0].mxu0
      %v5027 = vadd.f32 %v4866, %v5026
      %v5028 = vpop.f32.mrb[0].mxu0
      %v5029 = vpop.f32.mrb[0].mxu0
      %v5030 = vadd.f32 %v4869, %v5029
      %v5031 = vpop.f32.mrb[0].mxu0
      %5032 = vmatprep.mubr.bf16.mxu0 %v4031
      %5033 = vmatmul.mubr.bf16.gmra.mrb[0].mxu0 %v4009
      %v5034 = vpop.f32.mrb[0].mxu0
      %v5035 = vadd.f32 %v4874, %v5034
      %v5036 = vpop.f32.mrb[0].mxu0
      %v5037 = vpop.f32.mrb[0].mxu0
      %v5038 = vadd.f32 %v4877, %v5037
      %v5039 = vpop.f32.mrb[0].mxu0
      %5040 = vmatprep.mubr.bf16.mxu0 %v4050
      %5041 = vmatmul.mubr.bf16.gmra.mrb[0].mxu0 %v4028
      %v5042 = vpop.f32.mrb[0].mxu0
      %v5043 = vadd.f32 %v4882, %v5042
      %v5044 = vpop.f32.mrb[0].mxu0
      %v5045 = vpop.f32.mrb[0].mxu0
      %v5046 = vadd.f32 %v4885, %v5045
      %v5047 = vpop.f32.mrb[0].mxu0
      %5048 = vmatprep.mubr.bf16.mxu0 %v4069
      %5049 = vmatmul.mubr.bf16.gmra.mrb[0].mxu0 %v4047
      %v5050 = vpop.f32.mrb[0].mxu0
      %v5051 = vadd.f32 %v4890, %v5050
      %v5052 = vpop.f32.mrb[0].mxu0
      %v5053 = vpop.f32.mrb[0].mxu0
      %v5054 = vadd.f32 %v4893, %v5053
      %v5055 = vpop.f32.mrb[0].mxu0
      %5056 = vmatprep.mubr.bf16.mxu0 %v4088
      %5057 = vmatmul.mubr.bf16.gmra.mrb[0].mxu0 %v4066
      %v5058 = vpop.f32.mrb[0].mxu0
      %v5059 = vadd.f32 %v4898, %v5058
      %v5060 = vpop.f32.mrb[0].mxu0
      %v5061 = vpop.f32.mrb[0].mxu0
      %v5062 = vadd.f32 %v4901, %v5061
      %v5063 = vpop.f32.mrb[0].mxu0
      %5064 = vmatprep.mubr.bf16.mxu0 %v4107
      %5065 = vmatmul.mubr.bf16.gmra.mrb[0].mxu0 %v4085
      %v5066 = vpop.f32.mrb[0].mxu0
      %v5067 = vadd.f32 %v4906, %v5066
      %v5068 = vpop.f32.mrb[0].mxu0
      %v5069 = vpop.f32.mrb[0].mxu0
      %v5070 = vadd.f32 %v4909, %v5069
      %v5071 = vpop.f32.mrb[0].mxu0
      %5072 = vmatprep.mubr.bf16.mxu0 %v4126
      %5073 = vmatmul.mubr.bf16.gmra.mrb[0].mxu0 %v4104
      %v5074 = vpop.f32.mrb[0].mxu0
      %v5075 = vadd.f32 %v4914, %v5074
      %v5076 = vpop.f32.mrb[0].mxu0
      %v5077 = vpop.f32.mrb[0].mxu0
      %v5078 = vadd.f32 %v4917, %v5077
      %v5079 = vpop.f32.mrb[0].mxu0
      %5080 = vmatprep.mubr.bf16.mxu0 %v4145
      %5081 = vmatmul.mubr.bf16.gmra.mrb[0].mxu0 %v4123
      %v5082 = vpop.f32.mrb[0].mxu0
      %v5083 = vadd.f32 %v4922, %v5082
      %v5084 = vpop.f32.mrb[0].mxu0
      %v5085 = vpop.f32.mrb[0].mxu0
      %v5086 = vadd.f32 %v4925, %v5085
      %v5087 = vpop.f32.mrb[0].mxu0
      %5088 = vmatprep.mubr.bf16.mxu0 %v4164
      %5089 = vmatmul.mubr.bf16.gmra.mrb[0].mxu0 %v4142
      %v5090 = vpop.f32.mrb[0].mxu0
      %v5091 = vadd.f32 %v4930, %v5090
      %v5092 = vpop.f32.mrb[0].mxu0
      %v5093 = vpop.f32.mrb[0].mxu0
      %v5094 = vadd.f32 %v4933, %v5093
      %v5095 = vpop.f32.mrb[0].mxu0
      %5096 = vmatprep.mubr.bf16.mxu0 %v4183
      %5097 = vmatmul.mubr.bf16.gmra.mrb[0].mxu0 %v4161
      %v5098 = vpop.f32.mrb[0].mxu0
      %v5099 = vadd.f32 %v4938, %v5098
      %v5100 = vpop.f32.mrb[0].mxu0
      %v5101 = vpop.f32.mrb[0].mxu0
      %v5102 = vadd.f32 %v4941, %v5101
      %v5103 = vpop.f32.mrb[0].mxu0
      %5104 = vmatprep.mubr.bf16.mxu0 %v4202
      %5105 = vmatmul.mubr.bf16.gmra.mrb[0].mxu0 %v4253
      %v5106 = vpop.f32.mrb[0].mxu0
      %v5107 = vadd.f32 %v4946, %v5106
      %v5108 = vpop.f32.mrb[0].mxu0
      %v5109 = vpop.f32.mrb[0].mxu0
      %v5110 = vadd.f32 %v4949, %v5109
      %v5111 = vpop.f32.mrb[0].mxu0
      %5112 = vdwg.mxu0
      %5113 = vmatprep.subr.bf16.mxu0 0
      %5114 = vmatpush1.bf16.msra.mxu0 %v4679
      %5115 = vmatprep.subr.bf16.mxu0 0
      %5116 = vmatpush1.bf16.msra.mxu0 %v4680
      %5117 = vmatprep.subr.bf16.mxu0 0
      %5118 = vmatpush1.bf16.msra.mxu0 %v4681
      %5119 = vmatprep.subr.bf16.mxu0 0
      %5120 = vmatpush1.bf16.msra.mxu0 %v4682
      %5121 = vmatprep.subr.bf16.mxu0 0
      %5122 = vmatpush1.bf16.msra.mxu0 %v4683
      %5123 = vmatprep.subr.bf16.mxu0 0
      %5124 = vmatpush1.bf16.msra.mxu0 %v4684
      %5125 = vmatprep.subr.bf16.mxu0 0
      %5126 = vmatpush1.bf16.msra.mxu0 %v4685
      %5127 = vmatprep.subr.bf16.mxu0 0
      %5128 = vmatpush1.bf16.msra.mxu0 %v4686
      %5129 = vmatprep.subr.bf16.mxu0 0
      %5130 = vmatpush1.bf16.msra.mxu0 %v4687
      %5131 = vmatprep.subr.bf16.mxu0 0
      %5132 = vmatpush1.bf16.msra.mxu0 %v4688
      %5133 = vmatprep.subr.bf16.mxu0 0
      %5134 = vmatpush1.bf16.msra.mxu0 %v4689
      %5135 = vmatprep.subr.bf16.mxu0 0
      %5136 = vmatpush1.bf16.msra.mxu0 %v4690
      %5137 = vmatprep.subr.bf16.mxu0 0
      %5138 = vmatpush1.bf16.msra.mxu0 %v4691
      %5139 = vmatprep.subr.bf16.mxu0 0
      %5140 = vmatpush1.bf16.msra.mxu0 %v4692
      %5141 = vmatprep.subr.bf16.mxu0 0
      %5142 = vmatpush1.bf16.msra.mxu0 %v4693
      %5143 = vmatprep.subr.bf16.mxu0 0
      %5144 = vmatpush1.bf16.msra.mxu0 %v4694
      %5145 = vmatprep.mubr.bf16.mxu0 %v3896
      %5146 = vmatmul.mubr.bf16.gmra.mrb[0].mxu0 %v3884
      %v5147 = vpop.f32.mrb[0].mxu0
      %v5148 = vadd.f32 %v4987, %v5147
      %v5149 = vpop.f32.mrb[0].mxu0
      %v5150 = vpop.f32.mrb[0].mxu0
      %v5151 = vadd.f32 %v4990, %v5150
      %v5152 = vpop.f32.mrb[0].mxu0
      %5153 = vmatprep.mubr.bf16.mxu0 %v3965
      %5154 = vmatmul.mubr.bf16.gmra.mrb[0].mxu0 %v3957
      %v5155 = vpop.f32.mrb[0].mxu0
      %v5156 = vadd.f32 %v4995, %v5155
      %v5157 = vpop.f32.mrb[0].mxu0
      %v5158 = vpop.f32.mrb[0].mxu0
      %v5159 = vadd.f32 %v4998, %v5158
      %v5160 = vpop.f32.mrb[0].mxu0
      %5161 = vmatprep.mubr.bf16.mxu0 %v3990
      %5162 = vmatmul.mubr.bf16.gmra.mrb[0].mxu0 %v3989
      %v5163 = vpop.f32.mrb[0].mxu0
      %v5164 = vadd.f32 %v5003, %v5163
      %v5165 = vpop.f32.mrb[0].mxu0
      %v5166 = vpop.f32.mrb[0].mxu0
      %v5167 = vadd.f32 %v5006, %v5166
      %v5168 = vpop.f32.mrb[0].mxu0
      %5169 = vmatprep.mubr.bf16.mxu0 %v3984
      %5170 = vmatmul.mubr.bf16.gmra.mrb[0].mxu0 %v3976
      %v5171 = vpop.f32.mrb[0].mxu0
      %v5172 = vadd.f32 %v5011, %v5171
      %v5173 = vpop.f32.mrb[0].mxu0
      %v5174 = vpop.f32.mrb[0].mxu0
      %v5175 = vadd.f32 %v5014, %v5174
      %v5176 = vpop.f32.mrb[0].mxu0
      %5177 = vmatprep.mubr.bf16.mxu0 %v4009
      %5178 = vmatmul.mubr.bf16.gmra.mrb[0].mxu0 %v4001
      %v5179 = vpop.f32.mrb[0].mxu0
      %v5180 = vadd.f32 %v5019, %v5179
      %v5181 = vpop.f32.mrb[0].mxu0
      %v5182 = vpop.f32.mrb[0].mxu0
      %v5183 = vadd.f32 %v5022, %v5182
      %v5184 = vpop.f32.mrb[0].mxu0
      %5185 = vmatprep.mubr.bf16.mxu0 %v4028
      %5186 = vmatmul.mubr.bf16.gmra.mrb[0].mxu0 %v4020
      %v5187 = vpop.f32.mrb[0].mxu0
      %v5188 = vadd.f32 %v5027, %v5187
      %v5189 = vpop.f32.mrb[0].mxu0
      %v5190 = vpop.f32.mrb[0].mxu0
      %v5191 = vadd.f32 %v5030, %v5190
      %v5192 = vpop.f32.mrb[0].mxu0
      %5193 = vmatprep.mubr.bf16.mxu0 %v4047
      %5194 = vmatmul.mubr.bf16.gmra.mrb[0].mxu0 %v4039
      %v5195 = vpop.f32.mrb[0].mxu0
      %v5196 = vadd.f32 %v5035, %v5195
      %v5197 = vpop.f32.mrb[0].mxu0
      %v5198 = vpop.f32.mrb[0].mxu0
      %v5199 = vadd.f32 %v5038, %v5198
      %v5200 = vpop.f32.mrb[0].mxu0
      %5201 = vmatprep.mubr.bf16.mxu0 %v4066
      %5202 = vmatmul.mubr.bf16.gmra.mrb[0].mxu0 %v4058
      %v5203 = vpop.f32.mrb[0].mxu0
      %v5204 = vadd.f32 %v5043, %v5203
      %v5205 = vpop.f32.mrb[0].mxu0
      %v5206 = vpop.f32.mrb[0].mxu0
      %v5207 = vadd.f32 %v5046, %v5206
      %v5208 = vpop.f32.mrb[0].mxu0
      %5209 = vmatprep.mubr.bf16.mxu0 %v4085
      %5210 = vmatmul.mubr.bf16.gmra.mrb[0].mxu0 %v4077
      %v5211 = vpop.f32.mrb[0].mxu0
      %v5212 = vadd.f32 %v5051, %v5211
      %v5213 = vpop.f32.mrb[0].mxu0
      %v5214 = vpop.f32.mrb[0].mxu0
      %v5215 = vadd.f32 %v5054, %v5214
      %v5216 = vpop.f32.mrb[0].mxu0
      %5217 = vmatprep.mubr.bf16.mxu0 %v4104
      %5218 = vmatmul.mubr.bf16.gmra.mrb[0].mxu0 %v4096
      %v5219 = vpop.f32.mrb[0].mxu0
      %v5220 = vadd.f32 %v5059, %v5219
      %v5221 = vpop.f32.mrb[0].mxu0
      %v5222 = vpop.f32.mrb[0].mxu0
      %v5223 = vadd.f32 %v5062, %v5222
      %v5224 = vpop.f32.mrb[0].mxu0
      %5225 = vmatprep.mubr.bf16.mxu0 %v4123
      %5226 = vmatmul.mubr.bf16.gmra.mrb[0].mxu0 %v4115
      %v5227 = vpop.f32.mrb[0].mxu0
      %v5228 = vadd.f32 %v5067, %v5227
      %v5229 = vpop.f32.mrb[0].mxu0
      %v5230 = vpop.f32.mrb[0].mxu0
      %v5231 = vadd.f32 %v5070, %v5230
      %v5232 = vpop.f32.mrb[0].mxu0
      %5233 = vmatprep.mubr.bf16.mxu0 %v4142
      %5234 = vmatmul.mubr.bf16.gmra.mrb[0].mxu0 %v4134
      %v5235 = vpop.f32.mrb[0].mxu0
      %v5236 = vadd.f32 %v5075, %v5235
      %v5237 = vpop.f32.mrb[0].mxu0
      %v5238 = vpop.f32.mrb[0].mxu0
      %v5239 = vadd.f32 %v5078, %v5238
      %v5240 = vpop.f32.mrb[0].mxu0
      %5241 = vmatprep.mubr.bf16.mxu0 %v4161
      %5242 = vmatmul.mubr.bf16.gmra.mrb[0].mxu0 %v4153
      %v5243 = vpop.f32.mrb[0].mxu0
      %v5244 = vadd.f32 %v5083, %v5243
      %v5245 = vpop.f32.mrb[0].mxu0
      %v5246 = vpop.f32.mrb[0].mxu0
      %v5247 = vadd.f32 %v5086, %v5246
      %v5248 = vpop.f32.mrb[0].mxu0
      %5249 = vmatprep.mubr.bf16.mxu0 %v4180
      %5250 = vmatmul.mubr.bf16.gmra.mrb[0].mxu0 %v4172
      %v5251 = vpop.f32.mrb[0].mxu0
      %v5252 = vadd.f32 %v5091, %v5251
      %v5253 = vpop.f32.mrb[0].mxu0
      %v5254 = vpop.f32.mrb[0].mxu0
      %v5255 = vadd.f32 %v5094, %v5254
      %v5256 = vpop.f32.mrb[0].mxu0
      %5257 = vmatprep.mubr.bf16.mxu0 %v4199
      %5258 = vmatmul.mubr.bf16.gmra.mrb[0].mxu0 %v4191
      %v5259 = vpop.f32.mrb[0].mxu0
      %v5260 = vadd.f32 %v5099, %v5259
      %v5261 = vpop.f32.mrb[0].mxu0
      %v5262 = vpop.f32.mrb[0].mxu0
      %v5263 = vadd.f32 %v5102, %v5262
      %v5264 = vpop.f32.mrb[0].mxu0
      %5265 = vmatprep.mubr.bf16.mxu0 %v4269
      %5266 = vmatmul.mubr.bf16.gmra.mrb[0].mxu0 %v4261
      %v5267 = vpop.f32.mrb[0].mxu0
      %v5268 = vadd.f32 %v5107, %v5267
      %v5269 = vpop.f32.mrb[0].mxu0
      %v5270 = vpop.f32.mrb[0].mxu0
      %v5271 = vadd.f32 %v5110, %v5270
      %v5272 = vpop.f32.mrb[0].mxu0
      %5273 = vdwg.mxu0
      %5274 = vmatprep.subr.bf16.mxu0 0
      %5275 = vmatpush1.bf16.msra.mxu0 %v4695
      %5276 = vmatprep.subr.bf16.mxu0 0
      %5277 = vmatpush1.bf16.msra.mxu0 %v4696
      %5278 = vmatprep.subr.bf16.mxu0 0
      %5279 = vmatpush1.bf16.msra.mxu0 %v4697
      %5280 = vmatprep.subr.bf16.mxu0 0
      %5281 = vmatpush1.bf16.msra.mxu0 %v4698
      %5282 = vmatprep.subr.bf16.mxu0 0
      %5283 = vmatpush1.bf16.msra.mxu0 %v4699
      %5284 = vmatprep.subr.bf16.mxu0 0
      %5285 = vmatpush1.bf16.msra.mxu0 %v4700
      %5286 = vmatprep.subr.bf16.mxu0 0
      %5287 = vmatpush1.bf16.msra.mxu0 %v4701
      %5288 = vmatprep.subr.bf16.mxu0 0
      %5289 = vmatpush1.bf16.msra.mxu0 %v4702
      %5290 = vmatprep.subr.bf16.mxu0 0
      %5291 = vmatpush1.bf16.msra.mxu0 %v4703
      %5292 = vmatprep.subr.bf16.mxu0 0
      %5293 = vmatpush1.bf16.msra.mxu0 %v4704
      %5294 = vmatprep.subr.bf16.mxu0 0
      %5295 = vmatpush1.bf16.msra.mxu0 %v4705
      %5296 = vmatprep.subr.bf16.mxu0 0
      %5297 = vmatpush1.bf16.msra.mxu0 %v4706
      %5298 = vmatprep.subr.bf16.mxu0 0
      %5299 = vmatpush1.bf16.msra.mxu0 %v4707
      %5300 = vmatprep.subr.bf16.mxu0 0
      %5301 = vmatpush1.bf16.msra.mxu0 %v4708
      %5302 = vmatprep.subr.bf16.mxu0 0
      %5303 = vmatpush1.bf16.msra.mxu0 %v4709
      %5304 = vmatprep.subr.bf16.mxu0 0
      %5305 = vmatpush1.bf16.msra.mxu0 %v4710
      %5306 = vmatprep.mubr.bf16.mxu0 %v3915
      %5307 = vmatmul.mubr.bf16.gmra.mrb[0].mxu0 %v3903
      %v5308 = vpop.f32.mrb[0].mxu0
      %v5309 = vadd.f32 %v5148, %v5308
      %v5310 = vpop.f32.mrb[0].mxu0
      %v5311 = vpop.f32.mrb[0].mxu0
      %v5312 = vadd.f32 %v5151, %v5311
      %v5313 = vpop.f32.mrb[0].mxu0
      %5314 = vmatprep.mubr.bf16.mxu0 %v3976
      %5315 = vmatmul.mubr.bf16.gmra.mrb[0].mxu0 %v3968
      %v5316 = vpop.f32.mrb[0].mxu0
      %v5317 = vadd.f32 %v5156, %v5316
      %v5318 = vpop.f32.mrb[0].mxu0
      %v5319 = vpop.f32.mrb[0].mxu0
      %v5320 = vadd.f32 %v5159, %v5319
      %v5321 = vpop.f32.mrb[0].mxu0
      %5322 = vmatprep.mubr.bf16.mxu0 %v4001
      %5323 = vmatmul.mubr.bf16.gmra.mrb[0].mxu0 %v3993
      %v5324 = vpop.f32.mrb[0].mxu0
      %v5325 = vadd.f32 %v5164, %v5324
      %v5326 = vpop.f32.mrb[0].mxu0
      %v5327 = vpop.f32.mrb[0].mxu0
      %v5328 = vadd.f32 %v5167, %v5327
      %v5329 = vpop.f32.mrb[0].mxu0
      %5330 = vmatprep.mubr.bf16.mxu0 %v4020
      %5331 = vmatmul.mubr.bf16.gmra.mrb[0].mxu0 %v4012
      %v5332 = vpop.f32.mrb[0].mxu0
      %v5333 = vadd.f32 %v5172, %v5332
      %v5334 = vpop.f32.mrb[0].mxu0
      %v5335 = vpop.f32.mrb[0].mxu0
      %v5336 = vadd.f32 %v5175, %v5335
      %v5337 = vpop.f32.mrb[0].mxu0
      %5338 = vmatprep.mubr.bf16.mxu0 %v4039
      %5339 = vmatmul.mubr.bf16.gmra.mrb[0].mxu0 %v4031
      %v5340 = vpop.f32.mrb[0].mxu0
      %v5341 = vadd.f32 %v5180, %v5340
      %v5342 = vpop.f32.mrb[0].mxu0
      %v5343 = vpop.f32.mrb[0].mxu0
      %v5344 = vadd.f32 %v5183, %v5343
      %v5345 = vpop.f32.mrb[0].mxu0
      %5346 = vmatprep.mubr.bf16.mxu0 %v4058
      %5347 = vmatmul.mubr.bf16.gmra.mrb[0].mxu0 %v4050
      %v5348 = vpop.f32.mrb[0].mxu0
      %v5349 = vadd.f32 %v5188, %v5348
      %v5350 = vpop.f32.mrb[0].mxu0
      %v5351 = vpop.f32.mrb[0].mxu0
      %v5352 = vadd.f32 %v5191, %v5351
      %v5353 = vpop.f32.mrb[0].mxu0
      %5354 = vmatprep.mubr.bf16.mxu0 %v4077
      %5355 = vmatmul.mubr.bf16.gmra.mrb[0].mxu0 %v4069
      %v5356 = vpop.f32.mrb[0].mxu0
      %v5357 = vadd.f32 %v5196, %v5356
      %v5358 = vpop.f32.mrb[0].mxu0
      %v5359 = vpop.f32.mrb[0].mxu0
      %v5360 = vadd.f32 %v5199, %v5359
      %v5361 = vpop.f32.mrb[0].mxu0
      %5362 = vmatprep.mubr.bf16.mxu0 %v4096
      %5363 = vmatmul.mubr.bf16.gmra.mrb[0].mxu0 %v4088
      %v5364 = vpop.f32.mrb[0].mxu0
      %v5365 = vadd.f32 %v5204, %v5364
      %v5366 = vpop.f32.mrb[0].mxu0
      %v5367 = vpop.f32.mrb[0].mxu0
      %v5368 = vadd.f32 %v5207, %v5367
      %v5369 = vpop.f32.mrb[0].mxu0
      %5370 = vmatprep.mubr.bf16.mxu0 %v4115
      %5371 = vmatmul.mubr.bf16.gmra.mrb[0].mxu0 %v4107
      %v5372 = vpop.f32.mrb[0].mxu0
      %v5373 = vadd.f32 %v5212, %v5372
      %v5374 = vpop.f32.mrb[0].mxu0
      %v5375 = vpop.f32.mrb[0].mxu0
      %v5376 = vadd.f32 %v5215, %v5375
      %v5377 = vpop.f32.mrb[0].mxu0
      %5378 = vmatprep.mubr.bf16.mxu0 %v4134
      %5379 = vmatmul.mubr.bf16.gmra.mrb[0].mxu0 %v4126
      %v5380 = vpop.f32.mrb[0].mxu0
      %v5381 = vadd.f32 %v5220, %v5380
      %v5382 = vpop.f32.mrb[0].mxu0
      %v5383 = vpop.f32.mrb[0].mxu0
      %v5384 = vadd.f32 %v5223, %v5383
      %v5385 = vpop.f32.mrb[0].mxu0
      %5386 = vmatprep.mubr.bf16.mxu0 %v4153
      %5387 = vmatmul.mubr.bf16.gmra.mrb[0].mxu0 %v4145
      %v5388 = vpop.f32.mrb[0].mxu0
      %v5389 = vadd.f32 %v5228, %v5388
      %v5390 = vpop.f32.mrb[0].mxu0
      %v5391 = vpop.f32.mrb[0].mxu0
      %v5392 = vadd.f32 %v5231, %v5391
      %v5393 = vpop.f32.mrb[0].mxu0
      %5394 = vmatprep.mubr.bf16.mxu0 %v4172
      %5395 = vmatmul.mubr.bf16.gmra.mrb[0].mxu0 %v4164
      %v5396 = vpop.f32.mrb[0].mxu0
      %v5397 = vadd.f32 %v5236, %v5396
      %v5398 = vpop.f32.mrb[0].mxu0
      %v5399 = vpop.f32.mrb[0].mxu0
      %v5400 = vadd.f32 %v5239, %v5399
      %v5401 = vpop.f32.mrb[0].mxu0
      %5402 = vmatprep.mubr.bf16.mxu0 %v4191
      %5403 = vmatmul.mubr.bf16.gmra.mrb[0].mxu0 %v4183
      %v5404 = vpop.f32.mrb[0].mxu0
      %v5405 = vadd.f32 %v5244, %v5404
      %v5406 = vpop.f32.mrb[0].mxu0
      %v5407 = vpop.f32.mrb[0].mxu0
      %v5408 = vadd.f32 %v5247, %v5407
      %v5409 = vpop.f32.mrb[0].mxu0
      %5410 = vmatprep.mubr.bf16.mxu0 %v4210
      %5411 = vmatmul.mubr.bf16.gmra.mrb[0].mxu0 %v4202
      %v5412 = vpop.f32.mrb[0].mxu0
      %v5413 = vadd.f32 %v5252, %v5412
      %v5414 = vpop.f32.mrb[0].mxu0
      %v5415 = vpop.f32.mrb[0].mxu0
      %v5416 = vadd.f32 %v5255, %v5415
      %v5417 = vpop.f32.mrb[0].mxu0
      %5418 = vmatprep.mubr.bf16.mxu0 %v4229
      %5419 = vmatmul.mubr.bf16.gmra.mrb[0].mxu0 %v4221
      %v5420 = vpop.f32.mrb[0].mxu0
      %v5421 = vadd.f32 %v5260, %v5420
      %v5422 = vpop.f32.mrb[0].mxu0
      %v5423 = vpop.f32.mrb[0].mxu0
      %v5424 = vadd.f32 %v5263, %v5423
      %v5425 = vpop.f32.mrb[0].mxu0
      %5426 = vmatprep.mubr.bf16.mxu0 %v4280
      %5427 = vmatmul.mubr.bf16.gmra.mrb[0].mxu0 %v4272
      %v5428 = vpop.f32.mrb[0].mxu0
      %v5429 = vadd.f32 %v5268, %v5428
      %v5430 = vpop.f32.mrb[0].mxu0
      %v5431 = vpop.f32.mrb[0].mxu0
      %v5432 = vadd.f32 %v5271, %v5431
      %v5433 = vpop.f32.mrb[0].mxu0
      %5434 = vdwg.mxu0
      %5435 = vmatprep.subr.bf16.mxu0 0
      %5436 = vmatpush1.bf16.msra.mxu0 %v4711
      %5437 = vmatprep.subr.bf16.mxu0 0
      %5438 = vmatpush1.bf16.msra.mxu0 %v4712
      %5439 = vmatprep.subr.bf16.mxu0 0
      %5440 = vmatpush1.bf16.msra.mxu0 %v4713
      %5441 = vmatprep.subr.bf16.mxu0 0
      %5442 = vmatpush1.bf16.msra.mxu0 %v4714
      %5443 = vmatprep.subr.bf16.mxu0 0
      %5444 = vmatpush1.bf16.msra.mxu0 %v4715
      %5445 = vmatprep.subr.bf16.mxu0 0
      %5446 = vmatpush1.bf16.msra.mxu0 %v4716
      %5447 = vmatprep.subr.bf16.mxu0 0
      %5448 = vmatpush1.bf16.msra.mxu0 %v4717
      %5449 = vmatprep.subr.bf16.mxu0 0
      %5450 = vmatpush1.bf16.msra.mxu0 %v4718
      %5451 = vmatprep.subr.bf16.mxu0 0
      %5452 = vmatpush1.bf16.msra.mxu0 0
      %5453 = vmatprep.subr.bf16.mxu0 0
      %5454 = vmatpush1.bf16.msra.mxu0 0
      %5455 = vmatprep.subr.bf16.mxu0 0
      %5456 = vmatpush1.bf16.msra.mxu0 0
      %5457 = vmatprep.subr.bf16.mxu0 0
      %5458 = vmatpush1.bf16.msra.mxu0 0
      %5459 = vmatprep.subr.bf16.mxu0 0
      %5460 = vmatpush1.bf16.msra.mxu0 0
      %5461 = vmatprep.subr.bf16.mxu0 0
      %5462 = vmatpush1.bf16.msra.mxu0 0
      %5463 = vmatprep.subr.bf16.mxu0 0
      %5464 = vmatpush1.bf16.msra.mxu0 0
      %5465 = vmatprep.subr.bf16.mxu0 0
      %5466 = vmatpush1.bf16.msra.mxu0 0
      %5467 = vmatprep.mubr.bf16.mxu0 0
      %5468 = vmatmul.mubr.bf16.gmra.mrb[0].mxu0 %v3927
      %v5469 = vpop.f32.mrb[0].mxu0
      %v5470 = vadd.f32 %v5309, %v5469
      %v5471 = vpop.f32.mrb[0].mxu0
      %v5472 = vpop.f32.mrb[0].mxu0
      %v5473 = vadd.f32 %v5312, %v5472
      %v5474 = vpop.f32.mrb[0].mxu0
      %5475 = vmatprep.mubr.bf16.mxu0 0
      %5476 = vmatmul.mubr.bf16.gmra.mrb[0].mxu0 %v3984
      %v5477 = vpop.f32.mrb[0].mxu0
      %v5478 = vadd.f32 %v5317, %v5477
      %v5479 = vpop.f32.mrb[0].mxu0
      %v5480 = vpop.f32.mrb[0].mxu0
      %v5481 = vadd.f32 %v5320, %v5480
      %v5482 = vpop.f32.mrb[0].mxu0
      %5483 = vmatprep.mubr.bf16.mxu0 0
      %5484 = vmatmul.mubr.bf16.gmra.mrb[0].mxu0 %v4009
      %v5485 = vpop.f32.mrb[0].mxu0
      %v5486 = vadd.f32 %v5325, %v5485
      %v5487 = vpop.f32.mrb[0].mxu0
      %v5488 = vpop.f32.mrb[0].mxu0
      %v5489 = vadd.f32 %v5328, %v5488
      %v5490 = vpop.f32.mrb[0].mxu0
      %5491 = vmatprep.mubr.bf16.mxu0 0
      %5492 = vmatmul.mubr.bf16.gmra.mrb[0].mxu0 %v4028
      %v5493 = vpop.f32.mrb[0].mxu0
      %v5494 = vadd.f32 %v5333, %v5493
      %v5495 = vpop.f32.mrb[0].mxu0
      %v5496 = vpop.f32.mrb[0].mxu0
      %v5497 = vadd.f32 %v5336, %v5496
      %v5498 = vpop.f32.mrb[0].mxu0
      %5499 = vmatprep.mubr.bf16.mxu0 0
      %5500 = vmatmul.mubr.bf16.gmra.mrb[0].mxu0 %v4047
      %v5501 = vpop.f32.mrb[0].mxu0
      %v5502 = vadd.f32 %v5341, %v5501
      %v5503 = vpop.f32.mrb[0].mxu0
      %v5504 = vpop.f32.mrb[0].mxu0
      %v5505 = vadd.f32 %v5344, %v5504
      %v5506 = vpop.f32.mrb[0].mxu0
      %5507 = vmatprep.mubr.bf16.mxu0 0
      %5508 = vmatmul.mubr.bf16.gmra.mrb[0].mxu0 %v4066
      %v5509 = vpop.f32.mrb[0].mxu0
      %v5510 = vadd.f32 %v5349, %v5509
      %v5511 = vpop.f32.mrb[0].mxu0
      %v5512 = vpop.f32.mrb[0].mxu0
      %v5513 = vadd.f32 %v5352, %v5512
      %v5514 = vpop.f32.mrb[0].mxu0
      %5515 = vmatprep.mubr.bf16.mxu0 0
      %5516 = vmatmul.mubr.bf16.gmra.mrb[0].mxu0 %v4085
      %v5517 = vpop.f32.mrb[0].mxu0
      %v5518 = vadd.f32 %v5357, %v5517
      %v5519 = vpop.f32.mrb[0].mxu0
      %v5520 = vpop.f32.mrb[0].mxu0
      %v5521 = vadd.f32 %v5360, %v5520
      %v5522 = vpop.f32.mrb[0].mxu0
      %5523 = vmatprep.mubr.bf16.mxu0 0
      %5524 = vmatmul.mubr.bf16.gmra.mrb[0].mxu0 %v4104
      %v5525 = vpop.f32.mrb[0].mxu0
      %v5526 = vadd.f32 %v5365, %v5525
      %v5527 = vpop.f32.mrb[0].mxu0
      %v5528 = vpop.f32.mrb[0].mxu0
      %v5529 = vadd.f32 %v5368, %v5528
      %v5530 = vpop.f32.mrb[0].mxu0
      %5531 = vmatprep.mubr.bf16.mxu0 0
      %5532 = vmatmul.mubr.bf16.gmra.mrb[0].mxu0 %v4123
      %v5533 = vpop.f32.mrb[0].mxu0
      %v5534 = vadd.f32 %v5373, %v5533
      %v5535 = vpop.f32.mrb[0].mxu0
      %v5536 = vpop.f32.mrb[0].mxu0
      %v5537 = vadd.f32 %v5376, %v5536
      %v5538 = vpop.f32.mrb[0].mxu0
      %5539 = vmatprep.mubr.bf16.mxu0 0
      %5540 = vmatmul.mubr.bf16.gmra.mrb[0].mxu0 %v4142
      %v5541 = vpop.f32.mrb[0].mxu0
      %v5542 = vadd.f32 %v5381, %v5541
      %v5543 = vpop.f32.mrb[0].mxu0
      %v5544 = vpop.f32.mrb[0].mxu0
      %v5545 = vadd.f32 %v5384, %v5544
      %v5546 = vpop.f32.mrb[0].mxu0
      %5547 = vmatprep.mubr.bf16.mxu0 0
      %5548 = vmatmul.mubr.bf16.gmra.mrb[0].mxu0 %v4161
      %v5549 = vpop.f32.mrb[0].mxu0
      %v5550 = vadd.f32 %v5389, %v5549
      %v5551 = vpop.f32.mrb[0].mxu0
      %v5552 = vpop.f32.mrb[0].mxu0
      %v5553 = vadd.f32 %v5392, %v5552
      %v5554 = vpop.f32.mrb[0].mxu0
      %5555 = vmatprep.mubr.bf16.mxu0 0
      %5556 = vmatmul.mubr.bf16.gmra.mrb[0].mxu0 %v4180
      %v5557 = vpop.f32.mrb[0].mxu0
      %v5558 = vadd.f32 %v5397, %v5557
      %v5559 = vpop.f32.mrb[0].mxu0
      %v5560 = vpop.f32.mrb[0].mxu0
      %v5561 = vadd.f32 %v5400, %v5560
      %v5562 = vpop.f32.mrb[0].mxu0
      %5563 = vmatprep.mubr.bf16.mxu0 0
      %5564 = vmatmul.mubr.bf16.gmra.mrb[0].mxu0 %v4199
      %v5565 = vpop.f32.mrb[0].mxu0
      %v5566 = vadd.f32 %v5405, %v5565
      %v5567 = vpop.f32.mrb[0].mxu0
      %v5568 = vpop.f32.mrb[0].mxu0
      %v5569 = vadd.f32 %v5408, %v5568
      %v5570 = vpop.f32.mrb[0].mxu0
      %5571 = vmatprep.mubr.bf16.mxu0 0
      %5572 = vmatmul.mubr.bf16.gmra.mrb[0].mxu0 %v4218
      %v5573 = vpop.f32.mrb[0].mxu0
      %v5574 = vadd.f32 %v5413, %v5573
      %v5575 = vpop.f32.mrb[0].mxu0
      %v5576 = vpop.f32.mrb[0].mxu0
      %v5577 = vadd.f32 %v5416, %v5576
      %v5578 = vpop.f32.mrb[0].mxu0
      %5579 = vmatprep.mubr.bf16.mxu0 0
      %5580 = vmatmul.mubr.bf16.gmra.mrb[0].mxu0 %v4237
      %v5581 = vpop.f32.mrb[0].mxu0
      %v5582 = vadd.f32 %v5421, %v5581
      %v5583 = vpop.f32.mrb[0].mxu0
      %v5584 = vpop.f32.mrb[0].mxu0
      %v5585 = vadd.f32 %v5424, %v5584
      %v5586 = vpop.f32.mrb[0].mxu0
      %5587 = vmatprep.mubr.bf16.mxu0 0
      %5588 = vmatmul.mubr.bf16.gmra.mrb[0].mxu0 %v4288
      %v5589 = vpop.f32.mrb[0].mxu0
      %v5590 = vadd.f32 %v5429, %v5589
      %v5591 = vpop.f32.mrb[0].mxu0
      %v5592 = vpop.f32.mrb[0].mxu0
      %v5593 = vadd.f32 %v5432, %v5592
      %v5594 = vpop.f32.mrb[0].mxu0
      %5595 = vdwg.mxu0
      %v5596 = vmax.f32 %v5470, 0.0
      %v5597 = vmax.f32 %v5473, 0.0
      %v5598 = vmax.f32 %v5478, 0.0
      %v5599 = vmax.f32 %v5481, 0.0
      %v5600 = vmax.f32 %v5486, 0.0
      %v5601 = vmax.f32 %v5489, 0.0
      %v5602 = vmax.f32 %v5494, 0.0
      %v5603 = vmax.f32 %v5497, 0.0
      %v5604 = vmax.f32 %v5502, 0.0
      %v5605 = vmax.f32 %v5505, 0.0
      %v5606 = vmax.f32 %v5510, 0.0
      %v5607 = vmax.f32 %v5513, 0.0
      %v5608 = vmax.f32 %v5518, 0.0
      %v5609 = vmax.f32 %v5521, 0.0
      %v5610 = vmax.f32 %v5526, 0.0
      %v5611 = vmax.f32 %v5529, 0.0
      %v5612 = vmax.f32 %v5534, 0.0
      %v5613 = vmax.f32 %v5537, 0.0
      %v5614 = vmax.f32 %v5542, 0.0
      %v5615 = vmax.f32 %v5545, 0.0
      %v5616 = vmax.f32 %v5550, 0.0
      %v5617 = vmax.f32 %v5553, 0.0
      %v5618 = vmax.f32 %v5558, 0.0
      %v5619 = vmax.f32 %v5561, 0.0
      %v5620 = vmax.f32 %v5566, 0.0
      %v5621 = vmax.f32 %v5569, 0.0
      %v5622 = vmax.f32 %v5574, 0.0
      %v5623 = vmax.f32 %v5577, 0.0
      %v5624 = vmax.f32 %v5582, 0.0
      %v5625 = vmax.f32 %v5585, 0.0
      %v5626 = vmax.f32 %v5590, 0.0
      %v5627 = vmax.f32 %v5593, 0.0
      %v5628 = vld [vmem:[%s219 + $0x40] sm:$0xff]
      %v5629 = vld [vmem:[%s219 + $0x48] sm:$0xff]
      %v5630 = vld [vmem:[%s219 + $0x50] sm:$0xff]
      %v5631 = vld [vmem:[%s219 + $0x58] sm:$0xff]
      %v5632 = vld [vmem:[%s219 + $0x60] sm:$0xff]
      %v5633 = vld [vmem:[%s219 + $0x68] sm:$0xff]
      %v5634 = vld [vmem:[%s219 + $0x70] sm:$0xff]
      %v5635 = vld [vmem:[%s219 + $0x78] sm:$0xff]
      %v5636 = vld [vmem:[%s219 + $0x80] sm:$0xff]
      %v5637 = vld [vmem:[%s219 + $0x88] sm:$0xff]
      %v5638 = vld [vmem:[%s219 + $0x90] sm:$0xff]
      %v5639 = vld [vmem:[%s219 + $0x98] sm:$0xff]
      %v5640 = vld [vmem:[%s219 + $0xa0] sm:$0xff]
      %v5641 = vld [vmem:[%s219 + $0xa8] sm:$0xff]
      %v5642 = vld [vmem:[%s219 + $0xb0] sm:$0xff]
      %v5643 = vld [vmem:[%s219 + $0xb8] sm:$0xff]
      %v5644 = vld [vmem:[%s219 + $0xc0] sm:$0xff]
      %v5645 = vld [vmem:[%s219 + $0xc8] sm:$0xff]
      %v5646 = vld [vmem:[%s219 + $0xd0] sm:$0xff]
      %v5647 = vld [vmem:[%s219 + $0xd8] sm:$0xff]
      %v5648 = vld [vmem:[%s219 + $0xe0] sm:$0xff]
      %v5649 = vld [vmem:[%s219 + $0xe8] sm:$0xff]
      %v5650 = vld [vmem:[%s219 + $0xf0] sm:$0xff]
      %v5651 = vld [vmem:[%s219 + $0xf8] sm:$0xff]
      %v5652 = vld [vmem:[%s219 + $0x100] sm:$0xff]
      %v5653 = vld [vmem:[%s219 + $0x108] sm:$0xff]
      %v5654 = vld [vmem:[%s219 + $0x110] sm:$0xff]
      %v5655 = vld [vmem:[%s219 + $0x118] sm:$0xff]
      %v5656 = vld [vmem:[%s219 + $0x120] sm:$0xff]
      %v5657 = vld [vmem:[%s219 + $0x128] sm:$0xff]
      %v5658 = vld [vmem:[%s219 + $0x130] sm:$0xff]
      %v5659 = vld [vmem:[%s219 + $0x138] sm:$0xff]
      %v5660 = vadd.f32 %v5596, %v5628
      %v5661 = vadd.f32 %v5597, %v5629
      %v5662 = vadd.f32 %v5598, %v5630
      %v5663 = vadd.f32 %v5599, %v5631
      %v5664 = vadd.f32 %v5600, %v5632
      %v5665 = vadd.f32 %v5601, %v5633
      %v5666 = vadd.f32 %v5602, %v5634
      %v5667 = vadd.f32 %v5603, %v5635
      %v5668 = vadd.f32 %v5604, %v5636
      %v5669 = vadd.f32 %v5605, %v5637
      %v5670 = vadd.f32 %v5606, %v5638
      %v5671 = vadd.f32 %v5607, %v5639
      %v5672 = vadd.f32 %v5608, %v5640
      %v5673 = vadd.f32 %v5609, %v5641
      %v5674 = vadd.f32 %v5610, %v5642
      %v5675 = vadd.f32 %v5611, %v5643
      %v5676 = vadd.f32 %v5612, %v5644
      %v5677 = vadd.f32 %v5613, %v5645
      %v5678 = vadd.f32 %v5614, %v5646
      %v5679 = vadd.f32 %v5615, %v5647
      %v5680 = vadd.f32 %v5616, %v5648
      %v5681 = vadd.f32 %v5617, %v5649
      %v5682 = vadd.f32 %v5618, %v5650
      %v5683 = vadd.f32 %v5619, %v5651
      %v5684 = vadd.f32 %v5620, %v5652
      %v5685 = vadd.f32 %v5621, %v5653
      %v5686 = vadd.f32 %v5622, %v5654
      %v5687 = vadd.f32 %v5623, %v5655
      %v5688 = vadd.f32 %v5624, %v5656
      %v5689 = vadd.f32 %v5625, %v5657
      %v5690 = vadd.f32 %v5626, %v5658
      %v5691 = vadd.f32 %v5627, %v5659
      %5692 = vst [vmem:[%s224] sm:$0xff] %v5660
      %5693 = vst [vmem:[%s224 + $0x8] sm:$0xff] %v5661
      %5694 = vst [vmem:[%s224 + $0x10] sm:$0xff] %v5662
      %5695 = vst [vmem:[%s224 + $0x18] sm:$0xff] %v5663
      %5696 = vst [vmem:[%s224 + $0x20] sm:$0xff] %v5664
      %5697 = vst [vmem:[%s224 + $0x28] sm:$0xff] %v5665
      %5698 = vst [vmem:[%s224 + $0x30] sm:$0xff] %v5666
      %5699 = vst [vmem:[%s224 + $0x38] sm:$0xff] %v5667
      %5700 = vst [vmem:[%s224 + $0x40] sm:$0xff] %v5668
      %5701 = vst [vmem:[%s224 + $0x48] sm:$0xff] %v5669
      %5702 = vst [vmem:[%s224 + $0x50] sm:$0xff] %v5670
      %5703 = vst [vmem:[%s224 + $0x58] sm:$0xff] %v5671
      %5704 = vst [vmem:[%s224 + $0x60] sm:$0xff] %v5672
      %5705 = vst [vmem:[%s224 + $0x68] sm:$0xff] %v5673
      %5706 = vst [vmem:[%s224 + $0x70] sm:$0xff] %v5674
      %5707 = vst [vmem:[%s224 + $0x78] sm:$0xff] %v5675
      %5708 = vst [vmem:[%s224 + $0x80] sm:$0xff] %v5676
      %5709 = vst [vmem:[%s224 + $0x88] sm:$0xff] %v5677
      %5710 = vst [vmem:[%s224 + $0x90] sm:$0xff] %v5678
      %5711 = vst [vmem:[%s224 + $0x98] sm:$0xff] %v5679
      %5712 = vst [vmem:[%s224 + $0xa0] sm:$0xff] %v5680
      %5713 = vst [vmem:[%s224 + $0xa8] sm:$0xff] %v5681
      %5714 = vst [vmem:[%s224 + $0xb0] sm:$0xff] %v5682
      %5715 = vst [vmem:[%s224 + $0xb8] sm:$0xff] %v5683
      %5716 = vst [vmem:[%s224 + $0xc0] sm:$0xff] %v5684
      %5717 = vst [vmem:[%s224 + $0xc8] sm:$0xff] %v5685
      %5718 = vst [vmem:[%s224 + $0xd0] sm:$0xff] %v5686
      %5719 = vst [vmem:[%s224 + $0xd8] sm:$0xff] %v5687
      %5720 = vst [vmem:[%s224 + $0xe0] sm:$0xff] %v5688
      %5721 = vst [vmem:[%s224 + $0xe8] sm:$0xff] %v5689
      %5722 = vst [vmem:[%s224 + $0xf0] sm:$0xff] %v5690
      %5723 = vst [vmem:[%s224 + $0xf8] sm:$0xff] %v5691
      %v5724 = vld [vmem:[#allocation2 + $0x88] sm:$0x80]
      %v5725 = vld [vmem:[#allocation2 + $0x90] sm:$0xff]
      %v5726 = vld [vmem:[#allocation2 + $0x98] sm:$0xff]
      %v5727 = vld [vmem:[#allocation2 + $0xa0] sm:$0xff]
      %v5728 = vld [vmem:[#allocation2 + $0xa8] sm:$0xff]
      %v5729 = vld [vmem:[#allocation2 + $0xb0] sm:$0xff]
      %v5730 = vld [vmem:[#allocation2 + $0xb8] sm:$0xff]
      %v5731 = vld [vmem:[#allocation2 + $0xc0] sm:$0xff]
      %v5732 = vld [vmem:[#allocation2 + $0xc8] sm:$0xff]
      %v5733 = vld [vmem:[#allocation2 + $0xd0] sm:$0xff]
      %v5734 = vld [vmem:[#allocation2 + $0xd8] sm:$0xff]
      %v5735 = vld [vmem:[#allocation2 + $0xe0] sm:$0xff]
      %v5736 = vld [vmem:[#allocation2 + $0xe8] sm:$0xff]
      %v5737 = vld [vmem:[#allocation2 + $0xf0] sm:$0xff]
      %v5738 = vld [vmem:[#allocation2 + $0xf8] sm:$0xff]
      %v5739 = vld [vmem:[#allocation2 + $0x100] sm:$0xff]
      %v5740 = vld [vmem:[#allocation2 + $0x108] sm:$0xff]
      %v5741 = vld [vmem:[#allocation2 + $0x110] sm:$0x1]
      %v5742 = vld [vmem:[#allocation2 + $0x98] sm:$0x80]
      %v5743 = vld [vmem:[#allocation2 + $0x110] sm:$0xff]
      %v5744 = vld [vmem:[#allocation2 + $0x118] sm:$0xff]
      %v5745 = vld [vmem:[#allocation2 + $0x120] sm:$0x1]
      %v5746 = vld [vmem:[#allocation2 + $0xa8] sm:$0x80]
      %v5747 = vld [vmem:[#allocation2 + $0x120] sm:$0xff]
      %v5748 = vld [vmem:[#allocation2 + $0x128] sm:$0xff]
      %v5749 = vld [vmem:[#allocation2 + $0x130] sm:$0x1]
      %v5751 = vshll.u32 %v5725, 16
      %v5753 = vrot.slane %v5751, 1
      %v5754 = vshrl.u32 %v5725, 16
      %v5756 = vor.u32 %v5754, %v5753
      %v5758 = vshll.u32 %v5726, 16
      %v5760 = vrot.slane %v5758, 1
      %v5761 = vsel %vm3599, %v5756, %v5760
      %v5762 = vshrl.u32 %v5726, 16
      %v5764 = vor.u32 %v5762, %v5760
      %v5766 = vshll.u32 %v5727, 16
      %v5768 = vrot.slane %v5766, 1
      %v5769 = vsel %vm3599, %v5764, %v5768
      %v5770 = vshrl.u32 %v5727, 16
      %v5772 = vor.u32 %v5770, %v5768
      %v5774 = vshll.u32 %v5728, 16
      %v5776 = vrot.slane %v5774, 1
      %v5777 = vsel %vm3599, %v5772, %v5776
      %v5778 = vshrl.u32 %v5728, 16
      %v5780 = vor.u32 %v5778, %v5776
      %v5782 = vshll.u32 %v5729, 16
      %v5784 = vrot.slane %v5782, 1
      %v5785 = vsel %vm3599, %v5780, %v5784
      %v5786 = vshrl.u32 %v5729, 16
      %v5788 = vor.u32 %v5786, %v5784
      %v5790 = vshll.u32 %v5730, 16
      %v5792 = vrot.slane %v5790, 1
      %v5793 = vsel %vm3599, %v5788, %v5792
      %v5794 = vshrl.u32 %v5730, 16
      %v5796 = vor.u32 %v5794, %v5792
      %v5798 = vshll.u32 %v5731, 16
      %v5800 = vrot.slane %v5798, 1
      %v5801 = vsel %vm3599, %v5796, %v5800
      %v5802 = vshrl.u32 %v5731, 16
      %v5804 = vor.u32 %v5802, %v5800
      %v5806 = vshll.u32 %v5732, 16
      %v5808 = vrot.slane %v5806, 1
      %v5809 = vsel %vm3599, %v5804, %v5808
      %v5810 = vshrl.u32 %v5732, 16
      %v5812 = vor.u32 %v5810, %v5808
      %v5814 = vshll.u32 %v5733, 16
      %v5816 = vrot.slane %v5814, 1
      %v5817 = vsel %vm3599, %v5812, %v5816
      %v5818 = vshrl.u32 %v5733, 16
      %v5820 = vor.u32 %v5818, %v5816
      %v5822 = vshll.u32 %v5734, 16
      %v5824 = vrot.slane %v5822, 1
      %v5825 = vsel %vm3599, %v5820, %v5824
      %v5826 = vshrl.u32 %v5734, 16
      %v5828 = vor.u32 %v5826, %v5824
      %v5830 = vshll.u32 %v5735, 16
      %v5832 = vrot.slane %v5830, 1
      %v5833 = vsel %vm3599, %v5828, %v5832
      %v5834 = vshrl.u32 %v5735, 16
      %v5836 = vor.u32 %v5834, %v5832
      %v5838 = vshll.u32 %v5736, 16
      %v5840 = vrot.slane %v5838, 1
      %v5841 = vsel %vm3599, %v5836, %v5840
      %v5842 = vshrl.u32 %v5736, 16
      %v5844 = vor.u32 %v5842, %v5840
      %v5846 = vshll.u32 %v5737, 16
      %v5848 = vrot.slane %v5846, 1
      %v5849 = vsel %vm3599, %v5844, %v5848
      %v5850 = vshrl.u32 %v5737, 16
      %v5852 = vor.u32 %v5850, %v5848
      %v5854 = vshll.u32 %v5738, 16
      %v5856 = vrot.slane %v5854, 1
      %v5857 = vsel %vm3599, %v5852, %v5856
      %v5858 = vshrl.u32 %v5738, 16
      %v5860 = vor.u32 %v5858, %v5856
      %v5862 = vshll.u32 %v5739, 16
      %v5864 = vrot.slane %v5862, 1
      %v5865 = vsel %vm3599, %v5860, %v5864
      %v5866 = vshrl.u32 %v5739, 16
      %v5868 = vor.u32 %v5866, %v5864
      %v5870 = vshll.u32 %v5740, 16
      %v5872 = vrot.slane %v5870, 1
      %v5873 = vsel %vm3599, %v5868, %v5872
      %v5874 = vshrl.u32 %v5740, 16
      %v5876 = vor.u32 %v5874, %v5872
      %v5894 = vrot.slane %v5725, 1
      %v5895 = vrot.slane %v5726, 1
      %v5896 = vsel %vm3744, %v5894, %v5895
      %v5897 = vrot.slane %v5727, 1
      %v5898 = vsel %vm3744, %v5895, %v5897
      %v5899 = vrot.slane %v5728, 1
      %v5900 = vsel %vm3744, %v5897, %v5899
      %v5901 = vrot.slane %v5729, 1
      %v5902 = vsel %vm3744, %v5899, %v5901
      %v5903 = vrot.slane %v5730, 1
      %v5904 = vsel %vm3744, %v5901, %v5903
      %v5905 = vrot.slane %v5731, 1
      %v5906 = vsel %vm3744, %v5903, %v5905
      %v5907 = vrot.slane %v5732, 1
      %v5908 = vsel %vm3744, %v5905, %v5907
      %v5909 = vrot.slane %v5733, 1
      %v5910 = vsel %vm3744, %v5907, %v5909
      %v5911 = vrot.slane %v5734, 1
      %v5912 = vsel %vm3744, %v5909, %v5911
      %v5913 = vrot.slane %v5735, 1
      %v5914 = vsel %vm3744, %v5911, %v5913
      %v5915 = vrot.slane %v5736, 1
      %v5916 = vsel %vm3744, %v5913, %v5915
      %v5917 = vrot.slane %v5737, 1
      %v5918 = vsel %vm3744, %v5915, %v5917
      %v5919 = vrot.slane %v5738, 1
      %v5920 = vsel %vm3744, %v5917, %v5919
      %v5921 = vrot.slane %v5739, 1
      %v5922 = vsel %vm3744, %v5919, %v5921
      %v5923 = vrot.slane %v5740, 1
      %v5924 = vsel %vm3744, %v5921, %v5923
      %v5925 = vrot.slane %v5741, 1
      %v5926 = vsel %vm3744, %v5923, %v5925
      %v5928 = vshll.u32 %v5743, 16
      %v5930 = vrot.slane %v5928, 1
      %v5931 = vsel %vm3599, %v5876, %v5930
      %v5932 = vshrl.u32 %v5743, 16
      %v5934 = vor.u32 %v5932, %v5930
      %v5936 = vshll.u32 %v5744, 16
      %v5938 = vrot.slane %v5936, 1
      %v5939 = vsel %vm3599, %v5934, %v5938
      %v5940 = vshrl.u32 %v5744, 16
      %v5942 = vor.u32 %v5940, %v5938
      %v5946 = vrot.slane %v5743, 1
      %v5947 = vsel %vm3744, %v5923, %v5946
      %v5948 = vrot.slane %v5744, 1
      %v5949 = vsel %vm3744, %v5946, %v5948
      %v5950 = vrot.slane %v5745, 1
      %v5951 = vsel %vm3744, %v5948, %v5950
      %v5953 = vshll.u32 %v5747, 16
      %v5955 = vrot.slane %v5953, 1
      %v5956 = vsel %vm3599, %v5942, %v5955
      %v5957 = vshrl.u32 %v5747, 16
      %v5959 = vor.u32 %v5957, %v5955
      %v5961 = vshll.u32 %v5748, 16
      %v5963 = vrot.slane %v5961, 1
      %v5964 = vsel %vm3599, %v5959, %v5963
      %v5965 = vshrl.u32 %v5748, 16
      %v5967 = vor.u32 %v5965, %v5963
      %v5971 = vrot.slane %v5747, 1
      %v5972 = vsel %vm3744, %v5948, %v5971
      %v5973 = vrot.slane %v5748, 1
      %v5974 = vsel %vm3744, %v5971, %v5973
      %v5975 = vrot.slane %v5749, 1
      %v5976 = vsel %vm3744, %v5973, %v5975
      %v5978 = vshrl.u32 %v5724, 16
      %v5980 = vrot.slane %v5978, 7
      %v5981 = vrot.slane %v5754, 7
      %v5982 = vor.u32 %v5981, %v5751
      %v5983 = vsel %vm3834, %v5980, %v5982
      %v5985 = vshrl.u32 %v5753, 16
      %v5987 = vrot.slane %v5985, 7
      %v5989 = vshrl.u32 %v5761, 16
      %v5991 = vrot.slane %v5989, 7
      %v5992 = vshll.u32 %v5761, 16
      %v5994 = vor.u32 %v5991, %v5992
      %v5995 = vsel %vm3834, %v5987, %v5994
      %v5997 = vshrl.u32 %v5894, 16
      %v5999 = vrot.slane %v5997, 7
      %v6001 = vshrl.u32 %v5896, 16
      %v6003 = vrot.slane %v6001, 7
      %v6004 = vshll.u32 %v5896, 16
      %v6006 = vor.u32 %v6003, %v6004
      %v6007 = vsel %vm3834, %v5999, %v6006
      %v6009 = vshrl.u32 %v5742, 16
      %v6011 = vrot.slane %v6009, 7
      %v6012 = vrot.slane %v5770, 7
      %v6013 = vor.u32 %v6012, %v5766
      %v6014 = vsel %vm3834, %v6011, %v6013
      %v6016 = vshrl.u32 %v5768, 16
      %v6018 = vrot.slane %v6016, 7
      %v6020 = vshrl.u32 %v5777, 16
      %v6022 = vrot.slane %v6020, 7
      %v6023 = vshll.u32 %v5777, 16
      %v6025 = vor.u32 %v6022, %v6023
      %v6026 = vsel %vm3834, %v6018, %v6025
      %v6028 = vshrl.u32 %v5897, 16
      %v6030 = vrot.slane %v6028, 7
      %v6032 = vshrl.u32 %v5900, 16
      %v6034 = vrot.slane %v6032, 7
      %v6035 = vshll.u32 %v5900, 16
      %v6037 = vor.u32 %v6034, %v6035
      %v6038 = vsel %vm3834, %v6030, %v6037
      %v6040 = vshrl.u32 %v5746, 16
      %v6042 = vrot.slane %v6040, 7
      %v6043 = vrot.slane %v5786, 7
      %v6044 = vor.u32 %v6043, %v5782
      %v6045 = vsel %vm3834, %v6042, %v6044
      %v6047 = vshrl.u32 %v5784, 16
      %v6049 = vrot.slane %v6047, 7
      %v6051 = vshrl.u32 %v5793, 16
      %v6053 = vrot.slane %v6051, 7
      %v6054 = vshll.u32 %v5793, 16
      %v6056 = vor.u32 %v6053, %v6054
      %v6057 = vsel %vm3834, %v6049, %v6056
      %v6059 = vshrl.u32 %v5901, 16
      %v6061 = vrot.slane %v6059, 7
      %v6063 = vshrl.u32 %v5904, 16
      %v6065 = vrot.slane %v6063, 7
      %v6066 = vshll.u32 %v5904, 16
      %v6068 = vor.u32 %v6065, %v6066
      %v6069 = vsel %vm3834, %v6061, %v6068
      %v6070 = vrot.slane %v5762, 7
      %v6071 = vor.u32 %v6070, %v5758
      %v6072 = vsel %vm3834, %v5981, %v6071
      %v6074 = vshrl.u32 %v5769, 16
      %v6076 = vrot.slane %v6074, 7
      %v6077 = vshll.u32 %v5769, 16
      %v6079 = vor.u32 %v6076, %v6077
      %v6080 = vsel %vm3834, %v5991, %v6079
      %v6082 = vshrl.u32 %v5898, 16
      %v6084 = vrot.slane %v6082, 7
      %v6085 = vshll.u32 %v5898, 16
      %v6087 = vor.u32 %v6084, %v6085
      %v6088 = vsel %vm3834, %v6003, %v6087
      %v6089 = vrot.slane %v5778, 7
      %v6090 = vor.u32 %v6089, %v5774
      %v6091 = vsel %vm3834, %v6012, %v6090
      %v6093 = vshrl.u32 %v5785, 16
      %v6095 = vrot.slane %v6093, 7
      %v6096 = vshll.u32 %v5785, 16
      %v6098 = vor.u32 %v6095, %v6096
      %v6099 = vsel %vm3834, %v6022, %v6098
      %v6101 = vshrl.u32 %v5902, 16
      %v6103 = vrot.slane %v6101, 7
      %v6104 = vshll.u32 %v5902, 16
      %v6106 = vor.u32 %v6103, %v6104
      %v6107 = vsel %vm3834, %v6034, %v6106
      %v6108 = vrot.slane %v5794, 7
      %v6109 = vor.u32 %v6108, %v5790
      %v6110 = vsel %vm3834, %v6043, %v6109
      %v6112 = vshrl.u32 %v5801, 16
      %v6114 = vrot.slane %v6112, 7
      %v6115 = vshll.u32 %v5801, 16
      %v6117 = vor.u32 %v6114, %v6115
      %v6118 = vsel %vm3834, %v6053, %v6117
      %v6120 = vshrl.u32 %v5906, 16
      %v6122 = vrot.slane %v6120, 7
      %v6123 = vshll.u32 %v5906, 16
      %v6125 = vor.u32 %v6122, %v6123
      %v6126 = vsel %vm3834, %v6065, %v6125
      %v6127 = vsel %vm3834, %v6070, %v6013
      %v6128 = vsel %vm3834, %v6076, %v6025
      %v6129 = vsel %vm3834, %v6084, %v6037
      %v6130 = vsel %vm3834, %v6089, %v6044
      %v6131 = vsel %vm3834, %v6095, %v6056
      %v6132 = vsel %vm3834, %v6103, %v6068
      %v6133 = vrot.slane %v5802, 7
      %v6134 = vor.u32 %v6133, %v5798
      %v6135 = vsel %vm3834, %v6108, %v6134
      %v6137 = vshrl.u32 %v5809, 16
      %v6139 = vrot.slane %v6137, 7
      %v6140 = vshll.u32 %v5809, 16
      %v6142 = vor.u32 %v6139, %v6140
      %v6143 = vsel %vm3834, %v6114, %v6142
      %v6145 = vshrl.u32 %v5908, 16
      %v6147 = vrot.slane %v6145, 7
      %v6148 = vshll.u32 %v5908, 16
      %v6150 = vor.u32 %v6147, %v6148
      %v6151 = vsel %vm3834, %v6122, %v6150
      %v6152 = vrot.slane %v5810, 7
      %v6153 = vor.u32 %v6152, %v5806
      %v6154 = vsel %vm3834, %v6133, %v6153
      %v6156 = vshrl.u32 %v5817, 16
      %v6158 = vrot.slane %v6156, 7
      %v6159 = vshll.u32 %v5817, 16
      %v6161 = vor.u32 %v6158, %v6159
      %v6162 = vsel %vm3834, %v6139, %v6161
      %v6164 = vshrl.u32 %v5910, 16
      %v6166 = vrot.slane %v6164, 7
      %v6167 = vshll.u32 %v5910, 16
      %v6169 = vor.u32 %v6166, %v6167
      %v6170 = vsel %vm3834, %v6147, %v6169
      %v6171 = vrot.slane %v5818, 7
      %v6172 = vor.u32 %v6171, %v5814
      %v6173 = vsel %vm3834, %v6152, %v6172
      %v6175 = vshrl.u32 %v5825, 16
      %v6177 = vrot.slane %v6175, 7
      %v6178 = vshll.u32 %v5825, 16
      %v6180 = vor.u32 %v6177, %v6178
      %v6181 = vsel %vm3834, %v6158, %v6180
      %v6183 = vshrl.u32 %v5912, 16
      %v6185 = vrot.slane %v6183, 7
      %v6186 = vshll.u32 %v5912, 16
      %v6188 = vor.u32 %v6185, %v6186
      %v6189 = vsel %vm3834, %v6166, %v6188
      %v6190 = vrot.slane %v5826, 7
      %v6191 = vor.u32 %v6190, %v5822
      %v6192 = vsel %vm3834, %v6171, %v6191
      %v6194 = vshrl.u32 %v5833, 16
      %v6196 = vrot.slane %v6194, 7
      %v6197 = vshll.u32 %v5833, 16
      %v6199 = vor.u32 %v6196, %v6197
      %v6200 = vsel %vm3834, %v6177, %v6199
      %v6202 = vshrl.u32 %v5914, 16
      %v6204 = vrot.slane %v6202, 7
      %v6205 = vshll.u32 %v5914, 16
      %v6207 = vor.u32 %v6204, %v6205
      %v6208 = vsel %vm3834, %v6185, %v6207
      %v6209 = vrot.slane %v5834, 7
      %v6210 = vor.u32 %v6209, %v5830
      %v6211 = vsel %vm3834, %v6190, %v6210
      %v6213 = vshrl.u32 %v5841, 16
      %v6215 = vrot.slane %v6213, 7
      %v6216 = vshll.u32 %v5841, 16
      %v6218 = vor.u32 %v6215, %v6216
      %v6219 = vsel %vm3834, %v6196, %v6218
      %v6221 = vshrl.u32 %v5916, 16
      %v6223 = vrot.slane %v6221, 7
      %v6224 = vshll.u32 %v5916, 16
      %v6226 = vor.u32 %v6223, %v6224
      %v6227 = vsel %vm3834, %v6204, %v6226
      %v6228 = vrot.slane %v5842, 7
      %v6229 = vor.u32 %v6228, %v5838
      %v6230 = vsel %vm3834, %v6209, %v6229
      %v6232 = vshrl.u32 %v5849, 16
      %v6234 = vrot.slane %v6232, 7
      %v6235 = vshll.u32 %v5849, 16
      %v6237 = vor.u32 %v6234, %v6235
      %v6238 = vsel %vm3834, %v6215, %v6237
      %v6240 = vshrl.u32 %v5918, 16
      %v6242 = vrot.slane %v6240, 7
      %v6243 = vshll.u32 %v5918, 16
      %v6245 = vor.u32 %v6242, %v6243
      %v6246 = vsel %vm3834, %v6223, %v6245
      %v6247 = vrot.slane %v5850, 7
      %v6248 = vor.u32 %v6247, %v5846
      %v6249 = vsel %vm3834, %v6228, %v6248
      %v6251 = vshrl.u32 %v5857, 16
      %v6253 = vrot.slane %v6251, 7
      %v6254 = vshll.u32 %v5857, 16
      %v6256 = vor.u32 %v6253, %v6254
      %v6257 = vsel %vm3834, %v6234, %v6256
      %v6259 = vshrl.u32 %v5920, 16
      %v6261 = vrot.slane %v6259, 7
      %v6262 = vshll.u32 %v5920, 16
      %v6264 = vor.u32 %v6261, %v6262
      %v6265 = vsel %vm3834, %v6242, %v6264
      %v6266 = vrot.slane %v5858, 7
      %v6267 = vor.u32 %v6266, %v5854
      %v6268 = vsel %vm3834, %v6247, %v6267
      %v6270 = vshrl.u32 %v5865, 16
      %v6272 = vrot.slane %v6270, 7
      %v6273 = vshll.u32 %v5865, 16
      %v6275 = vor.u32 %v6272, %v6273
      %v6276 = vsel %vm3834, %v6253, %v6275
      %v6278 = vshrl.u32 %v5922, 16
      %v6280 = vrot.slane %v6278, 7
      %v6281 = vshll.u32 %v5922, 16
      %v6283 = vor.u32 %v6280, %v6281
      %v6284 = vsel %vm3834, %v6261, %v6283
      %v6285 = vrot.slane %v5866, 7
      %v6286 = vor.u32 %v6285, %v5862
      %v6287 = vsel %vm3834, %v6266, %v6286
      %v6289 = vshrl.u32 %v5873, 16
      %v6291 = vrot.slane %v6289, 7
      %v6292 = vshll.u32 %v5873, 16
      %v6294 = vor.u32 %v6291, %v6292
      %v6295 = vsel %vm3834, %v6272, %v6294
      %v6297 = vshrl.u32 %v5924, 16
      %v6299 = vrot.slane %v6297, 7
      %v6300 = vshll.u32 %v5924, 16
      %v6302 = vor.u32 %v6299, %v6300
      %v6303 = vsel %vm3834, %v6280, %v6302
      %v6304 = vrot.slane %v5874, 7
      %v6305 = vor.u32 %v6304, %v5870
      %v6306 = vsel %vm3834, %v6285, %v6305
      %v6308 = vshrl.u32 %v5931, 16
      %v6310 = vrot.slane %v6308, 7
      %v6311 = vshll.u32 %v5931, 16
      %v6313 = vor.u32 %v6310, %v6311
      %v6314 = vsel %vm3834, %v6291, %v6313
      %v6316 = vshrl.u32 %v5947, 16
      %v6318 = vrot.slane %v6316, 7
      %v6319 = vshll.u32 %v5947, 16
      %v6321 = vor.u32 %v6318, %v6319
      %v6322 = vsel %vm3834, %v6299, %v6321
      %v6323 = vrot.slane %v5932, 7
      %v6324 = vor.u32 %v6323, %v5928
      %v6325 = vsel %vm3834, %v6304, %v6324
      %v6327 = vshrl.u32 %v5939, 16
      %v6329 = vrot.slane %v6327, 7
      %v6330 = vshll.u32 %v5939, 16
      %v6332 = vor.u32 %v6329, %v6330
      %v6333 = vsel %vm3834, %v6310, %v6332
      %v6335 = vshrl.u32 %v5949, 16
      %v6337 = vrot.slane %v6335, 7
      %v6338 = vshll.u32 %v5949, 16
      %v6340 = vor.u32 %v6337, %v6338
      %v6341 = vsel %vm3834, %v6318, %v6340
      %v6342 = vrot.slane %v5940, 7
      %v6343 = vor.u32 %v6342, %v5936
      %v6344 = vsel %vm3834, %v6323, %v6343
      %v6346 = vshrl.u32 %v5956, 16
      %v6348 = vrot.slane %v6346, 7
      %v6349 = vshll.u32 %v5956, 16
      %v6351 = vor.u32 %v6348, %v6349
      %v6352 = vsel %vm3834, %v6329, %v6351
      %v6354 = vshrl.u32 %v5972, 16
      %v6356 = vrot.slane %v6354, 7
      %v6357 = vshll.u32 %v5972, 16
      %v6359 = vor.u32 %v6356, %v6357
      %v6360 = vsel %vm3834, %v6337, %v6359
      %v6361 = vrot.slane %v5957, 7
      %v6362 = vor.u32 %v6361, %v5953
      %v6363 = vsel %vm3834, %v6342, %v6362
      %v6365 = vshrl.u32 %v5964, 16
      %v6367 = vrot.slane %v6365, 7
      %v6368 = vshll.u32 %v5964, 16
      %v6370 = vor.u32 %v6367, %v6368
      %v6371 = vsel %vm3834, %v6348, %v6370
      %v6373 = vshrl.u32 %v5974, 16
      %v6375 = vrot.slane %v6373, 7
      %v6376 = vshll.u32 %v5974, 16
      %v6378 = vor.u32 %v6375, %v6376
      %v6379 = vsel %vm3834, %v6356, %v6378
      %v6381 = vshrl.u32 %v5876, 16
      %v6383 = vrot.slane %v6381, 7
      %v6384 = vshll.u32 %v5876, 16
      %v6386 = vor.u32 %v6383, %v6384
      %v6387 = vsel %vm3834, %v6291, %v6386
      %v6389 = vshrl.u32 %v5926, 16
      %v6391 = vrot.slane %v6389, 7
      %v6392 = vshll.u32 %v5926, 16
      %v6394 = vor.u32 %v6391, %v6392
      %v6395 = vsel %vm3834, %v6299, %v6394
      %v6397 = vshrl.u32 %v5942, 16
      %v6399 = vrot.slane %v6397, 7
      %v6400 = vshll.u32 %v5942, 16
      %v6402 = vor.u32 %v6399, %v6400
      %v6403 = vsel %vm3834, %v6329, %v6402
      %v6405 = vshrl.u32 %v5951, 16
      %v6407 = vrot.slane %v6405, 7
      %v6408 = vshll.u32 %v5951, 16
      %v6410 = vor.u32 %v6407, %v6408
      %v6411 = vsel %vm3834, %v6337, %v6410
      %v6412 = vrot.slane %v5965, 7
      %v6413 = vor.u32 %v6412, %v5961
      %v6414 = vsel %vm3834, %v6361, %v6413
      %v6416 = vshrl.u32 %v5967, 16
      %v6418 = vrot.slane %v6416, 7
      %v6419 = vshll.u32 %v5967, 16
      %v6421 = vor.u32 %v6418, %v6419
      %v6422 = vsel %vm3834, %v6367, %v6421
      %v6424 = vshrl.u32 %v5976, 16
      %v6426 = vrot.slane %v6424, 7
      %v6427 = vshll.u32 %v5976, 16
      %v6429 = vor.u32 %v6426, %v6427
      %v6430 = vsel %vm3834, %v6375, %v6429
      %6501 = vmatprep.subr.bf16.mxu0 0
      %6502 = vmatpush1.bf16.msra.mxu0 %v4647
      %6503 = vmatprep.subr.bf16.mxu0 0
      %6504 = vmatpush1.bf16.msra.mxu0 %v4648
      %6505 = vmatprep.subr.bf16.mxu0 0
      %6506 = vmatpush1.bf16.msra.mxu0 %v4649
      %6507 = vmatprep.subr.bf16.mxu0 0
      %6508 = vmatpush1.bf16.msra.mxu0 %v4650
      %6509 = vmatprep.subr.bf16.mxu0 0
      %6510 = vmatpush1.bf16.msra.mxu0 %v4651
      %6511 = vmatprep.subr.bf16.mxu0 0
      %6512 = vmatpush1.bf16.msra.mxu0 %v4652
      %6513 = vmatprep.subr.bf16.mxu0 0
      %6514 = vmatpush1.bf16.msra.mxu0 %v4653
      %6515 = vmatprep.subr.bf16.mxu0 0
      %6516 = vmatpush1.bf16.msra.mxu0 %v4654
      %6517 = vmatprep.subr.bf16.mxu0 0
      %6518 = vmatpush1.bf16.msra.mxu0 %v4655
      %6519 = vmatprep.subr.bf16.mxu0 0
      %6520 = vmatpush1.bf16.msra.mxu0 %v4656
      %6521 = vmatprep.subr.bf16.mxu0 0
      %6522 = vmatpush1.bf16.msra.mxu0 %v4657
      %6523 = vmatprep.subr.bf16.mxu0 0
      %6524 = vmatpush1.bf16.msra.mxu0 %v4658
      %6525 = vmatprep.subr.bf16.mxu0 0
      %6526 = vmatpush1.bf16.msra.mxu0 %v4659
      %6527 = vmatprep.subr.bf16.mxu0 0
      %6528 = vmatpush1.bf16.msra.mxu0 %v4660
      %6529 = vmatprep.subr.bf16.mxu0 0
      %6530 = vmatpush1.bf16.msra.mxu0 %v4661
      %6531 = vmatprep.subr.bf16.mxu0 0
      %6532 = vmatpush1.bf16.msra.mxu0 %v4662
      %6533 = vmatprep.mubr.bf16.mxu0 %v5995
      %6534 = vmatmul.mubr.bf16.gmra.mrb[0].mxu0 %v5983
      %v6535 = vpop.f32.mrb[0].mxu0
      %v6536 = vadd.f32 %v3832, %v6535
      %v6537 = vpop.f32.mrb[0].mxu0
      %v6538 = vpop.f32.mrb[0].mxu0
      %v6539 = vadd.f32 %v3832, %v6538
      %v6540 = vpop.f32.mrb[0].mxu0
      %6541 = vmatprep.mubr.bf16.mxu0 %v6080
      %6542 = vmatmul.mubr.bf16.gmra.mrb[0].mxu0 %v6072
      %v6543 = vpop.f32.mrb[0].mxu0
      %v6544 = vadd.f32 %v3832, %v6543
      %v6545 = vpop.f32.mrb[0].mxu0
      %v6546 = vpop.f32.mrb[0].mxu0
      %v6547 = vadd.f32 %v3832, %v6546
      %v6548 = vpop.f32.mrb[0].mxu0
      %6549 = vmatprep.mubr.bf16.mxu0 %v6128
      %6550 = vmatmul.mubr.bf16.gmra.mrb[0].mxu0 %v6127
      %v6551 = vpop.f32.mrb[0].mxu0
      %v6552 = vadd.f32 %v3832, %v6551
      %v6553 = vpop.f32.mrb[0].mxu0
      %v6554 = vpop.f32.mrb[0].mxu0
      %v6555 = vadd.f32 %v3832, %v6554
      %v6556 = vpop.f32.mrb[0].mxu0
      %6557 = vmatprep.mubr.bf16.mxu0 %v6099
      %6558 = vmatmul.mubr.bf16.gmra.mrb[0].mxu0 %v6091
      %v6559 = vpop.f32.mrb[0].mxu0
      %v6560 = vadd.f32 %v3832, %v6559
      %v6561 = vpop.f32.mrb[0].mxu0
      %v6562 = vpop.f32.mrb[0].mxu0
      %v6563 = vadd.f32 %v3832, %v6562
      %v6564 = vpop.f32.mrb[0].mxu0
      %6565 = vmatprep.mubr.bf16.mxu0 %v6131
      %6566 = vmatmul.mubr.bf16.gmra.mrb[0].mxu0 %v6130
      %v6567 = vpop.f32.mrb[0].mxu0
      %v6568 = vadd.f32 %v3832, %v6567
      %v6569 = vpop.f32.mrb[0].mxu0
      %v6570 = vpop.f32.mrb[0].mxu0
      %v6571 = vadd.f32 %v3832, %v6570
      %v6572 = vpop.f32.mrb[0].mxu0
      %6573 = vmatprep.mubr.bf16.mxu0 %v6118
      %6574 = vmatmul.mubr.bf16.gmra.mrb[0].mxu0 %v6110
      %v6575 = vpop.f32.mrb[0].mxu0
      %v6576 = vadd.f32 %v3832, %v6575
      %v6577 = vpop.f32.mrb[0].mxu0
      %v6578 = vpop.f32.mrb[0].mxu0
      %v6579 = vadd.f32 %v3832, %v6578
      %v6580 = vpop.f32.mrb[0].mxu0
      %6581 = vmatprep.mubr.bf16.mxu0 %v6143
      %6582 = vmatmul.mubr.bf16.gmra.mrb[0].mxu0 %v6135
      %v6583 = vpop.f32.mrb[0].mxu0
      %v6584 = vadd.f32 %v3832, %v6583
      %v6585 = vpop.f32.mrb[0].mxu0
      %v6586 = vpop.f32.mrb[0].mxu0
      %v6587 = vadd.f32 %v3832, %v6586
      %v6588 = vpop.f32.mrb[0].mxu0
      %6589 = vmatprep.mubr.bf16.mxu0 %v6162
      %6590 = vmatmul.mubr.bf16.gmra.mrb[0].mxu0 %v6154
      %v6591 = vpop.f32.mrb[0].mxu0
      %v6592 = vadd.f32 %v3832, %v6591
      %v6593 = vpop.f32.mrb[0].mxu0
      %v6594 = vpop.f32.mrb[0].mxu0
      %v6595 = vadd.f32 %v3832, %v6594
      %v6596 = vpop.f32.mrb[0].mxu0
      %6597 = vmatprep.mubr.bf16.mxu0 %v6181
      %6598 = vmatmul.mubr.bf16.gmra.mrb[0].mxu0 %v6173
      %v6599 = vpop.f32.mrb[0].mxu0
      %v6600 = vadd.f32 %v3832, %v6599
      %v6601 = vpop.f32.mrb[0].mxu0
      %v6602 = vpop.f32.mrb[0].mxu0
      %v6603 = vadd.f32 %v3832, %v6602
      %v6604 = vpop.f32.mrb[0].mxu0
      %6605 = vmatprep.mubr.bf16.mxu0 %v6200
      %6606 = vmatmul.mubr.bf16.gmra.mrb[0].mxu0 %v6192
      %v6607 = vpop.f32.mrb[0].mxu0
      %v6608 = vadd.f32 %v3832, %v6607
      %v6609 = vpop.f32.mrb[0].mxu0
      %v6610 = vpop.f32.mrb[0].mxu0
      %v6611 = vadd.f32 %v3832, %v6610
      %v6612 = vpop.f32.mrb[0].mxu0
      %6613 = vmatprep.mubr.bf16.mxu0 %v6219
      %6614 = vmatmul.mubr.bf16.gmra.mrb[0].mxu0 %v6211
      %v6615 = vpop.f32.mrb[0].mxu0
      %v6616 = vadd.f32 %v3832, %v6615
      %v6617 = vpop.f32.mrb[0].mxu0
      %v6618 = vpop.f32.mrb[0].mxu0
      %v6619 = vadd.f32 %v3832, %v6618
      %v6620 = vpop.f32.mrb[0].mxu0
      %6621 = vmatprep.mubr.bf16.mxu0 %v6238
      %6622 = vmatmul.mubr.bf16.gmra.mrb[0].mxu0 %v6230
      %v6623 = vpop.f32.mrb[0].mxu0
      %v6624 = vadd.f32 %v3832, %v6623
      %v6625 = vpop.f32.mrb[0].mxu0
      %v6626 = vpop.f32.mrb[0].mxu0
      %v6627 = vadd.f32 %v3832, %v6626
      %v6628 = vpop.f32.mrb[0].mxu0
      %6629 = vmatprep.mubr.bf16.mxu0 %v6257
      %6630 = vmatmul.mubr.bf16.gmra.mrb[0].mxu0 %v6249
      %v6631 = vpop.f32.mrb[0].mxu0
      %v6632 = vadd.f32 %v3832, %v6631
      %v6633 = vpop.f32.mrb[0].mxu0
      %v6634 = vpop.f32.mrb[0].mxu0
      %v6635 = vadd.f32 %v3832, %v6634
      %v6636 = vpop.f32.mrb[0].mxu0
      %6637 = vmatprep.mubr.bf16.mxu0 %v6276
      %6638 = vmatmul.mubr.bf16.gmra.mrb[0].mxu0 %v6268
      %v6639 = vpop.f32.mrb[0].mxu0
      %v6640 = vadd.f32 %v3832, %v6639
      %v6641 = vpop.f32.mrb[0].mxu0
      %v6642 = vpop.f32.mrb[0].mxu0
      %v6643 = vadd.f32 %v3832, %v6642
      %v6644 = vpop.f32.mrb[0].mxu0
      %6645 = vmatprep.mubr.bf16.mxu0 %v6295
      %6646 = vmatmul.mubr.bf16.gmra.mrb[0].mxu0 %v6287
      %v6647 = vpop.f32.mrb[0].mxu0
      %v6648 = vadd.f32 %v3832, %v6647
      %v6649 = vpop.f32.mrb[0].mxu0
      %v6650 = vpop.f32.mrb[0].mxu0
      %v6651 = vadd.f32 %v3832, %v6650
      %v6652 = vpop.f32.mrb[0].mxu0
      %6653 = vmatprep.mubr.bf16.mxu0 %v6387
      %6654 = vmatmul.mubr.bf16.gmra.mrb[0].mxu0 %v6306
      %v6655 = vpop.f32.mrb[0].mxu0
      %v6656 = vadd.f32 %v3832, %v6655
      %v6657 = vpop.f32.mrb[0].mxu0
      %v6658 = vpop.f32.mrb[0].mxu0
      %v6659 = vadd.f32 %v3832, %v6658
      %v6660 = vpop.f32.mrb[0].mxu0
      %6661 = vdwg.mxu0
      %6662 = vmatprep.subr.bf16.mxu0 0
      %6663 = vmatpush1.bf16.msra.mxu0 %v4663
      %6664 = vmatprep.subr.bf16.mxu0 0
      %6665 = vmatpush1.bf16.msra.mxu0 %v4664
      %6666 = vmatprep.subr.bf16.mxu0 0
      %6667 = vmatpush1.bf16.msra.mxu0 %v4665
      %6668 = vmatprep.subr.bf16.mxu0 0
      %6669 = vmatpush1.bf16.msra.mxu0 %v4666
      %6670 = vmatprep.subr.bf16.mxu0 0
      %6671 = vmatpush1.bf16.msra.mxu0 %v4667
      %6672 = vmatprep.subr.bf16.mxu0 0
      %6673 = vmatpush1.bf16.msra.mxu0 %v4668
      %6674 = vmatprep.subr.bf16.mxu0 0
      %6675 = vmatpush1.bf16.msra.mxu0 %v4669
      %6676 = vmatprep.subr.bf16.mxu0 0
      %6677 = vmatpush1.bf16.msra.mxu0 %v4670
      %6678 = vmatprep.subr.bf16.mxu0 0
      %6679 = vmatpush1.bf16.msra.mxu0 %v4671
      %6680 = vmatprep.subr.bf16.mxu0 0
      %6681 = vmatpush1.bf16.msra.mxu0 %v4672
      %6682 = vmatprep.subr.bf16.mxu0 0
      %6683 = vmatpush1.bf16.msra.mxu0 %v4673
      %6684 = vmatprep.subr.bf16.mxu0 0
      %6685 = vmatpush1.bf16.msra.mxu0 %v4674
      %6686 = vmatprep.subr.bf16.mxu0 0
      %6687 = vmatpush1.bf16.msra.mxu0 %v4675
      %6688 = vmatprep.subr.bf16.mxu0 0
      %6689 = vmatpush1.bf16.msra.mxu0 %v4676
      %6690 = vmatprep.subr.bf16.mxu0 0
      %6691 = vmatpush1.bf16.msra.mxu0 %v4677
      %6692 = vmatprep.subr.bf16.mxu0 0
      %6693 = vmatpush1.bf16.msra.mxu0 %v4678
      %6694 = vmatprep.mubr.bf16.mxu0 %v6014
      %6695 = vmatmul.mubr.bf16.gmra.mrb[0].mxu0 %v6007
      %v6696 = vpop.f32.mrb[0].mxu0
      %v6697 = vadd.f32 %v6536, %v6696
      %v6698 = vpop.f32.mrb[0].mxu0
      %v6699 = vpop.f32.mrb[0].mxu0
      %v6700 = vadd.f32 %v6539, %v6699
      %v6701 = vpop.f32.mrb[0].mxu0
      %6702 = vmatprep.mubr.bf16.mxu0 %v6091
      %6703 = vmatmul.mubr.bf16.gmra.mrb[0].mxu0 %v6088
      %v6704 = vpop.f32.mrb[0].mxu0
      %v6705 = vadd.f32 %v6544, %v6704
      %v6706 = vpop.f32.mrb[0].mxu0
      %v6707 = vpop.f32.mrb[0].mxu0
      %v6708 = vadd.f32 %v6547, %v6707
      %v6709 = vpop.f32.mrb[0].mxu0
      %6710 = vmatprep.mubr.bf16.mxu0 %v6130
      %6711 = vmatmul.mubr.bf16.gmra.mrb[0].mxu0 %v6129
      %v6712 = vpop.f32.mrb[0].mxu0
      %v6713 = vadd.f32 %v6552, %v6712
      %v6714 = vpop.f32.mrb[0].mxu0
      %v6715 = vpop.f32.mrb[0].mxu0
      %v6716 = vadd.f32 %v6555, %v6715
      %v6717 = vpop.f32.mrb[0].mxu0
      %6718 = vmatprep.mubr.bf16.mxu0 %v6110
      %6719 = vmatmul.mubr.bf16.gmra.mrb[0].mxu0 %v6107
      %v6720 = vpop.f32.mrb[0].mxu0
      %v6721 = vadd.f32 %v6560, %v6720
      %v6722 = vpop.f32.mrb[0].mxu0
      %v6723 = vpop.f32.mrb[0].mxu0
      %v6724 = vadd.f32 %v6563, %v6723
      %v6725 = vpop.f32.mrb[0].mxu0
      %6726 = vmatprep.mubr.bf16.mxu0 %v6135
      %6727 = vmatmul.mubr.bf16.gmra.mrb[0].mxu0 %v6132
      %v6728 = vpop.f32.mrb[0].mxu0
      %v6729 = vadd.f32 %v6568, %v6728
      %v6730 = vpop.f32.mrb[0].mxu0
      %v6731 = vpop.f32.mrb[0].mxu0
      %v6732 = vadd.f32 %v6571, %v6731
      %v6733 = vpop.f32.mrb[0].mxu0
      %6734 = vmatprep.mubr.bf16.mxu0 %v6154
      %6735 = vmatmul.mubr.bf16.gmra.mrb[0].mxu0 %v6126
      %v6736 = vpop.f32.mrb[0].mxu0
      %v6737 = vadd.f32 %v6576, %v6736
      %v6738 = vpop.f32.mrb[0].mxu0
      %v6739 = vpop.f32.mrb[0].mxu0
      %v6740 = vadd.f32 %v6579, %v6739
      %v6741 = vpop.f32.mrb[0].mxu0
      %6742 = vmatprep.mubr.bf16.mxu0 %v6173
      %6743 = vmatmul.mubr.bf16.gmra.mrb[0].mxu0 %v6151
      %v6744 = vpop.f32.mrb[0].mxu0
      %v6745 = vadd.f32 %v6584, %v6744
      %v6746 = vpop.f32.mrb[0].mxu0
      %v6747 = vpop.f32.mrb[0].mxu0
      %v6748 = vadd.f32 %v6587, %v6747
      %v6749 = vpop.f32.mrb[0].mxu0
      %6750 = vmatprep.mubr.bf16.mxu0 %v6192
      %6751 = vmatmul.mubr.bf16.gmra.mrb[0].mxu0 %v6170
      %v6752 = vpop.f32.mrb[0].mxu0
      %v6753 = vadd.f32 %v6592, %v6752
      %v6754 = vpop.f32.mrb[0].mxu0
      %v6755 = vpop.f32.mrb[0].mxu0
      %v6756 = vadd.f32 %v6595, %v6755
      %v6757 = vpop.f32.mrb[0].mxu0
      %6758 = vmatprep.mubr.bf16.mxu0 %v6211
      %6759 = vmatmul.mubr.bf16.gmra.mrb[0].mxu0 %v6189
      %v6760 = vpop.f32.mrb[0].mxu0
      %v6761 = vadd.f32 %v6600, %v6760
      %v6762 = vpop.f32.mrb[0].mxu0
      %v6763 = vpop.f32.mrb[0].mxu0
      %v6764 = vadd.f32 %v6603, %v6763
      %v6765 = vpop.f32.mrb[0].mxu0
      %6766 = vmatprep.mubr.bf16.mxu0 %v6230
      %6767 = vmatmul.mubr.bf16.gmra.mrb[0].mxu0 %v6208
      %v6768 = vpop.f32.mrb[0].mxu0
      %v6769 = vadd.f32 %v6608, %v6768
      %v6770 = vpop.f32.mrb[0].mxu0
      %v6771 = vpop.f32.mrb[0].mxu0
      %v6772 = vadd.f32 %v6611, %v6771
      %v6773 = vpop.f32.mrb[0].mxu0
      %6774 = vmatprep.mubr.bf16.mxu0 %v6249
      %6775 = vmatmul.mubr.bf16.gmra.mrb[0].mxu0 %v6227
      %v6776 = vpop.f32.mrb[0].mxu0
      %v6777 = vadd.f32 %v6616, %v6776
      %v6778 = vpop.f32.mrb[0].mxu0
      %v6779 = vpop.f32.mrb[0].mxu0
      %v6780 = vadd.f32 %v6619, %v6779
      %v6781 = vpop.f32.mrb[0].mxu0
      %6782 = vmatprep.mubr.bf16.mxu0 %v6268
      %6783 = vmatmul.mubr.bf16.gmra.mrb[0].mxu0 %v6246
      %v6784 = vpop.f32.mrb[0].mxu0
      %v6785 = vadd.f32 %v6624, %v6784
      %v6786 = vpop.f32.mrb[0].mxu0
      %v6787 = vpop.f32.mrb[0].mxu0
      %v6788 = vadd.f32 %v6627, %v6787
      %v6789 = vpop.f32.mrb[0].mxu0
      %6790 = vmatprep.mubr.bf16.mxu0 %v6287
      %6791 = vmatmul.mubr.bf16.gmra.mrb[0].mxu0 %v6265
      %v6792 = vpop.f32.mrb[0].mxu0
      %v6793 = vadd.f32 %v6632, %v6792
      %v6794 = vpop.f32.mrb[0].mxu0
      %v6795 = vpop.f32.mrb[0].mxu0
      %v6796 = vadd.f32 %v6635, %v6795
      %v6797 = vpop.f32.mrb[0].mxu0
      %6798 = vmatprep.mubr.bf16.mxu0 %v6306
      %6799 = vmatmul.mubr.bf16.gmra.mrb[0].mxu0 %v6284
      %v6800 = vpop.f32.mrb[0].mxu0
      %v6801 = vadd.f32 %v6640, %v6800
      %v6802 = vpop.f32.mrb[0].mxu0
      %v6803 = vpop.f32.mrb[0].mxu0
      %v6804 = vadd.f32 %v6643, %v6803
      %v6805 = vpop.f32.mrb[0].mxu0
      %6806 = vmatprep.mubr.bf16.mxu0 %v6325
      %6807 = vmatmul.mubr.bf16.gmra.mrb[0].mxu0 %v6303
      %v6808 = vpop.f32.mrb[0].mxu0
      %v6809 = vadd.f32 %v6648, %v6808
      %v6810 = vpop.f32.mrb[0].mxu0
      %v6811 = vpop.f32.mrb[0].mxu0
      %v6812 = vadd.f32 %v6651, %v6811
      %v6813 = vpop.f32.mrb[0].mxu0
      %6814 = vmatprep.mubr.bf16.mxu0 %v6344
      %6815 = vmatmul.mubr.bf16.gmra.mrb[0].mxu0 %v6395
      %v6816 = vpop.f32.mrb[0].mxu0
      %v6817 = vadd.f32 %v6656, %v6816
      %v6818 = vpop.f32.mrb[0].mxu0
      %v6819 = vpop.f32.mrb[0].mxu0
      %v6820 = vadd.f32 %v6659, %v6819
      %v6821 = vpop.f32.mrb[0].mxu0
      %6822 = vdwg.mxu0
      %6823 = vmatprep.subr.bf16.mxu0 0
      %6824 = vmatpush1.bf16.msra.mxu0 %v4679
      %6825 = vmatprep.subr.bf16.mxu0 0
      %6826 = vmatpush1.bf16.msra.mxu0 %v4680
      %6827 = vmatprep.subr.bf16.mxu0 0
      %6828 = vmatpush1.bf16.msra.mxu0 %v4681
      %6829 = vmatprep.subr.bf16.mxu0 0
      %6830 = vmatpush1.bf16.msra.mxu0 %v4682
      %6831 = vmatprep.subr.bf16.mxu0 0
      %6832 = vmatpush1.bf16.msra.mxu0 %v4683
      %6833 = vmatprep.subr.bf16.mxu0 0
      %6834 = vmatpush1.bf16.msra.mxu0 %v4684
      %6835 = vmatprep.subr.bf16.mxu0 0
      %6836 = vmatpush1.bf16.msra.mxu0 %v4685
      %6837 = vmatprep.subr.bf16.mxu0 0
      %6838 = vmatpush1.bf16.msra.mxu0 %v4686
      %6839 = vmatprep.subr.bf16.mxu0 0
      %6840 = vmatpush1.bf16.msra.mxu0 %v4687
      %6841 = vmatprep.subr.bf16.mxu0 0
      %6842 = vmatpush1.bf16.msra.mxu0 %v4688
      %6843 = vmatprep.subr.bf16.mxu0 0
      %6844 = vmatpush1.bf16.msra.mxu0 %v4689
      %6845 = vmatprep.subr.bf16.mxu0 0
      %6846 = vmatpush1.bf16.msra.mxu0 %v4690
      %6847 = vmatprep.subr.bf16.mxu0 0
      %6848 = vmatpush1.bf16.msra.mxu0 %v4691
      %6849 = vmatprep.subr.bf16.mxu0 0
      %6850 = vmatpush1.bf16.msra.mxu0 %v4692
      %6851 = vmatprep.subr.bf16.mxu0 0
      %6852 = vmatpush1.bf16.msra.mxu0 %v4693
      %6853 = vmatprep.subr.bf16.mxu0 0
      %6854 = vmatpush1.bf16.msra.mxu0 %v4694
      %6855 = vmatprep.mubr.bf16.mxu0 %v6038
      %6856 = vmatmul.mubr.bf16.gmra.mrb[0].mxu0 %v6026
      %v6857 = vpop.f32.mrb[0].mxu0
      %v6858 = vadd.f32 %v6697, %v6857
      %v6859 = vpop.f32.mrb[0].mxu0
      %v6860 = vpop.f32.mrb[0].mxu0
      %v6861 = vadd.f32 %v6700, %v6860
      %v6862 = vpop.f32.mrb[0].mxu0
      %6863 = vmatprep.mubr.bf16.mxu0 %v6107
      %6864 = vmatmul.mubr.bf16.gmra.mrb[0].mxu0 %v6099
      %v6865 = vpop.f32.mrb[0].mxu0
      %v6866 = vadd.f32 %v6705, %v6865
      %v6867 = vpop.f32.mrb[0].mxu0
      %v6868 = vpop.f32.mrb[0].mxu0
      %v6869 = vadd.f32 %v6708, %v6868
      %v6870 = vpop.f32.mrb[0].mxu0
      %6871 = vmatprep.mubr.bf16.mxu0 %v6132
      %6872 = vmatmul.mubr.bf16.gmra.mrb[0].mxu0 %v6131
      %v6873 = vpop.f32.mrb[0].mxu0
      %v6874 = vadd.f32 %v6713, %v6873
      %v6875 = vpop.f32.mrb[0].mxu0
      %v6876 = vpop.f32.mrb[0].mxu0
      %v6877 = vadd.f32 %v6716, %v6876
      %v6878 = vpop.f32.mrb[0].mxu0
      %6879 = vmatprep.mubr.bf16.mxu0 %v6126
      %6880 = vmatmul.mubr.bf16.gmra.mrb[0].mxu0 %v6118
      %v6881 = vpop.f32.mrb[0].mxu0
      %v6882 = vadd.f32 %v6721, %v6881
      %v6883 = vpop.f32.mrb[0].mxu0
      %v6884 = vpop.f32.mrb[0].mxu0
      %v6885 = vadd.f32 %v6724, %v6884
      %v6886 = vpop.f32.mrb[0].mxu0
      %6887 = vmatprep.mubr.bf16.mxu0 %v6151
      %6888 = vmatmul.mubr.bf16.gmra.mrb[0].mxu0 %v6143
      %v6889 = vpop.f32.mrb[0].mxu0
      %v6890 = vadd.f32 %v6729, %v6889
      %v6891 = vpop.f32.mrb[0].mxu0
      %v6892 = vpop.f32.mrb[0].mxu0
      %v6893 = vadd.f32 %v6732, %v6892
      %v6894 = vpop.f32.mrb[0].mxu0
      %6895 = vmatprep.mubr.bf16.mxu0 %v6170
      %6896 = vmatmul.mubr.bf16.gmra.mrb[0].mxu0 %v6162
      %v6897 = vpop.f32.mrb[0].mxu0
      %v6898 = vadd.f32 %v6737, %v6897
      %v6899 = vpop.f32.mrb[0].mxu0
      %v6900 = vpop.f32.mrb[0].mxu0
      %v6901 = vadd.f32 %v6740, %v6900
      %v6902 = vpop.f32.mrb[0].mxu0
      %6903 = vmatprep.mubr.bf16.mxu0 %v6189
      %6904 = vmatmul.mubr.bf16.gmra.mrb[0].mxu0 %v6181
      %v6905 = vpop.f32.mrb[0].mxu0
      %v6906 = vadd.f32 %v6745, %v6905
      %v6907 = vpop.f32.mrb[0].mxu0
      %v6908 = vpop.f32.mrb[0].mxu0
      %v6909 = vadd.f32 %v6748, %v6908
      %v6910 = vpop.f32.mrb[0].mxu0
      %6911 = vmatprep.mubr.bf16.mxu0 %v6208
      %6912 = vmatmul.mubr.bf16.gmra.mrb[0].mxu0 %v6200
      %v6913 = vpop.f32.mrb[0].mxu0
      %v6914 = vadd.f32 %v6753, %v6913
      %v6915 = vpop.f32.mrb[0].mxu0
      %v6916 = vpop.f32.mrb[0].mxu0
      %v6917 = vadd.f32 %v6756, %v6916
      %v6918 = vpop.f32.mrb[0].mxu0
      %6919 = vmatprep.mubr.bf16.mxu0 %v6227
      %6920 = vmatmul.mubr.bf16.gmra.mrb[0].mxu0 %v6219
      %v6921 = vpop.f32.mrb[0].mxu0
      %v6922 = vadd.f32 %v6761, %v6921
      %v6923 = vpop.f32.mrb[0].mxu0
      %v6924 = vpop.f32.mrb[0].mxu0
      %v6925 = vadd.f32 %v6764, %v6924
      %v6926 = vpop.f32.mrb[0].mxu0
      %6927 = vmatprep.mubr.bf16.mxu0 %v6246
      %6928 = vmatmul.mubr.bf16.gmra.mrb[0].mxu0 %v6238
      %v6929 = vpop.f32.mrb[0].mxu0
      %v6930 = vadd.f32 %v6769, %v6929
      %v6931 = vpop.f32.mrb[0].mxu0
      %v6932 = vpop.f32.mrb[0].mxu0
      %v6933 = vadd.f32 %v6772, %v6932
      %v6934 = vpop.f32.mrb[0].mxu0
      %6935 = vmatprep.mubr.bf16.mxu0 %v6265
      %6936 = vmatmul.mubr.bf16.gmra.mrb[0].mxu0 %v6257
      %v6937 = vpop.f32.mrb[0].mxu0
      %v6938 = vadd.f32 %v6777, %v6937
      %v6939 = vpop.f32.mrb[0].mxu0
      %v6940 = vpop.f32.mrb[0].mxu0
      %v6941 = vadd.f32 %v6780, %v6940
      %v6942 = vpop.f32.mrb[0].mxu0
      %6943 = vmatprep.mubr.bf16.mxu0 %v6284
      %6944 = vmatmul.mubr.bf16.gmra.mrb[0].mxu0 %v6276
      %v6945 = vpop.f32.mrb[0].mxu0
      %v6946 = vadd.f32 %v6785, %v6945
      %v6947 = vpop.f32.mrb[0].mxu0
      %v6948 = vpop.f32.mrb[0].mxu0
      %v6949 = vadd.f32 %v6788, %v6948
      %v6950 = vpop.f32.mrb[0].mxu0
      %6951 = vmatprep.mubr.bf16.mxu0 %v6303
      %6952 = vmatmul.mubr.bf16.gmra.mrb[0].mxu0 %v6295
      %v6953 = vpop.f32.mrb[0].mxu0
      %v6954 = vadd.f32 %v6793, %v6953
      %v6955 = vpop.f32.mrb[0].mxu0
      %v6956 = vpop.f32.mrb[0].mxu0
      %v6957 = vadd.f32 %v6796, %v6956
      %v6958 = vpop.f32.mrb[0].mxu0
      %6959 = vmatprep.mubr.bf16.mxu0 %v6322
      %6960 = vmatmul.mubr.bf16.gmra.mrb[0].mxu0 %v6314
      %v6961 = vpop.f32.mrb[0].mxu0
      %v6962 = vadd.f32 %v6801, %v6961
      %v6963 = vpop.f32.mrb[0].mxu0
      %v6964 = vpop.f32.mrb[0].mxu0
      %v6965 = vadd.f32 %v6804, %v6964
      %v6966 = vpop.f32.mrb[0].mxu0
      %6967 = vmatprep.mubr.bf16.mxu0 %v6341
      %6968 = vmatmul.mubr.bf16.gmra.mrb[0].mxu0 %v6333
      %v6969 = vpop.f32.mrb[0].mxu0
      %v6970 = vadd.f32 %v6809, %v6969
      %v6971 = vpop.f32.mrb[0].mxu0
      %v6972 = vpop.f32.mrb[0].mxu0
      %v6973 = vadd.f32 %v6812, %v6972
      %v6974 = vpop.f32.mrb[0].mxu0
      %6975 = vmatprep.mubr.bf16.mxu0 %v6411
      %6976 = vmatmul.mubr.bf16.gmra.mrb[0].mxu0 %v6403
      %v6977 = vpop.f32.mrb[0].mxu0
      %v6978 = vadd.f32 %v6817, %v6977
      %v6979 = vpop.f32.mrb[0].mxu0
      %v6980 = vpop.f32.mrb[0].mxu0
      %v6981 = vadd.f32 %v6820, %v6980
      %v6982 = vpop.f32.mrb[0].mxu0
      %6983 = vdwg.mxu0
      %6984 = vmatprep.subr.bf16.mxu0 0
      %6985 = vmatpush1.bf16.msra.mxu0 %v4695
      %6986 = vmatprep.subr.bf16.mxu0 0
      %6987 = vmatpush1.bf16.msra.mxu0 %v4696
      %6988 = vmatprep.subr.bf16.mxu0 0
      %6989 = vmatpush1.bf16.msra.mxu0 %v4697
      %6990 = vmatprep.subr.bf16.mxu0 0
      %6991 = vmatpush1.bf16.msra.mxu0 %v4698
      %6992 = vmatprep.subr.bf16.mxu0 0
      %6993 = vmatpush1.bf16.msra.mxu0 %v4699
      %6994 = vmatprep.subr.bf16.mxu0 0
      %6995 = vmatpush1.bf16.msra.mxu0 %v4700
      %6996 = vmatprep.subr.bf16.mxu0 0
      %6997 = vmatpush1.bf16.msra.mxu0 %v4701
      %6998 = vmatprep.subr.bf16.mxu0 0
      %6999 = vmatpush1.bf16.msra.mxu0 %v4702
      %7000 = vmatprep.subr.bf16.mxu0 0
      %7001 = vmatpush1.bf16.msra.mxu0 %v4703
      %7002 = vmatprep.subr.bf16.mxu0 0
      %7003 = vmatpush1.bf16.msra.mxu0 %v4704
      %7004 = vmatprep.subr.bf16.mxu0 0
      %7005 = vmatpush1.bf16.msra.mxu0 %v4705
      %7006 = vmatprep.subr.bf16.mxu0 0
      %7007 = vmatpush1.bf16.msra.mxu0 %v4706
      %7008 = vmatprep.subr.bf16.mxu0 0
      %7009 = vmatpush1.bf16.msra.mxu0 %v4707
      %7010 = vmatprep.subr.bf16.mxu0 0
      %7011 = vmatpush1.bf16.msra.mxu0 %v4708
      %7012 = vmatprep.subr.bf16.mxu0 0
      %7013 = vmatpush1.bf16.msra.mxu0 %v4709
      %7014 = vmatprep.subr.bf16.mxu0 0
      %7015 = vmatpush1.bf16.msra.mxu0 %v4710
      %7016 = vmatprep.mubr.bf16.mxu0 %v6057
      %7017 = vmatmul.mubr.bf16.gmra.mrb[0].mxu0 %v6045
      %v7018 = vpop.f32.mrb[0].mxu0
      %v7019 = vadd.f32 %v6858, %v7018
      %v7020 = vpop.f32.mrb[0].mxu0
      %v7021 = vpop.f32.mrb[0].mxu0
      %v7022 = vadd.f32 %v6861, %v7021
      %v7023 = vpop.f32.mrb[0].mxu0
      %7024 = vmatprep.mubr.bf16.mxu0 %v6118
      %7025 = vmatmul.mubr.bf16.gmra.mrb[0].mxu0 %v6110
      %v7026 = vpop.f32.mrb[0].mxu0
      %v7027 = vadd.f32 %v6866, %v7026
      %v7028 = vpop.f32.mrb[0].mxu0
      %v7029 = vpop.f32.mrb[0].mxu0
      %v7030 = vadd.f32 %v6869, %v7029
      %v7031 = vpop.f32.mrb[0].mxu0
      %7032 = vmatprep.mubr.bf16.mxu0 %v6143
      %7033 = vmatmul.mubr.bf16.gmra.mrb[0].mxu0 %v6135
      %v7034 = vpop.f32.mrb[0].mxu0
      %v7035 = vadd.f32 %v6874, %v7034
      %v7036 = vpop.f32.mrb[0].mxu0
      %v7037 = vpop.f32.mrb[0].mxu0
      %v7038 = vadd.f32 %v6877, %v7037
      %v7039 = vpop.f32.mrb[0].mxu0
      %7040 = vmatprep.mubr.bf16.mxu0 %v6162
      %7041 = vmatmul.mubr.bf16.gmra.mrb[0].mxu0 %v6154
      %v7042 = vpop.f32.mrb[0].mxu0
      %v7043 = vadd.f32 %v6882, %v7042
      %v7044 = vpop.f32.mrb[0].mxu0
      %v7045 = vpop.f32.mrb[0].mxu0
      %v7046 = vadd.f32 %v6885, %v7045
      %v7047 = vpop.f32.mrb[0].mxu0
      %7048 = vmatprep.mubr.bf16.mxu0 %v6181
      %7049 = vmatmul.mubr.bf16.gmra.mrb[0].mxu0 %v6173
      %v7050 = vpop.f32.mrb[0].mxu0
      %v7051 = vadd.f32 %v6890, %v7050
      %v7052 = vpop.f32.mrb[0].mxu0
      %v7053 = vpop.f32.mrb[0].mxu0
      %v7054 = vadd.f32 %v6893, %v7053
      %v7055 = vpop.f32.mrb[0].mxu0
      %7056 = vmatprep.mubr.bf16.mxu0 %v6200
      %7057 = vmatmul.mubr.bf16.gmra.mrb[0].mxu0 %v6192
      %v7058 = vpop.f32.mrb[0].mxu0
      %v7059 = vadd.f32 %v6898, %v7058
      %v7060 = vpop.f32.mrb[0].mxu0
      %v7061 = vpop.f32.mrb[0].mxu0
      %v7062 = vadd.f32 %v6901, %v7061
      %v7063 = vpop.f32.mrb[0].mxu0
      %7064 = vmatprep.mubr.bf16.mxu0 %v6219
      %7065 = vmatmul.mubr.bf16.gmra.mrb[0].mxu0 %v6211
      %v7066 = vpop.f32.mrb[0].mxu0
      %v7067 = vadd.f32 %v6906, %v7066
      %v7068 = vpop.f32.mrb[0].mxu0
      %v7069 = vpop.f32.mrb[0].mxu0
      %v7070 = vadd.f32 %v6909, %v7069
      %v7071 = vpop.f32.mrb[0].mxu0
      %7072 = vmatprep.mubr.bf16.mxu0 %v6238
      %7073 = vmatmul.mubr.bf16.gmra.mrb[0].mxu0 %v6230
      %v7074 = vpop.f32.mrb[0].mxu0
      %v7075 = vadd.f32 %v6914, %v7074
      %v7076 = vpop.f32.mrb[0].mxu0
      %v7077 = vpop.f32.mrb[0].mxu0
      %v7078 = vadd.f32 %v6917, %v7077
      %v7079 = vpop.f32.mrb[0].mxu0
      %7080 = vmatprep.mubr.bf16.mxu0 %v6257
      %7081 = vmatmul.mubr.bf16.gmra.mrb[0].mxu0 %v6249
      %v7082 = vpop.f32.mrb[0].mxu0
      %v7083 = vadd.f32 %v6922, %v7082
      %v7084 = vpop.f32.mrb[0].mxu0
      %v7085 = vpop.f32.mrb[0].mxu0
      %v7086 = vadd.f32 %v6925, %v7085
      %v7087 = vpop.f32.mrb[0].mxu0
      %7088 = vmatprep.mubr.bf16.mxu0 %v6276
      %7089 = vmatmul.mubr.bf16.gmra.mrb[0].mxu0 %v6268
      %v7090 = vpop.f32.mrb[0].mxu0
      %v7091 = vadd.f32 %v6930, %v7090
      %v7092 = vpop.f32.mrb[0].mxu0
      %v7093 = vpop.f32.mrb[0].mxu0
      %v7094 = vadd.f32 %v6933, %v7093
      %v7095 = vpop.f32.mrb[0].mxu0
      %7096 = vmatprep.mubr.bf16.mxu0 %v6295
      %7097 = vmatmul.mubr.bf16.gmra.mrb[0].mxu0 %v6287
      %v7098 = vpop.f32.mrb[0].mxu0
      %v7099 = vadd.f32 %v6938, %v7098
      %v7100 = vpop.f32.mrb[0].mxu0
      %v7101 = vpop.f32.mrb[0].mxu0
      %v7102 = vadd.f32 %v6941, %v7101
      %v7103 = vpop.f32.mrb[0].mxu0
      %7104 = vmatprep.mubr.bf16.mxu0 %v6314
      %7105 = vmatmul.mubr.bf16.gmra.mrb[0].mxu0 %v6306
      %v7106 = vpop.f32.mrb[0].mxu0
      %v7107 = vadd.f32 %v6946, %v7106
      %v7108 = vpop.f32.mrb[0].mxu0
      %v7109 = vpop.f32.mrb[0].mxu0
      %v7110 = vadd.f32 %v6949, %v7109
      %v7111 = vpop.f32.mrb[0].mxu0
      %7112 = vmatprep.mubr.bf16.mxu0 %v6333
      %7113 = vmatmul.mubr.bf16.gmra.mrb[0].mxu0 %v6325
      %v7114 = vpop.f32.mrb[0].mxu0
      %v7115 = vadd.f32 %v6954, %v7114
      %v7116 = vpop.f32.mrb[0].mxu0
      %v7117 = vpop.f32.mrb[0].mxu0
      %v7118 = vadd.f32 %v6957, %v7117
      %v7119 = vpop.f32.mrb[0].mxu0
      %7120 = vmatprep.mubr.bf16.mxu0 %v6352
      %7121 = vmatmul.mubr.bf16.gmra.mrb[0].mxu0 %v6344
      %v7122 = vpop.f32.mrb[0].mxu0
      %v7123 = vadd.f32 %v6962, %v7122
      %v7124 = vpop.f32.mrb[0].mxu0
      %v7125 = vpop.f32.mrb[0].mxu0
      %v7126 = vadd.f32 %v6965, %v7125
      %v7127 = vpop.f32.mrb[0].mxu0
      %7128 = vmatprep.mubr.bf16.mxu0 %v6371
      %7129 = vmatmul.mubr.bf16.gmra.mrb[0].mxu0 %v6363
      %v7130 = vpop.f32.mrb[0].mxu0
      %v7131 = vadd.f32 %v6970, %v7130
      %v7132 = vpop.f32.mrb[0].mxu0
      %v7133 = vpop.f32.mrb[0].mxu0
      %v7134 = vadd.f32 %v6973, %v7133
      %v7135 = vpop.f32.mrb[0].mxu0
      %7136 = vmatprep.mubr.bf16.mxu0 %v6422
      %7137 = vmatmul.mubr.bf16.gmra.mrb[0].mxu0 %v6414
      %v7138 = vpop.f32.mrb[0].mxu0
      %v7139 = vadd.f32 %v6978, %v7138
      %v7140 = vpop.f32.mrb[0].mxu0
      %v7141 = vpop.f32.mrb[0].mxu0
      %v7142 = vadd.f32 %v6981, %v7141
      %v7143 = vpop.f32.mrb[0].mxu0
      %7144 = vdwg.mxu0
      %7145 = vmatprep.subr.bf16.mxu0 0
      %7146 = vmatpush1.bf16.msra.mxu0 %v4711
      %7147 = vmatprep.subr.bf16.mxu0 0
      %7148 = vmatpush1.bf16.msra.mxu0 %v4712
      %7149 = vmatprep.subr.bf16.mxu0 0
      %7150 = vmatpush1.bf16.msra.mxu0 %v4713
      %7151 = vmatprep.subr.bf16.mxu0 0
      %7152 = vmatpush1.bf16.msra.mxu0 %v4714
      %7153 = vmatprep.subr.bf16.mxu0 0
      %7154 = vmatpush1.bf16.msra.mxu0 %v4715
      %7155 = vmatprep.subr.bf16.mxu0 0
      %7156 = vmatpush1.bf16.msra.mxu0 %v4716
      %7157 = vmatprep.subr.bf16.mxu0 0
      %7158 = vmatpush1.bf16.msra.mxu0 %v4717
      %7159 = vmatprep.subr.bf16.mxu0 0
      %7160 = vmatpush1.bf16.msra.mxu0 %v4718
      %7161 = vmatprep.subr.bf16.mxu0 0
      %7162 = vmatpush1.bf16.msra.mxu0 0
      %7163 = vmatprep.subr.bf16.mxu0 0
      %7164 = vmatpush1.bf16.msra.mxu0 0
      %7165 = vmatprep.subr.bf16.mxu0 0
      %7166 = vmatpush1.bf16.msra.mxu0 0
      %7167 = vmatprep.subr.bf16.mxu0 0
      %7168 = vmatpush1.bf16.msra.mxu0 0
      %7169 = vmatprep.subr.bf16.mxu0 0
      %7170 = vmatpush1.bf16.msra.mxu0 0
      %7171 = vmatprep.subr.bf16.mxu0 0
      %7172 = vmatpush1.bf16.msra.mxu0 0
      %7173 = vmatprep.subr.bf16.mxu0 0
      %7174 = vmatpush1.bf16.msra.mxu0 0
      %7175 = vmatprep.subr.bf16.mxu0 0
      %7176 = vmatpush1.bf16.msra.mxu0 0
      %7177 = vmatprep.mubr.bf16.mxu0 0
      %7178 = vmatmul.mubr.bf16.gmra.mrb[0].mxu0 %v6069
      %v7179 = vpop.f32.mrb[0].mxu0
      %v7180 = vadd.f32 %v7019, %v7179
      %v7181 = vpop.f32.mrb[0].mxu0
      %v7182 = vpop.f32.mrb[0].mxu0
      %v7183 = vadd.f32 %v7022, %v7182
      %v7184 = vpop.f32.mrb[0].mxu0
      %7185 = vmatprep.mubr.bf16.mxu0 0
      %7186 = vmatmul.mubr.bf16.gmra.mrb[0].mxu0 %v6126
      %v7187 = vpop.f32.mrb[0].mxu0
      %v7188 = vadd.f32 %v7027, %v7187
      %v7189 = vpop.f32.mrb[0].mxu0
      %v7190 = vpop.f32.mrb[0].mxu0
      %v7191 = vadd.f32 %v7030, %v7190
      %v7192 = vpop.f32.mrb[0].mxu0
      %7193 = vmatprep.mubr.bf16.mxu0 0
      %7194 = vmatmul.mubr.bf16.gmra.mrb[0].mxu0 %v6151
      %v7195 = vpop.f32.mrb[0].mxu0
      %v7196 = vadd.f32 %v7035, %v7195
      %v7197 = vpop.f32.mrb[0].mxu0
      %v7198 = vpop.f32.mrb[0].mxu0
      %v7199 = vadd.f32 %v7038, %v7198
      %v7200 = vpop.f32.mrb[0].mxu0
      %7201 = vmatprep.mubr.bf16.mxu0 0
      %7202 = vmatmul.mubr.bf16.gmra.mrb[0].mxu0 %v6170
      %v7203 = vpop.f32.mrb[0].mxu0
      %v7204 = vadd.f32 %v7043, %v7203
      %v7205 = vpop.f32.mrb[0].mxu0
      %v7206 = vpop.f32.mrb[0].mxu0
      %v7207 = vadd.f32 %v7046, %v7206
      %v7208 = vpop.f32.mrb[0].mxu0
      %7209 = vmatprep.mubr.bf16.mxu0 0
      %7210 = vmatmul.mubr.bf16.gmra.mrb[0].mxu0 %v6189
      %v7211 = vpop.f32.mrb[0].mxu0
      %v7212 = vadd.f32 %v7051, %v7211
      %v7213 = vpop.f32.mrb[0].mxu0
      %v7214 = vpop.f32.mrb[0].mxu0
      %v7215 = vadd.f32 %v7054, %v7214
      %v7216 = vpop.f32.mrb[0].mxu0
      %7217 = vmatprep.mubr.bf16.mxu0 0
      %7218 = vmatmul.mubr.bf16.gmra.mrb[0].mxu0 %v6208
      %v7219 = vpop.f32.mrb[0].mxu0
      %v7220 = vadd.f32 %v7059, %v7219
      %v7221 = vpop.f32.mrb[0].mxu0
      %v7222 = vpop.f32.mrb[0].mxu0
      %v7223 = vadd.f32 %v7062, %v7222
      %v7224 = vpop.f32.mrb[0].mxu0
      %7225 = vmatprep.mubr.bf16.mxu0 0
      %7226 = vmatmul.mubr.bf16.gmra.mrb[0].mxu0 %v6227
      %v7227 = vpop.f32.mrb[0].mxu0
      %v7228 = vadd.f32 %v7067, %v7227
      %v7229 = vpop.f32.mrb[0].mxu0
      %v7230 = vpop.f32.mrb[0].mxu0
      %v7231 = vadd.f32 %v7070, %v7230
      %v7232 = vpop.f32.mrb[0].mxu0
      %7233 = vmatprep.mubr.bf16.mxu0 0
      %7234 = vmatmul.mubr.bf16.gmra.mrb[0].mxu0 %v6246
      %v7235 = vpop.f32.mrb[0].mxu0
      %v7236 = vadd.f32 %v7075, %v7235
      %v7237 = vpop.f32.mrb[0].mxu0
      %v7238 = vpop.f32.mrb[0].mxu0
      %v7239 = vadd.f32 %v7078, %v7238
      %v7240 = vpop.f32.mrb[0].mxu0
      %7241 = vmatprep.mubr.bf16.mxu0 0
      %7242 = vmatmul.mubr.bf16.gmra.mrb[0].mxu0 %v6265
      %v7243 = vpop.f32.mrb[0].mxu0
      %v7244 = vadd.f32 %v7083, %v7243
      %v7245 = vpop.f32.mrb[0].mxu0
      %v7246 = vpop.f32.mrb[0].mxu0
      %v7247 = vadd.f32 %v7086, %v7246
      %v7248 = vpop.f32.mrb[0].mxu0
      %7249 = vmatprep.mubr.bf16.mxu0 0
      %7250 = vmatmul.mubr.bf16.gmra.mrb[0].mxu0 %v6284
      %v7251 = vpop.f32.mrb[0].mxu0
      %v7252 = vadd.f32 %v7091, %v7251
      %v7253 = vpop.f32.mrb[0].mxu0
      %v7254 = vpop.f32.mrb[0].mxu0
      %v7255 = vadd.f32 %v7094, %v7254
      %v7256 = vpop.f32.mrb[0].mxu0
      %7257 = vmatprep.mubr.bf16.mxu0 0
      %7258 = vmatmul.mubr.bf16.gmra.mrb[0].mxu0 %v6303
      %v7259 = vpop.f32.mrb[0].mxu0
      %v7260 = vadd.f32 %v7099, %v7259
      %v7261 = vpop.f32.mrb[0].mxu0
      %v7262 = vpop.f32.mrb[0].mxu0
      %v7263 = vadd.f32 %v7102, %v7262
      %v7264 = vpop.f32.mrb[0].mxu0
      %7265 = vmatprep.mubr.bf16.mxu0 0
      %7266 = vmatmul.mubr.bf16.gmra.mrb[0].mxu0 %v6322
      %v7267 = vpop.f32.mrb[0].mxu0
      %v7268 = vadd.f32 %v7107, %v7267
      %v7269 = vpop.f32.mrb[0].mxu0
      %v7270 = vpop.f32.mrb[0].mxu0
      %v7271 = vadd.f32 %v7110, %v7270
      %v7272 = vpop.f32.mrb[0].mxu0
      %7273 = vmatprep.mubr.bf16.mxu0 0
      %7274 = vmatmul.mubr.bf16.gmra.mrb[0].mxu0 %v6341
      %v7275 = vpop.f32.mrb[0].mxu0
      %v7276 = vadd.f32 %v7115, %v7275
      %v7277 = vpop.f32.mrb[0].mxu0
      %v7278 = vpop.f32.mrb[0].mxu0
      %v7279 = vadd.f32 %v7118, %v7278
      %v7280 = vpop.f32.mrb[0].mxu0
      %7281 = vmatprep.mubr.bf16.mxu0 0
      %7282 = vmatmul.mubr.bf16.gmra.mrb[0].mxu0 %v6360
      %v7283 = vpop.f32.mrb[0].mxu0
      %v7284 = vadd.f32 %v7123, %v7283
      %v7285 = vpop.f32.mrb[0].mxu0
      %v7286 = vpop.f32.mrb[0].mxu0
      %v7287 = vadd.f32 %v7126, %v7286
      %v7288 = vpop.f32.mrb[0].mxu0
      %7289 = vmatprep.mubr.bf16.mxu0 0
      %7290 = vmatmul.mubr.bf16.gmra.mrb[0].mxu0 %v6379
      %v7291 = vpop.f32.mrb[0].mxu0
      %v7292 = vadd.f32 %v7131, %v7291
      %v7293 = vpop.f32.mrb[0].mxu0
      %v7294 = vpop.f32.mrb[0].mxu0
      %v7295 = vadd.f32 %v7134, %v7294
      %v7296 = vpop.f32.mrb[0].mxu0
      %7297 = vmatprep.mubr.bf16.mxu0 0
      %7298 = vmatmul.mubr.bf16.gmra.mrb[0].mxu0 %v6430
      %v7299 = vpop.f32.mrb[0].mxu0
      %v7300 = vadd.f32 %v7139, %v7299
      %v7301 = vpop.f32.mrb[0].mxu0
      %v7302 = vpop.f32.mrb[0].mxu0
      %v7303 = vadd.f32 %v7142, %v7302
      %v7304 = vpop.f32.mrb[0].mxu0
      %7305 = vdwg.mxu0
      %v7306 = vmax.f32 %v7180, 0.0
      %v7307 = vmax.f32 %v7183, 0.0
      %v7308 = vmax.f32 %v7188, 0.0
      %v7309 = vmax.f32 %v7191, 0.0
      %v7310 = vmax.f32 %v7196, 0.0
      %v7311 = vmax.f32 %v7199, 0.0
      %v7312 = vmax.f32 %v7204, 0.0
      %v7313 = vmax.f32 %v7207, 0.0
      %v7314 = vmax.f32 %v7212, 0.0
      %v7315 = vmax.f32 %v7215, 0.0
      %v7316 = vmax.f32 %v7220, 0.0
      %v7317 = vmax.f32 %v7223, 0.0
      %v7318 = vmax.f32 %v7228, 0.0
      %v7319 = vmax.f32 %v7231, 0.0
      %v7320 = vmax.f32 %v7236, 0.0
      %v7321 = vmax.f32 %v7239, 0.0
      %v7322 = vmax.f32 %v7244, 0.0
      %v7323 = vmax.f32 %v7247, 0.0
      %v7324 = vmax.f32 %v7252, 0.0
      %v7325 = vmax.f32 %v7255, 0.0
      %v7326 = vmax.f32 %v7260, 0.0
      %v7327 = vmax.f32 %v7263, 0.0
      %v7328 = vmax.f32 %v7268, 0.0
      %v7329 = vmax.f32 %v7271, 0.0
      %v7330 = vmax.f32 %v7276, 0.0
      %v7331 = vmax.f32 %v7279, 0.0
      %v7332 = vmax.f32 %v7284, 0.0
      %v7333 = vmax.f32 %v7287, 0.0
      %v7334 = vmax.f32 %v7292, 0.0
      %v7335 = vmax.f32 %v7295, 0.0
      %v7336 = vmax.f32 %v7300, 0.0
      %v7337 = vmax.f32 %v7303, 0.0
      %v7338 = vld [vmem:[%s219 + $0x140] sm:$0xff]
      %v7339 = vld [vmem:[%s219 + $0x148] sm:$0xff]
      %v7340 = vld [vmem:[%s219 + $0x150] sm:$0xff]
      %v7341 = vld [vmem:[%s219 + $0x158] sm:$0xff]
      %v7342 = vld [vmem:[%s219 + $0x160] sm:$0xff]
      %v7343 = vld [vmem:[%s219 + $0x168] sm:$0xff]
      %v7344 = vld [vmem:[%s219 + $0x170] sm:$0xff]
      %v7345 = vld [vmem:[%s219 + $0x178] sm:$0xff]
      %v7346 = vld [vmem:[%s219 + $0x180] sm:$0xff]
      %v7347 = vld [vmem:[%s219 + $0x188] sm:$0xff]
      %v7348 = vld [vmem:[%s219 + $0x190] sm:$0xff]
      %v7349 = vld [vmem:[%s219 + $0x198] sm:$0xff]
      %v7350 = vld [vmem:[%s219 + $0x1a0] sm:$0xff]
      %v7351 = vld [vmem:[%s219 + $0x1a8] sm:$0xff]
      %v7352 = vld [vmem:[%s219 + $0x1b0] sm:$0xff]
      %v7353 = vld [vmem:[%s219 + $0x1b8] sm:$0xff]
      %v7354 = vld [vmem:[%s219 + $0x1c0] sm:$0xff]
      %v7355 = vld [vmem:[%s219 + $0x1c8] sm:$0xff]
      %v7356 = vld [vmem:[%s219 + $0x1d0] sm:$0xff]
      %v7357 = vld [vmem:[%s219 + $0x1d8] sm:$0xff]
      %v7358 = vld [vmem:[%s219 + $0x1e0] sm:$0xff]
      %v7359 = vld [vmem:[%s219 + $0x1e8] sm:$0xff]
      %v7360 = vld [vmem:[%s219 + $0x1f0] sm:$0xff]
      %v7361 = vld [vmem:[%s219 + $0x1f8] sm:$0xff]
      %v7362 = vld [vmem:[%s219 + $0x200] sm:$0xff]
      %v7363 = vld [vmem:[%s219 + $0x208] sm:$0xff]
      %v7364 = vld [vmem:[%s219 + $0x210] sm:$0xff]
      %v7365 = vld [vmem:[%s219 + $0x218] sm:$0xff]
      %v7366 = vld [vmem:[%s219 + $0x220] sm:$0xff]
      %v7367 = vld [vmem:[%s219 + $0x228] sm:$0xff]
      %v7368 = vld [vmem:[%s219 + $0x230] sm:$0xff]
      %v7369 = vld [vmem:[%s219 + $0x238] sm:$0xff]
      %v7370 = vadd.f32 %v7306, %v7338
      %v7371 = vadd.f32 %v7307, %v7339
      %v7372 = vadd.f32 %v7308, %v7340
      %v7373 = vadd.f32 %v7309, %v7341
      %v7374 = vadd.f32 %v7310, %v7342
      %v7375 = vadd.f32 %v7311, %v7343
      %v7376 = vadd.f32 %v7312, %v7344
      %v7377 = vadd.f32 %v7313, %v7345
      %v7378 = vadd.f32 %v7314, %v7346
      %v7379 = vadd.f32 %v7315, %v7347
      %v7380 = vadd.f32 %v7316, %v7348
      %v7381 = vadd.f32 %v7317, %v7349
      %v7382 = vadd.f32 %v7318, %v7350
      %v7383 = vadd.f32 %v7319, %v7351
      %v7384 = vadd.f32 %v7320, %v7352
      %v7385 = vadd.f32 %v7321, %v7353
      %v7386 = vadd.f32 %v7322, %v7354
      %v7387 = vadd.f32 %v7323, %v7355
      %v7388 = vadd.f32 %v7324, %v7356
      %v7389 = vadd.f32 %v7325, %v7357
      %v7390 = vadd.f32 %v7326, %v7358
      %v7391 = vadd.f32 %v7327, %v7359
      %v7392 = vadd.f32 %v7328, %v7360
      %v7393 = vadd.f32 %v7329, %v7361
      %v7394 = vadd.f32 %v7330, %v7362
      %v7395 = vadd.f32 %v7331, %v7363
      %v7396 = vadd.f32 %v7332, %v7364
      %v7397 = vadd.f32 %v7333, %v7365
      %v7398 = vadd.f32 %v7334, %v7366
      %v7399 = vadd.f32 %v7335, %v7367
      %v7400 = vadd.f32 %v7336, %v7368
      %v7401 = vadd.f32 %v7337, %v7369
      %7402 = vst [vmem:[%s224 + $0x100] sm:$0xff] %v7370
      %7403 = vst [vmem:[%s224 + $0x108] sm:$0xff] %v7371
      %7404 = vst [vmem:[%s224 + $0x110] sm:$0xff] %v7372
      %7405 = vst [vmem:[%s224 + $0x118] sm:$0xff] %v7373
      %7406 = vst [vmem:[%s224 + $0x120] sm:$0xff] %v7374
      %7407 = vst [vmem:[%s224 + $0x128] sm:$0xff] %v7375
      %7408 = vst [vmem:[%s224 + $0x130] sm:$0xff] %v7376
      %7409 = vst [vmem:[%s224 + $0x138] sm:$0xff] %v7377
      %7410 = vst [vmem:[%s224 + $0x140] sm:$0xff] %v7378
      %7411 = vst [vmem:[%s224 + $0x148] sm:$0xff] %v7379
      %7412 = vst [vmem:[%s224 + $0x150] sm:$0xff] %v7380
      %7413 = vst [vmem:[%s224 + $0x158] sm:$0xff] %v7381
      %7414 = vst [vmem:[%s224 + $0x160] sm:$0xff] %v7382
      %7415 = vst [vmem:[%s224 + $0x168] sm:$0xff] %v7383
      %7416 = vst [vmem:[%s224 + $0x170] sm:$0xff] %v7384
      %7417 = vst [vmem:[%s224 + $0x178] sm:$0xff] %v7385
      %7418 = vst [vmem:[%s224 + $0x180] sm:$0xff] %v7386
      %7419 = vst [vmem:[%s224 + $0x188] sm:$0xff] %v7387
      %7420 = vst [vmem:[%s224 + $0x190] sm:$0xff] %v7388
      %7421 = vst [vmem:[%s224 + $0x198] sm:$0xff] %v7389
      %7422 = vst [vmem:[%s224 + $0x1a0] sm:$0xff] %v7390
      %7423 = vst [vmem:[%s224 + $0x1a8] sm:$0xff] %v7391
      %7424 = vst [vmem:[%s224 + $0x1b0] sm:$0xff] %v7392
      %7425 = vst [vmem:[%s224 + $0x1b8] sm:$0xff] %v7393
      %7426 = vst [vmem:[%s224 + $0x1c0] sm:$0xff] %v7394
      %7427 = vst [vmem:[%s224 + $0x1c8] sm:$0xff] %v7395
      %7428 = vst [vmem:[%s224 + $0x1d0] sm:$0xff] %v7396
      %7429 = vst [vmem:[%s224 + $0x1d8] sm:$0xff] %v7397
      %7430 = vst [vmem:[%s224 + $0x1e0] sm:$0xff] %v7398
      %7431 = vst [vmem:[%s224 + $0x1e8] sm:$0xff] %v7399
      %7432 = vst [vmem:[%s224 + $0x1f0] sm:$0xff] %v7400
      %7433 = vst [vmem:[%s224 + $0x1f8] sm:$0xff] %v7401
      %p7434 = scmp.lt.s32.totalorder %s16, 1
      %s7435 = scalar_select %p7434, %s16, 1
      %s7436 = smul.addr %s7435, 64
      %s7437 = smul.addr %s7436, 8
      %s7438 = scalar_lea.vmem %s5, %s7437
      // Predicated region
      $region41: #{residual_block_forward.1} parent=39 // pred_check
        %p7439 = pneg %p144
      $region42: #{residual_block_forward.1} parent=39 // pred_check_branch
        %7441 = sbr.rel (%p7439) target = $region44
      $region43: #{residual_block_forward.1} parent=39 // pred_region
        _
      $region44: #{residual_block_forward.1} parent=39 // pred_fallthru
        _
    $region40: #{residual_block_forward.1} parent=5 // pred_fallthru
      _
    %p7442 = scmp.le.s32.totalorder 2, %s11
    // Predicated region
    $region45: #{residual_block_forward.1} parent=5 // pred_check
      %p7443 = pneg %p7442
    $region46: #{residual_block_forward.1} parent=5 // pred_check_branch
      %7445 = sbr.rel (%p7443) target = $region48
    $region47: #{residual_block_forward.1} parent=5 // pred_region
      %s7446 = ssub.s32 %s11, 2
      // Predicated region
      $region49: #{residual_block_forward.1} parent=47 // pred_check
        %p7447 = pneg %p150
      $region50: #{residual_block_forward.1} parent=47 // pred_check_branch
        %7449 = sbr.rel (%p7447) target = $region52
      $region51: #{residual_block_forward.1} parent=47 // pred_region
        %p7450 = scmp.lt.s32.totalorder %s17, 1
        %s7451 = scalar_select %p7450, %s17, 1
        %s7452 = smul.addr %s7451, 64
        %s7453 = smul.addr %s7452, 8
        %s7454 = scalar_lea.vmem %s5, %s7453
      $region52: #{residual_block_forward.1} parent=47 // pred_fallthru
        _
    $region48: #{residual_block_forward.1} parent=5 // pred_fallthru
      _
  $region6: #{residual_block_forward.1} parent=0 // loop_footer
    %s15 = sadd.s32 1, %s11
  $region7: #{residual_block_forward.1} parent=0 // loop_footer_branch
    %10 = sbr.rel target = $region3
  $region8: #{residual_block_forward.1} parent=0 // loop_exit
    _

</llo_original>
